<compile_context>
chip_gen: v5e
topology: v5e:2x2
jax: 0.10.0
libtpu: 0.0.40
codegen_flags: <defaults>
</compile_context>

<pallas_src>
import functools

import jax
import jax.numpy as jnp
from jax.experimental import pallas as pl
from jax.experimental.pallas import tpu as pltpu


# ----------------------------------------------------------------------------
# Helpers
# ----------------------------------------------------------------------------
def _pick_tile(dim, candidates):
    for c in candidates:
        if c <= dim and dim % c == 0:
            return c
    return dim


# ----------------------------------------------------------------------------
# Kernel 1: tiled matmul + bias (used for ConvTranspose3d k=s=2)
# ----------------------------------------------------------------------------
def _matmul_bias_kernel(a_ref, w_ref, b_ref, o_ref, acc_ref):
    k = pl.program_id(2)

    @pl.when(k == 0)
    def _():
        acc_ref[...] = jnp.zeros_like(acc_ref)

    acc_ref[...] += jnp.dot(a_ref[...], w_ref[...],
                            preferred_element_type=jnp.float32)

    @pl.when(k == pl.num_programs(2) - 1)
    def _():
        o_ref[...] = (acc_ref[...] + b_ref[...]).astype(o_ref.dtype)


def pallas_matmul_bias(a, w, b, out_dtype=jnp.bfloat16):
    """O = A @ W + b.  A:(M,K), W:(K,N), b:(N,). bf16 operands, f32 accumulate."""
    M0, K = a.shape
    K2, Ncol = w.shape
    assert K == K2
    a = a.astype(jnp.bfloat16)
    w = w.astype(jnp.bfloat16)
    b2 = b.reshape(1, Ncol).astype(jnp.float32)

    tn = _pick_tile(Ncol, (512, 256, 128)) if Ncol % 128 == 0 else Ncol
    tk = _pick_tile(K, (512, 256, 128)) if K % 128 == 0 else K

    # Keep the double-buffered working set comfortably inside the default
    # 32 MiB scoped VMEM (and v7x's 64 MiB physical VMEM).
    budget = 12 * 1024 * 1024

    def _fits(tm):
        return (2 * 2 * tm * tk          # A blocks (bf16, double buffered)
                + 2 * 2 * tk * tn        # W blocks
                + 2 * 2 * tm * tn        # O blocks
                + 4 * tm * tn) <= budget  # f32 accumulator

    tm, pad_m = None, 0
    for cand in (1024, 512, 256, 128, 64, 32, 16, 8):
        if M0 % cand == 0 and _fits(cand):
            tm = cand
            break
    if tm is None:
        if M0 <= 1024:
            tm = M0                      # small ragged M: one row block
        else:                            # large ragged M: pad rows, slice after
            tm = 256
            pad_m = (-M0) % tm
            a = jnp.pad(a, ((0, pad_m), (0, 0)))
    M = M0 + pad_m

    out = pl.pallas_call(
        _matmul_bias_kernel,
        out_shape=jax.ShapeDtypeStruct((M, Ncol), out_dtype),
        grid=(M // tm, Ncol // tn, K // tk),
        in_specs=[
            pl.BlockSpec((tm, tk), lambda i, j, k: (i, k)),
            pl.BlockSpec((tk, tn), lambda i, j, k: (k, j)),
            pl.BlockSpec((1, tn), lambda i, j, k: (0, j)),
        ],
        out_specs=pl.BlockSpec((tm, tn), lambda i, j, k: (i, j)),
        scratch_shapes=[pltpu.VMEM((tm, tn), jnp.float32)],
        compiler_params=pltpu.CompilerParams(
            dimension_semantics=("parallel", "parallel", "arbitrary")),
    )(a, w, b2)
    return out[:M0] if pad_m else out


# ----------------------------------------------------------------------------
# Kernel 2: fused 3x3x3 conv (stride 1, padding pre-applied), no im2col
# ----------------------------------------------------------------------------
def _conv3x3_kernel(*args, n_inputs, H, W):
    # args: [x_{i,kd} for i in inputs for kd in 0..2], [w_i ...], bias, out
    x_refs = args[:3 * n_inputs]
    w_refs = args[3 * n_inputs:4 * n_inputs]
    b_ref = args[4 * n_inputs]
    o_ref = args[4 * n_inputs + 1]

    cout = o_ref.shape[-1]
    acc = jnp.zeros((H * W, cout), jnp.float32)
    for i in range(n_inputs):
        for kd in range(3):
            x = x_refs[i * 3 + kd][0, 0]                 # (H+2, W+2, C_i) bf16
            for kh in range(3):
                for kw in range(3):
                    a = x[kh:kh + H, kw:kw + W, :].reshape(H * W, -1)
                    wt = w_refs[i][kd, kh, kw]           # (C_i, Cout) bf16
                    acc = acc + jnp.dot(
                        a, wt, preferred_element_type=jnp.float32)
    y = acc + b_ref[...]                                 # bias fused in epilogue
    o_ref[...] = y.reshape(o_ref.shape).astype(o_ref.dtype)


def conv3x3_fused(xs_padded, ws, bias, out_dtype=jnp.bfloat16):
    """3x3x3 conv over pre-padded NDHWC inputs.

    xs_padded: list of (N, D+2, H+2, W+2, C_i) bf16 tensors whose contributions
               are summed (the channel concat is fused by splitting the weight).
    ws:        list of (3, 3, 3, C_i, Cout) bf16 weights (kd, kh, kw, ci, co).
    bias:      (Cout,) f32.
    """
    N, Dp, Hp, Wp, _ = xs_padded[0].shape
    D, H, W = Dp - 2, Hp - 2, Wp - 2
    Cout = ws[0].shape[-1]
    n_inputs = len(xs_padded)

    in_specs = []
    call_args = []
    for x in xs_padded:                     # three shifted depth-slice views
        for kd in range(3):
            in_specs.append(
                pl.BlockSpec((1, 1, Hp, Wp, x.shape[-1]),
                             lambda n, d, _k=kd: (n, d + _k, 0, 0, 0)))
            call_args.append(x)
    for w in ws:
        in_specs.append(
            pl.BlockSpec((3, 3, 3, w.shape[-2], Cout),
                         lambda n, d: (0, 0, 0, 0, 0)))
        call_args.append(w)
    in_specs.append(pl.BlockSpec((1, Cout), lambda n, d: (0, 0)))
    call_args.append(bias.reshape(1, Cout).astype(jnp.float32))

    kern = functools.partial(_conv3x3_kernel, n_inputs=n_inputs, H=H, W=W)
    return pl.pallas_call(
        kern,
        out_shape=jax.ShapeDtypeStruct((N, D, H, W, Cout), out_dtype),
        grid=(N, D),
        in_specs=in_specs,
        out_specs=pl.BlockSpec((1, 1, H, W, Cout),
                               lambda n, d: (n, d, 0, 0, 0)),
        compiler_params=pltpu.CompilerParams(
            dimension_semantics=("parallel", "parallel")),
    )(*call_args)


# ----------------------------------------------------------------------------
# Kernel 3: InstanceNorm (biased var, affine) + LeakyReLU, chunked over S
# ----------------------------------------------------------------------------
def _in_stats_kernel(x_ref, stat_ref):
    s = pl.program_id(1)

    @pl.when(s == 0)
    def _():
        stat_ref[...] = jnp.zeros_like(stat_ref)

    x = x_ref[0].astype(jnp.float32)                        # (ts, C)
    stat_ref[0, 0:1, :] += jnp.sum(x, axis=0, keepdims=True)
    stat_ref[0, 1:2, :] += jnp.sum(x * x, axis=0, keepdims=True)


def _affine_lrelu_kernel(x_ref, sc_ref, sh_ref, o_ref, *, slope):
    y = x_ref[...].astype(jnp.float32) * sc_ref[...] + sh_ref[...]
    o_ref[...] = jnp.where(y >= 0.0, y, slope * y).astype(o_ref.dtype)


def pallas_instnorm_lrelu(x_nsc, gamma, beta, eps=1e-5, slope=1e-2):
    N, S, C = x_nsc.shape
    ts = _pick_tile(S, (4096, 2048, 1024, 512, 256, 128, 64, 32, 16, 8))

    stats = pl.pallas_call(
        _in_stats_kernel,
        out_shape=jax.ShapeDtypeStruct((N, 2, C), jnp.float32),
        grid=(N, S // ts),
        in_specs=[pl.BlockSpec((1, ts, C), lambda n, s: (n, s, 0))],
        out_specs=pl.BlockSpec((1, 2, C), lambda n, s: (n, 0, 0)),
        compiler_params=pltpu.CompilerParams(
            dimension_semantics=("parallel", "arbitrary")),
    )(x_nsc)

    mean = stats[:, 0, :] / S                               # (N, C), tiny XLA math
    var = jnp.maximum(stats[:, 1, :] / S - mean * mean, 0.0)
    scale = gamma[None, :] * jax.lax.rsqrt(var + eps)
    shift = beta[None, :] - mean * scale

    kern = functools.partial(_affine_lrelu_kernel, slope=slope)
    return pl.pallas_call(
        kern,
        out_shape=jax.ShapeDtypeStruct((N, S, C), x_nsc.dtype),
        grid=(N, S // ts),
        in_specs=[
            pl.BlockSpec((1, ts, C), lambda n, s: (n, s, 0)),
            pl.BlockSpec((1, 1, C), lambda n, s: (n, 0, 0)),
            pl.BlockSpec((1, 1, C), lambda n, s: (n, 0, 0)),
        ],
        out_specs=pl.BlockSpec((1, ts, C), lambda n, s: (n, s, 0)),
        compiler_params=pltpu.CompilerParams(
            dimension_semantics=("parallel", "parallel")),
    )(x_nsc, scale[:, None, :], shift[:, None, :])


# ----------------------------------------------------------------------------
# Layer wrappers
# ----------------------------------------------------------------------------
def conv_transpose3d_s2(x_ndhwc, w_pt, b):
    """ConvTranspose3d with kernel_size == stride == (2,2,2) (non-overlapping).

    w_pt: PyTorch layout (Cin, Cout, 2, 2, 2).
    out[n, 2d+kd, 2h+kh, 2w+kw, co] = sum_ci x[n,d,h,w,ci]*w[ci,co,kd,kh,kw] + b[co]
    """
    N, D, H, W, Cin = x_ndhwc.shape
    Cout = w_pt.shape[1]
    a = x_ndhwc.reshape(N * D * H * W, Cin)
    wk = jnp.transpose(w_pt, (0, 2, 3, 4, 1)).reshape(Cin, 8 * Cout)  # (ci, tap*co)
    bk = jnp.tile(b, 8)                                # bias per (tap, co) column
    y = pallas_matmul_bias(a, wk, bk)                  # (N*D*H*W, 8*Cout) bf16
    y = y.reshape(N, D, H, W, 2, 2, 2, Cout)
    # TODO(synk): this un-interleave is one extra XLA pass over the upsampled
    # tensor; it could be folded into the following conv's window indexing.
    y = jnp.transpose(y, (0, 1, 4, 2, 5, 3, 6, 7))
    return y.reshape(N, 2 * D, 2 * H, 2 * W, Cout)


def conv_dropout_norm_nonlin(x_list, p):
    """Conv3d(3,1,1) [+ fused channel-split skip] -> Dropout(p=0) -> IN -> LeakyReLU."""
    w_pt = p["w"]                                      # (Cout, Cin_total, 3, 3, 3)
    ws, xs_pad, c0 = [], [], 0
    for x in x_list:
        ci = x.shape[-1]
        ws.append(jnp.transpose(w_pt[:, c0:c0 + ci], (2, 3, 4, 1, 0))
                  .astype(jnp.bfloat16))               # (kd, kh, kw, ci, co)
        xs_pad.append(jnp.pad(x, ((0, 0), (1, 1), (1, 1), (1, 1), (0, 0))))
        c0 += ci
    y = conv3x3_fused(xs_pad, ws, p["b"])              # (N, D, H, W, Cout) bf16
    # TODO(synk): Dropout3d with p=0 / eval mode is an identity; omitted.
    N, D, H, W, C = y.shape
    y = pallas_instnorm_lrelu(y.reshape(N, D * H * W, C), p["gamma"], p["beta"])
    return y.reshape(N, D, H, W, C)


def up_block_forward(params, x_ncdhw, x_skip_ncdhw=None):
    x = jnp.transpose(x_ncdhw, (0, 2, 3, 4, 1)).astype(jnp.bfloat16)   # -> NDHWC
    x = conv_transpose3d_s2(x, params["up_w"], params["up_b"])
    inputs = [x]
    if x_skip_ncdhw is not None and params["skip_input"]:
        # torch.cat(dim=1) is fused into conv0 via a channel-split weight.
        inputs.append(jnp.transpose(x_skip_ncdhw, (0, 2, 3, 4, 1))
                      .astype(jnp.bfloat16))
    if params["has_nonlin"]:
        y = conv_dropout_norm_nonlin(inputs, params["conv0"])
        y = conv_dropout_norm_nonlin([y], params["conv1"])
    else:
        y = inputs[0] if len(inputs) == 1 else jnp.concatenate(inputs, axis=-1)
    return jnp.transpose(y, (0, 4, 1, 2, 3)).astype(jnp.float32)       # -> NCDHW


# ----------------------------------------------------------------------------
# Deterministic parameter init
# ----------------------------------------------------------------------------
def init_upblock_params(key, up_in_channels, in_channels, out_channels):
    ks = jax.random.split(key, 8)
    skip_input = in_channels is not None
    conv_in = out_channels + (in_channels if skip_input else 0)

    def cdnn(kw, kb, cin, cout):
        return {
            "w": 0.05 * jax.random.normal(kw, (cout, cin, 3, 3, 3), jnp.float32),
            "b": 0.05 * jax.random.normal(kb, (cout,), jnp.float32),
            "gamma": jnp.ones((cout,), jnp.float32),
            "beta": jnp.zeros((cout,), jnp.float32),
        }

    return {
        "skip_input": skip_input,
        "has_nonlin": True,
        "up_w": 0.05 * jax.random.normal(
            ks[0], (up_in_channels, out_channels, 2, 2, 2), jnp.float32),
        "up_b": 0.05 * jax.random.normal(ks[1], (out_channels,), jnp.float32),
        "conv0": cdnn(ks[2], ks[3], conv_in, out_channels),
        "conv1": cdnn(ks[4], ks[5], out_channels, out_channels),
    }


# ----------------------------------------------------------------------------
if __name__ == "__main__":
    key = jax.random.PRNGKey(0)
    k_p, k_x, k_s = jax.random.split(key, 3)

    up_in_channels, in_channels, out_channels = 8, 4, 8
    params = init_upblock_params(k_p, up_in_channels, in_channels, out_channels)

    # PyTorch-style NCDHW inputs.
    x = jax.random.normal(k_x, (2, up_in_channels, 4, 4, 4), jnp.float32)
    x_skip = jax.random.normal(k_s, (2, in_channels, 8, 8, 8), jnp.float32)

    fwd = jax.jit(lambda a, s: up_block_forward(params, a, s))
    out = jax.block_until_ready(fwd(x, x_skip))
    assert out.shape == (2, out_channels, 8, 8, 8), out.shape
    assert bool(jnp.all(jnp.isfinite(out)))
    print("KERNEL_OK")
</pallas_src>

<mosaic_0001>
module attributes {stable_mosaic.version = 11 : i64} {
  func.func @_matmul_bias_kernel(%arg0: i32, %arg1: i32, %arg2: i32, %arg3: memref<128x8xbf16, #tpu.memory_space<vmem>>, %arg4: memref<8x64xbf16, #tpu.memory_space<vmem>>, %arg5: memref<1x64xf32, #tpu.memory_space<vmem>>, %arg6: memref<128x64xbf16, #tpu.memory_space<vmem>>, %arg7: memref<128x64xf32, #tpu.memory_space<vmem>>) attributes {dimension_semantics = [#tpu.dimension_semantics<parallel>, #tpu.dimension_semantics<parallel>, #tpu.dimension_semantics<arbitrary>], iteration_bounds = array<i64: 1, 1, 1>, scalar_prefetch = 0 : i64, scratch_operands = 1 : i64, tpu.core_type = #tpu.core_type<tc>, window_params = [{transform_indices = @transform_0, window_bounds = array<i64: 128, 8>}, {transform_indices = @transform_1, window_bounds = array<i64: 8, 64>}, {transform_indices = @transform_2, window_bounds = array<i64: 1, 64>}, {transform_indices = @transform_3, window_bounds = array<i64: 128, 64>}]} {
    %c0_i32 = arith.constant 0 : i32
    %0 = arith.cmpi eq, %arg2, %c0_i32 : i32
    %1 = arith.extui %0 : i1 to i32
    %c0_i32_0 = arith.constant 0 : i32
    %2 = arith.cmpi ne, %1, %c0_i32_0 : i32
    scf.if %2 {
      %cst_10 = arith.constant 0.000000e+00 : f32
      %12 = vector.broadcast %cst_10 : f32 to vector<128x64xf32>
      %c0_11 = arith.constant 0 : index
      %c0_12 = arith.constant 0 : index
      %13 = vector.load %arg7[%c0_11, %c0_12] : memref<128x64xf32, #tpu.memory_space<vmem>>, vector<128x64xf32>
      tpu.vector_store %arg7[%c0_11, %c0_12], %12 {strides = array<i32>} : memref<128x64xf32, #tpu.memory_space<vmem>>, vector<128x64xf32>,
    } else {
    }
    %c0 = arith.constant 0 : index
    %c0_1 = arith.constant 0 : index
    %3 = vector.load %arg7[%c0, %c0_1] : memref<128x64xf32, #tpu.memory_space<vmem>>, vector<128x64xf32>
    %c0_2 = arith.constant 0 : index
    %c0_3 = arith.constant 0 : index
    %4 = vector.load %arg3[%c0_2, %c0_3] : memref<128x8xbf16, #tpu.memory_space<vmem>>, vector<128x8xbf16>
    %c0_4 = arith.constant 0 : index
    %c0_5 = arith.constant 0 : index
    %5 = vector.load %arg4[%c0_4, %c0_5] : memref<8x64xbf16, #tpu.memory_space<vmem>>, vector<8x64xbf16>
    %cst = arith.constant dense<0.000000e+00> : vector<128x64xf32>
    %6 = tpu.matmul %4, %5, %cst {dimension_numbers = #tpu.dot_dimension_numbers<[1], [0], [0], [1], [0, 0, 1, 1], [], []>} : vector<128x8xbf16>, vector<8x64xbf16>, vector<128x64xf32> -> vector<128x64xf32>
    %7 = arith.addf %3, %6 : vector<128x64xf32>
    %c0_6 = arith.constant 0 : index
    %c0_7 = arith.constant 0 : index
    %8 = vector.load %arg7[%c0_6, %c0_7] : memref<128x64xf32, #tpu.memory_space<vmem>>, vector<128x64xf32>
    tpu.vector_store %arg7[%c0_6, %c0_7], %7 {strides = array<i32>} : memref<128x64xf32, #tpu.memory_space<vmem>>, vector<128x64xf32>,
    %c0_i32_8 = arith.constant 0 : i32
    %9 = arith.cmpi eq, %arg2, %c0_i32_8 : i32
    %10 = arith.extui %9 : i1 to i32
    %c0_i32_9 = arith.constant 0 : i32
    %11 = arith.cmpi ne, %10, %c0_i32_9 : i32
    scf.if %11 {
      %c0_10 = arith.constant 0 : index
      %c0_11 = arith.constant 0 : index
      %12 = vector.load %arg7[%c0_10, %c0_11] : memref<128x64xf32, #tpu.memory_space<vmem>>, vector<128x64xf32>
      %c0_12 = arith.constant 0 : index
      %c0_13 = arith.constant 0 : index
      %13 = vector.load %arg5[%c0_12, %c0_13] : memref<1x64xf32, #tpu.memory_space<vmem>>, vector<1x64xf32>
      %14 = vector.broadcast %13 : vector<1x64xf32> to vector<128x64xf32>
      %15 = arith.addf %12, %14 : vector<128x64xf32>
      %16 = arith.truncf %15 : vector<128x64xf32> to vector<128x64xbf16>
      %c0_14 = arith.constant 0 : index
      %c0_15 = arith.constant 0 : index
      %17 = vector.load %arg6[%c0_14, %c0_15] : memref<128x64xbf16, #tpu.memory_space<vmem>>, vector<128x64xbf16>
      tpu.vector_store %arg6[%c0_14, %c0_15], %16 {strides = array<i32>} : memref<128x64xbf16, #tpu.memory_space<vmem>>, vector<128x64xbf16>,
    } else {
    }
    return
  }
  func.func @transform_0(%arg0: i32, %arg1: i32, %arg2: i32) -> (i32, i32) {
    %c0_i32 = arith.constant 0 : i32
    return %arg0, %arg2 : i32, i32
  }
  func.func @transform_1(%arg0: i32, %arg1: i32, %arg2: i32) -> (i32, i32) {
    %c0_i32 = arith.constant 0 : i32
    return %arg2, %arg1 : i32, i32
  }
  func.func @transform_2(%arg0: i32, %arg1: i32, %arg2: i32) -> (i32, i32) {
    %c0_i32 = arith.constant 0 : i32
    %c0_i32_0 = arith.constant 0 : i32
    return %c0_i32, %arg1 : i32, i32
  }
  func.func @transform_3(%arg0: i32, %arg1: i32, %arg2: i32) -> (i32, i32) {
    %c0_i32 = arith.constant 0 : i32
    return %arg0, %arg1 : i32, i32
  }
}

module attributes {stable_mosaic.version = 11 : i64} {
  func.func @_conv3x3_kernel(%arg0: i32, %arg1: i32, %arg2: memref<1x1x10x10x8xbf16, #tpu.memory_space<vmem>>, %arg3: memref<1x1x10x10x8xbf16, #tpu.memory_space<vmem>>, %arg4: memref<1x1x10x10x8xbf16, #tpu.memory_space<vmem>>, %arg5: memref<1x1x10x10x4xbf16, #tpu.memory_space<vmem>>, %arg6: memref<1x1x10x10x4xbf16, #tpu.memory_space<vmem>>, %arg7: memref<1x1x10x10x4xbf16, #tpu.memory_space<vmem>>, %arg8: memref<3x3x3x8x8xbf16, #tpu.memory_space<vmem>>, %arg9: memref<3x3x3x4x8xbf16, #tpu.memory_space<vmem>>, %arg10: memref<1x8xf32, #tpu.memory_space<vmem>>, %arg11: memref<1x1x8x8x8xbf16, #tpu.memory_space<vmem>>) attributes {dimension_semantics = [#tpu.dimension_semantics<parallel>, #tpu.dimension_semantics<parallel>], iteration_bounds = array<i64: 2, 8>, scalar_prefetch = 0 : i64, scratch_operands = 0 : i64, tpu.core_type = #tpu.core_type<tc>, window_params = [{transform_indices = @transform_0, window_bounds = array<i64: 1, 1, 10, 10, 8>}, {transform_indices = @transform_1, window_bounds = array<i64: 1, 1, 10, 10, 8>}, {transform_indices = @transform_2, window_bounds = array<i64: 1, 1, 10, 10, 8>}, {transform_indices = @transform_3, window_bounds = array<i64: 1, 1, 10, 10, 4>}, {transform_indices = @transform_4, window_bounds = array<i64: 1, 1, 10, 10, 4>}, {transform_indices = @transform_5, window_bounds = array<i64: 1, 1, 10, 10, 4>}, {pipeline_mode = #tpu.pipeline_mode<synchronous>, transform_indices = @transform_6, window_bounds = array<i64: 3, 3, 3, 8, 8>}, {pipeline_mode = #tpu.pipeline_mode<synchronous>, transform_indices = @transform_7, window_bounds = array<i64: 3, 3, 3, 4, 8>}, {pipeline_mode = #tpu.pipeline_mode<synchronous>, transform_indices = @transform_8, window_bounds = array<i64: 1, 8>}, {transform_indices = @transform_9, window_bounds = array<i64: 1, 1, 8, 8, 8>}]} {
    %cst = arith.constant 0.000000e+00 : f32
    %0 = vector.broadcast %cst : f32 to vector<64x8xf32>
    %c0 = arith.constant 0 : index
    %c0_0 = arith.constant 0 : index
    %c0_1 = arith.constant 0 : index
    %c0_2 = arith.constant 0 : index
    %c0_3 = arith.constant 0 : index
    %1 = vector.load %arg2[%c0, %c0_0, %c0_1, %c0_2, %c0_3] : memref<1x1x10x10x8xbf16, #tpu.memory_space<vmem>>, vector<1x1x10x10x8xbf16>
    %2 = vector.shape_cast %1 : vector<1x1x10x10x8xbf16> to vector<10x10x8xbf16>
    %3 = vector.extract_strided_slice %2 {offsets = [0, 0, 0], sizes = [8, 8, 8], strides = [1, 1, 1]} : vector<10x10x8xbf16> to vector<8x8x8xbf16>
    %4 = vector.shape_cast %3 : vector<8x8x8xbf16> to vector<64x8xbf16>
    %c0_4 = arith.constant 0 : index
    %c0_5 = arith.constant 0 : index
    %c0_6 = arith.constant 0 : index
    %c0_7 = arith.constant 0 : index
    %c0_8 = arith.constant 0 : index
    %5 = vector.load %arg8[%c0_4, %c0_5, %c0_6, %c0_7, %c0_8] : memref<3x3x3x8x8xbf16, #tpu.memory_space<vmem>>, vector<1x1x1x8x8xbf16>
    %6 = vector.shape_cast %5 : vector<1x1x1x8x8xbf16> to vector<8x8xbf16>
    %cst_9 = arith.constant dense<0.000000e+00> : vector<64x8xf32>
    %7 = tpu.matmul %4, %6, %cst_9 {dimension_numbers = #tpu.dot_dimension_numbers<[1], [0], [0], [1], [0, 0, 1, 1], [], []>} : vector<64x8xbf16>, vector<8x8xbf16>, vector<64x8xf32> -> vector<64x8xf32>
    %8 = arith.addf %0, %7 : vector<64x8xf32>
    %9 = vector.extract_strided_slice %2 {offsets = [0, 1, 0], sizes = [8, 8, 8], strides = [1, 1, 1]} : vector<10x10x8xbf16> to vector<8x8x8xbf16>
    %10 = vector.shape_cast %9 : vector<8x8x8xbf16> to vector<64x8xbf16>
    %c0_10 = arith.constant 0 : index
    %c0_11 = arith.constant 0 : index
    %c1 = arith.constant 1 : index
    %c0_12 = arith.constant 0 : index
    %c0_13 = arith.constant 0 : index
    %11 = vector.load %arg8[%c0_10, %c0_11, %c1, %c0_12, %c0_13] : memref<3x3x3x8x8xbf16, #tpu.memory_space<vmem>>, vector<1x1x1x8x8xbf16>
    %12 = vector.shape_cast %11 : vector<1x1x1x8x8xbf16> to vector<8x8xbf16>
    %cst_14 = arith.constant dense<0.000000e+00> : vector<64x8xf32>
    %13 = tpu.matmul %10, %12, %cst_14 {dimension_numbers = #tpu.dot_dimension_numbers<[1], [0], [0], [1], [0, 0, 1, 1], [], []>} : vector<64x8xbf16>, vector<8x8xbf16>, vector<64x8xf32> -> vector<64x8xf32>
    %14 = arith.addf %8, %13 : vector<64x8xf32>
    %15 = vector.extract_strided_slice %2 {offsets = [0, 2, 0], sizes = [8, 8, 8], strides = [1, 1, 1]} : vector<10x10x8xbf16> to vector<8x8x8xbf16>
    %16 = vector.shape_cast %15 : vector<8x8x8xbf16> to vector<64x8xbf16>
    %c0_15 = arith.constant 0 : index
    %c0_16 = arith.constant 0 : index
    %c2 = arith.constant 2 : index
    %c0_17 = arith.constant 0 : index
    %c0_18 = arith.constant 0 : index
    %17 = vector.load %arg8[%c0_15, %c0_16, %c2, %c0_17, %c0_18] : memref<3x3x3x8x8xbf16, #tpu.memory_space<vmem>>, vector<1x1x1x8x8xbf16>
    %18 = vector.shape_cast %17 : vector<1x1x1x8x8xbf16> to vector<8x8xbf16>
    %cst_19 = arith.constant dense<0.000000e+00> : vector<64x8xf32>
    %19 = tpu.matmul %16, %18, %cst_19 {dimension_numbers = #tpu.dot_dimension_numbers<[1], [0], [0], [1], [0, 0, 1, 1], [], []>} : vector<64x8xbf16>, vector<8x8xbf16>, vector<64x8xf32> -> vector<64x8xf32>
    %20 = arith.addf %14, %19 : vector<64x8xf32>
    %21 = vector.extract_strided_slice %2 {offsets = [1, 0, 0], sizes = [8, 8, 8], strides = [1, 1, 1]} : vector<10x10x8xbf16> to vector<8x8x8xbf16>
    %22 = vector.shape_cast %21 : vector<8x8x8xbf16> to vector<64x8xbf16>
    %c0_20 = arith.constant 0 : index
    %c1_21 = arith.constant 1 : index
    %c0_22 = arith.constant 0 : index
    %c0_23 = arith.constant 0 : index
    %c0_24 = arith.constant 0 : index
    %23 = vector.load %arg8[%c0_20, %c1_21, %c0_22, %c0_23, %c0_24] : memref<3x3x3x8x8xbf16, #tpu.memory_space<vmem>>, vector<1x1x1x8x8xbf16>
    %24 = vector.shape_cast %23 : vector<1x1x1x8x8xbf16> to vector<8x8xbf16>
    %cst_25 = arith.constant dense<0.000000e+00> : vector<64x8xf32>
    %25 = tpu.matmul %22, %24, %cst_25 {dimension_numbers = #tpu.dot_dimension_numbers<[1], [0], [0], [1], [0, 0, 1, 1], [], []>} : vector<64x8xbf16>, vector<8x8xbf16>, vector<64x8xf32> -> vector<64x8xf32>
    %26 = arith.addf %20, %25 : vector<64x8xf32>
    %27 = vector.extract_strided_slice %2 {offsets = [1, 1, 0], sizes = [8, 8, 8], strides = [1, 1, 1]} : vector<10x10x8xbf16> to vector<8x8x8xbf16>
    %28 = vector.shape_cast %27 : vector<8x8x8xbf16> to vector<64x8xbf16>
    %c0_26 = arith.constant 0 : index
    %c1_27 = arith.constant 1 : index
    %c1_28 = arith.constant 1 : index
    %c0_29 = arith.constant 0 : index
    %c0_30 = arith.constant 0 : index
    %29 = vector.load %arg8[%c0_26, %c1_27, %c1_28, %c0_29, %c0_30] : memref<3x3x3x8x8xbf16, #tpu.memory_space<vmem>>, vector<1x1x1x8x8xbf16>
    %30 = vector.shape_cast %29 : vector<1x1x1x8x8xbf16> to vector<8x8xbf16>
    %cst_31 = arith.constant dense<0.000000e+00> : vector<64x8xf32>
    %31 = tpu.matmul %28, %30, %cst_31 {dimension_numbers = #tpu.dot_dimension_numbers<[1], [0], [0], [1], [0, 0, 1, 1], [], []>} : vector<64x8xbf16>, vector<8x8xbf16>, vector<64x8xf32> -> vector<64x8xf32>
    %32 = arith.addf %26, %31 : vector<64x8xf32>
    %33 = vector.extract_strided_slice %2 {offsets = [1, 2, 0], sizes = [8, 8, 8], strides = [1, 1, 1]} : vector<10x10x8xbf16> to vector<8x8x8xbf16>
    %34 = vector.shape_cast %33 : vector<8x8x8xbf16> to vector<64x8xbf16>
    %c0_32 = arith.constant 0 : index
    %c1_33 = arith.constant 1 : index
    %c2_34 = arith.constant 2 : index
    %c0_35 = arith.constant 0 : index
    %c0_36 = arith.constant 0 : index
    %35 = vector.load %arg8[%c0_32, %c1_33, %c2_34, %c0_35, %c0_36] : memref<3x3x3x8x8xbf16, #tpu.memory_space<vmem>>, vector<1x1x1x8x8xbf16>
    %36 = vector.shape_cast %35 : vector<1x1x1x8x8xbf16> to vector<8x8xbf16>
    %cst_37 = arith.constant dense<0.000000e+00> : vector<64x8xf32>
    %37 = tpu.matmul %34, %36, %cst_37 {dimension_numbers = #tpu.dot_dimension_numbers<[1], [0], [0], [1], [0, 0, 1, 1], [], []>} : vector<64x8xbf16>, vector<8x8xbf16>, vector<64x8xf32> -> vector<64x8xf32>
    %38 = arith.addf %32, %37 : vector<64x8xf32>
    %39 = vector.extract_strided_slice %2 {offsets = [2, 0, 0], sizes = [8, 8, 8], strides = [1, 1, 1]} : vector<10x10x8xbf16> to vector<8x8x8xbf16>
    %40 = vector.shape_cast %39 : vector<8x8x8xbf16> to vector<64x8xbf16>
    %c0_38 = arith.constant 0 : index
    %c2_39 = arith.constant 2 : index
    %c0_40 = arith.constant 0 : index
    %c0_41 = arith.constant 0 : index
    %c0_42 = arith.constant 0 : index
    %41 = vector.load %arg8[%c0_38, %c2_39, %c0_40, %c0_41, %c0_42] : memref<3x3x3x8x8xbf16, #tpu.memory_space<vmem>>, vector<1x1x1x8x8xbf16>
    %42 = vector.shape_cast %41 : vector<1x1x1x8x8xbf16> to vector<8x8xbf16>
    %cst_43 = arith.constant dense<0.000000e+00> : vector<64x8xf32>
    %43 = tpu.matmul %40, %42, %cst_43 {dimension_numbers = #tpu.dot_dimension_numbers<[1], [0], [0], [1], [0, 0, 1, 1], [], []>} : vector<64x8xbf16>, vector<8x8xbf16>, vector<64x8xf32> -> vector<64x8xf32>
    %44 = arith.addf %38, %43 : vector<64x8xf32>
    %45 = vector.extract_strided_slice %2 {offsets = [2, 1, 0], sizes = [8, 8, 8], strides = [1, 1, 1]} : vector<10x10x8xbf16> to vector<8x8x8xbf16>
    %46 = vector.shape_cast %45 : vector<8x8x8xbf16> to vector<64x8xbf16>
    %c0_44 = arith.constant 0 : index
    %c2_45 = arith.constant 2 : index
    %c1_46 = arith.constant 1 : index
    %c0_47 = arith.constant 0 : index
    %c0_48 = arith.constant 0 : index
    %47 = vector.load %arg8[%c0_44, %c2_45, %c1_46, %c0_47, %c0_48] : memref<3x3x3x8x8xbf16, #tpu.memory_space<vmem>>, vector<1x1x1x8x8xbf16>
    %48 = vector.shape_cast %47 : vector<1x1x1x8x8xbf16> to vector<8x8xbf16>
    %cst_49 = arith.constant dense<0.000000e+00> : vector<64x8xf32>
    %49 = tpu.matmul %46, %48, %cst_49 {dimension_numbers = #tpu.dot_dimension_numbers<[1], [0], [0], [1], [0, 0, 1, 1], [], []>} : vector<64x8xbf16>, vector<8x8xbf16>, vector<64x8xf32> -> vector<64x8xf32>
    %50 = arith.addf %44, %49 : vector<64x8xf32>
    %51 = vector.extract_strided_slice %2 {offsets = [2, 2, 0], sizes = [8, 8, 8], strides = [1, 1, 1]} : vector<10x10x8xbf16> to vector<8x8x8xbf16>
    %52 = vector.shape_cast %51 : vector<8x8x8xbf16> to vector<64x8xbf16>
    %c0_50 = arith.constant 0 : index
    %c2_51 = arith.constant 2 : index
    %c2_52 = arith.constant 2 : index
    %c0_53 = arith.constant 0 : index
    %c0_54 = arith.constant 0 : index
    %53 = vector.load %arg8[%c0_50, %c2_51, %c2_52, %c0_53, %c0_54] : memref<3x3x3x8x8xbf16, #tpu.memory_space<vmem>>, vector<1x1x1x8x8xbf16>
    %54 = vector.shape_cast %53 : vector<1x1x1x8x8xbf16> to vector<8x8xbf16>
    %cst_55 = arith.constant dense<0.000000e+00> : vector<64x8xf32>
    %55 = tpu.matmul %52, %54, %cst_55 {dimension_numbers = #tpu.dot_dimension_numbers<[1], [0], [0], [1], [0, 0, 1, 1], [], []>} : vector<64x8xbf16>, vector<8x8xbf16>, vector<64x8xf32> -> vector<64x8xf32>
    %56 = arith.addf %50, %55 : vector<64x8xf32>
    %c0_56 = arith.constant 0 : index
    %c0_57 = arith.constant 0 : index
    %c0_58 = arith.constant 0 : index
    %c0_59 = arith.constant 0 : index
    %c0_60 = arith.constant 0 : index
    %57 = vector.load %arg3[%c0_56, %c0_57, %c0_58, %c0_59, %c0_60] : memref<1x1x10x10x8xbf16, #tpu.memory_space<vmem>>, vector<1x1x10x10x8xbf16>
    %58 = vector.shape_cast %57 : vector<1x1x10x10x8xbf16> to vector<10x10x8xbf16>
    %59 = vector.extract_strided_slice %58 {offsets = [0, 0, 0], sizes = [8, 8, 8], strides = [1, 1, 1]} : vector<10x10x8xbf16> to vector<8x8x8xbf16>
    %60 = vector.shape_cast %59 : vector<8x8x8xbf16> to vector<64x8xbf16>
    %c1_61 = arith.constant 1 : index
    %c0_62 = arith.constant 0 : index
    %c0_63 = arith.constant 0 : index
    %c0_64 = arith.constant 0 : index
    %c0_65 = arith.constant 0 : index
    %61 = vector.load %arg8[%c1_61, %c0_62, %c0_63, %c0_64, %c0_65] : memref<3x3x3x8x8xbf16, #tpu.memory_space<vmem>>, vector<1x1x1x8x8xbf16>
    %62 = vector.shape_cast %61 : vector<1x1x1x8x8xbf16> to vector<8x8xbf16>
    %cst_66 = arith.constant dense<0.000000e+00> : vector<64x8xf32>
    %63 = tpu.matmul %60, %62, %cst_66 {dimension_numbers = #tpu.dot_dimension_numbers<[1], [0], [0], [1], [0, 0, 1, 1], [], []>} : vector<64x8xbf16>, vector<8x8xbf16>, vector<64x8xf32> -> vector<64x8xf32>
    %64 = arith.addf %56, %63 : vector<64x8xf32>
    %65 = vector.extract_strided_slice %58 {offsets = [0, 1, 0], sizes = [8, 8, 8], strides = [1, 1, 1]} : vector<10x10x8xbf16> to vector<8x8x8xbf16>
    %66 = vector.shape_cast %65 : vector<8x8x8xbf16> to vector<64x8xbf16>
    %c1_67 = arith.constant 1 : index
    %c0_68 = arith.constant 0 : index
    %c1_69 = arith.constant 1 : index
    %c0_70 = arith.constant 0 : index
    %c0_71 = arith.constant 0 : index
    %67 = vector.load %arg8[%c1_67, %c0_68, %c1_69, %c0_70, %c0_71] : memref<3x3x3x8x8xbf16, #tpu.memory_space<vmem>>, vector<1x1x1x8x8xbf16>
    %68 = vector.shape_cast %67 : vector<1x1x1x8x8xbf16> to vector<8x8xbf16>
    %cst_72 = arith.constant dense<0.000000e+00> : vector<64x8xf32>
    %69 = tpu.matmul %66, %68, %cst_72 {dimension_numbers = #tpu.dot_dimension_numbers<[1], [0], [0], [1], [0, 0, 1, 1], [], []>} : vector<64x8xbf16>, vector<8x8xbf16>, vector<64x8xf32> -> vector<64x8xf32>
    %70 = arith.addf %64, %69 : vector<64x8xf32>
    %71 = vector.extract_strided_slice %58 {offsets = [0, 2, 0], sizes = [8, 8, 8], strides = [1, 1, 1]} : vector<10x10x8xbf16> to vector<8x8x8xbf16>
    %72 = vector.shape_cast %71 : vector<8x8x8xbf16> to vector<64x8xbf16>
    %c1_73 = arith.constant 1 : index
    %c0_74 = arith.constant 0 : index
    %c2_75 = arith.constant 2 : index
    %c0_76 = arith.constant 0 : index
    %c0_77 = arith.constant 0 : index
    %73 = vector.load %arg8[%c1_73, %c0_74, %c2_75, %c0_76, %c0_77] : memref<3x3x3x8x8xbf16, #tpu.memory_space<vmem>>, vector<1x1x1x8x8xbf16>
    %74 = vector.shape_cast %73 : vector<1x1x1x8x8xbf16> to vector<8x8xbf16>
    %cst_78 = arith.constant dense<0.000000e+00> : vector<64x8xf32>
    %75 = tpu.matmul %72, %74, %cst_78 {dimension_numbers = #tpu.dot_dimension_numbers<[1], [0], [0], [1], [0, 0, 1, 1], [], []>} : vector<64x8xbf16>, vector<8x8xbf16>, vector<64x8xf32> -> vector<64x8xf32>
    %76 = arith.addf %70, %75 : vector<64x8xf32>
    %77 = vector.extract_strided_slice %58 {offsets = [1, 0, 0], sizes = [8, 8, 8], strides = [1, 1, 1]} : vector<10x10x8xbf16> to vector<8x8x8xbf16>
    %78 = vector.shape_cast %77 : vector<8x8x8xbf16> to vector<64x8xbf16>
    %c1_79 = arith.constant 1 : index
    %c1_80 = arith.constant 1 : index
    %c0_81 = arith.constant 0 : index
    %c0_82 = arith.constant 0 : index
    %c0_83 = arith.constant 0 : index
    %79 = vector.load %arg8[%c1_79, %c1_80, %c0_81, %c0_82, %c0_83] : memref<3x3x3x8x8xbf16, #tpu.memory_space<vmem>>, vector<1x1x1x8x8xbf16>
    %80 = vector.shape_cast %79 : vector<1x1x1x8x8xbf16> to vector<8x8xbf16>
    %cst_84 = arith.constant dense<0.000000e+00> : vector<64x8xf32>
    %81 = tpu.matmul %78, %80, %cst_84 {dimension_numbers = #tpu.dot_dimension_numbers<[1], [0], [0], [1], [0, 0, 1, 1], [], []>} : vector<64x8xbf16>, vector<8x8xbf16>, vector<64x8xf32> -> vector<64x8xf32>
    %82 = arith.addf %76, %81 : vector<64x8xf32>
    %83 = vector.extract_strided_slice %58 {offsets = [1, 1, 0], sizes = [8, 8, 8], strides = [1, 1, 1]} : vector<10x10x8xbf16> to vector<8x8x8xbf16>
    %84 = vector.shape_cast %83 : vector<8x8x8xbf16> to vector<64x8xbf16>
    %c1_85 = arith.constant 1 : index
    %c1_86 = arith.constant 1 : index
    %c1_87 = arith.constant 1 : index
    %c0_88 = arith.constant 0 : index
    %c0_89 = arith.constant 0 : index
    %85 = vector.load %arg8[%c1_85, %c1_86, %c1_87, %c0_88, %c0_89] : memref<3x3x3x8x8xbf16, #tpu.memory_space<vmem>>, vector<1x1x1x8x8xbf16>
    %86 = vector.shape_cast %85 : vector<1x1x1x8x8xbf16> to vector<8x8xbf16>
    %cst_90 = arith.constant dense<0.000000e+00> : vector<64x8xf32>
    %87 = tpu.matmul %84, %86, %cst_90 {dimension_numbers = #tpu.dot_dimension_numbers<[1], [0], [0], [1], [0, 0, 1, 1], [], []>} : vector<64x8xbf16>, vector<8x8xbf16>, vector<64x8xf32> -> vector<64x8xf32>
    %88 = arith.addf %82, %87 : vector<64x8xf32>
    %89 = vector.extract_strided_slice %58 {offsets = [1, 2, 0], sizes = [8, 8, 8], strides = [1, 1, 1]} : vector<10x10x8xbf16> to vector<8x8x8xbf16>
    %90 = vector.shape_cast %89 : vector<8x8x8xbf16> to vector<64x8xbf16>
    %c1_91 = arith.constant 1 : index
    %c1_92 = arith.constant 1 : index
    %c2_93 = arith.constant 2 : index
    %c0_94 = arith.constant 0 : index
    %c0_95 = arith.constant 0 : index
    %91 = vector.load %arg8[%c1_91, %c1_92, %c2_93, %c0_94, %c0_95] : memref<3x3x3x8x8xbf16, #tpu.memory_space<vmem>>, vector<1x1x1x8x8xbf16>
    %92 = vector.shape_cast %91 : vector<1x1x1x8x8xbf16> to vector<8x8xbf16>
    %cst_96 = arith.constant dense<0.000000e+00> : vector<64x8xf32>
    %93 = tpu.matmul %90, %92, %cst_96 {dimension_numbers = #tpu.dot_dimension_numbers<[1], [0], [0], [1], [0, 0, 1, 1], [], []>} : vector<64x8xbf16>, vector<8x8xbf16>, vector<64x8xf32> -> vector<64x8xf32>
    %94 = arith.addf %88, %93 : vector<64x8xf32>
    %95 = vector.extract_strided_slice %58 {offsets = [2, 0, 0], sizes = [8, 8, 8], strides = [1, 1, 1]} : vector<10x10x8xbf16> to vector<8x8x8xbf16>
    %96 = vector.shape_cast %95 : vector<8x8x8xbf16> to vector<64x8xbf16>
    %c1_97 = arith.constant 1 : index
    %c2_98 = arith.constant 2 : index
    %c0_99 = arith.constant 0 : index
    %c0_100 = arith.constant 0 : index
    %c0_101 = arith.constant 0 : index
    %97 = vector.load %arg8[%c1_97, %c2_98, %c0_99, %c0_100, %c0_101] : memref<3x3x3x8x8xbf16, #tpu.memory_space<vmem>>, vector<1x1x1x8x8xbf16>
    %98 = vector.shape_cast %97 : vector<1x1x1x8x8xbf16> to vector<8x8xbf16>
    %cst_102 = arith.constant dense<0.000000e+00> : vector<64x8xf32>
    %99 = tpu.matmul %96, %98, %cst_102 {dimension_numbers = #tpu.dot_dimension_numbers<[1], [0], [0], [1], [0, 0, 1, 1], [], []>} : vector<64x8xbf16>, vector<8x8xbf16>, vector<64x8xf32> -> vector<64x8xf32>
    %100 = arith.addf %94, %99 : vector<64x8xf32>
    %101 = vector.extract_strided_slice %58 {offsets = [2, 1, 0], sizes = [8, 8, 8], strides = [1, 1, 1]} : vector<10x10x8xbf16> to vector<8x8x8xbf16>
    %102 = vector.shape_cast %101 : vector<8x8x8xbf16> to vector<64x8xbf16>
    %c1_103 = arith.constant 1 : index
    %c2_104 = arith.constant 2 : index
    %c1_105 = arith.constant 1 : index
    %c0_106 = arith.constant 0 : index
    %c0_107 = arith.constant 0 : index
    %103 = vector.load %arg8[%c1_103, %c2_104, %c1_105, %c0_106, %c0_107] : memref<3x3x3x8x8xbf16, #tpu.memory_space<vmem>>, vector<1x1x1x8x8xbf16>
    %104 = vector.shape_cast %103 : vector<1x1x1x8x8xbf16> to vector<8x8xbf16>
    %cst_108 = arith.constant dense<0.000000e+00> : vector<64x8xf32>
    %105 = tpu.matmul %102, %104, %cst_108 {dimension_numbers = #tpu.dot_dimension_numbers<[1], [0], [0], [1], [0, 0, 1, 1], [], []>} : vector<64x8xbf16>, vector<8x8xbf16>, vector<64x8xf32> -> vector<64x8xf32>
    %106 = arith.addf %100, %105 : vector<64x8xf32>
    %107 = vector.extract_strided_slice %58 {offsets = [2, 2, 0], sizes = [8, 8, 8], strides = [1, 1, 1]} : vector<10x10x8xbf16> to vector<8x8x8xbf16>
    %108 = vector.shape_cast %107 : vector<8x8x8xbf16> to vector<64x8xbf16>
    %c1_109 = arith.constant 1 : index
    %c2_110 = arith.constant 2 : index
    %c2_111 = arith.constant 2 : index
    %c0_112 = arith.constant 0 : index
    %c0_113 = arith.constant 0 : index
    %109 = vector.load %arg8[%c1_109, %c2_110, %c2_111, %c0_112, %c0_113] : memref<3x3x3x8x8xbf16, #tpu.memory_space<vmem>>, vector<1x1x1x8x8xbf16>
    %110 = vector.shape_cast %109 : vector<1x1x1x8x8xbf16> to vector<8x8xbf16>
    %cst_114 = arith.constant dense<0.000000e+00> : vector<64x8xf32>
    %111 = tpu.matmul %108, %110, %cst_114 {dimension_numbers = #tpu.dot_dimension_numbers<[1], [0], [0], [1], [0, 0, 1, 1], [], []>} : vector<64x8xbf16>, vector<8x8xbf16>, vector<64x8xf32> -> vector<64x8xf32>
    %112 = arith.addf %106, %111 : vector<64x8xf32>
    %c0_115 = arith.constant 0 : index
    %c0_116 = arith.constant 0 : index
    %c0_117 = arith.constant 0 : index
    %c0_118 = arith.constant 0 : index
    %c0_119 = arith.constant 0 : index
    %113 = vector.load %arg4[%c0_115, %c0_116, %c0_117, %c0_118, %c0_119] : memref<1x1x10x10x8xbf16, #tpu.memory_space<vmem>>, vector<1x1x10x10x8xbf16>
    %114 = vector.shape_cast %113 : vector<1x1x10x10x8xbf16> to vector<10x10x8xbf16>
    %115 = vector.extract_strided_slice %114 {offsets = [0, 0, 0], sizes = [8, 8, 8], strides = [1, 1, 1]} : vector<10x10x8xbf16> to vector<8x8x8xbf16>
    %116 = vector.shape_cast %115 : vector<8x8x8xbf16> to vector<64x8xbf16>
    %c2_120 = arith.constant 2 : index
    %c0_121 = arith.constant 0 : index
    %c0_122 = arith.constant 0 : index
    %c0_123 = arith.constant 0 : index
    %c0_124 = arith.constant 0 : index
    %117 = vector.load %arg8[%c2_120, %c0_121, %c0_122, %c0_123, %c0_124] : memref<3x3x3x8x8xbf16, #tpu.memory_space<vmem>>, vector<1x1x1x8x8xbf16>
    %118 = vector.shape_cast %117 : vector<1x1x1x8x8xbf16> to vector<8x8xbf16>
    %cst_125 = arith.constant dense<0.000000e+00> : vector<64x8xf32>
    %119 = tpu.matmul %116, %118, %cst_125 {dimension_numbers = #tpu.dot_dimension_numbers<[1], [0], [0], [1], [0, 0, 1, 1], [], []>} : vector<64x8xbf16>, vector<8x8xbf16>, vector<64x8xf32> -> vector<64x8xf32>
    %120 = arith.addf %112, %119 : vector<64x8xf32>
    %121 = vector.extract_strided_slice %114 {offsets = [0, 1, 0], sizes = [8, 8, 8], strides = [1, 1, 1]} : vector<10x10x8xbf16> to vector<8x8x8xbf16>
    %122 = vector.shape_cast %121 : vector<8x8x8xbf16> to vector<64x8xbf16>
    %c2_126 = arith.constant 2 : index
    %c0_127 = arith.constant 0 : index
    %c1_128 = arith.constant 1 : index
    %c0_129 = arith.constant 0 : index
    %c0_130 = arith.constant 0 : index
    %123 = vector.load %arg8[%c2_126, %c0_127, %c1_128, %c0_129, %c0_130] : memref<3x3x3x8x8xbf16, #tpu.memory_space<vmem>>, vector<1x1x1x8x8xbf16>
    %124 = vector.shape_cast %123 : vector<1x1x1x8x8xbf16> to vector<8x8xbf16>
    %cst_131 = arith.constant dense<0.000000e+00> : vector<64x8xf32>
    %125 = tpu.matmul %122, %124, %cst_131 {dimension_numbers = #tpu.dot_dimension_numbers<[1], [0], [0], [1], [0, 0, 1, 1], [], []>} : vector<64x8xbf16>, vector<8x8xbf16>, vector<64x8xf32> -> vector<64x8xf32>
    %126 = arith.addf %120, %125 : vector<64x8xf32>
    %127 = vector.extract_strided_slice %114 {offsets = [0, 2, 0], sizes = [8, 8, 8], strides = [1, 1, 1]} : vector<10x10x8xbf16> to vector<8x8x8xbf16>
    %128 = vector.shape_cast %127 : vector<8x8x8xbf16> to vector<64x8xbf16>
    %c2_132 = arith.constant 2 : index
    %c0_133 = arith.constant 0 : index
    %c2_134 = arith.constant 2 : index
    %c0_135 = arith.constant 0 : index
    %c0_136 = arith.constant 0 : index
    %129 = vector.load %arg8[%c2_132, %c0_133, %c2_134, %c0_135, %c0_136] : memref<3x3x3x8x8xbf16, #tpu.memory_space<vmem>>, vector<1x1x1x8x8xbf16>
    %130 = vector.shape_cast %129 : vector<1x1x1x8x8xbf16> to vector<8x8xbf16>
    %cst_137 = arith.constant dense<0.000000e+00> : vector<64x8xf32>
    %131 = tpu.matmul %128, %130, %cst_137 {dimension_numbers = #tpu.dot_dimension_numbers<[1], [0], [0], [1], [0, 0, 1, 1], [], []>} : vector<64x8xbf16>, vector<8x8xbf16>, vector<64x8xf32> -> vector<64x8xf32>
    %132 = arith.addf %126, %131 : vector<64x8xf32>
    %133 = vector.extract_strided_slice %114 {offsets = [1, 0, 0], sizes = [8, 8, 8], strides = [1, 1, 1]} : vector<10x10x8xbf16> to vector<8x8x8xbf16>
    %134 = vector.shape_cast %133 : vector<8x8x8xbf16> to vector<64x8xbf16>
    %c2_138 = arith.constant 2 : index
    %c1_139 = arith.constant 1 : index
    %c0_140 = arith.constant 0 : index
    %c0_141 = arith.constant 0 : index
    %c0_142 = arith.constant 0 : index
    %135 = vector.load %arg8[%c2_138, %c1_139, %c0_140, %c0_141, %c0_142] : memref<3x3x3x8x8xbf16, #tpu.memory_space<vmem>>, vector<1x1x1x8x8xbf16>
    %136 = vector.shape_cast %135 : vector<1x1x1x8x8xbf16> to vector<8x8xbf16>
    %cst_143 = arith.constant dense<0.000000e+00> : vector<64x8xf32>
    %137 = tpu.matmul %134, %136, %cst_143 {dimension_numbers = #tpu.dot_dimension_numbers<[1], [0], [0], [1], [0, 0, 1, 1], [], []>} : vector<64x8xbf16>, vector<8x8xbf16>, vector<64x8xf32> -> vector<64x8xf32>
    %138 = arith.addf %132, %137 : vector<64x8xf32>
    %139 = vector.extract_strided_slice %114 {offsets = [1, 1, 0], sizes = [8, 8, 8], strides = [1, 1, 1]} : vector<10x10x8xbf16> to vector<8x8x8xbf16>
    %140 = vector.shape_cast %139 : vector<8x8x8xbf16> to vector<64x8xbf16>
    %c2_144 = arith.constant 2 : index
    %c1_145 = arith.constant 1 : index
    %c1_146 = arith.constant 1 : index
    %c0_147 = arith.constant 0 : index
    %c0_148 = arith.constant 0 : index
    %141 = vector.load %arg8[%c2_144, %c1_145, %c1_146, %c0_147, %c0_148] : memref<3x3x3x8x8xbf16, #tpu.memory_space<vmem>>, vector<1x1x1x8x8xbf16>
    %142 = vector.shape_cast %141 : vector<1x1x1x8x8xbf16> to vector<8x8xbf16>
    %cst_149 = arith.constant dense<0.000000e+00> : vector<64x8xf32>
    %143 = tpu.matmul %140, %142, %cst_149 {dimension_numbers = #tpu.dot_dimension_numbers<[1], [0], [0], [1], [0, 0, 1, 1], [], []>} : vector<64x8xbf16>, vector<8x8xbf16>, vector<64x8xf32> -> vector<64x8xf32>
    %144 = arith.addf %138, %143 : vector<64x8xf32>
    %145 = vector.extract_strided_slice %114 {offsets = [1, 2, 0], sizes = [8, 8, 8], strides = [1, 1, 1]} : vector<10x10x8xbf16> to vector<8x8x8xbf16>
    %146 = vector.shape_cast %145 : vector<8x8x8xbf16> to vector<64x8xbf16>
    %c2_150 = arith.constant 2 : index
    %c1_151 = arith.constant 1 : index
    %c2_152 = arith.constant 2 : index
    %c0_153 = arith.constant 0 : index
    %c0_154 = arith.constant 0 : index
    %147 = vector.load %arg8[%c2_150, %c1_151, %c2_152, %c0_153, %c0_154] : memref<3x3x3x8x8xbf16, #tpu.memory_space<vmem>>, vector<1x1x1x8x8xbf16>
    %148 = vector.shape_cast %147 : vector<1x1x1x8x8xbf16> to vector<8x8xbf16>
    %cst_155 = arith.constant dense<0.000000e+00> : vector<64x8xf32>
    %149 = tpu.matmul %146, %148, %cst_155 {dimension_numbers = #tpu.dot_dimension_numbers<[1], [0], [0], [1], [0, 0, 1, 1], [], []>} : vector<64x8xbf16>, vector<8x8xbf16>, vector<64x8xf32> -> vector<64x8xf32>
    %150 = arith.addf %144, %149 : vector<64x8xf32>
    %151 = vector.extract_strided_slice %114 {offsets = [2, 0, 0], sizes = [8, 8, 8], strides = [1, 1, 1]} : vector<10x10x8xbf16> to vector<8x8x8xbf16>
    %152 = vector.shape_cast %151 : vector<8x8x8xbf16> to vector<64x8xbf16>
    %c2_156 = arith.constant 2 : index
    %c2_157 = arith.constant 2 : index
    %c0_158 = arith.constant 0 : index
    %c0_159 = arith.constant 0 : index
    %c0_160 = arith.constant 0 : index
    %153 = vector.load %arg8[%c2_156, %c2_157, %c0_158, %c0_159, %c0_160] : memref<3x3x3x8x8xbf16, #tpu.memory_space<vmem>>, vector<1x1x1x8x8xbf16>
    %154 = vector.shape_cast %153 : vector<1x1x1x8x8xbf16> to vector<8x8xbf16>
    %cst_161 = arith.constant dense<0.000000e+00> : vector<64x8xf32>
    %155 = tpu.matmul %152, %154, %cst_161 {dimension_numbers = #tpu.dot_dimension_numbers<[1], [0], [0], [1], [0, 0, 1, 1], [], []>} : vector<64x8xbf16>, vector<8x8xbf16>, vector<64x8xf32> -> vector<64x8xf32>
    %156 = arith.addf %150, %155 : vector<64x8xf32>
    %157 = vector.extract_strided_slice %114 {offsets = [2, 1, 0], sizes = [8, 8, 8], strides = [1, 1, 1]} : vector<10x10x8xbf16> to vector<8x8x8xbf16>
    %158 = vector.shape_cast %157 : vector<8x8x8xbf16> to vector<64x8xbf16>
    %c2_162 = arith.constant 2 : index
    %c2_163 = arith.constant 2 : index
    %c1_164 = arith.constant 1 : index
    %c0_165 = arith.constant 0 : index
    %c0_166 = arith.constant 0 : index
    %159 = vector.load %arg8[%c2_162, %c2_163, %c1_164, %c0_165, %c0_166] : memref<3x3x3x8x8xbf16, #tpu.memory_space<vmem>>, vector<1x1x1x8x8xbf16>
    %160 = vector.shape_cast %159 : vector<1x1x1x8x8xbf16> to vector<8x8xbf16>
    %cst_167 = arith.constant dense<0.000000e+00> : vector<64x8xf32>
    %161 = tpu.matmul %158, %160, %cst_167 {dimension_numbers = #tpu.dot_dimension_numbers<[1], [0], [0], [1], [0, 0, 1, 1], [], []>} : vector<64x8xbf16>, vector<8x8xbf16>, vector<64x8xf32> -> vector<64x8xf32>
    %162 = arith.addf %156, %161 : vector<64x8xf32>
    %163 = vector.extract_strided_slice %114 {offsets = [2, 2, 0], sizes = [8, 8, 8], strides = [1, 1, 1]} : vector<10x10x8xbf16> to vector<8x8x8xbf16>
    %164 = vector.shape_cast %163 : vector<8x8x8xbf16> to vector<64x8xbf16>
    %c2_168 = arith.constant 2 : index
    %c2_169 = arith.constant 2 : index
    %c2_170 = arith.constant 2 : index
    %c0_171 = arith.constant 0 : index
    %c0_172 = arith.constant 0 : index
    %165 = vector.load %arg8[%c2_168, %c2_169, %c2_170, %c0_171, %c0_172] : memref<3x3x3x8x8xbf16, #tpu.memory_space<vmem>>, vector<1x1x1x8x8xbf16>
    %166 = vector.shape_cast %165 : vector<1x1x1x8x8xbf16> to vector<8x8xbf16>
    %cst_173 = arith.constant dense<0.000000e+00> : vector<64x8xf32>
    %167 = tpu.matmul %164, %166, %cst_173 {dimension_numbers = #tpu.dot_dimension_numbers<[1], [0], [0], [1], [0, 0, 1, 1], [], []>} : vector<64x8xbf16>, vector<8x8xbf16>, vector<64x8xf32> -> vector<64x8xf32>
    %168 = arith.addf %162, %167 : vector<64x8xf32>
    %c0_174 = arith.constant 0 : index
    %c0_175 = arith.constant 0 : index
    %c0_176 = arith.constant 0 : index
    %c0_177 = arith.constant 0 : index
    %c0_178 = arith.constant 0 : index
    %169 = vector.load %arg5[%c0_174, %c0_175, %c0_176, %c0_177, %c0_178] : memref<1x1x10x10x4xbf16, #tpu.memory_space<vmem>>, vector<1x1x10x10x4xbf16>
    %170 = vector.shape_cast %169 : vector<1x1x10x10x4xbf16> to vector<10x10x4xbf16>
    %171 = vector.extract_strided_slice %170 {offsets = [0, 0, 0], sizes = [8, 8, 4], strides = [1, 1, 1]} : vector<10x10x4xbf16> to vector<8x8x4xbf16>
    %172 = vector.shape_cast %171 : vector<8x8x4xbf16> to vector<64x4xbf16>
    %c0_179 = arith.constant 0 : index
    %c0_180 = arith.constant 0 : index
    %c0_181 = arith.constant 0 : index
    %c0_182 = arith.constant 0 : index
    %c0_183 = arith.constant 0 : index
    %173 = vector.load %arg9[%c0_179, %c0_180, %c0_181, %c0_182, %c0_183] : memref<3x3x3x4x8xbf16, #tpu.memory_space<vmem>>, vector<1x1x1x4x8xbf16>
    %174 = vector.shape_cast %173 : vector<1x1x1x4x8xbf16> to vector<4x8xbf16>
    %cst_184 = arith.constant dense<0.000000e+00> : vector<64x8xf32>
    %175 = tpu.matmul %172, %174, %cst_184 {dimension_numbers = #tpu.dot_dimension_numbers<[1], [0], [0], [1], [0, 0, 1, 1], [], []>} : vector<64x4xbf16>, vector<4x8xbf16>, vector<64x8xf32> -> vector<64x8xf32>
    %176 = arith.addf %168, %175 : vector<64x8xf32>
    %177 = vector.extract_strided_slice %170 {offsets = [0, 1, 0], sizes = [8, 8, 4], strides = [1, 1, 1]} : vector<10x10x4xbf16> to vector<8x8x4xbf16>
    %178 = vector.shape_cast %177 : vector<8x8x4xbf16> to vector<64x4xbf16>
    %c0_185 = arith.constant 0 : index
    %c0_186 = arith.constant 0 : index
    %c1_187 = arith.constant 1 : index
    %c0_188 = arith.constant 0 : index
    %c0_189 = arith.constant 0 : index
    %179 = vector.load %arg9[%c0_185, %c0_186, %c1_187, %c0_188, %c0_189] : memref<3x3x3x4x8xbf16, #tpu.memory_space<vmem>>, vector<1x1x1x4x8xbf16>
    %180 = vector.shape_cast %179 : vector<1x1x1x4x8xbf16> to vector<4x8xbf16>
    %cst_190 = arith.constant dense<0.000000e+00> : vector<64x8xf32>
    %181 = tpu.matmul %178, %180, %cst_190 {dimension_numbers = #tpu.dot_dimension_numbers<[1], [0], [0], [1], [0, 0, 1, 1], [], []>} : vector<64x4xbf16>, vector<4x8xbf16>, vector<64x8xf32> -> vector<64x8xf32>
    %182 = arith.addf %176, %181 : vector<64x8xf32>
    %183 = vector.extract_strided_slice %170 {offsets = [0, 2, 0], sizes = [8, 8, 4], strides = [1, 1, 1]} : vector<10x10x4xbf16> to vector<8x8x4xbf16>
    %184 = vector.shape_cast %183 : vector<8x8x4xbf16> to vector<64x4xbf16>
    %c0_191 = arith.constant 0 : index
    %c0_192 = arith.constant 0 : index
    %c2_193 = arith.constant 2 : index
    %c0_194 = arith.constant 0 : index
    %c0_195 = arith.constant 0 : index
    %185 = vector.load %arg9[%c0_191, %c0_192, %c2_193, %c0_194, %c0_195] : memref<3x3x3x4x8xbf16, #tpu.memory_space<vmem>>, vector<1x1x1x4x8xbf16>
    %186 = vector.shape_cast %185 : vector<1x1x1x4x8xbf16> to vector<4x8xbf16>
    %cst_196 = arith.constant dense<0.000000e+00> : vector<64x8xf32>
    %187 = tpu.matmul %184, %186, %cst_196 {dimension_numbers = #tpu.dot_dimension_numbers<[1], [0], [0], [1], [0, 0, 1, 1], [], []>} : vector<64x4xbf16>, vector<4x8xbf16>, vector<64x8xf32> -> vector<64x8xf32>
    %188 = arith.addf %182, %187 : vector<64x8xf32>
    %189 = vector.extract_strided_slice %170 {offsets = [1, 0, 0], sizes = [8, 8, 4], strides = [1, 1, 1]} : vector<10x10x4xbf16> to vector<8x8x4xbf16>
    %190 = vector.shape_cast %189 : vector<8x8x4xbf16> to vector<64x4xbf16>
    %c0_197 = arith.constant 0 : index
    %c1_198 = arith.constant 1 : index
    %c0_199 = arith.constant 0 : index
    %c0_200 = arith.constant 0 : index
    %c0_201 = arith.constant 0 : index
    %191 = vector.load %arg9[%c0_197, %c1_198, %c0_199, %c0_200, %c0_201] : memref<3x3x3x4x8xbf16, #tpu.memory_space<vmem>>, vector<1x1x1x4x8xbf16>
    %192 = vector.shape_cast %191 : vector<1x1x1x4x8xbf16> to vector<4x8xbf16>
    %cst_202 = arith.constant dense<0.000000e+00> : vector<64x8xf32>
    %193 = tpu.matmul %190, %192, %cst_202 {dimension_numbers = #tpu.dot_dimension_numbers<[1], [0], [0], [1], [0, 0, 1, 1], [], []>} : vector<64x4xbf16>, vector<4x8xbf16>, vector<64x8xf32> -> vector<64x8xf32>
    %194 = arith.addf %188, %193 : vector<64x8xf32>
    %195 = vector.extract_strided_slice %170 {offsets = [1, 1, 0], sizes = [8, 8, 4], strides = [1, 1, 1]} : vector<10x10x4xbf16> to vector<8x8x4xbf16>
    %196 = vector.shape_cast %195 : vector<8x8x4xbf16> to vector<64x4xbf16>
    %c0_203 = arith.constant 0 : index
    %c1_204 = arith.constant 1 : index
    %c1_205 = arith.constant 1 : index
    %c0_206 = arith.constant 0 : index
    %c0_207 = arith.constant 0 : index
    %197 = vector.load %arg9[%c0_203, %c1_204, %c1_205, %c0_206, %c0_207] : memref<3x3x3x4x8xbf16, #tpu.memory_space<vmem>>, vector<1x1x1x4x8xbf16>
    %198 = vector.shape_cast %197 : vector<1x1x1x4x8xbf16> to vector<4x8xbf16>
    %cst_208 = arith.constant dense<0.000000e+00> : vector<64x8xf32>
    %199 = tpu.matmul %196, %198, %cst_208 {dimension_numbers = #tpu.dot_dimension_numbers<[1], [0], [0], [1], [0, 0, 1, 1], [], []>} : vector<64x4xbf16>, vector<4x8xbf16>, vector<64x8xf32> -> vector<64x8xf32>
    %200 = arith.addf %194, %199 : vector<64x8xf32>
    %201 = vector.extract_strided_slice %170 {offsets = [1, 2, 0], sizes = [8, 8, 4], strides = [1, 1, 1]} : vector<10x10x4xbf16> to vector<8x8x4xbf16>
    %202 = vector.shape_cast %201 : vector<8x8x4xbf16> to vector<64x4xbf16>
    %c0_209 = arith.constant 0 : index
    %c1_210 = arith.constant 1 : index
    %c2_211 = arith.constant 2 : index
    %c0_212 = arith.constant 0 : index
    %c0_213 = arith.constant 0 : index
    %203 = vector.load %arg9[%c0_209, %c1_210, %c2_211, %c0_212, %c0_213] : memref<3x3x3x4x8xbf16, #tpu.memory_space<vmem>>, vector<1x1x1x4x8xbf16>
    %204 = vector.shape_cast %203 : vector<1x1x1x4x8xbf16> to vector<4x8xbf16>
    %cst_214 = arith.constant dense<0.000000e+00> : vector<64x8xf32>
    %205 = tpu.matmul %202, %204, %cst_214 {dimension_numbers = #tpu.dot_dimension_numbers<[1], [0], [0], [1], [0, 0, 1, 1], [], []>} : vector<64x4xbf16>, vector<4x8xbf16>, vector<64x8xf32> -> vector<64x8xf32>
    %206 = arith.addf %200, %205 : vector<64x8xf32>
    %207 = vector.extract_strided_slice %170 {offsets = [2, 0, 0], sizes = [8, 8, 4], strides = [1, 1, 1]} : vector<10x10x4xbf16> to vector<8x8x4xbf16>
    %208 = vector.shape_cast %207 : vector<8x8x4xbf16> to vector<64x4xbf16>
    %c0_215 = arith.constant 0 : index
    %c2_216 = arith.constant 2 : index
    %c0_217 = arith.constant 0 : index
    %c0_218 = arith.constant 0 : index
    %c0_219 = arith.constant 0 : index
    %209 = vector.load %arg9[%c0_215, %c2_216, %c0_217, %c0_218, %c0_219] : memref<3x3x3x4x8xbf16, #tpu.memory_space<vmem>>, vector<1x1x1x4x8xbf16>
    %210 = vector.shape_cast %209 : vector<1x1x1x4x8xbf16> to vector<4x8xbf16>
    %cst_220 = arith.constant dense<0.000000e+00> : vector<64x8xf32>
    %211 = tpu.matmul %208, %210, %cst_220 {dimension_numbers = #tpu.dot_dimension_numbers<[1], [0], [0], [1], [0, 0, 1, 1], [], []>} : vector<64x4xbf16>, vector<4x8xbf16>, vector<64x8xf32> -> vector<64x8xf32>
    %212 = arith.addf %206, %211 : vector<64x8xf32>
    %213 = vector.extract_strided_slice %170 {offsets = [2, 1, 0], sizes = [8, 8, 4], strides = [1, 1, 1]} : vector<10x10x4xbf16> to vector<8x8x4xbf16>
    %214 = vector.shape_cast %213 : vector<8x8x4xbf16> to vector<64x4xbf16>
    %c0_221 = arith.constant 0 : index
    %c2_222 = arith.constant 2 : index
    %c1_223 = arith.constant 1 : index
    %c0_224 = arith.constant 0 : index
    %c0_225 = arith.constant 0 : index
    %215 = vector.load %arg9[%c0_221, %c2_222, %c1_223, %c0_224, %c0_225] : memref<3x3x3x4x8xbf16, #tpu.memory_space<vmem>>, vector<1x1x1x4x8xbf16>
    %216 = vector.shape_cast %215 : vector<1x1x1x4x8xbf16> to vector<4x8xbf16>
    %cst_226 = arith.constant dense<0.000000e+00> : vector<64x8xf32>
    %217 = tpu.matmul %214, %216, %cst_226 {dimension_numbers = #tpu.dot_dimension_numbers<[1], [0], [0], [1], [0, 0, 1, 1], [], []>} : vector<64x4xbf16>, vector<4x8xbf16>, vector<64x8xf32> -> vector<64x8xf32>
    %218 = arith.addf %212, %217 : vector<64x8xf32>
    %219 = vector.extract_strided_slice %170 {offsets = [2, 2, 0], sizes = [8, 8, 4], strides = [1, 1, 1]} : vector<10x10x4xbf16> to vector<8x8x4xbf16>
    %220 = vector.shape_cast %219 : vector<8x8x4xbf16> to vector<64x4xbf16>
    %c0_227 = arith.constant 0 : index
    %c2_228 = arith.constant 2 : index
    %c2_229 = arith.constant 2 : index
    %c0_230 = arith.constant 0 : index
    %c0_231 = arith.constant 0 : index
    %221 = vector.load %arg9[%c0_227, %c2_228, %c2_229, %c0_230, %c0_231] : memref<3x3x3x4x8xbf16, #tpu.memory_space<vmem>>, vector<1x1x1x4x8xbf16>
    %222 = vector.shape_cast %221 : vector<1x1x1x4x8xbf16> to vector<4x8xbf16>
    %cst_232 = arith.constant dense<0.000000e+00> : vector<64x8xf32>
    %223 = tpu.matmul %220, %222, %cst_232 {dimension_numbers = #tpu.dot_dimension_numbers<[1], [0], [0], [1], [0, 0, 1, 1], [], []>} : vector<64x4xbf16>, vector<4x8xbf16>, vector<64x8xf32> -> vector<64x8xf32>
    %224 = arith.addf %218, %223 : vector<64x8xf32>
    %c0_233 = arith.constant 0 : index
    %c0_234 = arith.constant 0 : index
    %c0_235 = arith.constant 0 : index
    %c0_236 = arith.constant 0 : index
    %c0_237 = arith.constant 0 : index
    %225 = vector.load %arg6[%c0_233, %c0_234, %c0_235, %c0_236, %c0_237] : memref<1x1x10x10x4xbf16, #tpu.memory_space<vmem>>, vector<1x1x10x10x4xbf16>
    %226 = vector.shape_cast %225 : vector<1x1x10x10x4xbf16> to vector<10x10x4xbf16>
    %227 = vector.extract_strided_slice %226 {offsets = [0, 0, 0], sizes = [8, 8, 4], strides = [1, 1, 1]} : vector<10x10x4xbf16> to vector<8x8x4xbf16>
    %228 = vector.shape_cast %227 : vector<8x8x4xbf16> to vector<64x4xbf16>
    %c1_238 = arith.constant 1 : index
    %c0_239 = arith.constant 0 : index
    %c0_240 = arith.constant 0 : index
    %c0_241 = arith.constant 0 : index
    %c0_242 = arith.constant 0 : index
    %229 = vector.load %arg9[%c1_238, %c0_239, %c0_240, %c0_241, %c0_242] : memref<3x3x3x4x8xbf16, #tpu.memory_space<vmem>>, vector<1x1x1x4x8xbf16>
    %230 = vector.shape_cast %229 : vector<1x1x1x4x8xbf16> to vector<4x8xbf16>
    %cst_243 = arith.constant dense<0.000000e+00> : vector<64x8xf32>
    %231 = tpu.matmul %228, %230, %cst_243 {dimension_numbers = #tpu.dot_dimension_numbers<[1], [0], [0], [1], [0, 0, 1, 1], [], []>} : vector<64x4xbf16>, vector<4x8xbf16>, vector<64x8xf32> -> vector<64x8xf32>
    %232 = arith.addf %224, %231 : vector<64x8xf32>
    %233 = vector.extract_strided_slice %226 {offsets = [0, 1, 0], sizes = [8, 8, 4], strides = [1, 1, 1]} : vector<10x10x4xbf16> to vector<8x8x4xbf16>
    %234 = vector.shape_cast %233 : vector<8x8x4xbf16> to vector<64x4xbf16>
    %c1_244 = arith.constant 1 : index
    %c0_245 = arith.constant 0 : index
    %c1_246 = arith.constant 1 : index
    %c0_247 = arith.constant 0 : index
    %c0_248 = arith.constant 0 : index
    %235 = vector.load %arg9[%c1_244, %c0_245, %c1_246, %c0_247, %c0_248] : memref<3x3x3x4x8xbf16, #tpu.memory_space<vmem>>, vector<1x1x1x4x8xbf16>
    %236 = vector.shape_cast %235 : vector<1x1x1x4x8xbf16> to vector<4x8xbf16>
    %cst_249 = arith.constant dense<0.000000e+00> : vector<64x8xf32>
    %237 = tpu.matmul %234, %236, %cst_249 {dimension_numbers = #tpu.dot_dimension_numbers<[1], [0], [0], [1], [0, 0, 1, 1], [], []>} : vector<64x4xbf16>, vector<4x8xbf16>, vector<64x8xf32> -> vector<64x8xf32>
    %238 = arith.addf %232, %237 : vector<64x8xf32>
    %239 = vector.extract_strided_slice %226 {offsets = [0, 2, 0], sizes = [8, 8, 4], strides = [1, 1, 1]} : vector<10x10x4xbf16> to vector<8x8x4xbf16>
    %240 = vector.shape_cast %239 : vector<8x8x4xbf16> to vector<64x4xbf16>
    %c1_250 = arith.constant 1 : index
    %c0_251 = arith.constant 0 : index
    %c2_252 = arith.constant 2 : index
    %c0_253 = arith.constant 0 : index
    %c0_254 = arith.constant 0 : index
    %241 = vector.load %arg9[%c1_250, %c0_251, %c2_252, %c0_253, %c0_254] : memref<3x3x3x4x8xbf16, #tpu.memory_space<vmem>>, vector<1x1x1x4x8xbf16>
    %242 = vector.shape_cast %241 : vector<1x1x1x4x8xbf16> to vector<4x8xbf16>
    %cst_255 = arith.constant dense<0.000000e+00> : vector<64x8xf32>
    %243 = tpu.matmul %240, %242, %cst_255 {dimension_numbers = #tpu.dot_dimension_numbers<[1], [0], [0], [1], [0, 0, 1, 1], [], []>} : vector<64x4xbf16>, vector<4x8xbf16>, vector<64x8xf32> -> vector<64x8xf32>
    %244 = arith.addf %238, %243 : vector<64x8xf32>
    %245 = vector.extract_strided_slice %226 {offsets = [1, 0, 0], sizes = [8, 8, 4], strides = [1, 1, 1]} : vector<10x10x4xbf16> to vector<8x8x4xbf16>
    %246 = vector.shape_cast %245 : vector<8x8x4xbf16> to vector<64x4xbf16>
    %c1_256 = arith.constant 1 : index
    %c1_257 = arith.constant 1 : index
    %c0_258 = arith.constant 0 : index
    %c0_259 = arith.constant 0 : index
    %c0_260 = arith.constant 0 : index
    %247 = vector.load %arg9[%c1_256, %c1_257, %c0_258, %c0_259, %c0_260] : memref<3x3x3x4x8xbf16, #tpu.memory_space<vmem>>, vector<1x1x1x4x8xbf16>
    %248 = vector.shape_cast %247 : vector<1x1x1x4x8xbf16> to vector<4x8xbf16>
    %cst_261 = arith.constant dense<0.000000e+00> : vector<64x8xf32>
    %249 = tpu.matmul %246, %248, %cst_261 {dimension_numbers = #tpu.dot_dimension_numbers<[1], [0], [0], [1], [0, 0, 1, 1], [], []>} : vector<64x4xbf16>, vector<4x8xbf16>, vector<64x8xf32> -> vector<64x8xf32>
    %250 = arith.addf %244, %249 : vector<64x8xf32>
    %251 = vector.extract_strided_slice %226 {offsets = [1, 1, 0], sizes = [8, 8, 4], strides = [1, 1, 1]} : vector<10x10x4xbf16> to vector<8x8x4xbf16>
    %252 = vector.shape_cast %251 : vector<8x8x4xbf16> to vector<64x4xbf16>
    %c1_262 = arith.constant 1 : index
    %c1_263 = arith.constant 1 : index
    %c1_264 = arith.constant 1 : index
    %c0_265 = arith.constant 0 : index
    %c0_266 = arith.constant 0 : index
    %253 = vector.load %arg9[%c1_262, %c1_263, %c1_264, %c0_265, %c0_266] : memref<3x3x3x4x8xbf16, #tpu.memory_space<vmem>>, vector<1x1x1x4x8xbf16>
    %254 = vector.shape_cast %253 : vector<1x1x1x4x8xbf16> to vector<4x8xbf16>
    %cst_267 = arith.constant dense<0.000000e+00> : vector<64x8xf32>
    %255 = tpu.matmul %252, %254, %cst_267 {dimension_numbers = #tpu.dot_dimension_numbers<[1], [0], [0], [1], [0, 0, 1, 1], [], []>} : vector<64x4xbf16>, vector<4x8xbf16>, vector<64x8xf32> -> vector<64x8xf32>
    %256 = arith.addf %250, %255 : vector<64x8xf32>
    %257 = vector.extract_strided_slice %226 {offsets = [1, 2, 0], sizes = [8, 8, 4], strides = [1, 1, 1]} : vector<10x10x4xbf16> to vector<8x8x4xbf16>
    %258 = vector.shape_cast %257 : vector<8x8x4xbf16> to vector<64x4xbf16>
    %c1_268 = arith.constant 1 : index
    %c1_269 = arith.constant 1 : index
    %c2_270 = arith.constant 2 : index
    %c0_271 = arith.constant 0 : index
    %c0_272 = arith.constant 0 : index
    %259 = vector.load %arg9[%c1_268, %c1_269, %c2_270, %c0_271, %c0_272] : memref<3x3x3x4x8xbf16, #tpu.memory_space<vmem>>, vector<1x1x1x4x8xbf16>
    %260 = vector.shape_cast %259 : vector<1x1x1x4x8xbf16> to vector<4x8xbf16>
    %cst_273 = arith.constant dense<0.000000e+00> : vector<64x8xf32>
    %261 = tpu.matmul %258, %260, %cst_273 {dimension_numbers = #tpu.dot_dimension_numbers<[1], [0], [0], [1], [0, 0, 1, 1], [], []>} : vector<64x4xbf16>, vector<4x8xbf16>, vector<64x8xf32> -> vector<64x8xf32>
    %262 = arith.addf %256, %261 : vector<64x8xf32>
    %263 = vector.extract_strided_slice %226 {offsets = [2, 0, 0], sizes = [8, 8, 4], strides = [1, 1, 1]} : vector<10x10x4xbf16> to vector<8x8x4xbf16>
    %264 = vector.shape_cast %263 : vector<8x8x4xbf16> to vector<64x4xbf16>
    %c1_274 = arith.constant 1 : index
    %c2_275 = arith.constant 2 : index
    %c0_276 = arith.constant 0 : index
    %c0_277 = arith.constant 0 : index
    %c0_278 = arith.constant 0 : index
    %265 = vector.load %arg9[%c1_274, %c2_275, %c0_276, %c0_277, %c0_278] : memref<3x3x3x4x8xbf16, #tpu.memory_space<vmem>>, vector<1x1x1x4x8xbf16>
    %266 = vector.shape_cast %265 : vector<1x1x1x4x8xbf16> to vector<4x8xbf16>
    %cst_279 = arith.constant dense<0.000000e+00> : vector<64x8xf32>
    %267 = tpu.matmul %264, %266, %cst_279 {dimension_numbers = #tpu.dot_dimension_numbers<[1], [0], [0], [1], [0, 0, 1, 1], [], []>} : vector<64x4xbf16>, vector<4x8xbf16>, vector<64x8xf32> -> vector<64x8xf32>
    %268 = arith.addf %262, %267 : vector<64x8xf32>
    %269 = vector.extract_strided_slice %226 {offsets = [2, 1, 0], sizes = [8, 8, 4], strides = [1, 1, 1]} : vector<10x10x4xbf16> to vector<8x8x4xbf16>
    %270 = vector.shape_cast %269 : vector<8x8x4xbf16> to vector<64x4xbf16>
    %c1_280 = arith.constant 1 : index
    %c2_281 = arith.constant 2 : index
    %c1_282 = arith.constant 1 : index
    %c0_283 = arith.constant 0 : index
    %c0_284 = arith.constant 0 : index
    %271 = vector.load %arg9[%c1_280, %c2_281, %c1_282, %c0_283, %c0_284] : memref<3x3x3x4x8xbf16, #tpu.memory_space<vmem>>, vector<1x1x1x4x8xbf16>
    %272 = vector.shape_cast %271 : vector<1x1x1x4x8xbf16> to vector<4x8xbf16>
    %cst_285 = arith.constant dense<0.000000e+00> : vector<64x8xf32>
    %273 = tpu.matmul %270, %272, %cst_285 {dimension_numbers = #tpu.dot_dimension_numbers<[1], [0], [0], [1], [0, 0, 1, 1], [], []>} : vector<64x4xbf16>, vector<4x8xbf16>, vector<64x8xf32> -> vector<64x8xf32>
    %274 = arith.addf %268, %273 : vector<64x8xf32>
    %275 = vector.extract_strided_slice %226 {offsets = [2, 2, 0], sizes = [8, 8, 4], strides = [1, 1, 1]} : vector<10x10x4xbf16> to vector<8x8x4xbf16>
    %276 = vector.shape_cast %275 : vector<8x8x4xbf16> to vector<64x4xbf16>
    %c1_286 = arith.constant 1 : index
    %c2_287 = arith.constant 2 : index
    %c2_288 = arith.constant 2 : index
    %c0_289 = arith.constant 0 : index
    %c0_290 = arith.constant 0 : index
    %277 = vector.load %arg9[%c1_286, %c2_287, %c2_288, %c0_289, %c0_290] : memref<3x3x3x4x8xbf16, #tpu.memory_space<vmem>>, vector<1x1x1x4x8xbf16>
    %278 = vector.shape_cast %277 : vector<1x1x1x4x8xbf16> to vector<4x8xbf16>
    %cst_291 = arith.constant dense<0.000000e+00> : vector<64x8xf32>
    %279 = tpu.matmul %276, %278, %cst_291 {dimension_numbers = #tpu.dot_dimension_numbers<[1], [0], [0], [1], [0, 0, 1, 1], [], []>} : vector<64x4xbf16>, vector<4x8xbf16>, vector<64x8xf32> -> vector<64x8xf32>
    %280 = arith.addf %274, %279 : vector<64x8xf32>
    %c0_292 = arith.constant 0 : index
    %c0_293 = arith.constant 0 : index
    %c0_294 = arith.constant 0 : index
    %c0_295 = arith.constant 0 : index
    %c0_296 = arith.constant 0 : index
    %281 = vector.load %arg7[%c0_292, %c0_293, %c0_294, %c0_295, %c0_296] : memref<1x1x10x10x4xbf16, #tpu.memory_space<vmem>>, vector<1x1x10x10x4xbf16>
    %282 = vector.shape_cast %281 : vector<1x1x10x10x4xbf16> to vector<10x10x4xbf16>
    %283 = vector.extract_strided_slice %282 {offsets = [0, 0, 0], sizes = [8, 8, 4], strides = [1, 1, 1]} : vector<10x10x4xbf16> to vector<8x8x4xbf16>
    %284 = vector.shape_cast %283 : vector<8x8x4xbf16> to vector<64x4xbf16>
    %c2_297 = arith.constant 2 : index
    %c0_298 = arith.constant 0 : index
    %c0_299 = arith.constant 0 : index
    %c0_300 = arith.constant 0 : index
    %c0_301 = arith.constant 0 : index
    %285 = vector.load %arg9[%c2_297, %c0_298, %c0_299, %c0_300, %c0_301] : memref<3x3x3x4x8xbf16, #tpu.memory_space<vmem>>, vector<1x1x1x4x8xbf16>
    %286 = vector.shape_cast %285 : vector<1x1x1x4x8xbf16> to vector<4x8xbf16>
    %cst_302 = arith.constant dense<0.000000e+00> : vector<64x8xf32>
    %287 = tpu.matmul %284, %286, %cst_302 {dimension_numbers = #tpu.dot_dimension_numbers<[1], [0], [0], [1], [0, 0, 1, 1], [], []>} : vector<64x4xbf16>, vector<4x8xbf16>, vector<64x8xf32> -> vector<64x8xf32>
    %288 = arith.addf %280, %287 : vector<64x8xf32>
    %289 = vector.extract_strided_slice %282 {offsets = [0, 1, 0], sizes = [8, 8, 4], strides = [1, 1, 1]} : vector<10x10x4xbf16> to vector<8x8x4xbf16>
    %290 = vector.shape_cast %289 : vector<8x8x4xbf16> to vector<64x4xbf16>
    %c2_303 = arith.constant 2 : index
    %c0_304 = arith.constant 0 : index
    %c1_305 = arith.constant 1 : index
    %c0_306 = arith.constant 0 : index
    %c0_307 = arith.constant 0 : index
    %291 = vector.load %arg9[%c2_303, %c0_304, %c1_305, %c0_306, %c0_307] : memref<3x3x3x4x8xbf16, #tpu.memory_space<vmem>>, vector<1x1x1x4x8xbf16>
    %292 = vector.shape_cast %291 : vector<1x1x1x4x8xbf16> to vector<4x8xbf16>
    %cst_308 = arith.constant dense<0.000000e+00> : vector<64x8xf32>
    %293 = tpu.matmul %290, %292, %cst_308 {dimension_numbers = #tpu.dot_dimension_numbers<[1], [0], [0], [1], [0, 0, 1, 1], [], []>} : vector<64x4xbf16>, vector<4x8xbf16>, vector<64x8xf32> -> vector<64x8xf32>
    %294 = arith.addf %288, %293 : vector<64x8xf32>
    %295 = vector.extract_strided_slice %282 {offsets = [0, 2, 0], sizes = [8, 8, 4], strides = [1, 1, 1]} : vector<10x10x4xbf16> to vector<8x8x4xbf16>
    %296 = vector.shape_cast %295 : vector<8x8x4xbf16> to vector<64x4xbf16>
    %c2_309 = arith.constant 2 : index
    %c0_310 = arith.constant 0 : index
    %c2_311 = arith.constant 2 : index
    %c0_312 = arith.constant 0 : index
    %c0_313 = arith.constant 0 : index
    %297 = vector.load %arg9[%c2_309, %c0_310, %c2_311, %c0_312, %c0_313] : memref<3x3x3x4x8xbf16, #tpu.memory_space<vmem>>, vector<1x1x1x4x8xbf16>
    %298 = vector.shape_cast %297 : vector<1x1x1x4x8xbf16> to vector<4x8xbf16>
    %cst_314 = arith.constant dense<0.000000e+00> : vector<64x8xf32>
    %299 = tpu.matmul %296, %298, %cst_314 {dimension_numbers = #tpu.dot_dimension_numbers<[1], [0], [0], [1], [0, 0, 1, 1], [], []>} : vector<64x4xbf16>, vector<4x8xbf16>, vector<64x8xf32> -> vector<64x8xf32>
    %300 = arith.addf %294, %299 : vector<64x8xf32>
    %301 = vector.extract_strided_slice %282 {offsets = [1, 0, 0], sizes = [8, 8, 4], strides = [1, 1, 1]} : vector<10x10x4xbf16> to vector<8x8x4xbf16>
    %302 = vector.shape_cast %301 : vector<8x8x4xbf16> to vector<64x4xbf16>
    %c2_315 = arith.constant 2 : index
    %c1_316 = arith.constant 1 : index
    %c0_317 = arith.constant 0 : index
    %c0_318 = arith.constant 0 : index
    %c0_319 = arith.constant 0 : index
    %303 = vector.load %arg9[%c2_315, %c1_316, %c0_317, %c0_318, %c0_319] : memref<3x3x3x4x8xbf16, #tpu.memory_space<vmem>>, vector<1x1x1x4x8xbf16>
    %304 = vector.shape_cast %303 : vector<1x1x1x4x8xbf16> to vector<4x8xbf16>
    %cst_320 = arith.constant dense<0.000000e+00> : vector<64x8xf32>
    %305 = tpu.matmul %302, %304, %cst_320 {dimension_numbers = #tpu.dot_dimension_numbers<[1], [0], [0], [1], [0, 0, 1, 1], [], []>} : vector<64x4xbf16>, vector<4x8xbf16>, vector<64x8xf32> -> vector<64x8xf32>
    %306 = arith.addf %300, %305 : vector<64x8xf32>
    %307 = vector.extract_strided_slice %282 {offsets = [1, 1, 0], sizes = [8, 8, 4], strides = [1, 1, 1]} : vector<10x10x4xbf16> to vector<8x8x4xbf16>
    %308 = vector.shape_cast %307 : vector<8x8x4xbf16> to vector<64x4xbf16>
    %c2_321 = arith.constant 2 : index
    %c1_322 = arith.constant 1 : index
    %c1_323 = arith.constant 1 : index
    %c0_324 = arith.constant 0 : index
    %c0_325 = arith.constant 0 : index
    %309 = vector.load %arg9[%c2_321, %c1_322, %c1_323, %c0_324, %c0_325] : memref<3x3x3x4x8xbf16, #tpu.memory_space<vmem>>, vector<1x1x1x4x8xbf16>
    %310 = vector.shape_cast %309 : vector<1x1x1x4x8xbf16> to vector<4x8xbf16>
    %cst_326 = arith.constant dense<0.000000e+00> : vector<64x8xf32>
    %311 = tpu.matmul %308, %310, %cst_326 {dimension_numbers = #tpu.dot_dimension_numbers<[1], [0], [0], [1], [0, 0, 1, 1], [], []>} : vector<64x4xbf16>, vector<4x8xbf16>, vector<64x8xf32> -> vector<64x8xf32>
    %312 = arith.addf %306, %311 : vector<64x8xf32>
    %313 = vector.extract_strided_slice %282 {offsets = [1, 2, 0], sizes = [8, 8, 4], strides = [1, 1, 1]} : vector<10x10x4xbf16> to vector<8x8x4xbf16>
    %314 = vector.shape_cast %313 : vector<8x8x4xbf16> to vector<64x4xbf16>
    %c2_327 = arith.constant 2 : index
    %c1_328 = arith.constant 1 : index
    %c2_329 = arith.constant 2 : index
    %c0_330 = arith.constant 0 : index
    %c0_331 = arith.constant 0 : index
    %315 = vector.load %arg9[%c2_327, %c1_328, %c2_329, %c0_330, %c0_331] : memref<3x3x3x4x8xbf16, #tpu.memory_space<vmem>>, vector<1x1x1x4x8xbf16>
    %316 = vector.shape_cast %315 : vector<1x1x1x4x8xbf16> to vector<4x8xbf16>
    %cst_332 = arith.constant dense<0.000000e+00> : vector<64x8xf32>
    %317 = tpu.matmul %314, %316, %cst_332 {dimension_numbers = #tpu.dot_dimension_numbers<[1], [0], [0], [1], [0, 0, 1, 1], [], []>} : vector<64x4xbf16>, vector<4x8xbf16>, vector<64x8xf32> -> vector<64x8xf32>
    %318 = arith.addf %312, %317 : vector<64x8xf32>
    %319 = vector.extract_strided_slice %282 {offsets = [2, 0, 0], sizes = [8, 8, 4], strides = [1, 1, 1]} : vector<10x10x4xbf16> to vector<8x8x4xbf16>
    %320 = vector.shape_cast %319 : vector<8x8x4xbf16> to vector<64x4xbf16>
    %c2_333 = arith.constant 2 : index
    %c2_334 = arith.constant 2 : index
    %c0_335 = arith.constant 0 : index
    %c0_336 = arith.constant 0 : index
    %c0_337 = arith.constant 0 : index
    %321 = vector.load %arg9[%c2_333, %c2_334, %c0_335, %c0_336, %c0_337] : memref<3x3x3x4x8xbf16, #tpu.memory_space<vmem>>, vector<1x1x1x4x8xbf16>
    %322 = vector.shape_cast %321 : vector<1x1x1x4x8xbf16> to vector<4x8xbf16>
    %cst_338 = arith.constant dense<0.000000e+00> : vector<64x8xf32>
    %323 = tpu.matmul %320, %322, %cst_338 {dimension_numbers = #tpu.dot_dimension_numbers<[1], [0], [0], [1], [0, 0, 1, 1], [], []>} : vector<64x4xbf16>, vector<4x8xbf16>, vector<64x8xf32> -> vector<64x8xf32>
    %324 = arith.addf %318, %323 : vector<64x8xf32>
    %325 = vector.extract_strided_slice %282 {offsets = [2, 1, 0], sizes = [8, 8, 4], strides = [1, 1, 1]} : vector<10x10x4xbf16> to vector<8x8x4xbf16>
    %326 = vector.shape_cast %325 : vector<8x8x4xbf16> to vector<64x4xbf16>
    %c2_339 = arith.constant 2 : index
    %c2_340 = arith.constant 2 : index
    %c1_341 = arith.constant 1 : index
    %c0_342 = arith.constant 0 : index
    %c0_343 = arith.constant 0 : index
    %327 = vector.load %arg9[%c2_339, %c2_340, %c1_341, %c0_342, %c0_343] : memref<3x3x3x4x8xbf16, #tpu.memory_space<vmem>>, vector<1x1x1x4x8xbf16>
    %328 = vector.shape_cast %327 : vector<1x1x1x4x8xbf16> to vector<4x8xbf16>
    %cst_344 = arith.constant dense<0.000000e+00> : vector<64x8xf32>
    %329 = tpu.matmul %326, %328, %cst_344 {dimension_numbers = #tpu.dot_dimension_numbers<[1], [0], [0], [1], [0, 0, 1, 1], [], []>} : vector<64x4xbf16>, vector<4x8xbf16>, vector<64x8xf32> -> vector<64x8xf32>
    %330 = arith.addf %324, %329 : vector<64x8xf32>
    %331 = vector.extract_strided_slice %282 {offsets = [2, 2, 0], sizes = [8, 8, 4], strides = [1, 1, 1]} : vector<10x10x4xbf16> to vector<8x8x4xbf16>
    %332 = vector.shape_cast %331 : vector<8x8x4xbf16> to vector<64x4xbf16>
    %c2_345 = arith.constant 2 : index
    %c2_346 = arith.constant 2 : index
    %c2_347 = arith.constant 2 : index
    %c0_348 = arith.constant 0 : index
    %c0_349 = arith.constant 0 : index
    %333 = vector.load %arg9[%c2_345, %c2_346, %c2_347, %c0_348, %c0_349] : memref<3x3x3x4x8xbf16, #tpu.memory_space<vmem>>, vector<1x1x1x4x8xbf16>
    %334 = vector.shape_cast %333 : vector<1x1x1x4x8xbf16> to vector<4x8xbf16>
    %cst_350 = arith.constant dense<0.000000e+00> : vector<64x8xf32>
    %335 = tpu.matmul %332, %334, %cst_350 {dimension_numbers = #tpu.dot_dimension_numbers<[1], [0], [0], [1], [0, 0, 1, 1], [], []>} : vector<64x4xbf16>, vector<4x8xbf16>, vector<64x8xf32> -> vector<64x8xf32>
    %336 = arith.addf %330, %335 : vector<64x8xf32>
    %c0_351 = arith.constant 0 : index
    %c0_352 = arith.constant 0 : index
    %337 = vector.load %arg10[%c0_351, %c0_352] : memref<1x8xf32, #tpu.memory_space<vmem>>, vector<1x8xf32>
    %338 = vector.broadcast %337 : vector<1x8xf32> to vector<64x8xf32>
    %339 = arith.addf %336, %338 : vector<64x8xf32>
    %340 = vector.shape_cast %339 : vector<64x8xf32> to vector<1x1x8x8x8xf32>
    %341 = arith.truncf %340 : vector<1x1x8x8x8xf32> to vector<1x1x8x8x8xbf16>
    %c0_353 = arith.constant 0 : index
    %c0_354 = arith.constant 0 : index
    %c0_355 = arith.constant 0 : index
    %c0_356 = arith.constant 0 : index
    %c0_357 = arith.constant 0 : index
    %342 = vector.load %arg11[%c0_353, %c0_354, %c0_355, %c0_356, %c0_357] : memref<1x1x8x8x8xbf16, #tpu.memory_space<vmem>>, vector<1x1x8x8x8xbf16>
    tpu.vector_store %arg11[%c0_353, %c0_354, %c0_355, %c0_356, %c0_357], %341 {strides = array<i32>} : memref<1x1x8x8x8xbf16, #tpu.memory_space<vmem>>, vector<1x1x8x8x8xbf16>,
    return
  }
  func.func @transform_0(%arg0: i32, %arg1: i32) -> (i32, i32, i32, i32, i32) {
    %c0_i32 = arith.constant 0 : i32
    %0 = arith.addi %arg1, %c0_i32 : i32
    %c0_i32_0 = arith.constant 0 : i32
    %c0_i32_1 = arith.constant 0 : i32
    %c0_i32_2 = arith.constant 0 : i32
    %c0_i32_3 = arith.constant 0 : i32
    return %arg0, %0, %c0_i32_0, %c0_i32_1, %c0_i32_2 : i32, i32, i32, i32, i32
  }
  func.func @transform_1(%arg0: i32, %arg1: i32) -> (i32, i32, i32, i32, i32) {
    %c1_i32 = arith.constant 1 : i32
    %0 = arith.addi %arg1, %c1_i32 : i32
    %c0_i32 = arith.constant 0 : i32
    %c0_i32_0 = arith.constant 0 : i32
    %c0_i32_1 = arith.constant 0 : i32
    %c0_i32_2 = arith.constant 0 : i32
    return %arg0, %0, %c0_i32, %c0_i32_0, %c0_i32_1 : i32, i32, i32, i32, i32
  }
  func.func @transform_2(%arg0: i32, %arg1: i32) -> (i32, i32, i32, i32, i32) {
    %c2_i32 = arith.constant 2 : i32
    %0 = arith.addi %arg1, %c2_i32 : i32
    %c0_i32 = arith.constant 0 : i32
    %c0_i32_0 = arith.constant 0 : i32
    %c0_i32_1 = arith.constant 0 : i32
    %c0_i32_2 = arith.constant 0 : i32
    return %arg0, %0, %c0_i32, %c0_i32_0, %c0_i32_1 : i32, i32, i32, i32, i32
  }
  func.func @transform_3(%arg0: i32, %arg1: i32) -> (i32, i32, i32, i32, i32) {
    %c0_i32 = arith.constant 0 : i32
    %0 = arith.addi %arg1, %c0_i32 : i32
    %c0_i32_0 = arith.constant 0 : i32
    %c0_i32_1 = arith.constant 0 : i32
    %c0_i32_2 = arith.constant 0 : i32
    %c0_i32_3 = arith.constant 0 : i32
    return %arg0, %0, %c0_i32_0, %c0_i32_1, %c0_i32_2 : i32, i32, i32, i32, i32
  }
  func.func @transform_4(%arg0: i32, %arg1: i32) -> (i32, i32, i32, i32, i32) {
    %c1_i32 = arith.constant 1 : i32
    %0 = arith.addi %arg1, %c1_i32 : i32
    %c0_i32 = arith.constant 0 : i32
    %c0_i32_0 = arith.constant 0 : i32
    %c0_i32_1 = arith.constant 0 : i32
    %c0_i32_2 = arith.constant 0 : i32
    return %arg0, %0, %c0_i32, %c0_i32_0, %c0_i32_1 : i32, i32, i32, i32, i32
  }
  func.func @transform_5(%arg0: i32, %arg1: i32) -> (i32, i32, i32, i32, i32) {
    %c2_i32 = arith.constant 2 : i32
    %0 = arith.addi %arg1, %c2_i32 : i32
    %c0_i32 = arith.constant 0 : i32
    %c0_i32_0 = arith.constant 0 : i32
    %c0_i32_1 = arith.constant 0 : i32
    %c0_i32_2 = arith.constant 0 : i32
    return %arg0, %0, %c0_i32, %c0_i32_0, %c0_i32_1 : i32, i32, i32, i32, i32
  }
  func.func @transform_6(%arg0: i32, %arg1: i32) -> (i32, i32, i32, i32, i32) {
    %c0_i32 = arith.constant 0 : i32
    %c0_i32_0 = arith.constant 0 : i32
    %c0_i32_1 = arith.constant 0 : i32
    %c0_i32_2 = arith.constant 0 : i32
    %c0_i32_3 = arith.constant 0 : i32
    %c0_i32_4 = arith.constant 0 : i32
    return %c0_i32, %c0_i32_0, %c0_i32_1, %c0_i32_2, %c0_i32_3 : i32, i32, i32, i32, i32
  }
  func.func @transform_7(%arg0: i32, %arg1: i32) -> (i32, i32, i32, i32, i32) {
    %c0_i32 = arith.constant 0 : i32
    %c0_i32_0 = arith.constant 0 : i32
    %c0_i32_1 = arith.constant 0 : i32
    %c0_i32_2 = arith.constant 0 : i32
    %c0_i32_3 = arith.constant 0 : i32
    %c0_i32_4 = arith.constant 0 : i32
    return %c0_i32, %c0_i32_0, %c0_i32_1, %c0_i32_2, %c0_i32_3 : i32, i32, i32, i32, i32
  }
  func.func @transform_8(%arg0: i32, %arg1: i32) -> (i32, i32) {
    %c0_i32 = arith.constant 0 : i32
    %c0_i32_0 = arith.constant 0 : i32
    %c0_i32_1 = arith.constant 0 : i32
    return %c0_i32, %c0_i32_0 : i32, i32
  }
  func.func @transform_9(%arg0: i32, %arg1: i32) -> (i32, i32, i32, i32, i32) {
    %c0_i32 = arith.constant 0 : i32
    %c0_i32_0 = arith.constant 0 : i32
    %c0_i32_1 = arith.constant 0 : i32
    %c0_i32_2 = arith.constant 0 : i32
    return %arg0, %arg1, %c0_i32, %c0_i32_0, %c0_i32_1 : i32, i32, i32, i32, i32
  }
}

module attributes {stable_mosaic.version = 11 : i64} {
  func.func @_in_stats_kernel(%arg0: i32, %arg1: i32, %arg2: memref<1x512x8xbf16, #tpu.memory_space<vmem>>, %arg3: memref<1x2x8xf32, #tpu.memory_space<vmem>>) attributes {dimension_semantics = [#tpu.dimension_semantics<parallel>, #tpu.dimension_semantics<arbitrary>], iteration_bounds = array<i64: 2, 1>, scalar_prefetch = 0 : i64, scratch_operands = 0 : i64, tpu.core_type = #tpu.core_type<tc>, window_params = [{transform_indices = @transform_0, window_bounds = array<i64: 1, 512, 8>}, {transform_indices = @transform_1, window_bounds = array<i64: 1, 2, 8>}]} {
    %c0_i32 = arith.constant 0 : i32
    %0 = arith.cmpi eq, %arg1, %c0_i32 : i32
    %1 = arith.extui %0 : i1 to i32
    %c0_i32_0 = arith.constant 0 : i32
    %2 = arith.cmpi ne, %1, %c0_i32_0 : i32
    scf.if %2 {
      %cst_15 = arith.constant 0.000000e+00 : f32
      %23 = vector.broadcast %cst_15 : f32 to vector<1x2x8xf32>
      %c0_16 = arith.constant 0 : index
      %c0_17 = arith.constant 0 : index
      %c0_18 = arith.constant 0 : index
      %24 = vector.load %arg3[%c0_16, %c0_17, %c0_18] : memref<1x2x8xf32, #tpu.memory_space<vmem>>, vector<1x2x8xf32>
      tpu.vector_store %arg3[%c0_16, %c0_17, %c0_18], %23 {strides = array<i32>} : memref<1x2x8xf32, #tpu.memory_space<vmem>>, vector<1x2x8xf32>,
    } else {
    }
    %c0 = arith.constant 0 : index
    %c0_1 = arith.constant 0 : index
    %c0_2 = arith.constant 0 : index
    %3 = vector.load %arg2[%c0, %c0_1, %c0_2] : memref<1x512x8xbf16, #tpu.memory_space<vmem>>, vector<1x512x8xbf16>
    %4 = vector.shape_cast %3 : vector<1x512x8xbf16> to vector<512x8xbf16>
    %5 = arith.extf %4 : vector<512x8xbf16> to vector<512x8xf32>
    %c0_3 = arith.constant 0 : index
    %c0_4 = arith.constant 0 : index
    %c0_5 = arith.constant 0 : index
    %6 = vector.load %arg3[%c0_3, %c0_4, %c0_5] : memref<1x2x8xf32, #tpu.memory_space<vmem>>, vector<1x1x8xf32>
    %7 = vector.shape_cast %6 : vector<1x1x8xf32> to vector<1x8xf32>
    %cst = arith.constant dense<0.000000e+00> : vector<8xf32>
    %8 = vector.multi_reduction <add>, %5, %cst [0] : vector<512x8xf32> to vector<8xf32>
    %9 = vector.shape_cast %8 : vector<8xf32> to vector<1x8xf32>
    %10 = arith.addf %7, %9 : vector<1x8xf32>
    %c0_6 = arith.constant 0 : index
    %c0_7 = arith.constant 0 : index
    %c0_8 = arith.constant 0 : index
    %11 = vector.load %arg3[%c0_6, %c0_7, %c0_8] : memref<1x2x8xf32, #tpu.memory_space<vmem>>, vector<1x1x8xf32>
    %12 = vector.shape_cast %11 : vector<1x1x8xf32> to vector<1x8xf32>
    %13 = vector.shape_cast %10 : vector<1x8xf32> to vector<1x1x8xf32>
    tpu.vector_store %arg3[%c0_6, %c0_7, %c0_8], %13 {strides = array<i32>} : memref<1x2x8xf32, #tpu.memory_space<vmem>>, vector<1x1x8xf32>,
    %c0_9 = arith.constant 0 : index
    %c1 = arith.constant 1 : index
    %c0_10 = arith.constant 0 : index
    %14 = vector.load %arg3[%c0_9, %c1, %c0_10] : memref<1x2x8xf32, #tpu.memory_space<vmem>>, vector<1x1x8xf32>
    %15 = vector.shape_cast %14 : vector<1x1x8xf32> to vector<1x8xf32>
    %16 = arith.mulf %5, %5 : vector<512x8xf32>
    %cst_11 = arith.constant dense<0.000000e+00> : vector<8xf32>
    %17 = vector.multi_reduction <add>, %16, %cst_11 [0] : vector<512x8xf32> to vector<8xf32>
    %18 = vector.shape_cast %17 : vector<8xf32> to vector<1x8xf32>
    %19 = arith.addf %15, %18 : vector<1x8xf32>
    %c0_12 = arith.constant 0 : index
    %c1_13 = arith.constant 1 : index
    %c0_14 = arith.constant 0 : index
    %20 = vector.load %arg3[%c0_12, %c1_13, %c0_14] : memref<1x2x8xf32, #tpu.memory_space<vmem>>, vector<1x1x8xf32>
    %21 = vector.shape_cast %20 : vector<1x1x8xf32> to vector<1x8xf32>
    %22 = vector.shape_cast %19 : vector<1x8xf32> to vector<1x1x8xf32>
    tpu.vector_store %arg3[%c0_12, %c1_13, %c0_14], %22 {strides = array<i32>} : memref<1x2x8xf32, #tpu.memory_space<vmem>>, vector<1x1x8xf32>,
    return
  }
  func.func @transform_0(%arg0: i32, %arg1: i32) -> (i32, i32, i32) {
    %c0_i32 = arith.constant 0 : i32
    %c0_i32_0 = arith.constant 0 : i32
    return %arg0, %arg1, %c0_i32 : i32, i32, i32
  }
  func.func @transform_1(%arg0: i32, %arg1: i32) -> (i32, i32, i32) {
    %c0_i32 = arith.constant 0 : i32
    %c0_i32_0 = arith.constant 0 : i32
    %c0_i32_1 = arith.constant 0 : i32
    return %arg0, %c0_i32, %c0_i32_0 : i32, i32, i32
  }
}

module attributes {stable_mosaic.version = 11 : i64} {
  func.func @_affine_lrelu_kernel(%arg0: i32, %arg1: i32, %arg2: memref<1x512x8xbf16, #tpu.memory_space<vmem>>, %arg3: memref<1x1x8xf32, #tpu.memory_space<vmem>>, %arg4: memref<1x1x8xf32, #tpu.memory_space<vmem>>, %arg5: memref<1x512x8xbf16, #tpu.memory_space<vmem>>) attributes {dimension_semantics = [#tpu.dimension_semantics<parallel>, #tpu.dimension_semantics<parallel>], iteration_bounds = array<i64: 2, 1>, scalar_prefetch = 0 : i64, scratch_operands = 0 : i64, tpu.core_type = #tpu.core_type<tc>, window_params = [{transform_indices = @transform_0, window_bounds = array<i64: 1, 512, 8>}, {transform_indices = @transform_1, window_bounds = array<i64: 1, 1, 8>}, {transform_indices = @transform_2, window_bounds = array<i64: 1, 1, 8>}, {transform_indices = @transform_3, window_bounds = array<i64: 1, 512, 8>}]} {
    %c0 = arith.constant 0 : index
    %c0_0 = arith.constant 0 : index
    %c0_1 = arith.constant 0 : index
    %0 = vector.load %arg2[%c0, %c0_0, %c0_1] : memref<1x512x8xbf16, #tpu.memory_space<vmem>>, vector<1x512x8xbf16>
    %1 = arith.extf %0 : vector<1x512x8xbf16> to vector<1x512x8xf32>
    %c0_2 = arith.constant 0 : index
    %c0_3 = arith.constant 0 : index
    %c0_4 = arith.constant 0 : index
    %2 = vector.load %arg3[%c0_2, %c0_3, %c0_4] : memref<1x1x8xf32, #tpu.memory_space<vmem>>, vector<1x1x8xf32>
    %3 = vector.broadcast %2 : vector<1x1x8xf32> to vector<1x512x8xf32>
    %4 = arith.mulf %1, %3 : vector<1x512x8xf32>
    %c0_5 = arith.constant 0 : index
    %c0_6 = arith.constant 0 : index
    %c0_7 = arith.constant 0 : index
    %5 = vector.load %arg4[%c0_5, %c0_6, %c0_7] : memref<1x1x8xf32, #tpu.memory_space<vmem>>, vector<1x1x8xf32>
    %6 = vector.broadcast %5 : vector<1x1x8xf32> to vector<1x512x8xf32>
    %7 = arith.addf %4, %6 : vector<1x512x8xf32>
    %cst = arith.constant 0.000000e+00 : f32
    %8 = vector.broadcast %cst : f32 to vector<1x512x8xf32>
    %9 = arith.cmpf oge, %7, %8 : vector<1x512x8xf32>
    %cst_8 = arith.constant 0.00999999977 : f32
    %10 = vector.broadcast %cst_8 : f32 to vector<1x512x8xf32>
    %11 = arith.mulf %10, %7 : vector<1x512x8xf32>
    %12 = arith.select %9, %7, %11 : vector<1x512x8xi1>, vector<1x512x8xf32>
    %13 = arith.truncf %12 : vector<1x512x8xf32> to vector<1x512x8xbf16>
    %c0_9 = arith.constant 0 : index
    %c0_10 = arith.constant 0 : index
    %c0_11 = arith.constant 0 : index
    %14 = vector.load %arg5[%c0_9, %c0_10, %c0_11] : memref<1x512x8xbf16, #tpu.memory_space<vmem>>, vector<1x512x8xbf16>
    tpu.vector_store %arg5[%c0_9, %c0_10, %c0_11], %13 {strides = array<i32>} : memref<1x512x8xbf16, #tpu.memory_space<vmem>>, vector<1x512x8xbf16>,
    return
  }
  func.func @transform_0(%arg0: i32, %arg1: i32) -> (i32, i32, i32) {
    %c0_i32 = arith.constant 0 : i32
    %c0_i32_0 = arith.constant 0 : i32
    return %arg0, %arg1, %c0_i32 : i32, i32, i32
  }
  func.func @transform_1(%arg0: i32, %arg1: i32) -> (i32, i32, i32) {
    %c0_i32 = arith.constant 0 : i32
    %c0_i32_0 = arith.constant 0 : i32
    %c0_i32_1 = arith.constant 0 : i32
    return %arg0, %c0_i32, %c0_i32_0 : i32, i32, i32
  }
  func.func @transform_2(%arg0: i32, %arg1: i32) -> (i32, i32, i32) {
    %c0_i32 = arith.constant 0 : i32
    %c0_i32_0 = arith.constant 0 : i32
    %c0_i32_1 = arith.constant 0 : i32
    return %arg0, %c0_i32, %c0_i32_0 : i32, i32, i32
  }
  func.func @transform_3(%arg0: i32, %arg1: i32) -> (i32, i32, i32) {
    %c0_i32 = arith.constant 0 : i32
    %c0_i32_0 = arith.constant 0 : i32
    return %arg0, %arg1, %c0_i32 : i32, i32, i32
  }
}

module attributes {stable_mosaic.version = 11 : i64} {
  func.func @_conv3x3_kernel(%arg0: i32, %arg1: i32, %arg2: memref<1x1x10x10x8xbf16, #tpu.memory_space<vmem>>, %arg3: memref<1x1x10x10x8xbf16, #tpu.memory_space<vmem>>, %arg4: memref<1x1x10x10x8xbf16, #tpu.memory_space<vmem>>, %arg5: memref<3x3x3x8x8xbf16, #tpu.memory_space<vmem>>, %arg6: memref<1x8xf32, #tpu.memory_space<vmem>>, %arg7: memref<1x1x8x8x8xbf16, #tpu.memory_space<vmem>>) attributes {dimension_semantics = [#tpu.dimension_semantics<parallel>, #tpu.dimension_semantics<parallel>], iteration_bounds = array<i64: 2, 8>, scalar_prefetch = 0 : i64, scratch_operands = 0 : i64, tpu.core_type = #tpu.core_type<tc>, window_params = [{transform_indices = @transform_0, window_bounds = array<i64: 1, 1, 10, 10, 8>}, {transform_indices = @transform_1, window_bounds = array<i64: 1, 1, 10, 10, 8>}, {transform_indices = @transform_2, window_bounds = array<i64: 1, 1, 10, 10, 8>}, {pipeline_mode = #tpu.pipeline_mode<synchronous>, transform_indices = @transform_3, window_bounds = array<i64: 3, 3, 3, 8, 8>}, {pipeline_mode = #tpu.pipeline_mode<synchronous>, transform_indices = @transform_4, window_bounds = array<i64: 1, 8>}, {transform_indices = @transform_5, window_bounds = array<i64: 1, 1, 8, 8, 8>}]} {
    %cst = arith.constant 0.000000e+00 : f32
    %0 = vector.broadcast %cst : f32 to vector<64x8xf32>
    %c0 = arith.constant 0 : index
    %c0_0 = arith.constant 0 : index
    %c0_1 = arith.constant 0 : index
    %c0_2 = arith.constant 0 : index
    %c0_3 = arith.constant 0 : index
    %1 = vector.load %arg2[%c0, %c0_0, %c0_1, %c0_2, %c0_3] : memref<1x1x10x10x8xbf16, #tpu.memory_space<vmem>>, vector<1x1x10x10x8xbf16>
    %2 = vector.shape_cast %1 : vector<1x1x10x10x8xbf16> to vector<10x10x8xbf16>
    %3 = vector.extract_strided_slice %2 {offsets = [0, 0, 0], sizes = [8, 8, 8], strides = [1, 1, 1]} : vector<10x10x8xbf16> to vector<8x8x8xbf16>
    %4 = vector.shape_cast %3 : vector<8x8x8xbf16> to vector<64x8xbf16>
    %c0_4 = arith.constant 0 : index
    %c0_5 = arith.constant 0 : index
    %c0_6 = arith.constant 0 : index
    %c0_7 = arith.constant 0 : index
    %c0_8 = arith.constant 0 : index
    %5 = vector.load %arg5[%c0_4, %c0_5, %c0_6, %c0_7, %c0_8] : memref<3x3x3x8x8xbf16, #tpu.memory_space<vmem>>, vector<1x1x1x8x8xbf16>
    %6 = vector.shape_cast %5 : vector<1x1x1x8x8xbf16> to vector<8x8xbf16>
    %cst_9 = arith.constant dense<0.000000e+00> : vector<64x8xf32>
    %7 = tpu.matmul %4, %6, %cst_9 {dimension_numbers = #tpu.dot_dimension_numbers<[1], [0], [0], [1], [0, 0, 1, 1], [], []>} : vector<64x8xbf16>, vector<8x8xbf16>, vector<64x8xf32> -> vector<64x8xf32>
    %8 = arith.addf %0, %7 : vector<64x8xf32>
    %9 = vector.extract_strided_slice %2 {offsets = [0, 1, 0], sizes = [8, 8, 8], strides = [1, 1, 1]} : vector<10x10x8xbf16> to vector<8x8x8xbf16>
    %10 = vector.shape_cast %9 : vector<8x8x8xbf16> to vector<64x8xbf16>
    %c0_10 = arith.constant 0 : index
    %c0_11 = arith.constant 0 : index
    %c1 = arith.constant 1 : index
    %c0_12 = arith.constant 0 : index
    %c0_13 = arith.constant 0 : index
    %11 = vector.load %arg5[%c0_10, %c0_11, %c1, %c0_12, %c0_13] : memref<3x3x3x8x8xbf16, #tpu.memory_space<vmem>>, vector<1x1x1x8x8xbf16>
    %12 = vector.shape_cast %11 : vector<1x1x1x8x8xbf16> to vector<8x8xbf16>
    %cst_14 = arith.constant dense<0.000000e+00> : vector<64x8xf32>
    %13 = tpu.matmul %10, %12, %cst_14 {dimension_numbers = #tpu.dot_dimension_numbers<[1], [0], [0], [1], [0, 0, 1, 1], [], []>} : vector<64x8xbf16>, vector<8x8xbf16>, vector<64x8xf32> -> vector<64x8xf32>
    %14 = arith.addf %8, %13 : vector<64x8xf32>
    %15 = vector.extract_strided_slice %2 {offsets = [0, 2, 0], sizes = [8, 8, 8], strides = [1, 1, 1]} : vector<10x10x8xbf16> to vector<8x8x8xbf16>
    %16 = vector.shape_cast %15 : vector<8x8x8xbf16> to vector<64x8xbf16>
    %c0_15 = arith.constant 0 : index
    %c0_16 = arith.constant 0 : index
    %c2 = arith.constant 2 : index
    %c0_17 = arith.constant 0 : index
    %c0_18 = arith.constant 0 : index
    %17 = vector.load %arg5[%c0_15, %c0_16, %c2, %c0_17, %c0_18] : memref<3x3x3x8x8xbf16, #tpu.memory_space<vmem>>, vector<1x1x1x8x8xbf16>
    %18 = vector.shape_cast %17 : vector<1x1x1x8x8xbf16> to vector<8x8xbf16>
    %cst_19 = arith.constant dense<0.000000e+00> : vector<64x8xf32>
    %19 = tpu.matmul %16, %18, %cst_19 {dimension_numbers = #tpu.dot_dimension_numbers<[1], [0], [0], [1], [0, 0, 1, 1], [], []>} : vector<64x8xbf16>, vector<8x8xbf16>, vector<64x8xf32> -> vector<64x8xf32>
    %20 = arith.addf %14, %19 : vector<64x8xf32>
    %21 = vector.extract_strided_slice %2 {offsets = [1, 0, 0], sizes = [8, 8, 8], strides = [1, 1, 1]} : vector<10x10x8xbf16> to vector<8x8x8xbf16>
    %22 = vector.shape_cast %21 : vector<8x8x8xbf16> to vector<64x8xbf16>
    %c0_20 = arith.constant 0 : index
    %c1_21 = arith.constant 1 : index
    %c0_22 = arith.constant 0 : index
    %c0_23 = arith.constant 0 : index
    %c0_24 = arith.constant 0 : index
    %23 = vector.load %arg5[%c0_20, %c1_21, %c0_22, %c0_23, %c0_24] : memref<3x3x3x8x8xbf16, #tpu.memory_space<vmem>>, vector<1x1x1x8x8xbf16>
    %24 = vector.shape_cast %23 : vector<1x1x1x8x8xbf16> to vector<8x8xbf16>
    %cst_25 = arith.constant dense<0.000000e+00> : vector<64x8xf32>
    %25 = tpu.matmul %22, %24, %cst_25 {dimension_numbers = #tpu.dot_dimension_numbers<[1], [0], [0], [1], [0, 0, 1, 1], [], []>} : vector<64x8xbf16>, vector<8x8xbf16>, vector<64x8xf32> -> vector<64x8xf32>
    %26 = arith.addf %20, %25 : vector<64x8xf32>
    %27 = vector.extract_strided_slice %2 {offsets = [1, 1, 0], sizes = [8, 8, 8], strides = [1, 1, 1]} : vector<10x10x8xbf16> to vector<8x8x8xbf16>
    %28 = vector.shape_cast %27 : vector<8x8x8xbf16> to vector<64x8xbf16>
    %c0_26 = arith.constant 0 : index
    %c1_27 = arith.constant 1 : index
    %c1_28 = arith.constant 1 : index
    %c0_29 = arith.constant 0 : index
    %c0_30 = arith.constant 0 : index
    %29 = vector.load %arg5[%c0_26, %c1_27, %c1_28, %c0_29, %c0_30] : memref<3x3x3x8x8xbf16, #tpu.memory_space<vmem>>, vector<1x1x1x8x8xbf16>
    %30 = vector.shape_cast %29 : vector<1x1x1x8x8xbf16> to vector<8x8xbf16>
    %cst_31 = arith.constant dense<0.000000e+00> : vector<64x8xf32>
    %31 = tpu.matmul %28, %30, %cst_31 {dimension_numbers = #tpu.dot_dimension_numbers<[1], [0], [0], [1], [0, 0, 1, 1], [], []>} : vector<64x8xbf16>, vector<8x8xbf16>, vector<64x8xf32> -> vector<64x8xf32>
    %32 = arith.addf %26, %31 : vector<64x8xf32>
    %33 = vector.extract_strided_slice %2 {offsets = [1, 2, 0], sizes = [8, 8, 8], strides = [1, 1, 1]} : vector<10x10x8xbf16> to vector<8x8x8xbf16>
    %34 = vector.shape_cast %33 : vector<8x8x8xbf16> to vector<64x8xbf16>
    %c0_32 = arith.constant 0 : index
    %c1_33 = arith.constant 1 : index
    %c2_34 = arith.constant 2 : index
    %c0_35 = arith.constant 0 : index
    %c0_36 = arith.constant 0 : index
    %35 = vector.load %arg5[%c0_32, %c1_33, %c2_34, %c0_35, %c0_36] : memref<3x3x3x8x8xbf16, #tpu.memory_space<vmem>>, vector<1x1x1x8x8xbf16>
    %36 = vector.shape_cast %35 : vector<1x1x1x8x8xbf16> to vector<8x8xbf16>
    %cst_37 = arith.constant dense<0.000000e+00> : vector<64x8xf32>
    %37 = tpu.matmul %34, %36, %cst_37 {dimension_numbers = #tpu.dot_dimension_numbers<[1], [0], [0], [1], [0, 0, 1, 1], [], []>} : vector<64x8xbf16>, vector<8x8xbf16>, vector<64x8xf32> -> vector<64x8xf32>
    %38 = arith.addf %32, %37 : vector<64x8xf32>
    %39 = vector.extract_strided_slice %2 {offsets = [2, 0, 0], sizes = [8, 8, 8], strides = [1, 1, 1]} : vector<10x10x8xbf16> to vector<8x8x8xbf16>
    %40 = vector.shape_cast %39 : vector<8x8x8xbf16> to vector<64x8xbf16>
    %c0_38 = arith.constant 0 : index
    %c2_39 = arith.constant 2 : index
    %c0_40 = arith.constant 0 : index
    %c0_41 = arith.constant 0 : index
    %c0_42 = arith.constant 0 : index
    %41 = vector.load %arg5[%c0_38, %c2_39, %c0_40, %c0_41, %c0_42] : memref<3x3x3x8x8xbf16, #tpu.memory_space<vmem>>, vector<1x1x1x8x8xbf16>
    %42 = vector.shape_cast %41 : vector<1x1x1x8x8xbf16> to vector<8x8xbf16>
    %cst_43 = arith.constant dense<0.000000e+00> : vector<64x8xf32>
    %43 = tpu.matmul %40, %42, %cst_43 {dimension_numbers = #tpu.dot_dimension_numbers<[1], [0], [0], [1], [0, 0, 1, 1], [], []>} : vector<64x8xbf16>, vector<8x8xbf16>, vector<64x8xf32> -> vector<64x8xf32>
    %44 = arith.addf %38, %43 : vector<64x8xf32>
    %45 = vector.extract_strided_slice %2 {offsets = [2, 1, 0], sizes = [8, 8, 8], strides = [1, 1, 1]} : vector<10x10x8xbf16> to vector<8x8x8xbf16>
    %46 = vector.shape_cast %45 : vector<8x8x8xbf16> to vector<64x8xbf16>
    %c0_44 = arith.constant 0 : index
    %c2_45 = arith.constant 2 : index
    %c1_46 = arith.constant 1 : index
    %c0_47 = arith.constant 0 : index
    %c0_48 = arith.constant 0 : index
    %47 = vector.load %arg5[%c0_44, %c2_45, %c1_46, %c0_47, %c0_48] : memref<3x3x3x8x8xbf16, #tpu.memory_space<vmem>>, vector<1x1x1x8x8xbf16>
    %48 = vector.shape_cast %47 : vector<1x1x1x8x8xbf16> to vector<8x8xbf16>
    %cst_49 = arith.constant dense<0.000000e+00> : vector<64x8xf32>
    %49 = tpu.matmul %46, %48, %cst_49 {dimension_numbers = #tpu.dot_dimension_numbers<[1], [0], [0], [1], [0, 0, 1, 1], [], []>} : vector<64x8xbf16>, vector<8x8xbf16>, vector<64x8xf32> -> vector<64x8xf32>
    %50 = arith.addf %44, %49 : vector<64x8xf32>
    %51 = vector.extract_strided_slice %2 {offsets = [2, 2, 0], sizes = [8, 8, 8], strides = [1, 1, 1]} : vector<10x10x8xbf16> to vector<8x8x8xbf16>
    %52 = vector.shape_cast %51 : vector<8x8x8xbf16> to vector<64x8xbf16>
    %c0_50 = arith.constant 0 : index
    %c2_51 = arith.constant 2 : index
    %c2_52 = arith.constant 2 : index
    %c0_53 = arith.constant 0 : index
    %c0_54 = arith.constant 0 : index
    %53 = vector.load %arg5[%c0_50, %c2_51, %c2_52, %c0_53, %c0_54] : memref<3x3x3x8x8xbf16, #tpu.memory_space<vmem>>, vector<1x1x1x8x8xbf16>
    %54 = vector.shape_cast %53 : vector<1x1x1x8x8xbf16> to vector<8x8xbf16>
    %cst_55 = arith.constant dense<0.000000e+00> : vector<64x8xf32>
    %55 = tpu.matmul %52, %54, %cst_55 {dimension_numbers = #tpu.dot_dimension_numbers<[1], [0], [0], [1], [0, 0, 1, 1], [], []>} : vector<64x8xbf16>, vector<8x8xbf16>, vector<64x8xf32> -> vector<64x8xf32>
    %56 = arith.addf %50, %55 : vector<64x8xf32>
    %c0_56 = arith.constant 0 : index
    %c0_57 = arith.constant 0 : index
    %c0_58 = arith.constant 0 : index
    %c0_59 = arith.constant 0 : index
    %c0_60 = arith.constant 0 : index
    %57 = vector.load %arg3[%c0_56, %c0_57, %c0_58, %c0_59, %c0_60] : memref<1x1x10x10x8xbf16, #tpu.memory_space<vmem>>, vector<1x1x10x10x8xbf16>
    %58 = vector.shape_cast %57 : vector<1x1x10x10x8xbf16> to vector<10x10x8xbf16>
    %59 = vector.extract_strided_slice %58 {offsets = [0, 0, 0], sizes = [8, 8, 8], strides = [1, 1, 1]} : vector<10x10x8xbf16> to vector<8x8x8xbf16>
    %60 = vector.shape_cast %59 : vector<8x8x8xbf16> to vector<64x8xbf16>
    %c1_61 = arith.constant 1 : index
    %c0_62 = arith.constant 0 : index
    %c0_63 = arith.constant 0 : index
    %c0_64 = arith.constant 0 : index
    %c0_65 = arith.constant 0 : index
    %61 = vector.load %arg5[%c1_61, %c0_62, %c0_63, %c0_64, %c0_65] : memref<3x3x3x8x8xbf16, #tpu.memory_space<vmem>>, vector<1x1x1x8x8xbf16>
    %62 = vector.shape_cast %61 : vector<1x1x1x8x8xbf16> to vector<8x8xbf16>
    %cst_66 = arith.constant dense<0.000000e+00> : vector<64x8xf32>
    %63 = tpu.matmul %60, %62, %cst_66 {dimension_numbers = #tpu.dot_dimension_numbers<[1], [0], [0], [1], [0, 0, 1, 1], [], []>} : vector<64x8xbf16>, vector<8x8xbf16>, vector<64x8xf32> -> vector<64x8xf32>
    %64 = arith.addf %56, %63 : vector<64x8xf32>
    %65 = vector.extract_strided_slice %58 {offsets = [0, 1, 0], sizes = [8, 8, 8], strides = [1, 1, 1]} : vector<10x10x8xbf16> to vector<8x8x8xbf16>
    %66 = vector.shape_cast %65 : vector<8x8x8xbf16> to vector<64x8xbf16>
    %c1_67 = arith.constant 1 : index
    %c0_68 = arith.constant 0 : index
    %c1_69 = arith.constant 1 : index
    %c0_70 = arith.constant 0 : index
    %c0_71 = arith.constant 0 : index
    %67 = vector.load %arg5[%c1_67, %c0_68, %c1_69, %c0_70, %c0_71] : memref<3x3x3x8x8xbf16, #tpu.memory_space<vmem>>, vector<1x1x1x8x8xbf16>
    %68 = vector.shape_cast %67 : vector<1x1x1x8x8xbf16> to vector<8x8xbf16>
    %cst_72 = arith.constant dense<0.000000e+00> : vector<64x8xf32>
    %69 = tpu.matmul %66, %68, %cst_72 {dimension_numbers = #tpu.dot_dimension_numbers<[1], [0], [0], [1], [0, 0, 1, 1], [], []>} : vector<64x8xbf16>, vector<8x8xbf16>, vector<64x8xf32> -> vector<64x8xf32>
    %70 = arith.addf %64, %69 : vector<64x8xf32>
    %71 = vector.extract_strided_slice %58 {offsets = [0, 2, 0], sizes = [8, 8, 8], strides = [1, 1, 1]} : vector<10x10x8xbf16> to vector<8x8x8xbf16>
    %72 = vector.shape_cast %71 : vector<8x8x8xbf16> to vector<64x8xbf16>
    %c1_73 = arith.constant 1 : index
    %c0_74 = arith.constant 0 : index
    %c2_75 = arith.constant 2 : index
    %c0_76 = arith.constant 0 : index
    %c0_77 = arith.constant 0 : index
    %73 = vector.load %arg5[%c1_73, %c0_74, %c2_75, %c0_76, %c0_77] : memref<3x3x3x8x8xbf16, #tpu.memory_space<vmem>>, vector<1x1x1x8x8xbf16>
    %74 = vector.shape_cast %73 : vector<1x1x1x8x8xbf16> to vector<8x8xbf16>
    %cst_78 = arith.constant dense<0.000000e+00> : vector<64x8xf32>
    %75 = tpu.matmul %72, %74, %cst_78 {dimension_numbers = #tpu.dot_dimension_numbers<[1], [0], [0], [1], [0, 0, 1, 1], [], []>} : vector<64x8xbf16>, vector<8x8xbf16>, vector<64x8xf32> -> vector<64x8xf32>
    %76 = arith.addf %70, %75 : vector<64x8xf32>
    %77 = vector.extract_strided_slice %58 {offsets = [1, 0, 0], sizes = [8, 8, 8], strides = [1, 1, 1]} : vector<10x10x8xbf16> to vector<8x8x8xbf16>
    %78 = vector.shape_cast %77 : vector<8x8x8xbf16> to vector<64x8xbf16>
    %c1_79 = arith.constant 1 : index
    %c1_80 = arith.constant 1 : index
    %c0_81 = arith.constant 0 : index
    %c0_82 = arith.constant 0 : index
    %c0_83 = arith.constant 0 : index
    %79 = vector.load %arg5[%c1_79, %c1_80, %c0_81, %c0_82, %c0_83] : memref<3x3x3x8x8xbf16, #tpu.memory_space<vmem>>, vector<1x1x1x8x8xbf16>
    %80 = vector.shape_cast %79 : vector<1x1x1x8x8xbf16> to vector<8x8xbf16>
    %cst_84 = arith.constant dense<0.000000e+00> : vector<64x8xf32>
    %81 = tpu.matmul %78, %80, %cst_84 {dimension_numbers = #tpu.dot_dimension_numbers<[1], [0], [0], [1], [0, 0, 1, 1], [], []>} : vector<64x8xbf16>, vector<8x8xbf16>, vector<64x8xf32> -> vector<64x8xf32>
    %82 = arith.addf %76, %81 : vector<64x8xf32>
    %83 = vector.extract_strided_slice %58 {offsets = [1, 1, 0], sizes = [8, 8, 8], strides = [1, 1, 1]} : vector<10x10x8xbf16> to vector<8x8x8xbf16>
    %84 = vector.shape_cast %83 : vector<8x8x8xbf16> to vector<64x8xbf16>
    %c1_85 = arith.constant 1 : index
    %c1_86 = arith.constant 1 : index
    %c1_87 = arith.constant 1 : index
    %c0_88 = arith.constant 0 : index
    %c0_89 = arith.constant 0 : index
    %85 = vector.load %arg5[%c1_85, %c1_86, %c1_87, %c0_88, %c0_89] : memref<3x3x3x8x8xbf16, #tpu.memory_space<vmem>>, vector<1x1x1x8x8xbf16>
    %86 = vector.shape_cast %85 : vector<1x1x1x8x8xbf16> to vector<8x8xbf16>
    %cst_90 = arith.constant dense<0.000000e+00> : vector<64x8xf32>
    %87 = tpu.matmul %84, %86, %cst_90 {dimension_numbers = #tpu.dot_dimension_numbers<[1], [0], [0], [1], [0, 0, 1, 1], [], []>} : vector<64x8xbf16>, vector<8x8xbf16>, vector<64x8xf32> -> vector<64x8xf32>
    %88 = arith.addf %82, %87 : vector<64x8xf32>
    %89 = vector.extract_strided_slice %58 {offsets = [1, 2, 0], sizes = [8, 8, 8], strides = [1, 1, 1]} : vector<10x10x8xbf16> to vector<8x8x8xbf16>
    %90 = vector.shape_cast %89 : vector<8x8x8xbf16> to vector<64x8xbf16>
    %c1_91 = arith.constant 1 : index
    %c1_92 = arith.constant 1 : index
    %c2_93 = arith.constant 2 : index
    %c0_94 = arith.constant 0 : index
    %c0_95 = arith.constant 0 : index
    %91 = vector.load %arg5[%c1_91, %c1_92, %c2_93, %c0_94, %c0_95] : memref<3x3x3x8x8xbf16, #tpu.memory_space<vmem>>, vector<1x1x1x8x8xbf16>
    %92 = vector.shape_cast %91 : vector<1x1x1x8x8xbf16> to vector<8x8xbf16>
    %cst_96 = arith.constant dense<0.000000e+00> : vector<64x8xf32>
    %93 = tpu.matmul %90, %92, %cst_96 {dimension_numbers = #tpu.dot_dimension_numbers<[1], [0], [0], [1], [0, 0, 1, 1], [], []>} : vector<64x8xbf16>, vector<8x8xbf16>, vector<64x8xf32> -> vector<64x8xf32>
    %94 = arith.addf %88, %93 : vector<64x8xf32>
    %95 = vector.extract_strided_slice %58 {offsets = [2, 0, 0], sizes = [8, 8, 8], strides = [1, 1, 1]} : vector<10x10x8xbf16> to vector<8x8x8xbf16>
    %96 = vector.shape_cast %95 : vector<8x8x8xbf16> to vector<64x8xbf16>
    %c1_97 = arith.constant 1 : index
    %c2_98 = arith.constant 2 : index
    %c0_99 = arith.constant 0 : index
    %c0_100 = arith.constant 0 : index
    %c0_101 = arith.constant 0 : index
    %97 = vector.load %arg5[%c1_97, %c2_98, %c0_99, %c0_100, %c0_101] : memref<3x3x3x8x8xbf16, #tpu.memory_space<vmem>>, vector<1x1x1x8x8xbf16>
    %98 = vector.shape_cast %97 : vector<1x1x1x8x8xbf16> to vector<8x8xbf16>
    %cst_102 = arith.constant dense<0.000000e+00> : vector<64x8xf32>
    %99 = tpu.matmul %96, %98, %cst_102 {dimension_numbers = #tpu.dot_dimension_numbers<[1], [0], [0], [1], [0, 0, 1, 1], [], []>} : vector<64x8xbf16>, vector<8x8xbf16>, vector<64x8xf32> -> vector<64x8xf32>
    %100 = arith.addf %94, %99 : vector<64x8xf32>
    %101 = vector.extract_strided_slice %58 {offsets = [2, 1, 0], sizes = [8, 8, 8], strides = [1, 1, 1]} : vector<10x10x8xbf16> to vector<8x8x8xbf16>
    %102 = vector.shape_cast %101 : vector<8x8x8xbf16> to vector<64x8xbf16>
    %c1_103 = arith.constant 1 : index
    %c2_104 = arith.constant 2 : index
    %c1_105 = arith.constant 1 : index
    %c0_106 = arith.constant 0 : index
    %c0_107 = arith.constant 0 : index
    %103 = vector.load %arg5[%c1_103, %c2_104, %c1_105, %c0_106, %c0_107] : memref<3x3x3x8x8xbf16, #tpu.memory_space<vmem>>, vector<1x1x1x8x8xbf16>
    %104 = vector.shape_cast %103 : vector<1x1x1x8x8xbf16> to vector<8x8xbf16>
    %cst_108 = arith.constant dense<0.000000e+00> : vector<64x8xf32>
    %105 = tpu.matmul %102, %104, %cst_108 {dimension_numbers = #tpu.dot_dimension_numbers<[1], [0], [0], [1], [0, 0, 1, 1], [], []>} : vector<64x8xbf16>, vector<8x8xbf16>, vector<64x8xf32> -> vector<64x8xf32>
    %106 = arith.addf %100, %105 : vector<64x8xf32>
    %107 = vector.extract_strided_slice %58 {offsets = [2, 2, 0], sizes = [8, 8, 8], strides = [1, 1, 1]} : vector<10x10x8xbf16> to vector<8x8x8xbf16>
    %108 = vector.shape_cast %107 : vector<8x8x8xbf16> to vector<64x8xbf16>
    %c1_109 = arith.constant 1 : index
    %c2_110 = arith.constant 2 : index
    %c2_111 = arith.constant 2 : index
    %c0_112 = arith.constant 0 : index
    %c0_113 = arith.constant 0 : index
    %109 = vector.load %arg5[%c1_109, %c2_110, %c2_111, %c0_112, %c0_113] : memref<3x3x3x8x8xbf16, #tpu.memory_space<vmem>>, vector<1x1x1x8x8xbf16>
    %110 = vector.shape_cast %109 : vector<1x1x1x8x8xbf16> to vector<8x8xbf16>
    %cst_114 = arith.constant dense<0.000000e+00> : vector<64x8xf32>
    %111 = tpu.matmul %108, %110, %cst_114 {dimension_numbers = #tpu.dot_dimension_numbers<[1], [0], [0], [1], [0, 0, 1, 1], [], []>} : vector<64x8xbf16>, vector<8x8xbf16>, vector<64x8xf32> -> vector<64x8xf32>
    %112 = arith.addf %106, %111 : vector<64x8xf32>
    %c0_115 = arith.constant 0 : index
    %c0_116 = arith.constant 0 : index
    %c0_117 = arith.constant 0 : index
    %c0_118 = arith.constant 0 : index
    %c0_119 = arith.constant 0 : index
    %113 = vector.load %arg4[%c0_115, %c0_116, %c0_117, %c0_118, %c0_119] : memref<1x1x10x10x8xbf16, #tpu.memory_space<vmem>>, vector<1x1x10x10x8xbf16>
    %114 = vector.shape_cast %113 : vector<1x1x10x10x8xbf16> to vector<10x10x8xbf16>
    %115 = vector.extract_strided_slice %114 {offsets = [0, 0, 0], sizes = [8, 8, 8], strides = [1, 1, 1]} : vector<10x10x8xbf16> to vector<8x8x8xbf16>
    %116 = vector.shape_cast %115 : vector<8x8x8xbf16> to vector<64x8xbf16>
    %c2_120 = arith.constant 2 : index
    %c0_121 = arith.constant 0 : index
    %c0_122 = arith.constant 0 : index
    %c0_123 = arith.constant 0 : index
    %c0_124 = arith.constant 0 : index
    %117 = vector.load %arg5[%c2_120, %c0_121, %c0_122, %c0_123, %c0_124] : memref<3x3x3x8x8xbf16, #tpu.memory_space<vmem>>, vector<1x1x1x8x8xbf16>
    %118 = vector.shape_cast %117 : vector<1x1x1x8x8xbf16> to vector<8x8xbf16>
    %cst_125 = arith.constant dense<0.000000e+00> : vector<64x8xf32>
    %119 = tpu.matmul %116, %118, %cst_125 {dimension_numbers = #tpu.dot_dimension_numbers<[1], [0], [0], [1], [0, 0, 1, 1], [], []>} : vector<64x8xbf16>, vector<8x8xbf16>, vector<64x8xf32> -> vector<64x8xf32>
    %120 = arith.addf %112, %119 : vector<64x8xf32>
    %121 = vector.extract_strided_slice %114 {offsets = [0, 1, 0], sizes = [8, 8, 8], strides = [1, 1, 1]} : vector<10x10x8xbf16> to vector<8x8x8xbf16>
    %122 = vector.shape_cast %121 : vector<8x8x8xbf16> to vector<64x8xbf16>
    %c2_126 = arith.constant 2 : index
    %c0_127 = arith.constant 0 : index
    %c1_128 = arith.constant 1 : index
    %c0_129 = arith.constant 0 : index
    %c0_130 = arith.constant 0 : index
    %123 = vector.load %arg5[%c2_126, %c0_127, %c1_128, %c0_129, %c0_130] : memref<3x3x3x8x8xbf16, #tpu.memory_space<vmem>>, vector<1x1x1x8x8xbf16>
    %124 = vector.shape_cast %123 : vector<1x1x1x8x8xbf16> to vector<8x8xbf16>
    %cst_131 = arith.constant dense<0.000000e+00> : vector<64x8xf32>
    %125 = tpu.matmul %122, %124, %cst_131 {dimension_numbers = #tpu.dot_dimension_numbers<[1], [0], [0], [1], [0, 0, 1, 1], [], []>} : vector<64x8xbf16>, vector<8x8xbf16>, vector<64x8xf32> -> vector<64x8xf32>
    %126 = arith.addf %120, %125 : vector<64x8xf32>
    %127 = vector.extract_strided_slice %114 {offsets = [0, 2, 0], sizes = [8, 8, 8], strides = [1, 1, 1]} : vector<10x10x8xbf16> to vector<8x8x8xbf16>
    %128 = vector.shape_cast %127 : vector<8x8x8xbf16> to vector<64x8xbf16>
    %c2_132 = arith.constant 2 : index
    %c0_133 = arith.constant 0 : index
    %c2_134 = arith.constant 2 : index
    %c0_135 = arith.constant 0 : index
    %c0_136 = arith.constant 0 : index
    %129 = vector.load %arg5[%c2_132, %c0_133, %c2_134, %c0_135, %c0_136] : memref<3x3x3x8x8xbf16, #tpu.memory_space<vmem>>, vector<1x1x1x8x8xbf16>
    %130 = vector.shape_cast %129 : vector<1x1x1x8x8xbf16> to vector<8x8xbf16>
    %cst_137 = arith.constant dense<0.000000e+00> : vector<64x8xf32>
    %131 = tpu.matmul %128, %130, %cst_137 {dimension_numbers = #tpu.dot_dimension_numbers<[1], [0], [0], [1], [0, 0, 1, 1], [], []>} : vector<64x8xbf16>, vector<8x8xbf16>, vector<64x8xf32> -> vector<64x8xf32>
    %132 = arith.addf %126, %131 : vector<64x8xf32>
    %133 = vector.extract_strided_slice %114 {offsets = [1, 0, 0], sizes = [8, 8, 8], strides = [1, 1, 1]} : vector<10x10x8xbf16> to vector<8x8x8xbf16>
    %134 = vector.shape_cast %133 : vector<8x8x8xbf16> to vector<64x8xbf16>
    %c2_138 = arith.constant 2 : index
    %c1_139 = arith.constant 1 : index
    %c0_140 = arith.constant 0 : index
    %c0_141 = arith.constant 0 : index
    %c0_142 = arith.constant 0 : index
    %135 = vector.load %arg5[%c2_138, %c1_139, %c0_140, %c0_141, %c0_142] : memref<3x3x3x8x8xbf16, #tpu.memory_space<vmem>>, vector<1x1x1x8x8xbf16>
    %136 = vector.shape_cast %135 : vector<1x1x1x8x8xbf16> to vector<8x8xbf16>
    %cst_143 = arith.constant dense<0.000000e+00> : vector<64x8xf32>
    %137 = tpu.matmul %134, %136, %cst_143 {dimension_numbers = #tpu.dot_dimension_numbers<[1], [0], [0], [1], [0, 0, 1, 1], [], []>} : vector<64x8xbf16>, vector<8x8xbf16>, vector<64x8xf32> -> vector<64x8xf32>
    %138 = arith.addf %132, %137 : vector<64x8xf32>
    %139 = vector.extract_strided_slice %114 {offsets = [1, 1, 0], sizes = [8, 8, 8], strides = [1, 1, 1]} : vector<10x10x8xbf16> to vector<8x8x8xbf16>
    %140 = vector.shape_cast %139 : vector<8x8x8xbf16> to vector<64x8xbf16>
    %c2_144 = arith.constant 2 : index
    %c1_145 = arith.constant 1 : index
    %c1_146 = arith.constant 1 : index
    %c0_147 = arith.constant 0 : index
    %c0_148 = arith.constant 0 : index
    %141 = vector.load %arg5[%c2_144, %c1_145, %c1_146, %c0_147, %c0_148] : memref<3x3x3x8x8xbf16, #tpu.memory_space<vmem>>, vector<1x1x1x8x8xbf16>
    %142 = vector.shape_cast %141 : vector<1x1x1x8x8xbf16> to vector<8x8xbf16>
    %cst_149 = arith.constant dense<0.000000e+00> : vector<64x8xf32>
    %143 = tpu.matmul %140, %142, %cst_149 {dimension_numbers = #tpu.dot_dimension_numbers<[1], [0], [0], [1], [0, 0, 1, 1], [], []>} : vector<64x8xbf16>, vector<8x8xbf16>, vector<64x8xf32> -> vector<64x8xf32>
    %144 = arith.addf %138, %143 : vector<64x8xf32>
    %145 = vector.extract_strided_slice %114 {offsets = [1, 2, 0], sizes = [8, 8, 8], strides = [1, 1, 1]} : vector<10x10x8xbf16> to vector<8x8x8xbf16>
    %146 = vector.shape_cast %145 : vector<8x8x8xbf16> to vector<64x8xbf16>
    %c2_150 = arith.constant 2 : index
    %c1_151 = arith.constant 1 : index
    %c2_152 = arith.constant 2 : index
    %c0_153 = arith.constant 0 : index
    %c0_154 = arith.constant 0 : index
    %147 = vector.load %arg5[%c2_150, %c1_151, %c2_152, %c0_153, %c0_154] : memref<3x3x3x8x8xbf16, #tpu.memory_space<vmem>>, vector<1x1x1x8x8xbf16>
    %148 = vector.shape_cast %147 : vector<1x1x1x8x8xbf16> to vector<8x8xbf16>
    %cst_155 = arith.constant dense<0.000000e+00> : vector<64x8xf32>
    %149 = tpu.matmul %146, %148, %cst_155 {dimension_numbers = #tpu.dot_dimension_numbers<[1], [0], [0], [1], [0, 0, 1, 1], [], []>} : vector<64x8xbf16>, vector<8x8xbf16>, vector<64x8xf32> -> vector<64x8xf32>
    %150 = arith.addf %144, %149 : vector<64x8xf32>
    %151 = vector.extract_strided_slice %114 {offsets = [2, 0, 0], sizes = [8, 8, 8], strides = [1, 1, 1]} : vector<10x10x8xbf16> to vector<8x8x8xbf16>
    %152 = vector.shape_cast %151 : vector<8x8x8xbf16> to vector<64x8xbf16>
    %c2_156 = arith.constant 2 : index
    %c2_157 = arith.constant 2 : index
    %c0_158 = arith.constant 0 : index
    %c0_159 = arith.constant 0 : index
    %c0_160 = arith.constant 0 : index
    %153 = vector.load %arg5[%c2_156, %c2_157, %c0_158, %c0_159, %c0_160] : memref<3x3x3x8x8xbf16, #tpu.memory_space<vmem>>, vector<1x1x1x8x8xbf16>
    %154 = vector.shape_cast %153 : vector<1x1x1x8x8xbf16> to vector<8x8xbf16>
    %cst_161 = arith.constant dense<0.000000e+00> : vector<64x8xf32>
    %155 = tpu.matmul %152, %154, %cst_161 {dimension_numbers = #tpu.dot_dimension_numbers<[1], [0], [0], [1], [0, 0, 1, 1], [], []>} : vector<64x8xbf16>, vector<8x8xbf16>, vector<64x8xf32> -> vector<64x8xf32>
    %156 = arith.addf %150, %155 : vector<64x8xf32>
    %157 = vector.extract_strided_slice %114 {offsets = [2, 1, 0], sizes = [8, 8, 8], strides = [1, 1, 1]} : vector<10x10x8xbf16> to vector<8x8x8xbf16>
    %158 = vector.shape_cast %157 : vector<8x8x8xbf16> to vector<64x8xbf16>
    %c2_162 = arith.constant 2 : index
    %c2_163 = arith.constant 2 : index
    %c1_164 = arith.constant 1 : index
    %c0_165 = arith.constant 0 : index
    %c0_166 = arith.constant 0 : index
    %159 = vector.load %arg5[%c2_162, %c2_163, %c1_164, %c0_165, %c0_166] : memref<3x3x3x8x8xbf16, #tpu.memory_space<vmem>>, vector<1x1x1x8x8xbf16>
    %160 = vector.shape_cast %159 : vector<1x1x1x8x8xbf16> to vector<8x8xbf16>
    %cst_167 = arith.constant dense<0.000000e+00> : vector<64x8xf32>
    %161 = tpu.matmul %158, %160, %cst_167 {dimension_numbers = #tpu.dot_dimension_numbers<[1], [0], [0], [1], [0, 0, 1, 1], [], []>} : vector<64x8xbf16>, vector<8x8xbf16>, vector<64x8xf32> -> vector<64x8xf32>
    %162 = arith.addf %156, %161 : vector<64x8xf32>
    %163 = vector.extract_strided_slice %114 {offsets = [2, 2, 0], sizes = [8, 8, 8], strides = [1, 1, 1]} : vector<10x10x8xbf16> to vector<8x8x8xbf16>
    %164 = vector.shape_cast %163 : vector<8x8x8xbf16> to vector<64x8xbf16>
    %c2_168 = arith.constant 2 : index
    %c2_169 = arith.constant 2 : index
    %c2_170 = arith.constant 2 : index
    %c0_171 = arith.constant 0 : index
    %c0_172 = arith.constant 0 : index
    %165 = vector.load %arg5[%c2_168, %c2_169, %c2_170, %c0_171, %c0_172] : memref<3x3x3x8x8xbf16, #tpu.memory_space<vmem>>, vector<1x1x1x8x8xbf16>
    %166 = vector.shape_cast %165 : vector<1x1x1x8x8xbf16> to vector<8x8xbf16>
    %cst_173 = arith.constant dense<0.000000e+00> : vector<64x8xf32>
    %167 = tpu.matmul %164, %166, %cst_173 {dimension_numbers = #tpu.dot_dimension_numbers<[1], [0], [0], [1], [0, 0, 1, 1], [], []>} : vector<64x8xbf16>, vector<8x8xbf16>, vector<64x8xf32> -> vector<64x8xf32>
    %168 = arith.addf %162, %167 : vector<64x8xf32>
    %c0_174 = arith.constant 0 : index
    %c0_175 = arith.constant 0 : index
    %169 = vector.load %arg6[%c0_174, %c0_175] : memref<1x8xf32, #tpu.memory_space<vmem>>, vector<1x8xf32>
    %170 = vector.broadcast %169 : vector<1x8xf32> to vector<64x8xf32>
    %171 = arith.addf %168, %170 : vector<64x8xf32>
    %172 = vector.shape_cast %171 : vector<64x8xf32> to vector<1x1x8x8x8xf32>
    %173 = arith.truncf %172 : vector<1x1x8x8x8xf32> to vector<1x1x8x8x8xbf16>
    %c0_176 = arith.constant 0 : index
    %c0_177 = arith.constant 0 : index
    %c0_178 = arith.constant 0 : index
    %c0_179 = arith.constant 0 : index
    %c0_180 = arith.constant 0 : index
    %174 = vector.load %arg7[%c0_176, %c0_177, %c0_178, %c0_179, %c0_180] : memref<1x1x8x8x8xbf16, #tpu.memory_space<vmem>>, vector<1x1x8x8x8xbf16>
    tpu.vector_store %arg7[%c0_176, %c0_177, %c0_178, %c0_179, %c0_180], %173 {strides = array<i32>} : memref<1x1x8x8x8xbf16, #tpu.memory_space<vmem>>, vector<1x1x8x8x8xbf16>,
    return
  }
  func.func @transform_0(%arg0: i32, %arg1: i32) -> (i32, i32, i32, i32, i32) {
    %c0_i32 = arith.constant 0 : i32
    %0 = arith.addi %arg1, %c0_i32 : i32
    %c0_i32_0 = arith.constant 0 : i32
    %c0_i32_1 = arith.constant 0 : i32
    %c0_i32_2 = arith.constant 0 : i32
    %c0_i32_3 = arith.constant 0 : i32
    return %arg0, %0, %c0_i32_0, %c0_i32_1, %c0_i32_2 : i32, i32, i32, i32, i32
  }
  func.func @transform_1(%arg0: i32, %arg1: i32) -> (i32, i32, i32, i32, i32) {
    %c1_i32 = arith.constant 1 : i32
    %0 = arith.addi %arg1, %c1_i32 : i32
    %c0_i32 = arith.constant 0 : i32
    %c0_i32_0 = arith.constant 0 : i32
    %c0_i32_1 = arith.constant 0 : i32
    %c0_i32_2 = arith.constant 0 : i32
    return %arg0, %0, %c0_i32, %c0_i32_0, %c0_i32_1 : i32, i32, i32, i32, i32
  }
  func.func @transform_2(%arg0: i32, %arg1: i32) -> (i32, i32, i32, i32, i32) {
    %c2_i32 = arith.constant 2 : i32
    %0 = arith.addi %arg1, %c2_i32 : i32
    %c0_i32 = arith.constant 0 : i32
    %c0_i32_0 = arith.constant 0 : i32
    %c0_i32_1 = arith.constant 0 : i32
    %c0_i32_2 = arith.constant 0 : i32
    return %arg0, %0, %c0_i32, %c0_i32_0, %c0_i32_1 : i32, i32, i32, i32, i32
  }
  func.func @transform_3(%arg0: i32, %arg1: i32) -> (i32, i32, i32, i32, i32) {
    %c0_i32 = arith.constant 0 : i32
    %c0_i32_0 = arith.constant 0 : i32
    %c0_i32_1 = arith.constant 0 : i32
    %c0_i32_2 = arith.constant 0 : i32
    %c0_i32_3 = arith.constant 0 : i32
    %c0_i32_4 = arith.constant 0 : i32
    return %c0_i32, %c0_i32_0, %c0_i32_1, %c0_i32_2, %c0_i32_3 : i32, i32, i32, i32, i32
  }
  func.func @transform_4(%arg0: i32, %arg1: i32) -> (i32, i32) {
    %c0_i32 = arith.constant 0 : i32
    %c0_i32_0 = arith.constant 0 : i32
    %c0_i32_1 = arith.constant 0 : i32
    return %c0_i32, %c0_i32_0 : i32, i32
  }
  func.func @transform_5(%arg0: i32, %arg1: i32) -> (i32, i32, i32, i32, i32) {
    %c0_i32 = arith.constant 0 : i32
    %c0_i32_0 = arith.constant 0 : i32
    %c0_i32_1 = arith.constant 0 : i32
    %c0_i32_2 = arith.constant 0 : i32
    return %arg0, %arg1, %c0_i32, %c0_i32_0, %c0_i32_1 : i32, i32, i32, i32, i32
  }
}

</mosaic_0001>

<llo_original>
// kernel: tile.7
$region0: #{tile.7}
  %s0 = inlined_call_operand.vmem [shape: f32[8,8], index: 0, kind: input, shape index: {}]
  %s1 = inlined_call_operand.vmem [shape: f32[1,64], index: 1, kind: output, shape index: {}]
  $region1: #{tile.7} parent=0
    #allocation0 [shape = 'u8[4096]{0}', space=vmem, size = 0x1000, scoped, tag = 'scoped mem for output reshape']
    %v2 = vld [vmem:[%s0] sm:$0x1]
    %vm3 = vcmask 64512
    %4 = vst.msk [vmem:[#allocation0] sm:$0x1] %vm3, %v2
    %s5 = scalar_lea.vmem %s0, 7
    %v6 = vld [vmem:[%s5] sm:$0x1]
    %7 = vrot.lane.b32.xlu0 %v6, 56
    %v8 = vpop.permute.xlu0 %7
    %vm9 = vcmask 523712
    %10 = vst.msk [vmem:[#allocation0] sm:$0x1] %vm9, %v8
    %s11 = scalar_lea.vmem %s0, 6
    %v12 = vld [vmem:[%s11] sm:$0x1]
    %13 = vrot.lane.b32.xlu0 %v12, 48
    %v14 = vpop.permute.xlu0 %13
    %vm15 = vcmask 458112
    %16 = vst.msk [vmem:[#allocation0] sm:$0x1] %vm15, %v14
    %s17 = scalar_lea.vmem %s0, 5
    %v18 = vld [vmem:[%s17] sm:$0x1]
    %19 = vrot.lane.b32.xlu0 %v18, 40
    %v20 = vpop.permute.xlu0 %19
    %vm21 = vcmask 392512
    %22 = vst.msk [vmem:[#allocation0] sm:$0x1] %vm21, %v20
    %s23 = scalar_lea.vmem %s0, 4
    %v24 = vld [vmem:[%s23] sm:$0x1]
    %25 = vrot.lane.b32.xlu0 %v24, 32
    %v26 = vpop.permute.xlu0 %25
    %vm27 = vcmask 326912
    %28 = vst.msk [vmem:[#allocation0] sm:$0x1] %vm27, %v26
    %s29 = scalar_lea.vmem %s0, 3
    %v30 = vld [vmem:[%s29] sm:$0x1]
    %31 = vrot.lane.b32.xlu0 %v30, 24
    %v32 = vpop.permute.xlu0 %31
    %vm33 = vcmask 261312
    %34 = vst.msk [vmem:[#allocation0] sm:$0x1] %vm33, %v32
    %s35 = scalar_lea.vmem %s0, 2
    %v36 = vld [vmem:[%s35] sm:$0x1]
    %37 = vrot.lane.b32.xlu0 %v36, 16
    %v38 = vpop.permute.xlu0 %37
    %vm39 = vcmask 195712
    %40 = vst.msk [vmem:[#allocation0] sm:$0x1] %vm39, %v38
    %s41 = scalar_lea.vmem %s0, 1
    %v42 = vld [vmem:[%s41] sm:$0x1]
    %43 = vrot.lane.b32.xlu0 %v42, 8
    %v44 = vpop.permute.xlu0 %43
    %vm45 = vcmask 130112
    %46 = vst.msk [vmem:[#allocation0] sm:$0x1] %vm45, %v44
    %s48 = ssub.s32 2, 1
    %v49 = vld [vmem:[#allocation0] sm:%s48]
    %s51 = ssub.s32 2, 1
    %52 = vst [vmem:[%s1] sm:%s51] %v49

// kernel: tile.6
$region0: #{tile.6}
  #allocation0 [shape = 's32[1]{0}', space=sflag, size = 0x4, scoped, tag = 'scoped memory for tile.6']
  %s0 = inlined_call_operand.vmem [shape: f32[8], index: 0, kind: input, shape index: {}]
  %s1 = inlined_call_operand.vmem [shape: f32[8,8], index: 1, kind: output, shape index: {}]
  // Predicated region
  $region2: #{tile.6} parent=0 // pred_check
    _
  $region3: #{tile.6} parent=0 // pred_check_branch
    %3 = sbr.rel (0) target = $region5
  $region4: #{tile.6} parent=0 // pred_region
    _
  $region5: #{tile.6} parent=0 // pred_fallthru
    _
  %v4 = vld [vmem:[%s0] ss:$0 sm:$0xff]
  %5 = vst [vmem:[%s1] sm:$0xff] %v4

// kernel: _lambda_.7
$region0: #{_lambda_.7}
  #allocation0 [shape = 'u32[]', space=smem, size = 0x4, offset = 0x4, fixed_abs, tag = 'smem constant byte address 0x4 - core index']
  #allocation1 [shape = 'u32[72,128]{1,0:T(1,128)}', space=vmem, size = 0x9000, scoped, tag = 'internal scratch']
  #allocation2 [shape = 'f32[128,64]{1,0:T(8,128)}', space=vmem, size = 0x10000, scoped, tag = 'scratch operand']
  %s0 = inlined_call_operand.vmem [shape: bf16[128,8], index: 0, kind: input, shape index: {}]
  %s1 = inlined_call_operand.vmem [shape: bf16[8,64], index: 1, kind: input, shape index: {}]
  %s2 = inlined_call_operand.vmem [shape: f32[1,64], index: 2, kind: input, shape index: {}]
  %s3 = inlined_call_operand.vmem [shape: bf16[128,64], index: 3, kind: output, shape index: {}]
  %s4 = sld [smem:[#allocation0]]
  $region30: #{_lambda_.7} parent=0
    _
  %s6 = ssub.s32 1, %s4
  %s7 = scalar_select 0, %s6, %s4
  // Predicated region
  $region2: #{_lambda_.7} parent=0 // pred_check
    _
  $region3: #{_lambda_.7} parent=0 // pred_check_branch
    %9 = sbr.rel (0) target = $region5
  $region4: #{_lambda_.7} parent=0 // pred_region
    _
  $region5: #{_lambda_.7} parent=0 // pred_fallthru
    _
  // Predicated region
  $region6: #{_lambda_.7} parent=0 // pred_check
    _
  $region7: #{_lambda_.7} parent=0 // pred_check_branch
    %11 = sbr.rel (0) target = $region9
  $region8: #{_lambda_.7} parent=0 // pred_region
    _
  $region9: #{_lambda_.7} parent=0 // pred_fallthru
    _
  // Predicated region
  $region10: #{_lambda_.7} parent=0 // pred_check
    _
  $region11: #{_lambda_.7} parent=0 // pred_check_branch
    %13 = sbr.rel (0) target = $region13
  $region12: #{_lambda_.7} parent=0 // pred_region
    _
  $region13: #{_lambda_.7} parent=0 // pred_fallthru
    _
  %p15 = scmp.eq.s32.totalorder 0, 0
  // Predicated region
  $region14: #{_lambda_.7} parent=0 // pred_check
    %p16 = pneg %p15
  $region15: #{_lambda_.7} parent=0 // pred_check_branch
    %18 = sbr.rel (%p16) target = $region17
  $region16: #{_lambda_.7} parent=0 // pred_region
    %vm19 = vcmask 523264
    %20 = vst.msk [vmem:[#allocation2] sm:$0xff] %vm19, 0.0
    %21 = vst.msk [vmem:[#allocation2 + $0x8] sm:$0xff] %vm19, 0.0
    %22 = vst.msk [vmem:[#allocation2 + $0x10] sm:$0xff] %vm19, 0.0
    %23 = vst.msk [vmem:[#allocation2 + $0x18] sm:$0xff] %vm19, 0.0
    %24 = vst.msk [vmem:[#allocation2 + $0x20] sm:$0xff] %vm19, 0.0
    %25 = vst.msk [vmem:[#allocation2 + $0x28] sm:$0xff] %vm19, 0.0
    %26 = vst.msk [vmem:[#allocation2 + $0x30] sm:$0xff] %vm19, 0.0
    %27 = vst.msk [vmem:[#allocation2 + $0x38] sm:$0xff] %vm19, 0.0
    %28 = vst.msk [vmem:[#allocation2 + $0x40] sm:$0xff] %vm19, 0.0
    %29 = vst.msk [vmem:[#allocation2 + $0x48] sm:$0xff] %vm19, 0.0
    %30 = vst.msk [vmem:[#allocation2 + $0x50] sm:$0xff] %vm19, 0.0
    %31 = vst.msk [vmem:[#allocation2 + $0x58] sm:$0xff] %vm19, 0.0
    %32 = vst.msk [vmem:[#allocation2 + $0x60] sm:$0xff] %vm19, 0.0
    %33 = vst.msk [vmem:[#allocation2 + $0x68] sm:$0xff] %vm19, 0.0
    %34 = vst.msk [vmem:[#allocation2 + $0x70] sm:$0xff] %vm19, 0.0
    %35 = vst.msk [vmem:[#allocation2 + $0x78] sm:$0xff] %vm19, 0.0
  $region17: #{_lambda_.7} parent=0 // pred_fallthru
    _
  %v36 = vld [vmem:[#allocation2] sm:$0xff]
  %v37 = vld [vmem:[#allocation2 + $0x8] sm:$0xff]
  %v38 = vld [vmem:[#allocation2 + $0x10] sm:$0xff]
  %v39 = vld [vmem:[#allocation2 + $0x18] sm:$0xff]
  %v40 = vld [vmem:[#allocation2 + $0x20] sm:$0xff]
  %v41 = vld [vmem:[#allocation2 + $0x28] sm:$0xff]
  %v42 = vld [vmem:[#allocation2 + $0x30] sm:$0xff]
  %v43 = vld [vmem:[#allocation2 + $0x38] sm:$0xff]
  %v44 = vld [vmem:[#allocation2 + $0x40] sm:$0xff]
  %v45 = vld [vmem:[#allocation2 + $0x48] sm:$0xff]
  %v46 = vld [vmem:[#allocation2 + $0x50] sm:$0xff]
  %v47 = vld [vmem:[#allocation2 + $0x58] sm:$0xff]
  %v48 = vld [vmem:[#allocation2 + $0x60] sm:$0xff]
  %v49 = vld [vmem:[#allocation2 + $0x68] sm:$0xff]
  %v50 = vld [vmem:[#allocation2 + $0x70] sm:$0xff]
  %v51 = vld [vmem:[#allocation2 + $0x78] sm:$0xff]
  %v52 = vld [vmem:[%s0] sm:$0xf]
  %v53 = vld [vmem:[%s0 + $0x4] sm:$0xf]
  %v54 = vld [vmem:[%s0 + $0x8] sm:$0xf]
  %v55 = vld [vmem:[%s0 + $0xc] sm:$0xf]
  %v56 = vld [vmem:[%s0 + $0x10] sm:$0xf]
  %v57 = vld [vmem:[%s0 + $0x14] sm:$0xf]
  %v58 = vld [vmem:[%s0 + $0x18] sm:$0xf]
  %v59 = vld [vmem:[%s0 + $0x1c] sm:$0xf]
  %v60 = vld [vmem:[%s0 + $0x20] sm:$0xf]
  %v61 = vld [vmem:[%s0 + $0x24] sm:$0xf]
  %v62 = vld [vmem:[%s0 + $0x28] sm:$0xf]
  %v63 = vld [vmem:[%s0 + $0x2c] sm:$0xf]
  %v64 = vld [vmem:[%s0 + $0x30] sm:$0xf]
  %v65 = vld [vmem:[%s0 + $0x34] sm:$0xf]
  %v66 = vld [vmem:[%s0 + $0x38] sm:$0xf]
  %v67 = vld [vmem:[%s0 + $0x3c] sm:$0xf]
  %v68 = vld [vmem:[%s1] sm:$0xf]
  %v85 = vunpack.c.l.b16 %v52
  %v86 = vunpack.c.l.b16 %v53
  %v87 = vunpack.c.l.b16 %v54
  %v88 = vunpack.c.l.b16 %v55
  %v89 = vunpack.c.l.b16 %v56
  %v90 = vunpack.c.l.b16 %v57
  %v91 = vunpack.c.l.b16 %v58
  %v92 = vunpack.c.l.b16 %v59
  %v93 = vunpack.c.l.b16 %v60
  %v94 = vunpack.c.l.b16 %v61
  %v95 = vunpack.c.l.b16 %v62
  %v96 = vunpack.c.l.b16 %v63
  %v97 = vunpack.c.l.b16 %v64
  %v98 = vunpack.c.l.b16 %v65
  %v99 = vunpack.c.l.b16 %v66
  %v100 = vunpack.c.l.b16 %v67
  %v101 = vpack.c.b16 %v86, %v85
  %v102 = vpack.c.b16 %v88, %v87
  %v103 = vpack.c.b16 %v90, %v89
  %v104 = vpack.c.b16 %v92, %v91
  %v105 = vpack.c.b16 %v94, %v93
  %v106 = vpack.c.b16 %v96, %v95
  %v107 = vpack.c.b16 %v98, %v97
  %v108 = vpack.c.b16 %v100, %v99
  %vm109 = vcmask 64512
  %v111 = vsel %vm109, %v101, 0
  %v114 = vsel %vm109, %v102, 0
  %v117 = vsel %vm109, %v103, 0
  %v120 = vsel %vm109, %v104, 0
  %v123 = vsel %vm109, %v105, 0
  %v126 = vsel %vm109, %v106, 0
  %v129 = vsel %vm109, %v107, 0
  %v132 = vsel %vm109, %v108, 0
  %vm134 = vcmask 1043456
  %v136 = vsel %vm134, %v68, 0
  %138 = vmatpush.bf16.msra.mxu0 0
  %139 = vmatpush.bf16.msra.mxu0 0
  %140 = vmatpush.bf16.msra.mxu0 0
  %141 = vmatpush.bf16.msra.mxu0 0
  %142 = vmatpush.bf16.msra.mxu0 0
  %143 = vmatpush.bf16.msra.mxu0 0
  %144 = vmatpush.bf16.msra.mxu0 0
  %145 = vmatpush.bf16.msra.mxu0 %v136
  %146 = vmatmul.bf16.gmra.mxu0 %v111
  %v147 = vpop.f32.mrf.mxu0
  %v148 = vadd.f32 0.0, %v147
  %v149 = vpop.f32.mrf.mxu0
  %v150 = vadd.f32 0.0, %v149
  %151 = vmatmul.bf16.gmra.mxu0 %v114
  %v152 = vpop.f32.mrf.mxu0
  %v153 = vadd.f32 0.0, %v152
  %v154 = vpop.f32.mrf.mxu0
  %v155 = vadd.f32 0.0, %v154
  %156 = vmatmul.bf16.gmra.mxu0 %v117
  %v157 = vpop.f32.mrf.mxu0
  %v158 = vadd.f32 0.0, %v157
  %v159 = vpop.f32.mrf.mxu0
  %v160 = vadd.f32 0.0, %v159
  %161 = vmatmul.bf16.gmra.mxu0 %v120
  %v162 = vpop.f32.mrf.mxu0
  %v163 = vadd.f32 0.0, %v162
  %v164 = vpop.f32.mrf.mxu0
  %v165 = vadd.f32 0.0, %v164
  %166 = vmatmul.bf16.gmra.mxu0 %v123
  %v167 = vpop.f32.mrf.mxu0
  %v168 = vadd.f32 0.0, %v167
  %v169 = vpop.f32.mrf.mxu0
  %v170 = vadd.f32 0.0, %v169
  %171 = vmatmul.bf16.gmra.mxu0 %v126
  %v172 = vpop.f32.mrf.mxu0
  %v173 = vadd.f32 0.0, %v172
  %v174 = vpop.f32.mrf.mxu0
  %v175 = vadd.f32 0.0, %v174
  %176 = vmatmul.bf16.gmra.mxu0 %v129
  %v177 = vpop.f32.mrf.mxu0
  %v178 = vadd.f32 0.0, %v177
  %v179 = vpop.f32.mrf.mxu0
  %v180 = vadd.f32 0.0, %v179
  %181 = vmatmul.bf16.gmra.mxu0 %v132
  %v182 = vpop.f32.mrf.mxu0
  %v183 = vadd.f32 0.0, %v182
  %v184 = vpop.f32.mrf.mxu0
  %v185 = vadd.f32 0.0, %v184
  %186 = vdwg.mxu0
  %v187 = vadd.f32 %v36, %v148
  %v188 = vadd.f32 %v37, %v150
  %v189 = vadd.f32 %v38, %v153
  %v190 = vadd.f32 %v39, %v155
  %v191 = vadd.f32 %v40, %v158
  %v192 = vadd.f32 %v41, %v160
  %v193 = vadd.f32 %v42, %v163
  %v194 = vadd.f32 %v43, %v165
  %v195 = vadd.f32 %v44, %v168
  %v196 = vadd.f32 %v45, %v170
  %v197 = vadd.f32 %v46, %v173
  %v198 = vadd.f32 %v47, %v175
  %v199 = vadd.f32 %v48, %v178
  %v200 = vadd.f32 %v49, %v180
  %v201 = vadd.f32 %v50, %v183
  %v202 = vadd.f32 %v51, %v185
  %vm203 = vcmask 523264
  %204 = vst.msk [vmem:[#allocation2] sm:$0xff] %vm203, %v187
  %205 = vst.msk [vmem:[#allocation2 + $0x8] sm:$0xff] %vm203, %v188
  %206 = vst.msk [vmem:[#allocation2 + $0x10] sm:$0xff] %vm203, %v189
  %207 = vst.msk [vmem:[#allocation2 + $0x18] sm:$0xff] %vm203, %v190
  %208 = vst.msk [vmem:[#allocation2 + $0x20] sm:$0xff] %vm203, %v191
  %209 = vst.msk [vmem:[#allocation2 + $0x28] sm:$0xff] %vm203, %v192
  %210 = vst.msk [vmem:[#allocation2 + $0x30] sm:$0xff] %vm203, %v193
  %211 = vst.msk [vmem:[#allocation2 + $0x38] sm:$0xff] %vm203, %v194
  %212 = vst.msk [vmem:[#allocation2 + $0x40] sm:$0xff] %vm203, %v195
  %213 = vst.msk [vmem:[#allocation2 + $0x48] sm:$0xff] %vm203, %v196
  %214 = vst.msk [vmem:[#allocation2 + $0x50] sm:$0xff] %vm203, %v197
  %215 = vst.msk [vmem:[#allocation2 + $0x58] sm:$0xff] %vm203, %v198
  %216 = vst.msk [vmem:[#allocation2 + $0x60] sm:$0xff] %vm203, %v199
  %217 = vst.msk [vmem:[#allocation2 + $0x68] sm:$0xff] %vm203, %v200
  %218 = vst.msk [vmem:[#allocation2 + $0x70] sm:$0xff] %vm203, %v201
  %219 = vst.msk [vmem:[#allocation2 + $0x78] sm:$0xff] %vm203, %v202
  // Predicated region
  $region18: #{_lambda_.7} parent=0 // pred_check
    %p220 = pneg %p15
  $region19: #{_lambda_.7} parent=0 // pred_check_branch
    %222 = sbr.rel (%p220) target = $region21
  $region20: #{_lambda_.7} parent=0 // pred_region
    %v223 = vld [vmem:[#allocation2] sm:$0xff]
    %v224 = vld [vmem:[#allocation2 + $0x8] sm:$0xff]
    %v225 = vld [vmem:[#allocation2 + $0x10] sm:$0xff]
    %v226 = vld [vmem:[#allocation2 + $0x18] sm:$0xff]
    %v227 = vld [vmem:[#allocation2 + $0x20] sm:$0xff]
    %v228 = vld [vmem:[#allocation2 + $0x28] sm:$0xff]
    %v229 = vld [vmem:[#allocation2 + $0x30] sm:$0xff]
    %v230 = vld [vmem:[#allocation2 + $0x38] sm:$0xff]
    %v231 = vld [vmem:[#allocation2 + $0x40] sm:$0xff]
    %v232 = vld [vmem:[#allocation2 + $0x48] sm:$0xff]
    %v233 = vld [vmem:[#allocation2 + $0x50] sm:$0xff]
    %v234 = vld [vmem:[#allocation2 + $0x58] sm:$0xff]
    %v235 = vld [vmem:[#allocation2 + $0x60] sm:$0xff]
    %v236 = vld [vmem:[#allocation2 + $0x68] sm:$0xff]
    %v237 = vld [vmem:[#allocation2 + $0x70] sm:$0xff]
    %v238 = vld [vmem:[#allocation2 + $0x78] sm:$0xff]
    %v239 = vld [vmem:[%s2] sm:$0x1]
    %v241 = vperm.slane %v239, 0
    %v243 = vadd.f32 %v223, %v241
    %v244 = vadd.f32 %v224, %v241
    %v245 = vadd.f32 %v225, %v241
    %v246 = vadd.f32 %v226, %v241
    %v247 = vadd.f32 %v227, %v241
    %v248 = vadd.f32 %v228, %v241
    %v249 = vadd.f32 %v229, %v241
    %v250 = vadd.f32 %v230, %v241
    %v251 = vadd.f32 %v231, %v241
    %v252 = vadd.f32 %v232, %v241
    %v253 = vadd.f32 %v233, %v241
    %v254 = vadd.f32 %v234, %v241
    %v255 = vadd.f32 %v235, %v241
    %v256 = vadd.f32 %v236, %v241
    %v257 = vadd.f32 %v237, %v241
    %v258 = vadd.f32 %v238, %v241
    %v259 = vpack.c.bf16 %v243, %v243
    %v260 = vpack.c.bf16 %v244, %v244
    %v261 = vpack.c.bf16 %v245, %v245
    %v262 = vpack.c.bf16 %v246, %v246
    %v263 = vpack.c.bf16 %v247, %v247
    %v264 = vpack.c.bf16 %v248, %v248
    %v265 = vpack.c.bf16 %v249, %v249
    %v266 = vpack.c.bf16 %v250, %v250
    %v267 = vpack.c.bf16 %v251, %v251
    %v268 = vpack.c.bf16 %v252, %v252
    %v269 = vpack.c.bf16 %v253, %v253
    %v270 = vpack.c.bf16 %v254, %v254
    %v271 = vpack.c.bf16 %v255, %v255
    %v272 = vpack.c.bf16 %v256, %v256
    %v273 = vpack.c.bf16 %v257, %v257
    %v274 = vpack.c.bf16 %v258, %v258
    %vm275 = vcmask 519168
    %276 = vst.msk [vmem:[%s3] sm:$0xf] %vm275, %v259
    %277 = vst.msk [vmem:[%s3 + $0x4] sm:$0xf] %vm275, %v260
    %278 = vst.msk [vmem:[%s3 + $0x8] sm:$0xf] %vm275, %v261
    %279 = vst.msk [vmem:[%s3 + $0xc] sm:$0xf] %vm275, %v262
    %280 = vst.msk [vmem:[%s3 + $0x10] sm:$0xf] %vm275, %v263
    %281 = vst.msk [vmem:[%s3 + $0x14] sm:$0xf] %vm275, %v264
    %282 = vst.msk [vmem:[%s3 + $0x18] sm:$0xf] %vm275, %v265
    %283 = vst.msk [vmem:[%s3 + $0x1c] sm:$0xf] %vm275, %v266
    %284 = vst.msk [vmem:[%s3 + $0x20] sm:$0xf] %vm275, %v267
    %285 = vst.msk [vmem:[%s3 + $0x24] sm:$0xf] %vm275, %v268
    %286 = vst.msk [vmem:[%s3 + $0x28] sm:$0xf] %vm275, %v269
    %287 = vst.msk [vmem:[%s3 + $0x2c] sm:$0xf] %vm275, %v270
    %288 = vst.msk [vmem:[%s3 + $0x30] sm:$0xf] %vm275, %v271
    %289 = vst.msk [vmem:[%s3 + $0x34] sm:$0xf] %vm275, %v272
    %290 = vst.msk [vmem:[%s3 + $0x38] sm:$0xf] %vm275, %v273
    %291 = vst.msk [vmem:[%s3 + $0x3c] sm:$0xf] %vm275, %v274
  $region21: #{_lambda_.7} parent=0 // pred_fallthru
    _
  // Predicated region
  $region22: #{_lambda_.7} parent=0 // pred_check
    _
  $region23: #{_lambda_.7} parent=0 // pred_check_branch
    %293 = sbr.rel (0) target = $region25
  $region24: #{_lambda_.7} parent=0 // pred_region
    _
  $region25: #{_lambda_.7} parent=0 // pred_fallthru
    _
  // Predicated region
  $region26: #{_lambda_.7} parent=0 // pred_check
    _
  $region27: #{_lambda_.7} parent=0 // pred_check_branch
    %295 = sbr.rel (0) target = $region29
  $region28: #{_lambda_.7} parent=0 // pred_region
    _
  $region29: #{_lambda_.7} parent=0 // pred_fallthru
    _

// kernel: _lambda_.9
$region0: #{_lambda_.9}
  #allocation0 [shape = 'u32[]', space=smem, size = 0x4, offset = 0x4, fixed_abs, tag = 'smem constant byte address 0x4 - core index']
  #allocation1 [shape = 'u32[72,128]{1,0:T(1,128)}', space=vmem, size = 0x9000, scoped, tag = 'internal scratch']
  %s0 = inlined_call_operand.vmem [shape: bf16[2,512,8], index: 0, kind: input, shape index: {}]
  %s1 = inlined_call_operand.vmem [shape: f32[2,2,8], index: 1, kind: output, shape index: {}]
  %s2 = sld [smem:[#allocation0]]
  $region41: #{_lambda_.9} parent=0
    _
  %s4 = ssub.s32 1, %s2
  %s5 = scalar_select 0, %s4, %s2
  loop: start=0, step=1, limit=4
  $region2: #{_lambda_.9} parent=0 // loop_pre_header
    _
  $region3: #{_lambda_.9} parent=0 // loop_header
    %s7 = sphi 0, %s11
    %p8 = scmp.ge.s32.totalorder %s7, 4
    %s14 = sphi 0, %s26
    %s15 = sphi 0, %s22
    %s16 = sphi 0, %s14
    %s17 = sphi 0, %s15
    %s18 = sphi 0, %s16
    %s19 = sphi 0, %s17
    %s31 = sphi 0, %s33
    %s34 = sphi 0, %s31
    %s35 = sphi 0, %s34
    %s51 = sphi 0, %s35
    %s57 = sphi 0, %s59
    %s60 = sphi 0, %s57
    %s61 = sphi 0, %s60
    %s77 = sphi 0, %s61
  $region4: #{_lambda_.9} parent=0 // loop_header_branch
    %10 = sbr.rel (%p8) target = $region8
  $region5: #{_lambda_.9} parent=0 // loop_body
    %s12 = ssub.s32 %s7, 1
    %s13 = ssub.s32 %s7, 2
    %s20 = sadd.s32 1, %s15
    %p21 = scmp.ge.s32.totalorder %s20, 1
    %s22 = scalar_select %p21, 0, %s20
    %s23 = sadd.s32 1, %s14
    %s24 = scalar_select %p21, %s23, %s14
    %p25 = scmp.ge.s32.totalorder %s24, 2
    %s26 = scalar_select %p25, 0, %s24
    %s27 = ssub.s32 %s14, %s26
    %s28 = ssub.s32 %s15, %s22
    %s29 = sor.u32 %s27, %s28
    %p30 = scmp.eq.s32.totalorder %s29, 0
    %s32 = sadd.s32 %s31, 1
    %s33 = scalar_select %p30, %s31, %s32
    %p36 = pneg %p30
    %p37 = scmp.eq.s32.totalorder %s7, 1
    %p38 = por %p36, %p37
    %p39 = scmp.ne.s32.totalorder %s31, %s34
    %p40 = scmp.eq.s32.totalorder %s7, 0
    %p41 = por %p39, %p40
    %p42 = scmp.ne.s32.totalorder %s31, %s34
    %p43 = scmp.eq.s32.totalorder %s12, 1
    %p44 = por %p42, %p43
    %p45 = scmp.ne.s32.totalorder %s34, %s35
    %p46 = scmp.eq.s32.totalorder %s12, 0
    %p47 = por %p45, %p46
    %p48 = scmp.ne.s32.totalorder %s34, %s35
    %p49 = scmp.eq.s32.totalorder %s13, 1
    %p50 = por %p48, %p49
    %p52 = scmp.ne.s32.totalorder %s35, %s51
    %p53 = scmp.eq.s32.totalorder %s13, 0
    %p54 = por %p52, %p53
    %s55 = ssub.s32 %s14, %s26
    %p56 = scmp.eq.s32.totalorder %s55, 0
    %s58 = sadd.s32 %s57, 1
    %s59 = scalar_select %p56, %s57, %s58
    %p62 = pneg %p56
    %p63 = scmp.eq.s32.totalorder %s7, 1
    %p64 = por %p62, %p63
    %p65 = scmp.ne.s32.totalorder %s57, %s60
    %p66 = scmp.eq.s32.totalorder %s7, 0
    %p67 = por %p65, %p66
    %p68 = scmp.ne.s32.totalorder %s57, %s60
    %p69 = scmp.eq.s32.totalorder %s12, 1
    %p70 = por %p68, %p69
    %p71 = scmp.ne.s32.totalorder %s60, %s61
    %p72 = scmp.eq.s32.totalorder %s12, 0
    %p73 = por %p71, %p72
    %p74 = scmp.ne.s32.totalorder %s60, %s61
    %p75 = scmp.eq.s32.totalorder %s13, 1
    %p76 = por %p74, %p75
    %p78 = scmp.ne.s32.totalorder %s61, %s77
    %p79 = scmp.eq.s32.totalorder %s13, 0
    %p80 = por %p78, %p79
    %p81 = scmp.le.s32.totalorder 1, %s7
    %p82 = scmp.lt.s32.totalorder %s7, 3
    %p83 = pnand %p81, %p82
    %p84 = pneg %p83
    // Predicated region
    $region9: #{_lambda_.9} parent=5 // pred_check
      _
    $region10: #{_lambda_.9} parent=5 // pred_check_branch
      %86 = sbr.rel (%p83) target = $region12
    $region11: #{_lambda_.9} parent=5 // pred_region
      %s87 = ssub.s32 %s7, 1
    $region12: #{_lambda_.9} parent=5 // pred_fallthru
      _
    %p88 = scmp.lt.s32.totalorder %s7, 2
    // Predicated region
    $region13: #{_lambda_.9} parent=5 // pred_check
      %p89 = pneg %p88
    $region14: #{_lambda_.9} parent=5 // pred_check_branch
      %91 = sbr.rel (%p89) target = $region16
    $region15: #{_lambda_.9} parent=5 // pred_region
      // Predicated region
      $region17: #{_lambda_.9} parent=15 // pred_check
        %p92 = pneg %p41
      $region18: #{_lambda_.9} parent=15 // pred_check_branch
        %94 = sbr.rel (%p92) target = $region20
      $region19: #{_lambda_.9} parent=15 // pred_region
        %s95 = smul.u32 64, %s15
        %p96 = scmp.lt.s32.totalorder %s14, 1
        %s97 = scalar_select %p96, %s14, 1
        %p98 = scmp.lt.s32.totalorder %s95, 63
        %s99 = scalar_select %p98, %s95, 63
        %s100 = smul.addr %s97, 64
        %s101 = sadd.s32 %s99, %s100
        %s102 = smul.addr %s101, 4
        %s103 = scalar_lea.vmem %s0, %s102
        %s104 = smul.u32 64, %s15
      $region20: #{_lambda_.9} parent=15 // pred_fallthru
        _
    $region16: #{_lambda_.9} parent=5 // pred_fallthru
      _
    %p105 = scmp.le.s32.totalorder 1, %s7
    %p106 = scmp.lt.s32.totalorder %s7, 3
    %p107 = pnand %p105, %p106
    %p108 = pneg %p107
    // Predicated region
    $region21: #{_lambda_.9} parent=5 // pred_check
      _
    $region22: #{_lambda_.9} parent=5 // pred_check_branch
      %110 = sbr.rel (%p107) target = $region24
    $region23: #{_lambda_.9} parent=5 // pred_region
      %s111 = ssub.s32 %s7, 1
      %s112 = smul.u32 64, %s17
      %p113 = scmp.lt.s32.totalorder %s16, 1
      %s114 = scalar_select %p113, %s16, 1
      %p115 = scmp.lt.s32.totalorder %s112, 63
      %s116 = scalar_select %p115, %s112, 63
      %s117 = smul.addr %s114, 64
      %s118 = sadd.s32 %s116, %s117
      %s119 = smul.addr %s118, 4
      %s120 = scalar_lea.vmem %s0, %s119
      %p121 = pneg %p47
      %p122 = pneg %p44
      %p123 = pneg %p73
      %p124 = pneg %p70
      %p125 = scmp.lt.s32.totalorder %s16, 1
      %s126 = scalar_select %p125, %s16, 1
      %s127 = smul.addr %s126, 2
      %s128 = scalar_lea.vmem %s1, %s127
      %s129 = smul.u32 64, %s17
      %p130 = scmp.lt.s32.totalorder %s16, 1
      %s131 = scalar_select %p130, %s16, 1
      %p132 = scmp.lt.s32.totalorder %s129, 63
      %s133 = scalar_select %p132, %s129, 63
      %s134 = smul.addr %s131, 64
      %s135 = sadd.s32 %s133, %s134
      %s136 = smul.addr %s135, 4
      %s137 = scalar_lea.vmem %s0, %s136
      %s138 = smul.u32 64, %s17
      %p139 = scmp.lt.s32.totalorder %s16, 1
      %s140 = scalar_select %p139, %s16, 1
      %s141 = smul.addr %s140, 2
      %s142 = scalar_lea.vmem %s1, %s141
      %p143 = scmp.eq.s32.totalorder %s17, 0
      // Predicated region
      $region25: #{_lambda_.9} parent=23 // pred_check
        %p144 = pneg %p143
      $region26: #{_lambda_.9} parent=23 // pred_check_branch
        %146 = sbr.rel (%p144) target = $region28
      $region27: #{_lambda_.9} parent=23 // pred_region
        %vm147 = vcmask 58368
        %148 = vst.msk [vmem:[%s142] sm:$0x3] %vm147, 0.0
      $region28: #{_lambda_.9} parent=23 // pred_fallthru
        _
      %v149 = vld [vmem:[%s137] sm:$0xf]
      %v150 = vld [vmem:[%s137 + $0x4] sm:$0xf]
      %v151 = vld [vmem:[%s137 + $0x8] sm:$0xf]
      %v152 = vld [vmem:[%s137 + $0xc] sm:$0xf]
      %v153 = vld [vmem:[%s137 + $0x10] sm:$0xf]
      %v154 = vld [vmem:[%s137 + $0x14] sm:$0xf]
      %v155 = vld [vmem:[%s137 + $0x18] sm:$0xf]
      %v156 = vld [vmem:[%s137 + $0x1c] sm:$0xf]
      %v157 = vld [vmem:[%s137 + $0x20] sm:$0xf]
      %v158 = vld [vmem:[%s137 + $0x24] sm:$0xf]
      %v159 = vld [vmem:[%s137 + $0x28] sm:$0xf]
      %v160 = vld [vmem:[%s137 + $0x2c] sm:$0xf]
      %v161 = vld [vmem:[%s137 + $0x30] sm:$0xf]
      %v162 = vld [vmem:[%s137 + $0x34] sm:$0xf]
      %v163 = vld [vmem:[%s137 + $0x38] sm:$0xf]
      %v164 = vld [vmem:[%s137 + $0x3c] sm:$0xf]
      %v165 = vld [vmem:[%s137 + $0x40] sm:$0xf]
      %v166 = vld [vmem:[%s137 + $0x44] sm:$0xf]
      %v167 = vld [vmem:[%s137 + $0x48] sm:$0xf]
      %v168 = vld [vmem:[%s137 + $0x4c] sm:$0xf]
      %v169 = vld [vmem:[%s137 + $0x50] sm:$0xf]
      %v170 = vld [vmem:[%s137 + $0x54] sm:$0xf]
      %v171 = vld [vmem:[%s137 + $0x58] sm:$0xf]
      %v172 = vld [vmem:[%s137 + $0x5c] sm:$0xf]
      %v173 = vld [vmem:[%s137 + $0x60] sm:$0xf]
      %v174 = vld [vmem:[%s137 + $0x64] sm:$0xf]
      %v175 = vld [vmem:[%s137 + $0x68] sm:$0xf]
      %v176 = vld [vmem:[%s137 + $0x6c] sm:$0xf]
      %v177 = vld [vmem:[%s137 + $0x70] sm:$0xf]
      %v178 = vld [vmem:[%s137 + $0x74] sm:$0xf]
      %v179 = vld [vmem:[%s137 + $0x78] sm:$0xf]
      %v180 = vld [vmem:[%s137 + $0x7c] sm:$0xf]
      %v181 = vld [vmem:[%s137 + $0x80] sm:$0xf]
      %v182 = vld [vmem:[%s137 + $0x84] sm:$0xf]
      %v183 = vld [vmem:[%s137 + $0x88] sm:$0xf]
      %v184 = vld [vmem:[%s137 + $0x8c] sm:$0xf]
      %v185 = vld [vmem:[%s137 + $0x90] sm:$0xf]
      %v186 = vld [vmem:[%s137 + $0x94] sm:$0xf]
      %v187 = vld [vmem:[%s137 + $0x98] sm:$0xf]
      %v188 = vld [vmem:[%s137 + $0x9c] sm:$0xf]
      %v189 = vld [vmem:[%s137 + $0xa0] sm:$0xf]
      %v190 = vld [vmem:[%s137 + $0xa4] sm:$0xf]
      %v191 = vld [vmem:[%s137 + $0xa8] sm:$0xf]
      %v192 = vld [vmem:[%s137 + $0xac] sm:$0xf]
      %v193 = vld [vmem:[%s137 + $0xb0] sm:$0xf]
      %v194 = vld [vmem:[%s137 + $0xb4] sm:$0xf]
      %v195 = vld [vmem:[%s137 + $0xb8] sm:$0xf]
      %v196 = vld [vmem:[%s137 + $0xbc] sm:$0xf]
      %v197 = vld [vmem:[%s137 + $0xc0] sm:$0xf]
      %v198 = vld [vmem:[%s137 + $0xc4] sm:$0xf]
      %v199 = vld [vmem:[%s137 + $0xc8] sm:$0xf]
      %v200 = vld [vmem:[%s137 + $0xcc] sm:$0xf]
      %v201 = vld [vmem:[%s137 + $0xd0] sm:$0xf]
      %v202 = vld [vmem:[%s137 + $0xd4] sm:$0xf]
      %v203 = vld [vmem:[%s137 + $0xd8] sm:$0xf]
      %v204 = vld [vmem:[%s137 + $0xdc] sm:$0xf]
      %v205 = vld [vmem:[%s137 + $0xe0] sm:$0xf]
      %v206 = vld [vmem:[%s137 + $0xe4] sm:$0xf]
      %v207 = vld [vmem:[%s137 + $0xe8] sm:$0xf]
      %v208 = vld [vmem:[%s137 + $0xec] sm:$0xf]
      %v209 = vld [vmem:[%s137 + $0xf0] sm:$0xf]
      %v210 = vld [vmem:[%s137 + $0xf4] sm:$0xf]
      %v211 = vld [vmem:[%s137 + $0xf8] sm:$0xf]
      %v212 = vld [vmem:[%s137 + $0xfc] sm:$0xf]
      %v213 = vunpack.c.l.bf16 %v149
      %v214 = vunpack.c.l.bf16 %v150
      %v215 = vunpack.c.l.bf16 %v151
      %v216 = vunpack.c.l.bf16 %v152
      %v217 = vunpack.c.l.bf16 %v153
      %v218 = vunpack.c.l.bf16 %v154
      %v219 = vunpack.c.l.bf16 %v155
      %v220 = vunpack.c.l.bf16 %v156
      %v221 = vunpack.c.l.bf16 %v157
      %v222 = vunpack.c.l.bf16 %v158
      %v223 = vunpack.c.l.bf16 %v159
      %v224 = vunpack.c.l.bf16 %v160
      %v225 = vunpack.c.l.bf16 %v161
      %v226 = vunpack.c.l.bf16 %v162
      %v227 = vunpack.c.l.bf16 %v163
      %v228 = vunpack.c.l.bf16 %v164
      %v229 = vunpack.c.l.bf16 %v165
      %v230 = vunpack.c.l.bf16 %v166
      %v231 = vunpack.c.l.bf16 %v167
      %v232 = vunpack.c.l.bf16 %v168
      %v233 = vunpack.c.l.bf16 %v169
      %v234 = vunpack.c.l.bf16 %v170
      %v235 = vunpack.c.l.bf16 %v171
      %v236 = vunpack.c.l.bf16 %v172
      %v237 = vunpack.c.l.bf16 %v173
      %v238 = vunpack.c.l.bf16 %v174
      %v239 = vunpack.c.l.bf16 %v175
      %v240 = vunpack.c.l.bf16 %v176
      %v241 = vunpack.c.l.bf16 %v177
      %v242 = vunpack.c.l.bf16 %v178
      %v243 = vunpack.c.l.bf16 %v179
      %v244 = vunpack.c.l.bf16 %v180
      %v245 = vunpack.c.l.bf16 %v181
      %v246 = vunpack.c.l.bf16 %v182
      %v247 = vunpack.c.l.bf16 %v183
      %v248 = vunpack.c.l.bf16 %v184
      %v249 = vunpack.c.l.bf16 %v185
      %v250 = vunpack.c.l.bf16 %v186
      %v251 = vunpack.c.l.bf16 %v187
      %v252 = vunpack.c.l.bf16 %v188
      %v253 = vunpack.c.l.bf16 %v189
      %v254 = vunpack.c.l.bf16 %v190
      %v255 = vunpack.c.l.bf16 %v191
      %v256 = vunpack.c.l.bf16 %v192
      %v257 = vunpack.c.l.bf16 %v193
      %v258 = vunpack.c.l.bf16 %v194
      %v259 = vunpack.c.l.bf16 %v195
      %v260 = vunpack.c.l.bf16 %v196
      %v261 = vunpack.c.l.bf16 %v197
      %v262 = vunpack.c.l.bf16 %v198
      %v263 = vunpack.c.l.bf16 %v199
      %v264 = vunpack.c.l.bf16 %v200
      %v265 = vunpack.c.l.bf16 %v201
      %v266 = vunpack.c.l.bf16 %v202
      %v267 = vunpack.c.l.bf16 %v203
      %v268 = vunpack.c.l.bf16 %v204
      %v269 = vunpack.c.l.bf16 %v205
      %v270 = vunpack.c.l.bf16 %v206
      %v271 = vunpack.c.l.bf16 %v207
      %v272 = vunpack.c.l.bf16 %v208
      %v273 = vunpack.c.l.bf16 %v209
      %v274 = vunpack.c.l.bf16 %v210
      %v275 = vunpack.c.l.bf16 %v211
      %v276 = vunpack.c.l.bf16 %v212
      %v277 = vld [vmem:[%s142] sm:$0x1]
      %vm278 = vcmask 64512
      %v279 = vsel %vm278, %v213, 0.0
      %v280 = vsel %vm278, %v214, 0.0
      %v281 = vadd.f32 %v279, %v280
      %v282 = vsel %vm278, %v215, 0.0
      %v283 = vadd.f32 %v281, %v282
      %v284 = vsel %vm278, %v216, 0.0
      %v285 = vadd.f32 %v283, %v284
      %v286 = vsel %vm278, %v217, 0.0
      %v287 = vadd.f32 %v285, %v286
      %v288 = vsel %vm278, %v218, 0.0
      %v289 = vadd.f32 %v287, %v288
      %v290 = vsel %vm278, %v219, 0.0
      %v291 = vadd.f32 %v289, %v290
      %v292 = vsel %vm278, %v220, 0.0
      %v293 = vadd.f32 %v291, %v292
      %v294 = vsel %vm278, %v221, 0.0
      %v295 = vadd.f32 %v293, %v294
      %v296 = vsel %vm278, %v222, 0.0
      %v297 = vadd.f32 %v295, %v296
      %v298 = vsel %vm278, %v223, 0.0
      %v299 = vadd.f32 %v297, %v298
      %v300 = vsel %vm278, %v224, 0.0
      %v301 = vadd.f32 %v299, %v300
      %v302 = vsel %vm278, %v225, 0.0
      %v303 = vadd.f32 %v301, %v302
      %v304 = vsel %vm278, %v226, 0.0
      %v305 = vadd.f32 %v303, %v304
      %v306 = vsel %vm278, %v227, 0.0
      %v307 = vadd.f32 %v305, %v306
      %v308 = vsel %vm278, %v228, 0.0
      %v309 = vadd.f32 %v307, %v308
      %v310 = vsel %vm278, %v229, 0.0
      %v311 = vadd.f32 %v309, %v310
      %v312 = vsel %vm278, %v230, 0.0
      %v313 = vadd.f32 %v311, %v312
      %v314 = vsel %vm278, %v231, 0.0
      %v315 = vadd.f32 %v313, %v314
      %v316 = vsel %vm278, %v232, 0.0
      %v317 = vadd.f32 %v315, %v316
      %v318 = vsel %vm278, %v233, 0.0
      %v319 = vadd.f32 %v317, %v318
      %v320 = vsel %vm278, %v234, 0.0
      %v321 = vadd.f32 %v319, %v320
      %v322 = vsel %vm278, %v235, 0.0
      %v323 = vadd.f32 %v321, %v322
      %v324 = vsel %vm278, %v236, 0.0
      %v325 = vadd.f32 %v323, %v324
      %v326 = vsel %vm278, %v237, 0.0
      %v327 = vadd.f32 %v325, %v326
      %v328 = vsel %vm278, %v238, 0.0
      %v329 = vadd.f32 %v327, %v328
      %v330 = vsel %vm278, %v239, 0.0
      %v331 = vadd.f32 %v329, %v330
      %v332 = vsel %vm278, %v240, 0.0
      %v333 = vadd.f32 %v331, %v332
      %v334 = vsel %vm278, %v241, 0.0
      %v335 = vadd.f32 %v333, %v334
      %v336 = vsel %vm278, %v242, 0.0
      %v337 = vadd.f32 %v335, %v336
      %v338 = vsel %vm278, %v243, 0.0
      %v339 = vadd.f32 %v337, %v338
      %v340 = vsel %vm278, %v244, 0.0
      %v341 = vadd.f32 %v339, %v340
      %v342 = vsel %vm278, %v245, 0.0
      %v343 = vadd.f32 %v341, %v342
      %v344 = vsel %vm278, %v246, 0.0
      %v345 = vadd.f32 %v343, %v344
      %v346 = vsel %vm278, %v247, 0.0
      %v347 = vadd.f32 %v345, %v346
      %v348 = vsel %vm278, %v248, 0.0
      %v349 = vadd.f32 %v347, %v348
      %v350 = vsel %vm278, %v249, 0.0
      %v351 = vadd.f32 %v349, %v350
      %v352 = vsel %vm278, %v250, 0.0
      %v353 = vadd.f32 %v351, %v352
      %v354 = vsel %vm278, %v251, 0.0
      %v355 = vadd.f32 %v353, %v354
      %v356 = vsel %vm278, %v252, 0.0
      %v357 = vadd.f32 %v355, %v356
      %v358 = vsel %vm278, %v253, 0.0
      %v359 = vadd.f32 %v357, %v358
      %v360 = vsel %vm278, %v254, 0.0
      %v361 = vadd.f32 %v359, %v360
      %v362 = vsel %vm278, %v255, 0.0
      %v363 = vadd.f32 %v361, %v362
      %v364 = vsel %vm278, %v256, 0.0
      %v365 = vadd.f32 %v363, %v364
      %v366 = vsel %vm278, %v257, 0.0
      %v367 = vadd.f32 %v365, %v366
      %v368 = vsel %vm278, %v258, 0.0
      %v369 = vadd.f32 %v367, %v368
      %v370 = vsel %vm278, %v259, 0.0
      %v371 = vadd.f32 %v369, %v370
      %v372 = vsel %vm278, %v260, 0.0
      %v373 = vadd.f32 %v371, %v372
      %v374 = vsel %vm278, %v261, 0.0
      %v375 = vadd.f32 %v373, %v374
      %v376 = vsel %vm278, %v262, 0.0
      %v377 = vadd.f32 %v375, %v376
      %v378 = vsel %vm278, %v263, 0.0
      %v379 = vadd.f32 %v377, %v378
      %v380 = vsel %vm278, %v264, 0.0
      %v381 = vadd.f32 %v379, %v380
      %v382 = vsel %vm278, %v265, 0.0
      %v383 = vadd.f32 %v381, %v382
      %v384 = vsel %vm278, %v266, 0.0
      %v385 = vadd.f32 %v383, %v384
      %v386 = vsel %vm278, %v267, 0.0
      %v387 = vadd.f32 %v385, %v386
      %v388 = vsel %vm278, %v268, 0.0
      %v389 = vadd.f32 %v387, %v388
      %v390 = vsel %vm278, %v269, 0.0
      %v391 = vadd.f32 %v389, %v390
      %v392 = vsel %vm278, %v270, 0.0
      %v393 = vadd.f32 %v391, %v392
      %v394 = vsel %vm278, %v271, 0.0
      %v395 = vadd.f32 %v393, %v394
      %v396 = vsel %vm278, %v272, 0.0
      %v397 = vadd.f32 %v395, %v396
      %v398 = vsel %vm278, %v273, 0.0
      %v399 = vadd.f32 %v397, %v398
      %v400 = vsel %vm278, %v274, 0.0
      %v401 = vadd.f32 %v399, %v400
      %v402 = vsel %vm278, %v275, 0.0
      %v403 = vadd.f32 %v401, %v402
      %v404 = vsel %vm278, %v276, 0.0
      %v405 = vadd.f32 %v403, %v404
      %v406 = vrot.slane %v405, 4
      %v407 = vadd.f32 %v405, %v406
      %v408 = vrot.slane %v407, 2
      %v409 = vadd.f32 %v407, %v408
      %v410 = vrot.slane %v409, 1
      %v411 = vadd.f32 %v409, %v410
      %v412 = vadd.f32 %v277, %v411
      %vm413 = vcmask 57344
      %414 = vst.msk [vmem:[%s142] sm:$0x1] %vm413, %v412
      %v415 = vld [vmem:[%s142 + $0x1] sm:$0x1]
      %v416 = vmul.f32 %v213, %v213
      %v417 = vmul.f32 %v214, %v214
      %v418 = vmul.f32 %v215, %v215
      %v419 = vmul.f32 %v216, %v216
      %v420 = vmul.f32 %v217, %v217
      %v421 = vmul.f32 %v218, %v218
      %v422 = vmul.f32 %v219, %v219
      %v423 = vmul.f32 %v220, %v220
      %v424 = vmul.f32 %v221, %v221
      %v425 = vmul.f32 %v222, %v222
      %v426 = vmul.f32 %v223, %v223
      %v427 = vmul.f32 %v224, %v224
      %v428 = vmul.f32 %v225, %v225
      %v429 = vmul.f32 %v226, %v226
      %v430 = vmul.f32 %v227, %v227
      %v431 = vmul.f32 %v228, %v228
      %v432 = vmul.f32 %v229, %v229
      %v433 = vmul.f32 %v230, %v230
      %v434 = vmul.f32 %v231, %v231
      %v435 = vmul.f32 %v232, %v232
      %v436 = vmul.f32 %v233, %v233
      %v437 = vmul.f32 %v234, %v234
      %v438 = vmul.f32 %v235, %v235
      %v439 = vmul.f32 %v236, %v236
      %v440 = vmul.f32 %v237, %v237
      %v441 = vmul.f32 %v238, %v238
      %v442 = vmul.f32 %v239, %v239
      %v443 = vmul.f32 %v240, %v240
      %v444 = vmul.f32 %v241, %v241
      %v445 = vmul.f32 %v242, %v242
      %v446 = vmul.f32 %v243, %v243
      %v447 = vmul.f32 %v244, %v244
      %v448 = vmul.f32 %v245, %v245
      %v449 = vmul.f32 %v246, %v246
      %v450 = vmul.f32 %v247, %v247
      %v451 = vmul.f32 %v248, %v248
      %v452 = vmul.f32 %v249, %v249
      %v453 = vmul.f32 %v250, %v250
      %v454 = vmul.f32 %v251, %v251
      %v455 = vmul.f32 %v252, %v252
      %v456 = vmul.f32 %v253, %v253
      %v457 = vmul.f32 %v254, %v254
      %v458 = vmul.f32 %v255, %v255
      %v459 = vmul.f32 %v256, %v256
      %v460 = vmul.f32 %v257, %v257
      %v461 = vmul.f32 %v258, %v258
      %v462 = vmul.f32 %v259, %v259
      %v463 = vmul.f32 %v260, %v260
      %v464 = vmul.f32 %v261, %v261
      %v465 = vmul.f32 %v262, %v262
      %v466 = vmul.f32 %v263, %v263
      %v467 = vmul.f32 %v264, %v264
      %v468 = vmul.f32 %v265, %v265
      %v469 = vmul.f32 %v266, %v266
      %v470 = vmul.f32 %v267, %v267
      %v471 = vmul.f32 %v268, %v268
      %v472 = vmul.f32 %v269, %v269
      %v473 = vmul.f32 %v270, %v270
      %v474 = vmul.f32 %v271, %v271
      %v475 = vmul.f32 %v272, %v272
      %v476 = vmul.f32 %v273, %v273
      %v477 = vmul.f32 %v274, %v274
      %v478 = vmul.f32 %v275, %v275
      %v479 = vmul.f32 %v276, %v276
      %v480 = vsel %vm278, %v416, 0.0
      %v481 = vsel %vm278, %v417, 0.0
      %v482 = vadd.f32 %v480, %v481
      %v483 = vsel %vm278, %v418, 0.0
      %v484 = vadd.f32 %v482, %v483
      %v485 = vsel %vm278, %v419, 0.0
      %v486 = vadd.f32 %v484, %v485
      %v487 = vsel %vm278, %v420, 0.0
      %v488 = vadd.f32 %v486, %v487
      %v489 = vsel %vm278, %v421, 0.0
      %v490 = vadd.f32 %v488, %v489
      %v491 = vsel %vm278, %v422, 0.0
      %v492 = vadd.f32 %v490, %v491
      %v493 = vsel %vm278, %v423, 0.0
      %v494 = vadd.f32 %v492, %v493
      %v495 = vsel %vm278, %v424, 0.0
      %v496 = vadd.f32 %v494, %v495
      %v497 = vsel %vm278, %v425, 0.0
      %v498 = vadd.f32 %v496, %v497
      %v499 = vsel %vm278, %v426, 0.0
      %v500 = vadd.f32 %v498, %v499
      %v501 = vsel %vm278, %v427, 0.0
      %v502 = vadd.f32 %v500, %v501
      %v503 = vsel %vm278, %v428, 0.0
      %v504 = vadd.f32 %v502, %v503
      %v505 = vsel %vm278, %v429, 0.0
      %v506 = vadd.f32 %v504, %v505
      %v507 = vsel %vm278, %v430, 0.0
      %v508 = vadd.f32 %v506, %v507
      %v509 = vsel %vm278, %v431, 0.0
      %v510 = vadd.f32 %v508, %v509
      %v511 = vsel %vm278, %v432, 0.0
      %v512 = vadd.f32 %v510, %v511
      %v513 = vsel %vm278, %v433, 0.0
      %v514 = vadd.f32 %v512, %v513
      %v515 = vsel %vm278, %v434, 0.0
      %v516 = vadd.f32 %v514, %v515
      %v517 = vsel %vm278, %v435, 0.0
      %v518 = vadd.f32 %v516, %v517
      %v519 = vsel %vm278, %v436, 0.0
      %v520 = vadd.f32 %v518, %v519
      %v521 = vsel %vm278, %v437, 0.0
      %v522 = vadd.f32 %v520, %v521
      %v523 = vsel %vm278, %v438, 0.0
      %v524 = vadd.f32 %v522, %v523
      %v525 = vsel %vm278, %v439, 0.0
      %v526 = vadd.f32 %v524, %v525
      %v527 = vsel %vm278, %v440, 0.0
      %v528 = vadd.f32 %v526, %v527
      %v529 = vsel %vm278, %v441, 0.0
      %v530 = vadd.f32 %v528, %v529
      %v531 = vsel %vm278, %v442, 0.0
      %v532 = vadd.f32 %v530, %v531
      %v533 = vsel %vm278, %v443, 0.0
      %v534 = vadd.f32 %v532, %v533
      %v535 = vsel %vm278, %v444, 0.0
      %v536 = vadd.f32 %v534, %v535
      %v537 = vsel %vm278, %v445, 0.0
      %v538 = vadd.f32 %v536, %v537
      %v539 = vsel %vm278, %v446, 0.0
      %v540 = vadd.f32 %v538, %v539
      %v541 = vsel %vm278, %v447, 0.0
      %v542 = vadd.f32 %v540, %v541
      %v543 = vsel %vm278, %v448, 0.0
      %v544 = vadd.f32 %v542, %v543
      %v545 = vsel %vm278, %v449, 0.0
      %v546 = vadd.f32 %v544, %v545
      %v547 = vsel %vm278, %v450, 0.0
      %v548 = vadd.f32 %v546, %v547
      %v549 = vsel %vm278, %v451, 0.0
      %v550 = vadd.f32 %v548, %v549
      %v551 = vsel %vm278, %v452, 0.0
      %v552 = vadd.f32 %v550, %v551
      %v553 = vsel %vm278, %v453, 0.0
      %v554 = vadd.f32 %v552, %v553
      %v555 = vsel %vm278, %v454, 0.0
      %v556 = vadd.f32 %v554, %v555
      %v557 = vsel %vm278, %v455, 0.0
      %v558 = vadd.f32 %v556, %v557
      %v559 = vsel %vm278, %v456, 0.0
      %v560 = vadd.f32 %v558, %v559
      %v561 = vsel %vm278, %v457, 0.0
      %v562 = vadd.f32 %v560, %v561
      %v563 = vsel %vm278, %v458, 0.0
      %v564 = vadd.f32 %v562, %v563
      %v565 = vsel %vm278, %v459, 0.0
      %v566 = vadd.f32 %v564, %v565
      %v567 = vsel %vm278, %v460, 0.0
      %v568 = vadd.f32 %v566, %v567
      %v569 = vsel %vm278, %v461, 0.0
      %v570 = vadd.f32 %v568, %v569
      %v571 = vsel %vm278, %v462, 0.0
      %v572 = vadd.f32 %v570, %v571
      %v573 = vsel %vm278, %v463, 0.0
      %v574 = vadd.f32 %v572, %v573
      %v575 = vsel %vm278, %v464, 0.0
      %v576 = vadd.f32 %v574, %v575
      %v577 = vsel %vm278, %v465, 0.0
      %v578 = vadd.f32 %v576, %v577
      %v579 = vsel %vm278, %v466, 0.0
      %v580 = vadd.f32 %v578, %v579
      %v581 = vsel %vm278, %v467, 0.0
      %v582 = vadd.f32 %v580, %v581
      %v583 = vsel %vm278, %v468, 0.0
      %v584 = vadd.f32 %v582, %v583
      %v585 = vsel %vm278, %v469, 0.0
      %v586 = vadd.f32 %v584, %v585
      %v587 = vsel %vm278, %v470, 0.0
      %v588 = vadd.f32 %v586, %v587
      %v589 = vsel %vm278, %v471, 0.0
      %v590 = vadd.f32 %v588, %v589
      %v591 = vsel %vm278, %v472, 0.0
      %v592 = vadd.f32 %v590, %v591
      %v593 = vsel %vm278, %v473, 0.0
      %v594 = vadd.f32 %v592, %v593
      %v595 = vsel %vm278, %v474, 0.0
      %v596 = vadd.f32 %v594, %v595
      %v597 = vsel %vm278, %v475, 0.0
      %v598 = vadd.f32 %v596, %v597
      %v599 = vsel %vm278, %v476, 0.0
      %v600 = vadd.f32 %v598, %v599
      %v601 = vsel %vm278, %v477, 0.0
      %v602 = vadd.f32 %v600, %v601
      %v603 = vsel %vm278, %v478, 0.0
      %v604 = vadd.f32 %v602, %v603
      %v605 = vsel %vm278, %v479, 0.0
      %v606 = vadd.f32 %v604, %v605
      %v607 = vrot.slane %v606, 4
      %v608 = vadd.f32 %v606, %v607
      %v609 = vrot.slane %v608, 2
      %v610 = vadd.f32 %v608, %v609
      %v611 = vrot.slane %v610, 1
      %v612 = vadd.f32 %v610, %v611
      %v613 = vadd.f32 %v415, %v612
      %614 = vst.msk [vmem:[%s142 + $0x1] sm:$0x1] %vm413, %v613
      %p615 = scmp.lt.s32.totalorder %s16, 1
      %s616 = scalar_select %p615, %s16, 1
      %s617 = smul.addr %s616, 2
      %s618 = scalar_lea.vmem %s1, %s617
      // Predicated region
      $region29: #{_lambda_.9} parent=23 // pred_check
        %p619 = pneg %p70
      $region30: #{_lambda_.9} parent=23 // pred_check_branch
        %621 = sbr.rel (%p619) target = $region32
      $region31: #{_lambda_.9} parent=23 // pred_region
        _
      $region32: #{_lambda_.9} parent=23 // pred_fallthru
        _
    $region24: #{_lambda_.9} parent=5 // pred_fallthru
      _
    %p622 = scmp.le.s32.totalorder 2, %s7
    // Predicated region
    $region33: #{_lambda_.9} parent=5 // pred_check
      %p623 = pneg %p622
    $region34: #{_lambda_.9} parent=5 // pred_check_branch
      %625 = sbr.rel (%p623) target = $region36
    $region35: #{_lambda_.9} parent=5 // pred_region
      %s626 = ssub.s32 %s7, 2
      // Predicated region
      $region37: #{_lambda_.9} parent=35 // pred_check
        %p627 = pneg %p76
      $region38: #{_lambda_.9} parent=35 // pred_check_branch
        %629 = sbr.rel (%p627) target = $region40
      $region39: #{_lambda_.9} parent=35 // pred_region
        %p630 = scmp.lt.s32.totalorder %s18, 1
        %s631 = scalar_select %p630, %s18, 1
        %s632 = smul.addr %s631, 2
        %s633 = scalar_lea.vmem %s1, %s632
      $region40: #{_lambda_.9} parent=35 // pred_fallthru
        _
    $region36: #{_lambda_.9} parent=5 // pred_fallthru
      _
  $region6: #{_lambda_.9} parent=0 // loop_footer
    %s11 = sadd.s32 1, %s7
  $region7: #{_lambda_.9} parent=0 // loop_footer_branch
    %6 = sbr.rel target = $region3
  $region8: #{_lambda_.9} parent=0 // loop_exit
    _

// kernel: _lambda_.10
$region0: #{_lambda_.10}
  #allocation0 [shape = 'u32[]', space=smem, size = 0x4, offset = 0x4, fixed_abs, tag = 'smem constant byte address 0x4 - core index']
  #allocation1 [shape = 'u32[72,128]{1,0:T(1,128)}', space=vmem, size = 0x9000, scoped, tag = 'internal scratch']
  %s0 = inlined_call_operand.vmem [shape: bf16[2,512,8], index: 0, kind: input, shape index: {}]
  %s1 = inlined_call_operand.vmem [shape: f32[2,1,8], index: 1, kind: input, shape index: {}]
  %s2 = inlined_call_operand.vmem [shape: f32[2,1,8], index: 2, kind: input, shape index: {}]
  %s3 = inlined_call_operand.vmem [shape: bf16[2,512,8], index: 3, kind: output, shape index: {}]
  %s4 = sld [smem:[#allocation0]]
  $region45: #{_lambda_.10} parent=0
    _
  %s6 = ssub.s32 1, %s4
  %s7 = scalar_select 0, %s6, %s4
  loop: start=0, step=1, limit=4
  $region2: #{_lambda_.10} parent=0 // loop_pre_header
    _
  $region3: #{_lambda_.10} parent=0 // loop_header
    %s9 = sphi 0, %s13
    %p10 = scmp.ge.s32.totalorder %s9, 4
    %s16 = sphi 0, %s28
    %s17 = sphi 0, %s24
    %s18 = sphi 0, %s16
    %s19 = sphi 0, %s17
    %s20 = sphi 0, %s18
    %s21 = sphi 0, %s19
    %s33 = sphi 0, %s35
    %s36 = sphi 0, %s33
    %s37 = sphi 0, %s36
    %s53 = sphi 0, %s37
    %s59 = sphi 0, %s61
    %s62 = sphi 0, %s59
    %s63 = sphi 0, %s62
    %s79 = sphi 0, %s63
    %s85 = sphi 0, %s87
    %s88 = sphi 0, %s85
    %s89 = sphi 0, %s88
    %s105 = sphi 0, %s89
    %s113 = sphi 0, %s115
    %s116 = sphi 0, %s113
    %s117 = sphi 0, %s116
    %s133 = sphi 0, %s117
  $region4: #{_lambda_.10} parent=0 // loop_header_branch
    %12 = sbr.rel (%p10) target = $region8
  $region5: #{_lambda_.10} parent=0 // loop_body
    %s14 = ssub.s32 %s9, 1
    %s15 = ssub.s32 %s9, 2
    %s22 = sadd.s32 1, %s17
    %p23 = scmp.ge.s32.totalorder %s22, 1
    %s24 = scalar_select %p23, 0, %s22
    %s25 = sadd.s32 1, %s16
    %s26 = scalar_select %p23, %s25, %s16
    %p27 = scmp.ge.s32.totalorder %s26, 2
    %s28 = scalar_select %p27, 0, %s26
    %s29 = ssub.s32 %s16, %s28
    %s30 = ssub.s32 %s17, %s24
    %s31 = sor.u32 %s29, %s30
    %p32 = scmp.eq.s32.totalorder %s31, 0
    %s34 = sadd.s32 %s33, 1
    %s35 = scalar_select %p32, %s33, %s34
    %p38 = pneg %p32
    %p39 = scmp.eq.s32.totalorder %s9, 1
    %p40 = por %p38, %p39
    %p41 = scmp.ne.s32.totalorder %s33, %s36
    %p42 = scmp.eq.s32.totalorder %s9, 0
    %p43 = por %p41, %p42
    %p44 = scmp.ne.s32.totalorder %s33, %s36
    %p45 = scmp.eq.s32.totalorder %s14, 1
    %p46 = por %p44, %p45
    %p47 = scmp.ne.s32.totalorder %s36, %s37
    %p48 = scmp.eq.s32.totalorder %s14, 0
    %p49 = por %p47, %p48
    %p50 = scmp.ne.s32.totalorder %s36, %s37
    %p51 = scmp.eq.s32.totalorder %s15, 1
    %p52 = por %p50, %p51
    %p54 = scmp.ne.s32.totalorder %s37, %s53
    %p55 = scmp.eq.s32.totalorder %s15, 0
    %p56 = por %p54, %p55
    %s57 = ssub.s32 %s16, %s28
    %p58 = scmp.eq.s32.totalorder %s57, 0
    %s60 = sadd.s32 %s59, 1
    %s61 = scalar_select %p58, %s59, %s60
    %p64 = pneg %p58
    %p65 = scmp.eq.s32.totalorder %s9, 1
    %p66 = por %p64, %p65
    %p67 = scmp.ne.s32.totalorder %s59, %s62
    %p68 = scmp.eq.s32.totalorder %s9, 0
    %p69 = por %p67, %p68
    %p70 = scmp.ne.s32.totalorder %s59, %s62
    %p71 = scmp.eq.s32.totalorder %s14, 1
    %p72 = por %p70, %p71
    %p73 = scmp.ne.s32.totalorder %s62, %s63
    %p74 = scmp.eq.s32.totalorder %s14, 0
    %p75 = por %p73, %p74
    %p76 = scmp.ne.s32.totalorder %s62, %s63
    %p77 = scmp.eq.s32.totalorder %s15, 1
    %p78 = por %p76, %p77
    %p80 = scmp.ne.s32.totalorder %s63, %s79
    %p81 = scmp.eq.s32.totalorder %s15, 0
    %p82 = por %p80, %p81
    %s83 = ssub.s32 %s16, %s28
    %p84 = scmp.eq.s32.totalorder %s83, 0
    %s86 = sadd.s32 %s85, 1
    %s87 = scalar_select %p84, %s85, %s86
    %p90 = pneg %p84
    %p91 = scmp.eq.s32.totalorder %s9, 1
    %p92 = por %p90, %p91
    %p93 = scmp.ne.s32.totalorder %s85, %s88
    %p94 = scmp.eq.s32.totalorder %s9, 0
    %p95 = por %p93, %p94
    %p96 = scmp.ne.s32.totalorder %s85, %s88
    %p97 = scmp.eq.s32.totalorder %s14, 1
    %p98 = por %p96, %p97
    %p99 = scmp.ne.s32.totalorder %s88, %s89
    %p100 = scmp.eq.s32.totalorder %s14, 0
    %p101 = por %p99, %p100
    %p102 = scmp.ne.s32.totalorder %s88, %s89
    %p103 = scmp.eq.s32.totalorder %s15, 1
    %p104 = por %p102, %p103
    %p106 = scmp.ne.s32.totalorder %s89, %s105
    %p107 = scmp.eq.s32.totalorder %s15, 0
    %p108 = por %p106, %p107
    %s109 = ssub.s32 %s16, %s28
    %s110 = ssub.s32 %s17, %s24
    %s111 = sor.u32 %s109, %s110
    %p112 = scmp.eq.s32.totalorder %s111, 0
    %s114 = sadd.s32 %s113, 1
    %s115 = scalar_select %p112, %s113, %s114
    %p118 = pneg %p112
    %p119 = scmp.eq.s32.totalorder %s9, 1
    %p120 = por %p118, %p119
    %p121 = scmp.ne.s32.totalorder %s113, %s116
    %p122 = scmp.eq.s32.totalorder %s9, 0
    %p123 = por %p121, %p122
    %p124 = scmp.ne.s32.totalorder %s113, %s116
    %p125 = scmp.eq.s32.totalorder %s14, 1
    %p126 = por %p124, %p125
    %p127 = scmp.ne.s32.totalorder %s116, %s117
    %p128 = scmp.eq.s32.totalorder %s14, 0
    %p129 = por %p127, %p128
    %p130 = scmp.ne.s32.totalorder %s116, %s117
    %p131 = scmp.eq.s32.totalorder %s15, 1
    %p132 = por %p130, %p131
    %p134 = scmp.ne.s32.totalorder %s117, %s133
    %p135 = scmp.eq.s32.totalorder %s15, 0
    %p136 = por %p134, %p135
    %p137 = scmp.le.s32.totalorder 1, %s9
    %p138 = scmp.lt.s32.totalorder %s9, 3
    %p139 = pnand %p137, %p138
    %p140 = pneg %p139
    // Predicated region
    $region9: #{_lambda_.10} parent=5 // pred_check
      _
    $region10: #{_lambda_.10} parent=5 // pred_check_branch
      %142 = sbr.rel (%p139) target = $region12
    $region11: #{_lambda_.10} parent=5 // pred_region
      %s143 = ssub.s32 %s9, 1
    $region12: #{_lambda_.10} parent=5 // pred_fallthru
      _
    %p144 = scmp.lt.s32.totalorder %s9, 2
    // Predicated region
    $region13: #{_lambda_.10} parent=5 // pred_check
      %p145 = pneg %p144
    $region14: #{_lambda_.10} parent=5 // pred_check_branch
      %147 = sbr.rel (%p145) target = $region16
    $region15: #{_lambda_.10} parent=5 // pred_region
      // Predicated region
      $region17: #{_lambda_.10} parent=15 // pred_check
        %p148 = pneg %p43
      $region18: #{_lambda_.10} parent=15 // pred_check_branch
        %150 = sbr.rel (%p148) target = $region20
      $region19: #{_lambda_.10} parent=15 // pred_region
        %s151 = smul.u32 64, %s17
        %p152 = scmp.lt.s32.totalorder %s16, 1
        %s153 = scalar_select %p152, %s16, 1
        %p154 = scmp.lt.s32.totalorder %s151, 63
        %s155 = scalar_select %p154, %s151, 63
        %s156 = smul.addr %s153, 64
        %s157 = sadd.s32 %s155, %s156
        %s158 = smul.addr %s157, 4
        %s159 = scalar_lea.vmem %s0, %s158
        %s160 = smul.u32 64, %s17
      $region20: #{_lambda_.10} parent=15 // pred_fallthru
        _
      // Predicated region
      $region21: #{_lambda_.10} parent=15 // pred_check
        %p161 = pneg %p69
      $region22: #{_lambda_.10} parent=15 // pred_check_branch
        %163 = sbr.rel (%p161) target = $region24
      $region23: #{_lambda_.10} parent=15 // pred_region
        %p164 = scmp.lt.s32.totalorder %s16, 1
        %s165 = scalar_select %p164, %s16, 1
        %s166 = scalar_lea.vmem %s1, %s165
      $region24: #{_lambda_.10} parent=15 // pred_fallthru
        _
      // Predicated region
      $region25: #{_lambda_.10} parent=15 // pred_check
        %p167 = pneg %p95
      $region26: #{_lambda_.10} parent=15 // pred_check_branch
        %169 = sbr.rel (%p167) target = $region28
      $region27: #{_lambda_.10} parent=15 // pred_region
        %p170 = scmp.lt.s32.totalorder %s16, 1
        %s171 = scalar_select %p170, %s16, 1
        %s172 = scalar_lea.vmem %s2, %s171
      $region28: #{_lambda_.10} parent=15 // pred_fallthru
        _
    $region16: #{_lambda_.10} parent=5 // pred_fallthru
      _
    %p173 = scmp.le.s32.totalorder 1, %s9
    %p174 = scmp.lt.s32.totalorder %s9, 3
    %p175 = pnand %p173, %p174
    %p176 = pneg %p175
    // Predicated region
    $region29: #{_lambda_.10} parent=5 // pred_check
      _
    $region30: #{_lambda_.10} parent=5 // pred_check_branch
      %178 = sbr.rel (%p175) target = $region32
    $region31: #{_lambda_.10} parent=5 // pred_region
      %s179 = ssub.s32 %s9, 1
      %s180 = smul.u32 64, %s19
      %p181 = scmp.lt.s32.totalorder %s18, 1
      %s182 = scalar_select %p181, %s18, 1
      %p183 = scmp.lt.s32.totalorder %s180, 63
      %s184 = scalar_select %p183, %s180, 63
      %s185 = smul.addr %s182, 64
      %s186 = sadd.s32 %s184, %s185
      %s187 = smul.addr %s186, 4
      %s188 = scalar_lea.vmem %s0, %s187
      %p189 = pneg %p49
      %p190 = pneg %p46
      %p191 = scmp.lt.s32.totalorder %s18, 1
      %s192 = scalar_select %p191, %s18, 1
      %s193 = scalar_lea.vmem %s1, %s192
      %p194 = pneg %p75
      %p195 = pneg %p72
      %p196 = scmp.lt.s32.totalorder %s18, 1
      %s197 = scalar_select %p196, %s18, 1
      %s198 = scalar_lea.vmem %s2, %s197
      %p199 = pneg %p101
      %p200 = pneg %p98
      %p201 = pneg %p129
      %p202 = pneg %p126
      %s203 = smul.u32 64, %s19
      %p204 = scmp.lt.s32.totalorder %s18, 1
      %s205 = scalar_select %p204, %s18, 1
      %p206 = scmp.lt.s32.totalorder %s203, 63
      %s207 = scalar_select %p206, %s203, 63
      %s208 = smul.addr %s205, 64
      %s209 = sadd.s32 %s207, %s208
      %s210 = smul.addr %s209, 4
      %s211 = scalar_lea.vmem %s3, %s210
      %s212 = smul.u32 64, %s19
      %p213 = scmp.lt.s32.totalorder %s18, 1
      %s214 = scalar_select %p213, %s18, 1
      %p215 = scmp.lt.s32.totalorder %s212, 63
      %s216 = scalar_select %p215, %s212, 63
      %s217 = smul.addr %s214, 64
      %s218 = sadd.s32 %s216, %s217
      %s219 = smul.addr %s218, 4
      %s220 = scalar_lea.vmem %s0, %s219
      %s221 = smul.u32 64, %s19
      %p222 = scmp.lt.s32.totalorder %s18, 1
      %s223 = scalar_select %p222, %s18, 1
      %s224 = scalar_lea.vmem %s1, %s223
      %p225 = scmp.lt.s32.totalorder %s18, 1
      %s226 = scalar_select %p225, %s18, 1
      %s227 = scalar_lea.vmem %s2, %s226
      %s228 = smul.u32 64, %s19
      %p229 = scmp.lt.s32.totalorder %s18, 1
      %s230 = scalar_select %p229, %s18, 1
      %p231 = scmp.lt.s32.totalorder %s228, 63
      %s232 = scalar_select %p231, %s228, 63
      %s233 = smul.addr %s230, 64
      %s234 = sadd.s32 %s232, %s233
      %s235 = smul.addr %s234, 4
      %s236 = scalar_lea.vmem %s3, %s235
      %s237 = smul.u32 64, %s19
      %v238 = vld [vmem:[%s220] sm:$0xf]
      %v239 = vld [vmem:[%s220 + $0x4] sm:$0xf]
      %v240 = vld [vmem:[%s220 + $0x8] sm:$0xf]
      %v241 = vld [vmem:[%s220 + $0xc] sm:$0xf]
      %v242 = vld [vmem:[%s220 + $0x10] sm:$0xf]
      %v243 = vld [vmem:[%s220 + $0x14] sm:$0xf]
      %v244 = vld [vmem:[%s220 + $0x18] sm:$0xf]
      %v245 = vld [vmem:[%s220 + $0x1c] sm:$0xf]
      %v246 = vld [vmem:[%s220 + $0x20] sm:$0xf]
      %v247 = vld [vmem:[%s220 + $0x24] sm:$0xf]
      %v248 = vld [vmem:[%s220 + $0x28] sm:$0xf]
      %v249 = vld [vmem:[%s220 + $0x2c] sm:$0xf]
      %v250 = vld [vmem:[%s220 + $0x30] sm:$0xf]
      %v251 = vld [vmem:[%s220 + $0x34] sm:$0xf]
      %v252 = vld [vmem:[%s220 + $0x38] sm:$0xf]
      %v253 = vld [vmem:[%s220 + $0x3c] sm:$0xf]
      %v254 = vld [vmem:[%s220 + $0x40] sm:$0xf]
      %v255 = vld [vmem:[%s220 + $0x44] sm:$0xf]
      %v256 = vld [vmem:[%s220 + $0x48] sm:$0xf]
      %v257 = vld [vmem:[%s220 + $0x4c] sm:$0xf]
      %v258 = vld [vmem:[%s220 + $0x50] sm:$0xf]
      %v259 = vld [vmem:[%s220 + $0x54] sm:$0xf]
      %v260 = vld [vmem:[%s220 + $0x58] sm:$0xf]
      %v261 = vld [vmem:[%s220 + $0x5c] sm:$0xf]
      %v262 = vld [vmem:[%s220 + $0x60] sm:$0xf]
      %v263 = vld [vmem:[%s220 + $0x64] sm:$0xf]
      %v264 = vld [vmem:[%s220 + $0x68] sm:$0xf]
      %v265 = vld [vmem:[%s220 + $0x6c] sm:$0xf]
      %v266 = vld [vmem:[%s220 + $0x70] sm:$0xf]
      %v267 = vld [vmem:[%s220 + $0x74] sm:$0xf]
      %v268 = vld [vmem:[%s220 + $0x78] sm:$0xf]
      %v269 = vld [vmem:[%s220 + $0x7c] sm:$0xf]
      %v270 = vld [vmem:[%s220 + $0x80] sm:$0xf]
      %v271 = vld [vmem:[%s220 + $0x84] sm:$0xf]
      %v272 = vld [vmem:[%s220 + $0x88] sm:$0xf]
      %v273 = vld [vmem:[%s220 + $0x8c] sm:$0xf]
      %v274 = vld [vmem:[%s220 + $0x90] sm:$0xf]
      %v275 = vld [vmem:[%s220 + $0x94] sm:$0xf]
      %v276 = vld [vmem:[%s220 + $0x98] sm:$0xf]
      %v277 = vld [vmem:[%s220 + $0x9c] sm:$0xf]
      %v278 = vld [vmem:[%s220 + $0xa0] sm:$0xf]
      %v279 = vld [vmem:[%s220 + $0xa4] sm:$0xf]
      %v280 = vld [vmem:[%s220 + $0xa8] sm:$0xf]
      %v281 = vld [vmem:[%s220 + $0xac] sm:$0xf]
      %v282 = vld [vmem:[%s220 + $0xb0] sm:$0xf]
      %v283 = vld [vmem:[%s220 + $0xb4] sm:$0xf]
      %v284 = vld [vmem:[%s220 + $0xb8] sm:$0xf]
      %v285 = vld [vmem:[%s220 + $0xbc] sm:$0xf]
      %v286 = vld [vmem:[%s220 + $0xc0] sm:$0xf]
      %v287 = vld [vmem:[%s220 + $0xc4] sm:$0xf]
      %v288 = vld [vmem:[%s220 + $0xc8] sm:$0xf]
      %v289 = vld [vmem:[%s220 + $0xcc] sm:$0xf]
      %v290 = vld [vmem:[%s220 + $0xd0] sm:$0xf]
      %v291 = vld [vmem:[%s220 + $0xd4] sm:$0xf]
      %v292 = vld [vmem:[%s220 + $0xd8] sm:$0xf]
      %v293 = vld [vmem:[%s220 + $0xdc] sm:$0xf]
      %v294 = vld [vmem:[%s220 + $0xe0] sm:$0xf]
      %v295 = vld [vmem:[%s220 + $0xe4] sm:$0xf]
      %v296 = vld [vmem:[%s220 + $0xe8] sm:$0xf]
      %v297 = vld [vmem:[%s220 + $0xec] sm:$0xf]
      %v298 = vld [vmem:[%s220 + $0xf0] sm:$0xf]
      %v299 = vld [vmem:[%s220 + $0xf4] sm:$0xf]
      %v300 = vld [vmem:[%s220 + $0xf8] sm:$0xf]
      %v301 = vld [vmem:[%s220 + $0xfc] sm:$0xf]
      %v302 = vunpack.c.l.bf16 %v238
      %v303 = vunpack.c.l.bf16 %v239
      %v304 = vunpack.c.l.bf16 %v240
      %v305 = vunpack.c.l.bf16 %v241
      %v306 = vunpack.c.l.bf16 %v242
      %v307 = vunpack.c.l.bf16 %v243
      %v308 = vunpack.c.l.bf16 %v244
      %v309 = vunpack.c.l.bf16 %v245
      %v310 = vunpack.c.l.bf16 %v246
      %v311 = vunpack.c.l.bf16 %v247
      %v312 = vunpack.c.l.bf16 %v248
      %v313 = vunpack.c.l.bf16 %v249
      %v314 = vunpack.c.l.bf16 %v250
      %v315 = vunpack.c.l.bf16 %v251
      %v316 = vunpack.c.l.bf16 %v252
      %v317 = vunpack.c.l.bf16 %v253
      %v318 = vunpack.c.l.bf16 %v254
      %v319 = vunpack.c.l.bf16 %v255
      %v320 = vunpack.c.l.bf16 %v256
      %v321 = vunpack.c.l.bf16 %v257
      %v322 = vunpack.c.l.bf16 %v258
      %v323 = vunpack.c.l.bf16 %v259
      %v324 = vunpack.c.l.bf16 %v260
      %v325 = vunpack.c.l.bf16 %v261
      %v326 = vunpack.c.l.bf16 %v262
      %v327 = vunpack.c.l.bf16 %v263
      %v328 = vunpack.c.l.bf16 %v264
      %v329 = vunpack.c.l.bf16 %v265
      %v330 = vunpack.c.l.bf16 %v266
      %v331 = vunpack.c.l.bf16 %v267
      %v332 = vunpack.c.l.bf16 %v268
      %v333 = vunpack.c.l.bf16 %v269
      %v334 = vunpack.c.l.bf16 %v270
      %v335 = vunpack.c.l.bf16 %v271
      %v336 = vunpack.c.l.bf16 %v272
      %v337 = vunpack.c.l.bf16 %v273
      %v338 = vunpack.c.l.bf16 %v274
      %v339 = vunpack.c.l.bf16 %v275
      %v340 = vunpack.c.l.bf16 %v276
      %v341 = vunpack.c.l.bf16 %v277
      %v342 = vunpack.c.l.bf16 %v278
      %v343 = vunpack.c.l.bf16 %v279
      %v344 = vunpack.c.l.bf16 %v280
      %v345 = vunpack.c.l.bf16 %v281
      %v346 = vunpack.c.l.bf16 %v282
      %v347 = vunpack.c.l.bf16 %v283
      %v348 = vunpack.c.l.bf16 %v284
      %v349 = vunpack.c.l.bf16 %v285
      %v350 = vunpack.c.l.bf16 %v286
      %v351 = vunpack.c.l.bf16 %v287
      %v352 = vunpack.c.l.bf16 %v288
      %v353 = vunpack.c.l.bf16 %v289
      %v354 = vunpack.c.l.bf16 %v290
      %v355 = vunpack.c.l.bf16 %v291
      %v356 = vunpack.c.l.bf16 %v292
      %v357 = vunpack.c.l.bf16 %v293
      %v358 = vunpack.c.l.bf16 %v294
      %v359 = vunpack.c.l.bf16 %v295
      %v360 = vunpack.c.l.bf16 %v296
      %v361 = vunpack.c.l.bf16 %v297
      %v362 = vunpack.c.l.bf16 %v298
      %v363 = vunpack.c.l.bf16 %v299
      %v364 = vunpack.c.l.bf16 %v300
      %v365 = vunpack.c.l.bf16 %v301
      %v366 = vld [vmem:[%s224] sm:$0x1]
      %v368 = vperm.slane %v366, 0
      %v370 = vmul.f32 %v302, %v368
      %v371 = vmul.f32 %v303, %v368
      %v372 = vmul.f32 %v304, %v368
      %v373 = vmul.f32 %v305, %v368
      %v374 = vmul.f32 %v306, %v368
      %v375 = vmul.f32 %v307, %v368
      %v376 = vmul.f32 %v308, %v368
      %v377 = vmul.f32 %v309, %v368
      %v378 = vmul.f32 %v310, %v368
      %v379 = vmul.f32 %v311, %v368
      %v380 = vmul.f32 %v312, %v368
      %v381 = vmul.f32 %v313, %v368
      %v382 = vmul.f32 %v314, %v368
      %v383 = vmul.f32 %v315, %v368
      %v384 = vmul.f32 %v316, %v368
      %v385 = vmul.f32 %v317, %v368
      %v386 = vmul.f32 %v318, %v368
      %v387 = vmul.f32 %v319, %v368
      %v388 = vmul.f32 %v320, %v368
      %v389 = vmul.f32 %v321, %v368
      %v390 = vmul.f32 %v322, %v368
      %v391 = vmul.f32 %v323, %v368
      %v392 = vmul.f32 %v324, %v368
      %v393 = vmul.f32 %v325, %v368
      %v394 = vmul.f32 %v326, %v368
      %v395 = vmul.f32 %v327, %v368
      %v396 = vmul.f32 %v328, %v368
      %v397 = vmul.f32 %v329, %v368
      %v398 = vmul.f32 %v330, %v368
      %v399 = vmul.f32 %v331, %v368
      %v400 = vmul.f32 %v332, %v368
      %v401 = vmul.f32 %v333, %v368
      %v402 = vmul.f32 %v334, %v368
      %v403 = vmul.f32 %v335, %v368
      %v404 = vmul.f32 %v336, %v368
      %v405 = vmul.f32 %v337, %v368
      %v406 = vmul.f32 %v338, %v368
      %v407 = vmul.f32 %v339, %v368
      %v408 = vmul.f32 %v340, %v368
      %v409 = vmul.f32 %v341, %v368
      %v410 = vmul.f32 %v342, %v368
      %v411 = vmul.f32 %v343, %v368
      %v412 = vmul.f32 %v344, %v368
      %v413 = vmul.f32 %v345, %v368
      %v414 = vmul.f32 %v346, %v368
      %v415 = vmul.f32 %v347, %v368
      %v416 = vmul.f32 %v348, %v368
      %v417 = vmul.f32 %v349, %v368
      %v418 = vmul.f32 %v350, %v368
      %v419 = vmul.f32 %v351, %v368
      %v420 = vmul.f32 %v352, %v368
      %v421 = vmul.f32 %v353, %v368
      %v422 = vmul.f32 %v354, %v368
      %v423 = vmul.f32 %v355, %v368
      %v424 = vmul.f32 %v356, %v368
      %v425 = vmul.f32 %v357, %v368
      %v426 = vmul.f32 %v358, %v368
      %v427 = vmul.f32 %v359, %v368
      %v428 = vmul.f32 %v360, %v368
      %v429 = vmul.f32 %v361, %v368
      %v430 = vmul.f32 %v362, %v368
      %v431 = vmul.f32 %v363, %v368
      %v432 = vmul.f32 %v364, %v368
      %v433 = vmul.f32 %v365, %v368
      %v434 = vld [vmem:[%s227] sm:$0x1]
      %v436 = vperm.slane %v434, 0
      %v438 = vadd.f32 %v370, %v436
      %v439 = vadd.f32 %v371, %v436
      %v440 = vadd.f32 %v372, %v436
      %v441 = vadd.f32 %v373, %v436
      %v442 = vadd.f32 %v374, %v436
      %v443 = vadd.f32 %v375, %v436
      %v444 = vadd.f32 %v376, %v436
      %v445 = vadd.f32 %v377, %v436
      %v446 = vadd.f32 %v378, %v436
      %v447 = vadd.f32 %v379, %v436
      %v448 = vadd.f32 %v380, %v436
      %v449 = vadd.f32 %v381, %v436
      %v450 = vadd.f32 %v382, %v436
      %v451 = vadd.f32 %v383, %v436
      %v452 = vadd.f32 %v384, %v436
      %v453 = vadd.f32 %v385, %v436
      %v454 = vadd.f32 %v386, %v436
      %v455 = vadd.f32 %v387, %v436
      %v456 = vadd.f32 %v388, %v436
      %v457 = vadd.f32 %v389, %v436
      %v458 = vadd.f32 %v390, %v436
      %v459 = vadd.f32 %v391, %v436
      %v460 = vadd.f32 %v392, %v436
      %v461 = vadd.f32 %v393, %v436
      %v462 = vadd.f32 %v394, %v436
      %v463 = vadd.f32 %v395, %v436
      %v464 = vadd.f32 %v396, %v436
      %v465 = vadd.f32 %v397, %v436
      %v466 = vadd.f32 %v398, %v436
      %v467 = vadd.f32 %v399, %v436
      %v468 = vadd.f32 %v400, %v436
      %v469 = vadd.f32 %v401, %v436
      %v470 = vadd.f32 %v402, %v436
      %v471 = vadd.f32 %v403, %v436
      %v472 = vadd.f32 %v404, %v436
      %v473 = vadd.f32 %v405, %v436
      %v474 = vadd.f32 %v406, %v436
      %v475 = vadd.f32 %v407, %v436
      %v476 = vadd.f32 %v408, %v436
      %v477 = vadd.f32 %v409, %v436
      %v478 = vadd.f32 %v410, %v436
      %v479 = vadd.f32 %v411, %v436
      %v480 = vadd.f32 %v412, %v436
      %v481 = vadd.f32 %v413, %v436
      %v482 = vadd.f32 %v414, %v436
      %v483 = vadd.f32 %v415, %v436
      %v484 = vadd.f32 %v416, %v436
      %v485 = vadd.f32 %v417, %v436
      %v486 = vadd.f32 %v418, %v436
      %v487 = vadd.f32 %v419, %v436
      %v488 = vadd.f32 %v420, %v436
      %v489 = vadd.f32 %v421, %v436
      %v490 = vadd.f32 %v422, %v436
      %v491 = vadd.f32 %v423, %v436
      %v492 = vadd.f32 %v424, %v436
      %v493 = vadd.f32 %v425, %v436
      %v494 = vadd.f32 %v426, %v436
      %v495 = vadd.f32 %v427, %v436
      %v496 = vadd.f32 %v428, %v436
      %v497 = vadd.f32 %v429, %v436
      %v498 = vadd.f32 %v430, %v436
      %v499 = vadd.f32 %v431, %v436
      %v500 = vadd.f32 %v432, %v436
      %v501 = vadd.f32 %v433, %v436
      %vm502 = vcmp.ge.f32.partialorder %v438, 0.0
      %vm503 = vcmp.ge.f32.partialorder %v439, 0.0
      %vm504 = vcmp.ge.f32.partialorder %v440, 0.0
      %vm505 = vcmp.ge.f32.partialorder %v441, 0.0
      %vm506 = vcmp.ge.f32.partialorder %v442, 0.0
      %vm507 = vcmp.ge.f32.partialorder %v443, 0.0
      %vm508 = vcmp.ge.f32.partialorder %v444, 0.0
      %vm509 = vcmp.ge.f32.partialorder %v445, 0.0
      %vm510 = vcmp.ge.f32.partialorder %v446, 0.0
      %vm511 = vcmp.ge.f32.partialorder %v447, 0.0
      %vm512 = vcmp.ge.f32.partialorder %v448, 0.0
      %vm513 = vcmp.ge.f32.partialorder %v449, 0.0
      %vm514 = vcmp.ge.f32.partialorder %v450, 0.0
      %vm515 = vcmp.ge.f32.partialorder %v451, 0.0
      %vm516 = vcmp.ge.f32.partialorder %v452, 0.0
      %vm517 = vcmp.ge.f32.partialorder %v453, 0.0
      %vm518 = vcmp.ge.f32.partialorder %v454, 0.0
      %vm519 = vcmp.ge.f32.partialorder %v455, 0.0
      %vm520 = vcmp.ge.f32.partialorder %v456, 0.0
      %vm521 = vcmp.ge.f32.partialorder %v457, 0.0
      %vm522 = vcmp.ge.f32.partialorder %v458, 0.0
      %vm523 = vcmp.ge.f32.partialorder %v459, 0.0
      %vm524 = vcmp.ge.f32.partialorder %v460, 0.0
      %vm525 = vcmp.ge.f32.partialorder %v461, 0.0
      %vm526 = vcmp.ge.f32.partialorder %v462, 0.0
      %vm527 = vcmp.ge.f32.partialorder %v463, 0.0
      %vm528 = vcmp.ge.f32.partialorder %v464, 0.0
      %vm529 = vcmp.ge.f32.partialorder %v465, 0.0
      %vm530 = vcmp.ge.f32.partialorder %v466, 0.0
      %vm531 = vcmp.ge.f32.partialorder %v467, 0.0
      %vm532 = vcmp.ge.f32.partialorder %v468, 0.0
      %vm533 = vcmp.ge.f32.partialorder %v469, 0.0
      %vm534 = vcmp.ge.f32.partialorder %v470, 0.0
      %vm535 = vcmp.ge.f32.partialorder %v471, 0.0
      %vm536 = vcmp.ge.f32.partialorder %v472, 0.0
      %vm537 = vcmp.ge.f32.partialorder %v473, 0.0
      %vm538 = vcmp.ge.f32.partialorder %v474, 0.0
      %vm539 = vcmp.ge.f32.partialorder %v475, 0.0
      %vm540 = vcmp.ge.f32.partialorder %v476, 0.0
      %vm541 = vcmp.ge.f32.partialorder %v477, 0.0
      %vm542 = vcmp.ge.f32.partialorder %v478, 0.0
      %vm543 = vcmp.ge.f32.partialorder %v479, 0.0
      %vm544 = vcmp.ge.f32.partialorder %v480, 0.0
      %vm545 = vcmp.ge.f32.partialorder %v481, 0.0
      %vm546 = vcmp.ge.f32.partialorder %v482, 0.0
      %vm547 = vcmp.ge.f32.partialorder %v483, 0.0
      %vm548 = vcmp.ge.f32.partialorder %v484, 0.0
      %vm549 = vcmp.ge.f32.partialorder %v485, 0.0
      %vm550 = vcmp.ge.f32.partialorder %v486, 0.0
      %vm551 = vcmp.ge.f32.partialorder %v487, 0.0
      %vm552 = vcmp.ge.f32.partialorder %v488, 0.0
      %vm553 = vcmp.ge.f32.partialorder %v489, 0.0
      %vm554 = vcmp.ge.f32.partialorder %v490, 0.0
      %vm555 = vcmp.ge.f32.partialorder %v491, 0.0
      %vm556 = vcmp.ge.f32.partialorder %v492, 0.0
      %vm557 = vcmp.ge.f32.partialorder %v493, 0.0
      %vm558 = vcmp.ge.f32.partialorder %v494, 0.0
      %vm559 = vcmp.ge.f32.partialorder %v495, 0.0
      %vm560 = vcmp.ge.f32.partialorder %v496, 0.0
      %vm561 = vcmp.ge.f32.partialorder %v497, 0.0
      %vm562 = vcmp.ge.f32.partialorder %v498, 0.0
      %vm563 = vcmp.ge.f32.partialorder %v499, 0.0
      %vm564 = vcmp.ge.f32.partialorder %v500, 0.0
      %vm565 = vcmp.ge.f32.partialorder %v501, 0.0
      %v566 = vmul.f32 %v438, 0.01
      %v567 = vmul.f32 %v439, 0.01
      %v568 = vmul.f32 %v440, 0.01
      %v569 = vmul.f32 %v441, 0.01
      %v570 = vmul.f32 %v442, 0.01
      %v571 = vmul.f32 %v443, 0.01
      %v572 = vmul.f32 %v444, 0.01
      %v573 = vmul.f32 %v445, 0.01
      %v574 = vmul.f32 %v446, 0.01
      %v575 = vmul.f32 %v447, 0.01
      %v576 = vmul.f32 %v448, 0.01
      %v577 = vmul.f32 %v449, 0.01
      %v578 = vmul.f32 %v450, 0.01
      %v579 = vmul.f32 %v451, 0.01
      %v580 = vmul.f32 %v452, 0.01
      %v581 = vmul.f32 %v453, 0.01
      %v582 = vmul.f32 %v454, 0.01
      %v583 = vmul.f32 %v455, 0.01
      %v584 = vmul.f32 %v456, 0.01
      %v585 = vmul.f32 %v457, 0.01
      %v586 = vmul.f32 %v458, 0.01
      %v587 = vmul.f32 %v459, 0.01
      %v588 = vmul.f32 %v460, 0.01
      %v589 = vmul.f32 %v461, 0.01
      %v590 = vmul.f32 %v462, 0.01
      %v591 = vmul.f32 %v463, 0.01
      %v592 = vmul.f32 %v464, 0.01
      %v593 = vmul.f32 %v465, 0.01
      %v594 = vmul.f32 %v466, 0.01
      %v595 = vmul.f32 %v467, 0.01
      %v596 = vmul.f32 %v468, 0.01
      %v597 = vmul.f32 %v469, 0.01
      %v598 = vmul.f32 %v470, 0.01
      %v599 = vmul.f32 %v471, 0.01
      %v600 = vmul.f32 %v472, 0.01
      %v601 = vmul.f32 %v473, 0.01
      %v602 = vmul.f32 %v474, 0.01
      %v603 = vmul.f32 %v475, 0.01
      %v604 = vmul.f32 %v476, 0.01
      %v605 = vmul.f32 %v477, 0.01
      %v606 = vmul.f32 %v478, 0.01
      %v607 = vmul.f32 %v479, 0.01
      %v608 = vmul.f32 %v480, 0.01
      %v609 = vmul.f32 %v481, 0.01
      %v610 = vmul.f32 %v482, 0.01
      %v611 = vmul.f32 %v483, 0.01
      %v612 = vmul.f32 %v484, 0.01
      %v613 = vmul.f32 %v485, 0.01
      %v614 = vmul.f32 %v486, 0.01
      %v615 = vmul.f32 %v487, 0.01
      %v616 = vmul.f32 %v488, 0.01
      %v617 = vmul.f32 %v489, 0.01
      %v618 = vmul.f32 %v490, 0.01
      %v619 = vmul.f32 %v491, 0.01
      %v620 = vmul.f32 %v492, 0.01
      %v621 = vmul.f32 %v493, 0.01
      %v622 = vmul.f32 %v494, 0.01
      %v623 = vmul.f32 %v495, 0.01
      %v624 = vmul.f32 %v496, 0.01
      %v625 = vmul.f32 %v497, 0.01
      %v626 = vmul.f32 %v498, 0.01
      %v627 = vmul.f32 %v499, 0.01
      %v628 = vmul.f32 %v500, 0.01
      %v629 = vmul.f32 %v501, 0.01
      %v630 = vsel %vm502, %v438, %v566
      %v631 = vsel %vm503, %v439, %v567
      %v632 = vsel %vm504, %v440, %v568
      %v633 = vsel %vm505, %v441, %v569
      %v634 = vsel %vm506, %v442, %v570
      %v635 = vsel %vm507, %v443, %v571
      %v636 = vsel %vm508, %v444, %v572
      %v637 = vsel %vm509, %v445, %v573
      %v638 = vsel %vm510, %v446, %v574
      %v639 = vsel %vm511, %v447, %v575
      %v640 = vsel %vm512, %v448, %v576
      %v641 = vsel %vm513, %v449, %v577
      %v642 = vsel %vm514, %v450, %v578
      %v643 = vsel %vm515, %v451, %v579
      %v644 = vsel %vm516, %v452, %v580
      %v645 = vsel %vm517, %v453, %v581
      %v646 = vsel %vm518, %v454, %v582
      %v647 = vsel %vm519, %v455, %v583
      %v648 = vsel %vm520, %v456, %v584
      %v649 = vsel %vm521, %v457, %v585
      %v650 = vsel %vm522, %v458, %v586
      %v651 = vsel %vm523, %v459, %v587
      %v652 = vsel %vm524, %v460, %v588
      %v653 = vsel %vm525, %v461, %v589
      %v654 = vsel %vm526, %v462, %v590
      %v655 = vsel %vm527, %v463, %v591
      %v656 = vsel %vm528, %v464, %v592
      %v657 = vsel %vm529, %v465, %v593
      %v658 = vsel %vm530, %v466, %v594
      %v659 = vsel %vm531, %v467, %v595
      %v660 = vsel %vm532, %v468, %v596
      %v661 = vsel %vm533, %v469, %v597
      %v662 = vsel %vm534, %v470, %v598
      %v663 = vsel %vm535, %v471, %v599
      %v664 = vsel %vm536, %v472, %v600
      %v665 = vsel %vm537, %v473, %v601
      %v666 = vsel %vm538, %v474, %v602
      %v667 = vsel %vm539, %v475, %v603
      %v668 = vsel %vm540, %v476, %v604
      %v669 = vsel %vm541, %v477, %v605
      %v670 = vsel %vm542, %v478, %v606
      %v671 = vsel %vm543, %v479, %v607
      %v672 = vsel %vm544, %v480, %v608
      %v673 = vsel %vm545, %v481, %v609
      %v674 = vsel %vm546, %v482, %v610
      %v675 = vsel %vm547, %v483, %v611
      %v676 = vsel %vm548, %v484, %v612
      %v677 = vsel %vm549, %v485, %v613
      %v678 = vsel %vm550, %v486, %v614
      %v679 = vsel %vm551, %v487, %v615
      %v680 = vsel %vm552, %v488, %v616
      %v681 = vsel %vm553, %v489, %v617
      %v682 = vsel %vm554, %v490, %v618
      %v683 = vsel %vm555, %v491, %v619
      %v684 = vsel %vm556, %v492, %v620
      %v685 = vsel %vm557, %v493, %v621
      %v686 = vsel %vm558, %v494, %v622
      %v687 = vsel %vm559, %v495, %v623
      %v688 = vsel %vm560, %v496, %v624
      %v689 = vsel %vm561, %v497, %v625
      %v690 = vsel %vm562, %v498, %v626
      %v691 = vsel %vm563, %v499, %v627
      %v692 = vsel %vm564, %v500, %v628
      %v693 = vsel %vm565, %v501, %v629
      %v694 = vpack.c.bf16 %v630, %v630
      %v695 = vpack.c.bf16 %v631, %v631
      %v696 = vpack.c.bf16 %v632, %v632
      %v697 = vpack.c.bf16 %v633, %v633
      %v698 = vpack.c.bf16 %v634, %v634
      %v699 = vpack.c.bf16 %v635, %v635
      %v700 = vpack.c.bf16 %v636, %v636
      %v701 = vpack.c.bf16 %v637, %v637
      %v702 = vpack.c.bf16 %v638, %v638
      %v703 = vpack.c.bf16 %v639, %v639
      %v704 = vpack.c.bf16 %v640, %v640
      %v705 = vpack.c.bf16 %v641, %v641
      %v706 = vpack.c.bf16 %v642, %v642
      %v707 = vpack.c.bf16 %v643, %v643
      %v708 = vpack.c.bf16 %v644, %v644
      %v709 = vpack.c.bf16 %v645, %v645
      %v710 = vpack.c.bf16 %v646, %v646
      %v711 = vpack.c.bf16 %v647, %v647
      %v712 = vpack.c.bf16 %v648, %v648
      %v713 = vpack.c.bf16 %v649, %v649
      %v714 = vpack.c.bf16 %v650, %v650
      %v715 = vpack.c.bf16 %v651, %v651
      %v716 = vpack.c.bf16 %v652, %v652
      %v717 = vpack.c.bf16 %v653, %v653
      %v718 = vpack.c.bf16 %v654, %v654
      %v719 = vpack.c.bf16 %v655, %v655
      %v720 = vpack.c.bf16 %v656, %v656
      %v721 = vpack.c.bf16 %v657, %v657
      %v722 = vpack.c.bf16 %v658, %v658
      %v723 = vpack.c.bf16 %v659, %v659
      %v724 = vpack.c.bf16 %v660, %v660
      %v725 = vpack.c.bf16 %v661, %v661
      %v726 = vpack.c.bf16 %v662, %v662
      %v727 = vpack.c.bf16 %v663, %v663
      %v728 = vpack.c.bf16 %v664, %v664
      %v729 = vpack.c.bf16 %v665, %v665
      %v730 = vpack.c.bf16 %v666, %v666
      %v731 = vpack.c.bf16 %v667, %v667
      %v732 = vpack.c.bf16 %v668, %v668
      %v733 = vpack.c.bf16 %v669, %v669
      %v734 = vpack.c.bf16 %v670, %v670
      %v735 = vpack.c.bf16 %v671, %v671
      %v736 = vpack.c.bf16 %v672, %v672
      %v737 = vpack.c.bf16 %v673, %v673
      %v738 = vpack.c.bf16 %v674, %v674
      %v739 = vpack.c.bf16 %v675, %v675
      %v740 = vpack.c.bf16 %v676, %v676
      %v741 = vpack.c.bf16 %v677, %v677
      %v742 = vpack.c.bf16 %v678, %v678
      %v743 = vpack.c.bf16 %v679, %v679
      %v744 = vpack.c.bf16 %v680, %v680
      %v745 = vpack.c.bf16 %v681, %v681
      %v746 = vpack.c.bf16 %v682, %v682
      %v747 = vpack.c.bf16 %v683, %v683
      %v748 = vpack.c.bf16 %v684, %v684
      %v749 = vpack.c.bf16 %v685, %v685
      %v750 = vpack.c.bf16 %v686, %v686
      %v751 = vpack.c.bf16 %v687, %v687
      %v752 = vpack.c.bf16 %v688, %v688
      %v753 = vpack.c.bf16 %v689, %v689
      %v754 = vpack.c.bf16 %v690, %v690
      %v755 = vpack.c.bf16 %v691, %v691
      %v756 = vpack.c.bf16 %v692, %v692
      %v757 = vpack.c.bf16 %v693, %v693
      %vm758 = vcmask 60416
      %759 = vst.msk [vmem:[%s236] sm:$0xf] %vm758, %v694
      %760 = vst.msk [vmem:[%s236 + $0x4] sm:$0xf] %vm758, %v695
      %761 = vst.msk [vmem:[%s236 + $0x8] sm:$0xf] %vm758, %v696
      %762 = vst.msk [vmem:[%s236 + $0xc] sm:$0xf] %vm758, %v697
      %763 = vst.msk [vmem:[%s236 + $0x10] sm:$0xf] %vm758, %v698
      %764 = vst.msk [vmem:[%s236 + $0x14] sm:$0xf] %vm758, %v699
      %765 = vst.msk [vmem:[%s236 + $0x18] sm:$0xf] %vm758, %v700
      %766 = vst.msk [vmem:[%s236 + $0x1c] sm:$0xf] %vm758, %v701
      %767 = vst.msk [vmem:[%s236 + $0x20] sm:$0xf] %vm758, %v702
      %768 = vst.msk [vmem:[%s236 + $0x24] sm:$0xf] %vm758, %v703
      %769 = vst.msk [vmem:[%s236 + $0x28] sm:$0xf] %vm758, %v704
      %770 = vst.msk [vmem:[%s236 + $0x2c] sm:$0xf] %vm758, %v705
      %771 = vst.msk [vmem:[%s236 + $0x30] sm:$0xf] %vm758, %v706
      %772 = vst.msk [vmem:[%s236 + $0x34] sm:$0xf] %vm758, %v707
      %773 = vst.msk [vmem:[%s236 + $0x38] sm:$0xf] %vm758, %v708
      %774 = vst.msk [vmem:[%s236 + $0x3c] sm:$0xf] %vm758, %v709
      %775 = vst.msk [vmem:[%s236 + $0x40] sm:$0xf] %vm758, %v710
      %776 = vst.msk [vmem:[%s236 + $0x44] sm:$0xf] %vm758, %v711
      %777 = vst.msk [vmem:[%s236 + $0x48] sm:$0xf] %vm758, %v712
      %778 = vst.msk [vmem:[%s236 + $0x4c] sm:$0xf] %vm758, %v713
      %779 = vst.msk [vmem:[%s236 + $0x50] sm:$0xf] %vm758, %v714
      %780 = vst.msk [vmem:[%s236 + $0x54] sm:$0xf] %vm758, %v715
      %781 = vst.msk [vmem:[%s236 + $0x58] sm:$0xf] %vm758, %v716
      %782 = vst.msk [vmem:[%s236 + $0x5c] sm:$0xf] %vm758, %v717
      %783 = vst.msk [vmem:[%s236 + $0x60] sm:$0xf] %vm758, %v718
      %784 = vst.msk [vmem:[%s236 + $0x64] sm:$0xf] %vm758, %v719
      %785 = vst.msk [vmem:[%s236 + $0x68] sm:$0xf] %vm758, %v720
      %786 = vst.msk [vmem:[%s236 + $0x6c] sm:$0xf] %vm758, %v721
      %787 = vst.msk [vmem:[%s236 + $0x70] sm:$0xf] %vm758, %v722
      %788 = vst.msk [vmem:[%s236 + $0x74] sm:$0xf] %vm758, %v723
      %789 = vst.msk [vmem:[%s236 + $0x78] sm:$0xf] %vm758, %v724
      %790 = vst.msk [vmem:[%s236 + $0x7c] sm:$0xf] %vm758, %v725
      %791 = vst.msk [vmem:[%s236 + $0x80] sm:$0xf] %vm758, %v726
      %792 = vst.msk [vmem:[%s236 + $0x84] sm:$0xf] %vm758, %v727
      %793 = vst.msk [vmem:[%s236 + $0x88] sm:$0xf] %vm758, %v728
      %794 = vst.msk [vmem:[%s236 + $0x8c] sm:$0xf] %vm758, %v729
      %795 = vst.msk [vmem:[%s236 + $0x90] sm:$0xf] %vm758, %v730
      %796 = vst.msk [vmem:[%s236 + $0x94] sm:$0xf] %vm758, %v731
      %797 = vst.msk [vmem:[%s236 + $0x98] sm:$0xf] %vm758, %v732
      %798 = vst.msk [vmem:[%s236 + $0x9c] sm:$0xf] %vm758, %v733
      %799 = vst.msk [vmem:[%s236 + $0xa0] sm:$0xf] %vm758, %v734
      %800 = vst.msk [vmem:[%s236 + $0xa4] sm:$0xf] %vm758, %v735
      %801 = vst.msk [vmem:[%s236 + $0xa8] sm:$0xf] %vm758, %v736
      %802 = vst.msk [vmem:[%s236 + $0xac] sm:$0xf] %vm758, %v737
      %803 = vst.msk [vmem:[%s236 + $0xb0] sm:$0xf] %vm758, %v738
      %804 = vst.msk [vmem:[%s236 + $0xb4] sm:$0xf] %vm758, %v739
      %805 = vst.msk [vmem:[%s236 + $0xb8] sm:$0xf] %vm758, %v740
      %806 = vst.msk [vmem:[%s236 + $0xbc] sm:$0xf] %vm758, %v741
      %807 = vst.msk [vmem:[%s236 + $0xc0] sm:$0xf] %vm758, %v742
      %808 = vst.msk [vmem:[%s236 + $0xc4] sm:$0xf] %vm758, %v743
      %809 = vst.msk [vmem:[%s236 + $0xc8] sm:$0xf] %vm758, %v744
      %810 = vst.msk [vmem:[%s236 + $0xcc] sm:$0xf] %vm758, %v745
      %811 = vst.msk [vmem:[%s236 + $0xd0] sm:$0xf] %vm758, %v746
      %812 = vst.msk [vmem:[%s236 + $0xd4] sm:$0xf] %vm758, %v747
      %813 = vst.msk [vmem:[%s236 + $0xd8] sm:$0xf] %vm758, %v748
      %814 = vst.msk [vmem:[%s236 + $0xdc] sm:$0xf] %vm758, %v749
      %815 = vst.msk [vmem:[%s236 + $0xe0] sm:$0xf] %vm758, %v750
      %816 = vst.msk [vmem:[%s236 + $0xe4] sm:$0xf] %vm758, %v751
      %817 = vst.msk [vmem:[%s236 + $0xe8] sm:$0xf] %vm758, %v752
      %818 = vst.msk [vmem:[%s236 + $0xec] sm:$0xf] %vm758, %v753
      %819 = vst.msk [vmem:[%s236 + $0xf0] sm:$0xf] %vm758, %v754
      %820 = vst.msk [vmem:[%s236 + $0xf4] sm:$0xf] %vm758, %v755
      %821 = vst.msk [vmem:[%s236 + $0xf8] sm:$0xf] %vm758, %v756
      %822 = vst.msk [vmem:[%s236 + $0xfc] sm:$0xf] %vm758, %v757
      %s823 = smul.u32 64, %s19
      %p824 = scmp.lt.s32.totalorder %s18, 1
      %s825 = scalar_select %p824, %s18, 1
      %p826 = scmp.lt.s32.totalorder %s823, 63
      %s827 = scalar_select %p826, %s823, 63
      %s828 = smul.addr %s825, 64
      %s829 = sadd.s32 %s827, %s828
      %s830 = smul.addr %s829, 4
      %s831 = scalar_lea.vmem %s3, %s830
      // Predicated region
      $region33: #{_lambda_.10} parent=31 // pred_check
        %p832 = pneg %p126
      $region34: #{_lambda_.10} parent=31 // pred_check_branch
        %834 = sbr.rel (%p832) target = $region36
      $region35: #{_lambda_.10} parent=31 // pred_region
        %s835 = smul.u32 64, %s19
      $region36: #{_lambda_.10} parent=31 // pred_fallthru
        _
    $region32: #{_lambda_.10} parent=5 // pred_fallthru
      _
    %p836 = scmp.le.s32.totalorder 2, %s9
    // Predicated region
    $region37: #{_lambda_.10} parent=5 // pred_check
      %p837 = pneg %p836
    $region38: #{_lambda_.10} parent=5 // pred_check_branch
      %839 = sbr.rel (%p837) target = $region40
    $region39: #{_lambda_.10} parent=5 // pred_region
      %s840 = ssub.s32 %s9, 2
      // Predicated region
      $region41: #{_lambda_.10} parent=39 // pred_check
        %p841 = pneg %p132
      $region42: #{_lambda_.10} parent=39 // pred_check_branch
        %843 = sbr.rel (%p841) target = $region44
      $region43: #{_lambda_.10} parent=39 // pred_region
        %s844 = smul.u32 64, %s21
        %p845 = scmp.lt.s32.totalorder %s20, 1
        %s846 = scalar_select %p845, %s20, 1
        %p847 = scmp.lt.s32.totalorder %s844, 63
        %s848 = scalar_select %p847, %s844, 63
        %s849 = smul.addr %s846, 64
        %s850 = sadd.s32 %s848, %s849
        %s851 = smul.addr %s850, 4
        %s852 = scalar_lea.vmem %s3, %s851
      $region44: #{_lambda_.10} parent=39 // pred_fallthru
        _
    $region40: #{_lambda_.10} parent=5 // pred_fallthru
      _
  $region6: #{_lambda_.10} parent=0 // loop_footer
    %s13 = sadd.s32 1, %s9
  $region7: #{_lambda_.10} parent=0 // loop_footer_branch
    %8 = sbr.rel target = $region3
  $region8: #{_lambda_.10} parent=0 // loop_exit
    _

// kernel: _lambda_.11
$region0: #{_lambda_.11}
  #allocation0 [shape = 'u32[]', space=smem, size = 0x4, offset = 0x4, fixed_abs, tag = 'smem constant byte address 0x4 - core index']
  #allocation1 [shape = 'u32[72,128]{1,0:T(1,128)}', space=vmem, size = 0x9000, scoped, tag = 'internal scratch']
  %s0 = inlined_call_operand.vmem [shape: bf16[2,10,10,10,8], index: 0, kind: input, shape index: {}, may-alias: {0,1,2}]
  %s1 = inlined_call_operand.vmem [shape: bf16[2,10,10,10,8], index: 1, kind: input, shape index: {}, may-alias: {0,1,2}]
  %s2 = inlined_call_operand.vmem [shape: bf16[2,10,10,10,8], index: 2, kind: input, shape index: {}, may-alias: {0,1,2}]
  %s3 = inlined_call_operand.vmem [shape: bf16[3,3,3,8,8], index: 3, kind: input, shape index: {}]
  %s4 = inlined_call_operand.vmem [shape: f32[1,8], index: 4, kind: input, shape index: {}]
  %s5 = inlined_call_operand.vmem [shape: bf16[2,8,8,8,8], index: 5, kind: output, shape index: {}]
  %s6 = sld [smem:[#allocation0]]
  $region53: #{_lambda_.11} parent=0
    _
  %s8 = ssub.s32 1, %s6
  %s9 = scalar_select 0, %s8, %s6
  loop: start=0, step=1, limit=18
  $region2: #{_lambda_.11} parent=0 // loop_pre_header
    _
  $region3: #{_lambda_.11} parent=0 // loop_header
    %s11 = sphi 0, %s15
    %p12 = scmp.ge.s32.totalorder %s11, 18
    %s18 = sphi 0, %s30
    %s19 = sphi 0, %s26
    %s20 = sphi 0, %s18
    %s21 = sphi 0, %s19
    %s22 = sphi 0, %s20
    %s23 = sphi 0, %s21
    %s35 = sphi 0, %s37
    %s38 = sphi 0, %s35
    %s39 = sphi 0, %s38
    %s55 = sphi 0, %s39
    %s65 = sphi 0, %s67
    %s68 = sphi 0, %s65
    %s69 = sphi 0, %s68
    %s85 = sphi 0, %s69
    %s95 = sphi 0, %s97
    %s98 = sphi 0, %s95
    %s99 = sphi 0, %s98
    %s115 = sphi 0, %s99
    %s119 = sphi 0, %s119
    %s121 = sphi 0, %s119
    %s122 = sphi 0, %s121
    %s136 = sphi 0, %s122
    %s140 = sphi 0, %s140
    %s142 = sphi 0, %s140
    %s143 = sphi 0, %s142
    %s157 = sphi 0, %s143
    %s165 = sphi 0, %s167
    %s168 = sphi 0, %s165
    %s169 = sphi 0, %s168
    %s185 = sphi 0, %s169
  $region4: #{_lambda_.11} parent=0 // loop_header_branch
    %14 = sbr.rel (%p12) target = $region8
  $region5: #{_lambda_.11} parent=0 // loop_body
    %s16 = ssub.s32 %s11, 1
    %s17 = ssub.s32 %s11, 2
    %s24 = sadd.s32 1, %s19
    %p25 = scmp.ge.s32.totalorder %s24, 8
    %s26 = scalar_select %p25, 0, %s24
    %s27 = sadd.s32 1, %s18
    %s28 = scalar_select %p25, %s27, %s18
    %p29 = scmp.ge.s32.totalorder %s28, 2
    %s30 = scalar_select %p29, 0, %s28
    %s31 = ssub.s32 %s18, %s30
    %s32 = ssub.s32 %s19, %s26
    %s33 = sor.u32 %s31, %s32
    %p34 = scmp.eq.s32.totalorder %s33, 0
    %s36 = sadd.s32 %s35, 1
    %s37 = scalar_select %p34, %s35, %s36
    %p40 = pneg %p34
    %p41 = scmp.eq.s32.totalorder %s11, 15
    %p42 = por %p40, %p41
    %p43 = scmp.ne.s32.totalorder %s35, %s38
    %p44 = scmp.eq.s32.totalorder %s11, 0
    %p45 = por %p43, %p44
    %p46 = scmp.ne.s32.totalorder %s35, %s38
    %p47 = scmp.eq.s32.totalorder %s16, 15
    %p48 = por %p46, %p47
    %p49 = scmp.ne.s32.totalorder %s38, %s39
    %p50 = scmp.eq.s32.totalorder %s16, 0
    %p51 = por %p49, %p50
    %p52 = scmp.ne.s32.totalorder %s38, %s39
    %p53 = scmp.eq.s32.totalorder %s17, 15
    %p54 = por %p52, %p53
    %p56 = scmp.ne.s32.totalorder %s39, %s55
    %p57 = scmp.eq.s32.totalorder %s17, 0
    %p58 = por %p56, %p57
    %s59 = sadd.s32 %s19, 1
    %s60 = sadd.s32 %s26, 1
    %s61 = ssub.s32 %s18, %s30
    %s62 = ssub.s32 %s59, %s60
    %s63 = sor.u32 %s61, %s62
    %p64 = scmp.eq.s32.totalorder %s63, 0
    %s66 = sadd.s32 %s65, 1
    %s67 = scalar_select %p64, %s65, %s66
    %p70 = pneg %p64
    %p71 = scmp.eq.s32.totalorder %s11, 15
    %p72 = por %p70, %p71
    %p73 = scmp.ne.s32.totalorder %s65, %s68
    %p74 = scmp.eq.s32.totalorder %s11, 0
    %p75 = por %p73, %p74
    %p76 = scmp.ne.s32.totalorder %s65, %s68
    %p77 = scmp.eq.s32.totalorder %s16, 15
    %p78 = por %p76, %p77
    %p79 = scmp.ne.s32.totalorder %s68, %s69
    %p80 = scmp.eq.s32.totalorder %s16, 0
    %p81 = por %p79, %p80
    %p82 = scmp.ne.s32.totalorder %s68, %s69
    %p83 = scmp.eq.s32.totalorder %s17, 15
    %p84 = por %p82, %p83
    %p86 = scmp.ne.s32.totalorder %s69, %s85
    %p87 = scmp.eq.s32.totalorder %s17, 0
    %p88 = por %p86, %p87
    %s89 = sadd.s32 %s19, 2
    %s90 = sadd.s32 %s26, 2
    %s91 = ssub.s32 %s18, %s30
    %s92 = ssub.s32 %s89, %s90
    %s93 = sor.u32 %s91, %s92
    %p94 = scmp.eq.s32.totalorder %s93, 0
    %s96 = sadd.s32 %s95, 1
    %s97 = scalar_select %p94, %s95, %s96
    %p100 = pneg %p94
    %p101 = scmp.eq.s32.totalorder %s11, 15
    %p102 = por %p100, %p101
    %p103 = scmp.ne.s32.totalorder %s95, %s98
    %p104 = scmp.eq.s32.totalorder %s11, 0
    %p105 = por %p103, %p104
    %p106 = scmp.ne.s32.totalorder %s95, %s98
    %p107 = scmp.eq.s32.totalorder %s16, 15
    %p108 = por %p106, %p107
    %p109 = scmp.ne.s32.totalorder %s98, %s99
    %p110 = scmp.eq.s32.totalorder %s16, 0
    %p111 = por %p109, %p110
    %p112 = scmp.ne.s32.totalorder %s98, %s99
    %p113 = scmp.eq.s32.totalorder %s17, 15
    %p114 = por %p112, %p113
    %p116 = scmp.ne.s32.totalorder %s99, %s115
    %p117 = scmp.eq.s32.totalorder %s17, 0
    %p118 = por %p116, %p117
    %s120 = sadd.s32 %s119, 1
    %p123 = scmp.eq.s32.totalorder %s11, 15
    %p124 = scmp.ne.s32.totalorder %s119, %s121
    %p125 = scmp.eq.s32.totalorder %s11, 0
    %p126 = por %p124, %p125
    %p127 = scmp.ne.s32.totalorder %s119, %s121
    %p128 = scmp.eq.s32.totalorder %s16, 15
    %p129 = por %p127, %p128
    %p130 = scmp.ne.s32.totalorder %s121, %s122
    %p131 = scmp.eq.s32.totalorder %s16, 0
    %p132 = por %p130, %p131
    %p133 = scmp.ne.s32.totalorder %s121, %s122
    %p134 = scmp.eq.s32.totalorder %s17, 15
    %p135 = por %p133, %p134
    %p137 = scmp.ne.s32.totalorder %s122, %s136
    %p138 = scmp.eq.s32.totalorder %s17, 0
    %p139 = por %p137, %p138
    %s141 = sadd.s32 %s140, 1
    %p144 = scmp.eq.s32.totalorder %s11, 15
    %p145 = scmp.ne.s32.totalorder %s140, %s142
    %p146 = scmp.eq.s32.totalorder %s11, 0
    %p147 = por %p145, %p146
    %p148 = scmp.ne.s32.totalorder %s140, %s142
    %p149 = scmp.eq.s32.totalorder %s16, 15
    %p150 = por %p148, %p149
    %p151 = scmp.ne.s32.totalorder %s142, %s143
    %p152 = scmp.eq.s32.totalorder %s16, 0
    %p153 = por %p151, %p152
    %p154 = scmp.ne.s32.totalorder %s142, %s143
    %p155 = scmp.eq.s32.totalorder %s17, 15
    %p156 = por %p154, %p155
    %p158 = scmp.ne.s32.totalorder %s143, %s157
    %p159 = scmp.eq.s32.totalorder %s17, 0
    %p160 = por %p158, %p159
    %s161 = ssub.s32 %s18, %s30
    %s162 = ssub.s32 %s19, %s26
    %s163 = sor.u32 %s161, %s162
    %p164 = scmp.eq.s32.totalorder %s163, 0
    %s166 = sadd.s32 %s165, 1
    %s167 = scalar_select %p164, %s165, %s166
    %p170 = pneg %p164
    %p171 = scmp.eq.s32.totalorder %s11, 15
    %p172 = por %p170, %p171
    %p173 = scmp.ne.s32.totalorder %s165, %s168
    %p174 = scmp.eq.s32.totalorder %s11, 0
    %p175 = por %p173, %p174
    %p176 = scmp.ne.s32.totalorder %s165, %s168
    %p177 = scmp.eq.s32.totalorder %s16, 15
    %p178 = por %p176, %p177
    %p179 = scmp.ne.s32.totalorder %s168, %s169
    %p180 = scmp.eq.s32.totalorder %s16, 0
    %p181 = por %p179, %p180
    %p182 = scmp.ne.s32.totalorder %s168, %s169
    %p183 = scmp.eq.s32.totalorder %s17, 15
    %p184 = por %p182, %p183
    %p186 = scmp.ne.s32.totalorder %s169, %s185
    %p187 = scmp.eq.s32.totalorder %s17, 0
    %p188 = por %p186, %p187
    %p189 = scmp.le.s32.totalorder 1, %s11
    %p190 = scmp.lt.s32.totalorder %s11, 17
    %p191 = pnand %p189, %p190
    %p192 = pneg %p191
    // Predicated region
    $region9: #{_lambda_.11} parent=5 // pred_check
      _
    $region10: #{_lambda_.11} parent=5 // pred_check_branch
      %194 = sbr.rel (%p191) target = $region12
    $region11: #{_lambda_.11} parent=5 // pred_region
      %s195 = ssub.s32 %s11, 1
      // Predicated region
      $region13: #{_lambda_.11} parent=11 // pred_check
        %p196 = pneg %p132
      $region14: #{_lambda_.11} parent=11 // pred_check_branch
        %198 = sbr.rel (%p196) target = $region16
      $region15: #{_lambda_.11} parent=11 // pred_region
        _
      $region16: #{_lambda_.11} parent=11 // pred_fallthru
        _
      // Predicated region
      $region17: #{_lambda_.11} parent=11 // pred_check
        %p199 = pneg %p153
      $region18: #{_lambda_.11} parent=11 // pred_check_branch
        %201 = sbr.rel (%p199) target = $region20
      $region19: #{_lambda_.11} parent=11 // pred_region
        _
      $region20: #{_lambda_.11} parent=11 // pred_fallthru
        _
    $region12: #{_lambda_.11} parent=5 // pred_fallthru
      _
    %p202 = scmp.lt.s32.totalorder %s11, 16
    // Predicated region
    $region21: #{_lambda_.11} parent=5 // pred_check
      %p203 = pneg %p202
    $region22: #{_lambda_.11} parent=5 // pred_check_branch
      %205 = sbr.rel (%p203) target = $region24
    $region23: #{_lambda_.11} parent=5 // pred_region
      // Predicated region
      $region25: #{_lambda_.11} parent=23 // pred_check
        %p206 = pneg %p45
      $region26: #{_lambda_.11} parent=23 // pred_check_branch
        %208 = sbr.rel (%p206) target = $region28
      $region27: #{_lambda_.11} parent=23 // pred_region
        %p209 = scmp.lt.s32.totalorder %s18, 1
        %s210 = scalar_select %p209, %s18, 1
        %p211 = scmp.lt.s32.totalorder %s19, 9
        %s212 = scalar_select %p211, %s19, 9
        %s213 = smul.addr %s212, 20
        %s214 = smul.addr %s210, 200
        %s215 = sadd.s32 %s213, %s214
        %s216 = smul.addr %s215, 4
        %s217 = scalar_lea.vmem %s0, %s216
      $region28: #{_lambda_.11} parent=23 // pred_fallthru
        _
      // Predicated region
      $region29: #{_lambda_.11} parent=23 // pred_check
        %p218 = pneg %p75
      $region30: #{_lambda_.11} parent=23 // pred_check_branch
        %220 = sbr.rel (%p218) target = $region32
      $region31: #{_lambda_.11} parent=23 // pred_region
        %s221 = sadd.s32 %s19, 1
        %p222 = scmp.lt.s32.totalorder %s18, 1
        %s223 = scalar_select %p222, %s18, 1
        %p224 = scmp.lt.s32.totalorder %s221, 9
        %s225 = scalar_select %p224, %s221, 9
        %s226 = smul.addr %s225, 20
        %s227 = smul.addr %s223, 200
        %s228 = sadd.s32 %s226, %s227
        %s229 = smul.addr %s228, 4
        %s230 = scalar_lea.vmem %s1, %s229
        %s231 = sadd.s32 %s19, 1
      $region32: #{_lambda_.11} parent=23 // pred_fallthru
        _
      // Predicated region
      $region33: #{_lambda_.11} parent=23 // pred_check
        %p232 = pneg %p105
      $region34: #{_lambda_.11} parent=23 // pred_check_branch
        %234 = sbr.rel (%p232) target = $region36
      $region35: #{_lambda_.11} parent=23 // pred_region
        %s235 = sadd.s32 %s19, 2
        %p236 = scmp.lt.s32.totalorder %s18, 1
        %s237 = scalar_select %p236, %s18, 1
        %p238 = scmp.lt.s32.totalorder %s235, 9
        %s239 = scalar_select %p238, %s235, 9
        %s240 = smul.addr %s239, 20
        %s241 = smul.addr %s237, 200
        %s242 = sadd.s32 %s240, %s241
        %s243 = smul.addr %s242, 4
        %s244 = scalar_lea.vmem %s2, %s243
        %s245 = sadd.s32 %s19, 2
      $region36: #{_lambda_.11} parent=23 // pred_fallthru
        _
    $region24: #{_lambda_.11} parent=5 // pred_fallthru
      _
    %p246 = scmp.le.s32.totalorder 1, %s11
    %p247 = scmp.lt.s32.totalorder %s11, 17
    %p248 = pnand %p246, %p247
    %p249 = pneg %p248
    // Predicated region
    $region37: #{_lambda_.11} parent=5 // pred_check
      _
    $region38: #{_lambda_.11} parent=5 // pred_check_branch
      %251 = sbr.rel (%p248) target = $region40
    $region39: #{_lambda_.11} parent=5 // pred_region
      %s252 = ssub.s32 %s11, 1
      %p253 = scmp.lt.s32.totalorder %s20, 1
      %s254 = scalar_select %p253, %s20, 1
      %p255 = scmp.lt.s32.totalorder %s21, 9
      %s256 = scalar_select %p255, %s21, 9
      %s257 = smul.addr %s256, 20
      %s258 = smul.addr %s254, 200
      %s259 = sadd.s32 %s257, %s258
      %s260 = smul.addr %s259, 4
      %s261 = scalar_lea.vmem %s0, %s260
      %p262 = pneg %p51
      %p263 = pneg %p48
      %s264 = sadd.s32 %s21, 1
      %p265 = scmp.lt.s32.totalorder %s20, 1
      %s266 = scalar_select %p265, %s20, 1
      %p267 = scmp.lt.s32.totalorder %s264, 9
      %s268 = scalar_select %p267, %s264, 9
      %s269 = smul.addr %s268, 20
      %s270 = smul.addr %s266, 200
      %s271 = sadd.s32 %s269, %s270
      %s272 = smul.addr %s271, 4
      %s273 = scalar_lea.vmem %s1, %s272
      %p274 = pneg %p81
      %p275 = pneg %p78
      %s276 = sadd.s32 %s21, 2
      %p277 = scmp.lt.s32.totalorder %s20, 1
      %s278 = scalar_select %p277, %s20, 1
      %p279 = scmp.lt.s32.totalorder %s276, 9
      %s280 = scalar_select %p279, %s276, 9
      %s281 = smul.addr %s280, 20
      %s282 = smul.addr %s278, 200
      %s283 = sadd.s32 %s281, %s282
      %s284 = smul.addr %s283, 4
      %s285 = scalar_lea.vmem %s2, %s284
      %p286 = pneg %p111
      %p287 = pneg %p108
      %p288 = pneg %p132
      %p289 = pneg %p129
      %p290 = pneg %p153
      %p291 = pneg %p150
      %p292 = pneg %p181
      %p293 = pneg %p178
      %p294 = scmp.lt.s32.totalorder %s20, 1
      %s295 = scalar_select %p294, %s20, 1
      %p296 = scmp.lt.s32.totalorder %s21, 7
      %s297 = scalar_select %p296, %s21, 7
      %s298 = smul.addr %s297, 8
      %s299 = smul.addr %s295, 64
      %s300 = sadd.s32 %s298, %s299
      %s301 = smul.addr %s300, 4
      %s302 = scalar_lea.vmem %s5, %s301
      %p303 = scmp.lt.s32.totalorder %s20, 1
      %s304 = scalar_select %p303, %s20, 1
      %p305 = scmp.lt.s32.totalorder %s21, 9
      %s306 = scalar_select %p305, %s21, 9
      %s307 = smul.addr %s306, 20
      %s308 = smul.addr %s304, 200
      %s309 = sadd.s32 %s307, %s308
      %s310 = smul.addr %s309, 4
      %s311 = scalar_lea.vmem %s0, %s310
      %s312 = sadd.s32 %s21, 1
      %p313 = scmp.lt.s32.totalorder %s20, 1
      %s314 = scalar_select %p313, %s20, 1
      %p315 = scmp.lt.s32.totalorder %s312, 9
      %s316 = scalar_select %p315, %s312, 9
      %s317 = smul.addr %s316, 20
      %s318 = smul.addr %s314, 200
      %s319 = sadd.s32 %s317, %s318
      %s320 = smul.addr %s319, 4
      %s321 = scalar_lea.vmem %s1, %s320
      %s322 = sadd.s32 %s21, 1
      %s323 = sadd.s32 %s21, 2
      %p324 = scmp.lt.s32.totalorder %s20, 1
      %s325 = scalar_select %p324, %s20, 1
      %p326 = scmp.lt.s32.totalorder %s323, 9
      %s327 = scalar_select %p326, %s323, 9
      %s328 = smul.addr %s327, 20
      %s329 = smul.addr %s325, 200
      %s330 = sadd.s32 %s328, %s329
      %s331 = smul.addr %s330, 4
      %s332 = scalar_lea.vmem %s2, %s331
      %s333 = sadd.s32 %s21, 2
      %p334 = scmp.lt.s32.totalorder %s20, 1
      %s335 = scalar_select %p334, %s20, 1
      %p336 = scmp.lt.s32.totalorder %s21, 7
      %s337 = scalar_select %p336, %s21, 7
      %s338 = smul.addr %s337, 8
      %s339 = smul.addr %s335, 64
      %s340 = sadd.s32 %s338, %s339
      %s341 = smul.addr %s340, 4
      %s342 = scalar_lea.vmem %s5, %s341
      %v344 = vld [vmem:[%s311] sm:$0xf]
      %v345 = vld [vmem:[%s311 + $0x4] sm:$0x1]
      %v346 = vld [vmem:[%s311 + $0x8] sm:$0xf]
      %v347 = vld [vmem:[%s311 + $0xc] sm:$0x1]
      %v348 = vld [vmem:[%s311 + $0x10] sm:$0xf]
      %v349 = vld [vmem:[%s311 + $0x14] sm:$0x1]
      %v350 = vld [vmem:[%s311 + $0x18] sm:$0xf]
      %v351 = vld [vmem:[%s311 + $0x1c] sm:$0x1]
      %v352 = vld [vmem:[%s311 + $0x20] sm:$0xf]
      %v353 = vld [vmem:[%s311 + $0x24] sm:$0x1]
      %v354 = vld [vmem:[%s311 + $0x28] sm:$0xf]
      %v355 = vld [vmem:[%s311 + $0x2c] sm:$0x1]
      %v356 = vld [vmem:[%s311 + $0x30] sm:$0xf]
      %v357 = vld [vmem:[%s311 + $0x34] sm:$0x1]
      %v358 = vld [vmem:[%s311 + $0x38] sm:$0xf]
      %v359 = vld [vmem:[%s311 + $0x3c] sm:$0x1]
      %v360 = vld [vmem:[%s311 + $0x40] sm:$0xf]
      %v361 = vld [vmem:[%s311 + $0x44] sm:$0x1]
      %v362 = vld [vmem:[%s311 + $0x48] sm:$0xf]
      %v363 = vld [vmem:[%s311 + $0x4c] sm:$0x1]
      %v364 = vld [vmem:[%s3] sm:$0xf]
      %vm365 = vsmask.f32 3328
      %vm366 = vsmask.f32 7440
      %vm367 = vmor %vm365, %vm366
      %v369 = vshrl.u32 %v344, 16
      %v371 = vrot.slane %v369, 4
      %v372 = vshll.u32 %v344, 16
      %v374 = vrot.slane %v372, 5
      %v375 = vor.u32 %v371, %v374
      %v376 = vrot.slane %v375, 4
      %v378 = vshll.u32 %v345, 16
      %v380 = vrot.slane %v378, 5
      %v381 = vsel %vm367, %v376, %v380
      %v383 = vshrl.u32 %v346, 16
      %v385 = vrot.slane %v383, 4
      %v386 = vshll.u32 %v346, 16
      %v388 = vrot.slane %v386, 5
      %v389 = vor.u32 %v385, %v388
      %v390 = vrot.slane %v389, 4
      %v392 = vshll.u32 %v347, 16
      %v394 = vrot.slane %v392, 5
      %v395 = vsel %vm367, %v390, %v394
      %v397 = vshrl.u32 %v348, 16
      %v399 = vrot.slane %v397, 4
      %v400 = vshll.u32 %v348, 16
      %v402 = vrot.slane %v400, 5
      %v403 = vor.u32 %v399, %v402
      %v404 = vrot.slane %v403, 4
      %v406 = vshll.u32 %v349, 16
      %v408 = vrot.slane %v406, 5
      %v409 = vsel %vm367, %v404, %v408
      %v411 = vshrl.u32 %v350, 16
      %v413 = vrot.slane %v411, 4
      %v414 = vshll.u32 %v350, 16
      %v416 = vrot.slane %v414, 5
      %v417 = vor.u32 %v413, %v416
      %v418 = vrot.slane %v417, 4
      %v420 = vshll.u32 %v351, 16
      %v422 = vrot.slane %v420, 5
      %v423 = vsel %vm367, %v418, %v422
      %v425 = vshrl.u32 %v352, 16
      %v427 = vrot.slane %v425, 4
      %v428 = vshll.u32 %v352, 16
      %v430 = vrot.slane %v428, 5
      %v431 = vor.u32 %v427, %v430
      %v432 = vrot.slane %v431, 4
      %v434 = vshll.u32 %v353, 16
      %v436 = vrot.slane %v434, 5
      %v437 = vsel %vm367, %v432, %v436
      %v439 = vshrl.u32 %v354, 16
      %v441 = vrot.slane %v439, 4
      %v442 = vshll.u32 %v354, 16
      %v444 = vrot.slane %v442, 5
      %v445 = vor.u32 %v441, %v444
      %v446 = vrot.slane %v445, 4
      %v448 = vshll.u32 %v355, 16
      %v450 = vrot.slane %v448, 5
      %v451 = vsel %vm367, %v446, %v450
      %v453 = vshrl.u32 %v356, 16
      %v455 = vrot.slane %v453, 4
      %v456 = vshll.u32 %v356, 16
      %v458 = vrot.slane %v456, 5
      %v459 = vor.u32 %v455, %v458
      %v460 = vrot.slane %v459, 4
      %v462 = vshll.u32 %v357, 16
      %v464 = vrot.slane %v462, 5
      %v465 = vsel %vm367, %v460, %v464
      %v467 = vshrl.u32 %v358, 16
      %v469 = vrot.slane %v467, 4
      %v470 = vshll.u32 %v358, 16
      %v472 = vrot.slane %v470, 5
      %v473 = vor.u32 %v469, %v472
      %v474 = vrot.slane %v473, 4
      %v476 = vshll.u32 %v359, 16
      %v478 = vrot.slane %v476, 5
      %v479 = vsel %vm367, %v474, %v478
      %s480 = scalar_lea.vmem %s3, 4
      %v481 = vld [vmem:[%s480] sm:$0xf]
      %v482 = vunpack.c.l.b16 %v381
      %v483 = vunpack.c.l.b16 %v395
      %v484 = vunpack.c.l.b16 %v409
      %v485 = vunpack.c.l.b16 %v423
      %v486 = vunpack.c.l.b16 %v437
      %v487 = vunpack.c.l.b16 %v451
      %v488 = vunpack.c.l.b16 %v465
      %v489 = vunpack.c.l.b16 %v479
      %v490 = vpack.c.b16 %v483, %v482
      %v491 = vpack.c.b16 %v485, %v484
      %v492 = vpack.c.b16 %v487, %v486
      %v493 = vpack.c.b16 %v489, %v488
      %vm494 = vcmask 64512
      %v496 = vsel %vm494, %v490, 0
      %v499 = vsel %vm494, %v491, 0
      %v502 = vsel %vm494, %v492, 0
      %v505 = vsel %vm494, %v493, 0
      %vm507 = vcmask 1043456
      %v509 = vsel %vm507, %v481, 0
      %511 = vmatpush.bf16.msra.mxu0 0
      %512 = vmatpush.bf16.msra.mxu0 0
      %513 = vmatpush.bf16.msra.mxu0 0
      %514 = vmatpush.bf16.msra.mxu0 0
      %515 = vmatpush.bf16.msra.mxu0 0
      %516 = vmatpush.bf16.msra.mxu0 0
      %517 = vmatpush.bf16.msra.mxu0 0
      %518 = vmatpush.bf16.msra.mxu0 %v509
      %519 = vmatmul.bf16.gmra.mxu0 %v496
      %v520 = vpop.f32.mrf.mxu0
      %v521 = vadd.f32 0.0, %v520
      %v522 = vpop.f32.mrf.mxu0
      %v523 = vadd.f32 0.0, %v522
      %524 = vmatmul.bf16.gmra.mxu0 %v499
      %v525 = vpop.f32.mrf.mxu0
      %v526 = vadd.f32 0.0, %v525
      %v527 = vpop.f32.mrf.mxu0
      %v528 = vadd.f32 0.0, %v527
      %529 = vmatmul.bf16.gmra.mxu0 %v502
      %v530 = vpop.f32.mrf.mxu0
      %v531 = vadd.f32 0.0, %v530
      %v532 = vpop.f32.mrf.mxu0
      %v533 = vadd.f32 0.0, %v532
      %534 = vmatmul.bf16.gmra.mxu0 %v505
      %v535 = vpop.f32.mrf.mxu0
      %v536 = vadd.f32 0.0, %v535
      %v537 = vpop.f32.mrf.mxu0
      %v538 = vadd.f32 0.0, %v537
      %539 = vdwg.mxu0
      %v548 = vunpack.c.l.b16 %v344
      %v549 = vunpack.c.l.b16 %v346
      %v550 = vunpack.c.l.b16 %v348
      %v551 = vunpack.c.l.b16 %v350
      %v552 = vunpack.c.l.b16 %v352
      %v553 = vunpack.c.l.b16 %v354
      %v554 = vunpack.c.l.b16 %v356
      %v555 = vunpack.c.l.b16 %v358
      %v556 = vpack.c.b16 %v549, %v548
      %v557 = vpack.c.b16 %v551, %v550
      %v558 = vpack.c.b16 %v553, %v552
      %v559 = vpack.c.b16 %v555, %v554
      %v561 = vsel %vm494, %v556, 0
      %v564 = vsel %vm494, %v557, 0
      %v567 = vsel %vm494, %v558, 0
      %v570 = vsel %vm494, %v559, 0
      %v573 = vsel %vm507, %v364, 0
      %575 = vmatpush.bf16.msra.mxu0 0
      %576 = vmatpush.bf16.msra.mxu0 0
      %577 = vmatpush.bf16.msra.mxu0 0
      %578 = vmatpush.bf16.msra.mxu0 0
      %579 = vmatpush.bf16.msra.mxu0 0
      %580 = vmatpush.bf16.msra.mxu0 0
      %581 = vmatpush.bf16.msra.mxu0 0
      %582 = vmatpush.bf16.msra.mxu0 %v573
      %583 = vmatmul.bf16.gmra.mxu0 %v561
      %v584 = vpop.f32.mrf.mxu0
      %v585 = vadd.f32 %v521, %v584
      %v586 = vpop.f32.mrf.mxu0
      %v587 = vadd.f32 %v523, %v586
      %588 = vmatmul.bf16.gmra.mxu0 %v564
      %v589 = vpop.f32.mrf.mxu0
      %v590 = vadd.f32 %v526, %v589
      %v591 = vpop.f32.mrf.mxu0
      %v592 = vadd.f32 %v528, %v591
      %593 = vmatmul.bf16.gmra.mxu0 %v567
      %v594 = vpop.f32.mrf.mxu0
      %v595 = vadd.f32 %v531, %v594
      %v596 = vpop.f32.mrf.mxu0
      %v597 = vadd.f32 %v533, %v596
      %598 = vmatmul.bf16.gmra.mxu0 %v570
      %v599 = vpop.f32.mrf.mxu0
      %v600 = vadd.f32 %v536, %v599
      %v601 = vpop.f32.mrf.mxu0
      %v602 = vadd.f32 %v538, %v601
      %603 = vdwg.mxu0
      %vm612 = vcmask 1042432
      %vm613 = vcmask 1046532
      %vm614 = vmor %vm612, %vm613
      %v615 = vrot.slane %v344, 5
      %v616 = vrot.slane %v615, 4
      %v617 = vrot.slane %v345, 5
      %v618 = vsel %vm614, %v616, %v617
      %v619 = vrot.slane %v346, 5
      %v620 = vrot.slane %v619, 4
      %v621 = vrot.slane %v347, 5
      %v622 = vsel %vm614, %v620, %v621
      %v623 = vrot.slane %v348, 5
      %v624 = vrot.slane %v623, 4
      %v625 = vrot.slane %v349, 5
      %v626 = vsel %vm614, %v624, %v625
      %v627 = vrot.slane %v350, 5
      %v628 = vrot.slane %v627, 4
      %v629 = vrot.slane %v351, 5
      %v630 = vsel %vm614, %v628, %v629
      %v631 = vrot.slane %v352, 5
      %v632 = vrot.slane %v631, 4
      %v633 = vrot.slane %v353, 5
      %v634 = vsel %vm614, %v632, %v633
      %v635 = vrot.slane %v354, 5
      %v636 = vrot.slane %v635, 4
      %v637 = vrot.slane %v355, 5
      %v638 = vsel %vm614, %v636, %v637
      %v639 = vrot.slane %v356, 5
      %v640 = vrot.slane %v639, 4
      %v641 = vrot.slane %v357, 5
      %v642 = vsel %vm614, %v640, %v641
      %v643 = vrot.slane %v358, 5
      %v644 = vrot.slane %v643, 4
      %v645 = vrot.slane %v359, 5
      %v646 = vsel %vm614, %v644, %v645
      %s647 = scalar_lea.vmem %s3, 8
      %v648 = vld [vmem:[%s647] sm:$0xf]
      %v649 = vunpack.c.l.b16 %v618
      %v650 = vunpack.c.l.b16 %v622
      %v651 = vunpack.c.l.b16 %v626
      %v652 = vunpack.c.l.b16 %v630
      %v653 = vunpack.c.l.b16 %v634
      %v654 = vunpack.c.l.b16 %v638
      %v655 = vunpack.c.l.b16 %v642
      %v656 = vunpack.c.l.b16 %v646
      %v657 = vpack.c.b16 %v650, %v649
      %v658 = vpack.c.b16 %v652, %v651
      %v659 = vpack.c.b16 %v654, %v653
      %v660 = vpack.c.b16 %v656, %v655
      %v662 = vsel %vm494, %v657, 0
      %v665 = vsel %vm494, %v658, 0
      %v668 = vsel %vm494, %v659, 0
      %v671 = vsel %vm494, %v660, 0
      %v674 = vsel %vm507, %v648, 0
      %676 = vmatpush.bf16.msra.mxu0 0
      %677 = vmatpush.bf16.msra.mxu0 0
      %678 = vmatpush.bf16.msra.mxu0 0
      %679 = vmatpush.bf16.msra.mxu0 0
      %680 = vmatpush.bf16.msra.mxu0 0
      %681 = vmatpush.bf16.msra.mxu0 0
      %682 = vmatpush.bf16.msra.mxu0 0
      %683 = vmatpush.bf16.msra.mxu0 %v674
      %684 = vmatmul.bf16.gmra.mxu0 %v662
      %v685 = vpop.f32.mrf.mxu0
      %v686 = vadd.f32 0.0, %v685
      %v687 = vpop.f32.mrf.mxu0
      %v688 = vadd.f32 0.0, %v687
      %689 = vmatmul.bf16.gmra.mxu0 %v665
      %v690 = vpop.f32.mrf.mxu0
      %v691 = vadd.f32 0.0, %v690
      %v692 = vpop.f32.mrf.mxu0
      %v693 = vadd.f32 0.0, %v692
      %694 = vmatmul.bf16.gmra.mxu0 %v668
      %v695 = vpop.f32.mrf.mxu0
      %v696 = vadd.f32 0.0, %v695
      %v697 = vpop.f32.mrf.mxu0
      %v698 = vadd.f32 0.0, %v697
      %699 = vmatmul.bf16.gmra.mxu0 %v671
      %v700 = vpop.f32.mrf.mxu0
      %v701 = vadd.f32 0.0, %v700
      %v702 = vpop.f32.mrf.mxu0
      %v703 = vadd.f32 0.0, %v702
      %704 = vdwg.mxu0
      %v705 = vadd.f32 %v585, %v686
      %v706 = vadd.f32 %v587, %v688
      %v707 = vadd.f32 %v590, %v691
      %v708 = vadd.f32 %v592, %v693
      %v709 = vadd.f32 %v595, %v696
      %v710 = vadd.f32 %v597, %v698
      %v711 = vadd.f32 %v600, %v701
      %v712 = vadd.f32 %v602, %v703
      %s713 = scalar_lea.vmem %s3, 12
      %v714 = vld [vmem:[%s713] sm:$0xf]
      %v716 = vunpack.c.l.b16 %v360
      %v717 = vpack.c.b16 %v550, %v549
      %v718 = vpack.c.b16 %v552, %v551
      %v719 = vpack.c.b16 %v554, %v553
      %v720 = vpack.c.b16 %v716, %v555
      %v722 = vsel %vm494, %v717, 0
      %v725 = vsel %vm494, %v718, 0
      %v728 = vsel %vm494, %v719, 0
      %v731 = vsel %vm494, %v720, 0
      %v734 = vsel %vm507, %v714, 0
      %736 = vmatpush.bf16.msra.mxu0 0
      %737 = vmatpush.bf16.msra.mxu0 0
      %738 = vmatpush.bf16.msra.mxu0 0
      %739 = vmatpush.bf16.msra.mxu0 0
      %740 = vmatpush.bf16.msra.mxu0 0
      %741 = vmatpush.bf16.msra.mxu0 0
      %742 = vmatpush.bf16.msra.mxu0 0
      %743 = vmatpush.bf16.msra.mxu0 %v734
      %744 = vmatmul.bf16.gmra.mxu0 %v722
      %v745 = vpop.f32.mrf.mxu0
      %v746 = vadd.f32 0.0, %v745
      %v747 = vpop.f32.mrf.mxu0
      %v748 = vadd.f32 0.0, %v747
      %749 = vmatmul.bf16.gmra.mxu0 %v725
      %v750 = vpop.f32.mrf.mxu0
      %v751 = vadd.f32 0.0, %v750
      %v752 = vpop.f32.mrf.mxu0
      %v753 = vadd.f32 0.0, %v752
      %754 = vmatmul.bf16.gmra.mxu0 %v728
      %v755 = vpop.f32.mrf.mxu0
      %v756 = vadd.f32 0.0, %v755
      %v757 = vpop.f32.mrf.mxu0
      %v758 = vadd.f32 0.0, %v757
      %759 = vmatmul.bf16.gmra.mxu0 %v731
      %v760 = vpop.f32.mrf.mxu0
      %v761 = vadd.f32 0.0, %v760
      %v762 = vpop.f32.mrf.mxu0
      %v763 = vadd.f32 0.0, %v762
      %764 = vdwg.mxu0
      %v765 = vadd.f32 %v705, %v746
      %v766 = vadd.f32 %v706, %v748
      %v767 = vadd.f32 %v707, %v751
      %v768 = vadd.f32 %v708, %v753
      %v769 = vadd.f32 %v709, %v756
      %v770 = vadd.f32 %v710, %v758
      %v771 = vadd.f32 %v711, %v761
      %v772 = vadd.f32 %v712, %v763
      %v774 = vshrl.u32 %v360, 16
      %v776 = vrot.slane %v774, 4
      %v777 = vshll.u32 %v360, 16
      %v779 = vrot.slane %v777, 5
      %v780 = vor.u32 %v776, %v779
      %v781 = vrot.slane %v780, 4
      %v783 = vshll.u32 %v361, 16
      %v785 = vrot.slane %v783, 5
      %v786 = vsel %vm367, %v781, %v785
      %s787 = scalar_lea.vmem %s3, 16
      %v788 = vld [vmem:[%s787] sm:$0xf]
      %v789 = vunpack.c.l.b16 %v786
      %v790 = vpack.c.b16 %v484, %v483
      %v791 = vpack.c.b16 %v486, %v485
      %v792 = vpack.c.b16 %v488, %v487
      %v793 = vpack.c.b16 %v789, %v489
      %v795 = vsel %vm494, %v790, 0
      %v798 = vsel %vm494, %v791, 0
      %v801 = vsel %vm494, %v792, 0
      %v804 = vsel %vm494, %v793, 0
      %v807 = vsel %vm507, %v788, 0
      %809 = vmatpush.bf16.msra.mxu0 0
      %810 = vmatpush.bf16.msra.mxu0 0
      %811 = vmatpush.bf16.msra.mxu0 0
      %812 = vmatpush.bf16.msra.mxu0 0
      %813 = vmatpush.bf16.msra.mxu0 0
      %814 = vmatpush.bf16.msra.mxu0 0
      %815 = vmatpush.bf16.msra.mxu0 0
      %816 = vmatpush.bf16.msra.mxu0 %v807
      %817 = vmatmul.bf16.gmra.mxu0 %v795
      %v818 = vpop.f32.mrf.mxu0
      %v819 = vadd.f32 0.0, %v818
      %v820 = vpop.f32.mrf.mxu0
      %v821 = vadd.f32 0.0, %v820
      %822 = vmatmul.bf16.gmra.mxu0 %v798
      %v823 = vpop.f32.mrf.mxu0
      %v824 = vadd.f32 0.0, %v823
      %v825 = vpop.f32.mrf.mxu0
      %v826 = vadd.f32 0.0, %v825
      %827 = vmatmul.bf16.gmra.mxu0 %v801
      %v828 = vpop.f32.mrf.mxu0
      %v829 = vadd.f32 0.0, %v828
      %v830 = vpop.f32.mrf.mxu0
      %v831 = vadd.f32 0.0, %v830
      %832 = vmatmul.bf16.gmra.mxu0 %v804
      %v833 = vpop.f32.mrf.mxu0
      %v834 = vadd.f32 0.0, %v833
      %v835 = vpop.f32.mrf.mxu0
      %v836 = vadd.f32 0.0, %v835
      %837 = vdwg.mxu0
      %v838 = vadd.f32 %v765, %v819
      %v839 = vadd.f32 %v766, %v821
      %v840 = vadd.f32 %v767, %v824
      %v841 = vadd.f32 %v768, %v826
      %v842 = vadd.f32 %v769, %v829
      %v843 = vadd.f32 %v770, %v831
      %v844 = vadd.f32 %v771, %v834
      %v845 = vadd.f32 %v772, %v836
      %v847 = vrot.slane %v360, 5
      %v848 = vrot.slane %v847, 4
      %v849 = vrot.slane %v361, 5
      %v850 = vsel %vm614, %v848, %v849
      %s851 = scalar_lea.vmem %s3, 20
      %v852 = vld [vmem:[%s851] sm:$0xf]
      %v853 = vunpack.c.l.b16 %v850
      %v854 = vpack.c.b16 %v651, %v650
      %v855 = vpack.c.b16 %v653, %v652
      %v856 = vpack.c.b16 %v655, %v654
      %v857 = vpack.c.b16 %v853, %v656
      %v859 = vsel %vm494, %v854, 0
      %v862 = vsel %vm494, %v855, 0
      %v865 = vsel %vm494, %v856, 0
      %v868 = vsel %vm494, %v857, 0
      %v871 = vsel %vm507, %v852, 0
      %873 = vmatpush.bf16.msra.mxu0 0
      %874 = vmatpush.bf16.msra.mxu0 0
      %875 = vmatpush.bf16.msra.mxu0 0
      %876 = vmatpush.bf16.msra.mxu0 0
      %877 = vmatpush.bf16.msra.mxu0 0
      %878 = vmatpush.bf16.msra.mxu0 0
      %879 = vmatpush.bf16.msra.mxu0 0
      %880 = vmatpush.bf16.msra.mxu0 %v871
      %881 = vmatmul.bf16.gmra.mxu0 %v859
      %v882 = vpop.f32.mrf.mxu0
      %v883 = vadd.f32 0.0, %v882
      %v884 = vpop.f32.mrf.mxu0
      %v885 = vadd.f32 0.0, %v884
      %886 = vmatmul.bf16.gmra.mxu0 %v862
      %v887 = vpop.f32.mrf.mxu0
      %v888 = vadd.f32 0.0, %v887
      %v889 = vpop.f32.mrf.mxu0
      %v890 = vadd.f32 0.0, %v889
      %891 = vmatmul.bf16.gmra.mxu0 %v865
      %v892 = vpop.f32.mrf.mxu0
      %v893 = vadd.f32 0.0, %v892
      %v894 = vpop.f32.mrf.mxu0
      %v895 = vadd.f32 0.0, %v894
      %896 = vmatmul.bf16.gmra.mxu0 %v868
      %v897 = vpop.f32.mrf.mxu0
      %v898 = vadd.f32 0.0, %v897
      %v899 = vpop.f32.mrf.mxu0
      %v900 = vadd.f32 0.0, %v899
      %901 = vdwg.mxu0
      %v902 = vadd.f32 %v838, %v883
      %v903 = vadd.f32 %v839, %v885
      %v904 = vadd.f32 %v840, %v888
      %v905 = vadd.f32 %v841, %v890
      %v906 = vadd.f32 %v842, %v893
      %v907 = vadd.f32 %v843, %v895
      %v908 = vadd.f32 %v844, %v898
      %v909 = vadd.f32 %v845, %v900
      %s910 = scalar_lea.vmem %s3, 24
      %v911 = vld [vmem:[%s910] sm:$0xf]
      %v913 = vunpack.c.l.b16 %v362
      %v914 = vpack.c.b16 %v913, %v716
      %v916 = vsel %vm494, %v914, 0
      %v919 = vsel %vm507, %v911, 0
      %921 = vmatpush.bf16.msra.mxu0 0
      %922 = vmatpush.bf16.msra.mxu0 0
      %923 = vmatpush.bf16.msra.mxu0 0
      %924 = vmatpush.bf16.msra.mxu0 0
      %925 = vmatpush.bf16.msra.mxu0 0
      %926 = vmatpush.bf16.msra.mxu0 0
      %927 = vmatpush.bf16.msra.mxu0 0
      %928 = vmatpush.bf16.msra.mxu0 %v919
      %929 = vmatmul.bf16.gmra.mxu0 %v564
      %v930 = vpop.f32.mrf.mxu0
      %v931 = vadd.f32 0.0, %v930
      %v932 = vpop.f32.mrf.mxu0
      %v933 = vadd.f32 0.0, %v932
      %934 = vmatmul.bf16.gmra.mxu0 %v567
      %v935 = vpop.f32.mrf.mxu0
      %v936 = vadd.f32 0.0, %v935
      %v937 = vpop.f32.mrf.mxu0
      %v938 = vadd.f32 0.0, %v937
      %939 = vmatmul.bf16.gmra.mxu0 %v570
      %v940 = vpop.f32.mrf.mxu0
      %v941 = vadd.f32 0.0, %v940
      %v942 = vpop.f32.mrf.mxu0
      %v943 = vadd.f32 0.0, %v942
      %944 = vmatmul.bf16.gmra.mxu0 %v916
      %v945 = vpop.f32.mrf.mxu0
      %v946 = vadd.f32 0.0, %v945
      %v947 = vpop.f32.mrf.mxu0
      %v948 = vadd.f32 0.0, %v947
      %949 = vdwg.mxu0
      %v950 = vadd.f32 %v902, %v931
      %v951 = vadd.f32 %v903, %v933
      %v952 = vadd.f32 %v904, %v936
      %v953 = vadd.f32 %v905, %v938
      %v954 = vadd.f32 %v906, %v941
      %v955 = vadd.f32 %v907, %v943
      %v956 = vadd.f32 %v908, %v946
      %v957 = vadd.f32 %v909, %v948
      %v959 = vshrl.u32 %v362, 16
      %v961 = vrot.slane %v959, 4
      %v962 = vshll.u32 %v362, 16
      %v964 = vrot.slane %v962, 5
      %v965 = vor.u32 %v961, %v964
      %v966 = vrot.slane %v965, 4
      %v968 = vshll.u32 %v363, 16
      %v970 = vrot.slane %v968, 5
      %v971 = vsel %vm367, %v966, %v970
      %s972 = scalar_lea.vmem %s3, 28
      %v973 = vld [vmem:[%s972] sm:$0xf]
      %v974 = vunpack.c.l.b16 %v971
      %v975 = vpack.c.b16 %v974, %v789
      %v977 = vsel %vm494, %v975, 0
      %v980 = vsel %vm507, %v973, 0
      %982 = vmatpush.bf16.msra.mxu0 0
      %983 = vmatpush.bf16.msra.mxu0 0
      %984 = vmatpush.bf16.msra.mxu0 0
      %985 = vmatpush.bf16.msra.mxu0 0
      %986 = vmatpush.bf16.msra.mxu0 0
      %987 = vmatpush.bf16.msra.mxu0 0
      %988 = vmatpush.bf16.msra.mxu0 0
      %989 = vmatpush.bf16.msra.mxu0 %v980
      %990 = vmatmul.bf16.gmra.mxu0 %v499
      %v991 = vpop.f32.mrf.mxu0
      %v992 = vadd.f32 0.0, %v991
      %v993 = vpop.f32.mrf.mxu0
      %v994 = vadd.f32 0.0, %v993
      %995 = vmatmul.bf16.gmra.mxu0 %v502
      %v996 = vpop.f32.mrf.mxu0
      %v997 = vadd.f32 0.0, %v996
      %v998 = vpop.f32.mrf.mxu0
      %v999 = vadd.f32 0.0, %v998
      %1000 = vmatmul.bf16.gmra.mxu0 %v505
      %v1001 = vpop.f32.mrf.mxu0
      %v1002 = vadd.f32 0.0, %v1001
      %v1003 = vpop.f32.mrf.mxu0
      %v1004 = vadd.f32 0.0, %v1003
      %1005 = vmatmul.bf16.gmra.mxu0 %v977
      %v1006 = vpop.f32.mrf.mxu0
      %v1007 = vadd.f32 0.0, %v1006
      %v1008 = vpop.f32.mrf.mxu0
      %v1009 = vadd.f32 0.0, %v1008
      %1010 = vdwg.mxu0
      %v1011 = vadd.f32 %v950, %v992
      %v1012 = vadd.f32 %v951, %v994
      %v1013 = vadd.f32 %v952, %v997
      %v1014 = vadd.f32 %v953, %v999
      %v1015 = vadd.f32 %v954, %v1002
      %v1016 = vadd.f32 %v955, %v1004
      %v1017 = vadd.f32 %v956, %v1007
      %v1018 = vadd.f32 %v957, %v1009
      %v1020 = vrot.slane %v362, 5
      %v1021 = vrot.slane %v1020, 4
      %v1022 = vrot.slane %v363, 5
      %v1023 = vsel %vm614, %v1021, %v1022
      %s1024 = scalar_lea.vmem %s3, 32
      %v1025 = vld [vmem:[%s1024] sm:$0xf]
      %v1026 = vunpack.c.l.b16 %v1023
      %v1027 = vpack.c.b16 %v1026, %v853
      %v1029 = vsel %vm494, %v1027, 0
      %v1032 = vsel %vm507, %v1025, 0
      %1034 = vmatpush.bf16.msra.mxu0 0
      %1035 = vmatpush.bf16.msra.mxu0 0
      %1036 = vmatpush.bf16.msra.mxu0 0
      %1037 = vmatpush.bf16.msra.mxu0 0
      %1038 = vmatpush.bf16.msra.mxu0 0
      %1039 = vmatpush.bf16.msra.mxu0 0
      %1040 = vmatpush.bf16.msra.mxu0 0
      %1041 = vmatpush.bf16.msra.mxu0 %v1032
      %1042 = vmatmul.bf16.gmra.mxu0 %v665
      %v1043 = vpop.f32.mrf.mxu0
      %v1044 = vadd.f32 0.0, %v1043
      %v1045 = vpop.f32.mrf.mxu0
      %v1046 = vadd.f32 0.0, %v1045
      %1047 = vmatmul.bf16.gmra.mxu0 %v668
      %v1048 = vpop.f32.mrf.mxu0
      %v1049 = vadd.f32 0.0, %v1048
      %v1050 = vpop.f32.mrf.mxu0
      %v1051 = vadd.f32 0.0, %v1050
      %1052 = vmatmul.bf16.gmra.mxu0 %v671
      %v1053 = vpop.f32.mrf.mxu0
      %v1054 = vadd.f32 0.0, %v1053
      %v1055 = vpop.f32.mrf.mxu0
      %v1056 = vadd.f32 0.0, %v1055
      %1057 = vmatmul.bf16.gmra.mxu0 %v1029
      %v1058 = vpop.f32.mrf.mxu0
      %v1059 = vadd.f32 0.0, %v1058
      %v1060 = vpop.f32.mrf.mxu0
      %v1061 = vadd.f32 0.0, %v1060
      %1062 = vdwg.mxu0
      %v1063 = vadd.f32 %v1011, %v1044
      %v1064 = vadd.f32 %v1012, %v1046
      %v1065 = vadd.f32 %v1013, %v1049
      %v1066 = vadd.f32 %v1014, %v1051
      %v1067 = vadd.f32 %v1015, %v1054
      %v1068 = vadd.f32 %v1016, %v1056
      %v1069 = vadd.f32 %v1017, %v1059
      %v1070 = vadd.f32 %v1018, %v1061
      %v1071 = vld [vmem:[%s321] sm:$0xf]
      %v1072 = vld [vmem:[%s321 + $0x4] sm:$0x1]
      %v1073 = vld [vmem:[%s321 + $0x8] sm:$0xf]
      %v1074 = vld [vmem:[%s321 + $0xc] sm:$0x1]
      %v1075 = vld [vmem:[%s321 + $0x10] sm:$0xf]
      %v1076 = vld [vmem:[%s321 + $0x14] sm:$0x1]
      %v1077 = vld [vmem:[%s321 + $0x18] sm:$0xf]
      %v1078 = vld [vmem:[%s321 + $0x1c] sm:$0x1]
      %v1079 = vld [vmem:[%s321 + $0x20] sm:$0xf]
      %v1080 = vld [vmem:[%s321 + $0x24] sm:$0x1]
      %v1081 = vld [vmem:[%s321 + $0x28] sm:$0xf]
      %v1082 = vld [vmem:[%s321 + $0x2c] sm:$0x1]
      %v1083 = vld [vmem:[%s321 + $0x30] sm:$0xf]
      %v1084 = vld [vmem:[%s321 + $0x34] sm:$0x1]
      %v1085 = vld [vmem:[%s321 + $0x38] sm:$0xf]
      %v1086 = vld [vmem:[%s321 + $0x3c] sm:$0x1]
      %v1087 = vld [vmem:[%s321 + $0x40] sm:$0xf]
      %v1088 = vld [vmem:[%s321 + $0x44] sm:$0x1]
      %v1089 = vld [vmem:[%s321 + $0x48] sm:$0xf]
      %v1090 = vld [vmem:[%s321 + $0x4c] sm:$0x1]
      %s1091 = scalar_lea.vmem %s3, 36
      %v1092 = vld [vmem:[%s1091] sm:$0xf]
      %v1101 = vunpack.c.l.b16 %v1071
      %v1102 = vunpack.c.l.b16 %v1073
      %v1103 = vunpack.c.l.b16 %v1075
      %v1104 = vunpack.c.l.b16 %v1077
      %v1105 = vunpack.c.l.b16 %v1079
      %v1106 = vunpack.c.l.b16 %v1081
      %v1107 = vunpack.c.l.b16 %v1083
      %v1108 = vunpack.c.l.b16 %v1085
      %v1109 = vpack.c.b16 %v1102, %v1101
      %v1110 = vpack.c.b16 %v1104, %v1103
      %v1111 = vpack.c.b16 %v1106, %v1105
      %v1112 = vpack.c.b16 %v1108, %v1107
      %v1114 = vsel %vm494, %v1109, 0
      %v1117 = vsel %vm494, %v1110, 0
      %v1120 = vsel %vm494, %v1111, 0
      %v1123 = vsel %vm494, %v1112, 0
      %v1126 = vsel %vm507, %v1092, 0
      %1128 = vmatpush.bf16.msra.mxu0 0
      %1129 = vmatpush.bf16.msra.mxu0 0
      %1130 = vmatpush.bf16.msra.mxu0 0
      %1131 = vmatpush.bf16.msra.mxu0 0
      %1132 = vmatpush.bf16.msra.mxu0 0
      %1133 = vmatpush.bf16.msra.mxu0 0
      %1134 = vmatpush.bf16.msra.mxu0 0
      %1135 = vmatpush.bf16.msra.mxu0 %v1126
      %1136 = vmatmul.bf16.gmra.mxu0 %v1114
      %v1137 = vpop.f32.mrf.mxu0
      %v1138 = vadd.f32 0.0, %v1137
      %v1139 = vpop.f32.mrf.mxu0
      %v1140 = vadd.f32 0.0, %v1139
      %1141 = vmatmul.bf16.gmra.mxu0 %v1117
      %v1142 = vpop.f32.mrf.mxu0
      %v1143 = vadd.f32 0.0, %v1142
      %v1144 = vpop.f32.mrf.mxu0
      %v1145 = vadd.f32 0.0, %v1144
      %1146 = vmatmul.bf16.gmra.mxu0 %v1120
      %v1147 = vpop.f32.mrf.mxu0
      %v1148 = vadd.f32 0.0, %v1147
      %v1149 = vpop.f32.mrf.mxu0
      %v1150 = vadd.f32 0.0, %v1149
      %1151 = vmatmul.bf16.gmra.mxu0 %v1123
      %v1152 = vpop.f32.mrf.mxu0
      %v1153 = vadd.f32 0.0, %v1152
      %v1154 = vpop.f32.mrf.mxu0
      %v1155 = vadd.f32 0.0, %v1154
      %1156 = vdwg.mxu0
      %v1157 = vadd.f32 %v1063, %v1138
      %v1158 = vadd.f32 %v1064, %v1140
      %v1159 = vadd.f32 %v1065, %v1143
      %v1160 = vadd.f32 %v1066, %v1145
      %v1161 = vadd.f32 %v1067, %v1148
      %v1162 = vadd.f32 %v1068, %v1150
      %v1163 = vadd.f32 %v1069, %v1153
      %v1164 = vadd.f32 %v1070, %v1155
      %v1166 = vshrl.u32 %v1071, 16
      %v1168 = vrot.slane %v1166, 4
      %v1169 = vshll.u32 %v1071, 16
      %v1171 = vrot.slane %v1169, 5
      %v1172 = vor.u32 %v1168, %v1171
      %v1173 = vrot.slane %v1172, 4
      %v1175 = vshll.u32 %v1072, 16
      %v1177 = vrot.slane %v1175, 5
      %v1178 = vsel %vm367, %v1173, %v1177
      %v1180 = vshrl.u32 %v1073, 16
      %v1182 = vrot.slane %v1180, 4
      %v1183 = vshll.u32 %v1073, 16
      %v1185 = vrot.slane %v1183, 5
      %v1186 = vor.u32 %v1182, %v1185
      %v1187 = vrot.slane %v1186, 4
      %v1189 = vshll.u32 %v1074, 16
      %v1191 = vrot.slane %v1189, 5
      %v1192 = vsel %vm367, %v1187, %v1191
      %v1194 = vshrl.u32 %v1075, 16
      %v1196 = vrot.slane %v1194, 4
      %v1197 = vshll.u32 %v1075, 16
      %v1199 = vrot.slane %v1197, 5
      %v1200 = vor.u32 %v1196, %v1199
      %v1201 = vrot.slane %v1200, 4
      %v1203 = vshll.u32 %v1076, 16
      %v1205 = vrot.slane %v1203, 5
      %v1206 = vsel %vm367, %v1201, %v1205
      %v1208 = vshrl.u32 %v1077, 16
      %v1210 = vrot.slane %v1208, 4
      %v1211 = vshll.u32 %v1077, 16
      %v1213 = vrot.slane %v1211, 5
      %v1214 = vor.u32 %v1210, %v1213
      %v1215 = vrot.slane %v1214, 4
      %v1217 = vshll.u32 %v1078, 16
      %v1219 = vrot.slane %v1217, 5
      %v1220 = vsel %vm367, %v1215, %v1219
      %v1222 = vshrl.u32 %v1079, 16
      %v1224 = vrot.slane %v1222, 4
      %v1225 = vshll.u32 %v1079, 16
      %v1227 = vrot.slane %v1225, 5
      %v1228 = vor.u32 %v1224, %v1227
      %v1229 = vrot.slane %v1228, 4
      %v1231 = vshll.u32 %v1080, 16
      %v1233 = vrot.slane %v1231, 5
      %v1234 = vsel %vm367, %v1229, %v1233
      %v1236 = vshrl.u32 %v1081, 16
      %v1238 = vrot.slane %v1236, 4
      %v1239 = vshll.u32 %v1081, 16
      %v1241 = vrot.slane %v1239, 5
      %v1242 = vor.u32 %v1238, %v1241
      %v1243 = vrot.slane %v1242, 4
      %v1245 = vshll.u32 %v1082, 16
      %v1247 = vrot.slane %v1245, 5
      %v1248 = vsel %vm367, %v1243, %v1247
      %v1250 = vshrl.u32 %v1083, 16
      %v1252 = vrot.slane %v1250, 4
      %v1253 = vshll.u32 %v1083, 16
      %v1255 = vrot.slane %v1253, 5
      %v1256 = vor.u32 %v1252, %v1255
      %v1257 = vrot.slane %v1256, 4
      %v1259 = vshll.u32 %v1084, 16
      %v1261 = vrot.slane %v1259, 5
      %v1262 = vsel %vm367, %v1257, %v1261
      %v1264 = vshrl.u32 %v1085, 16
      %v1266 = vrot.slane %v1264, 4
      %v1267 = vshll.u32 %v1085, 16
      %v1269 = vrot.slane %v1267, 5
      %v1270 = vor.u32 %v1266, %v1269
      %v1271 = vrot.slane %v1270, 4
      %v1273 = vshll.u32 %v1086, 16
      %v1275 = vrot.slane %v1273, 5
      %v1276 = vsel %vm367, %v1271, %v1275
      %s1277 = scalar_lea.vmem %s3, 40
      %v1278 = vld [vmem:[%s1277] sm:$0xf]
      %v1279 = vunpack.c.l.b16 %v1178
      %v1280 = vunpack.c.l.b16 %v1192
      %v1281 = vunpack.c.l.b16 %v1206
      %v1282 = vunpack.c.l.b16 %v1220
      %v1283 = vunpack.c.l.b16 %v1234
      %v1284 = vunpack.c.l.b16 %v1248
      %v1285 = vunpack.c.l.b16 %v1262
      %v1286 = vunpack.c.l.b16 %v1276
      %v1287 = vpack.c.b16 %v1280, %v1279
      %v1288 = vpack.c.b16 %v1282, %v1281
      %v1289 = vpack.c.b16 %v1284, %v1283
      %v1290 = vpack.c.b16 %v1286, %v1285
      %v1292 = vsel %vm494, %v1287, 0
      %v1295 = vsel %vm494, %v1288, 0
      %v1298 = vsel %vm494, %v1289, 0
      %v1301 = vsel %vm494, %v1290, 0
      %v1304 = vsel %vm507, %v1278, 0
      %1306 = vmatpush.bf16.msra.mxu0 0
      %1307 = vmatpush.bf16.msra.mxu0 0
      %1308 = vmatpush.bf16.msra.mxu0 0
      %1309 = vmatpush.bf16.msra.mxu0 0
      %1310 = vmatpush.bf16.msra.mxu0 0
      %1311 = vmatpush.bf16.msra.mxu0 0
      %1312 = vmatpush.bf16.msra.mxu0 0
      %1313 = vmatpush.bf16.msra.mxu0 %v1304
      %1314 = vmatmul.bf16.gmra.mxu0 %v1292
      %v1315 = vpop.f32.mrf.mxu0
      %v1316 = vadd.f32 0.0, %v1315
      %v1317 = vpop.f32.mrf.mxu0
      %v1318 = vadd.f32 0.0, %v1317
      %1319 = vmatmul.bf16.gmra.mxu0 %v1295
      %v1320 = vpop.f32.mrf.mxu0
      %v1321 = vadd.f32 0.0, %v1320
      %v1322 = vpop.f32.mrf.mxu0
      %v1323 = vadd.f32 0.0, %v1322
      %1324 = vmatmul.bf16.gmra.mxu0 %v1298
      %v1325 = vpop.f32.mrf.mxu0
      %v1326 = vadd.f32 0.0, %v1325
      %v1327 = vpop.f32.mrf.mxu0
      %v1328 = vadd.f32 0.0, %v1327
      %1329 = vmatmul.bf16.gmra.mxu0 %v1301
      %v1330 = vpop.f32.mrf.mxu0
      %v1331 = vadd.f32 0.0, %v1330
      %v1332 = vpop.f32.mrf.mxu0
      %v1333 = vadd.f32 0.0, %v1332
      %1334 = vdwg.mxu0
      %v1335 = vadd.f32 %v1157, %v1316
      %v1336 = vadd.f32 %v1158, %v1318
      %v1337 = vadd.f32 %v1159, %v1321
      %v1338 = vadd.f32 %v1160, %v1323
      %v1339 = vadd.f32 %v1161, %v1326
      %v1340 = vadd.f32 %v1162, %v1328
      %v1341 = vadd.f32 %v1163, %v1331
      %v1342 = vadd.f32 %v1164, %v1333
      %v1351 = vrot.slane %v1071, 5
      %v1352 = vrot.slane %v1351, 4
      %v1353 = vrot.slane %v1072, 5
      %v1354 = vsel %vm614, %v1352, %v1353
      %v1355 = vrot.slane %v1073, 5
      %v1356 = vrot.slane %v1355, 4
      %v1357 = vrot.slane %v1074, 5
      %v1358 = vsel %vm614, %v1356, %v1357
      %v1359 = vrot.slane %v1075, 5
      %v1360 = vrot.slane %v1359, 4
      %v1361 = vrot.slane %v1076, 5
      %v1362 = vsel %vm614, %v1360, %v1361
      %v1363 = vrot.slane %v1077, 5
      %v1364 = vrot.slane %v1363, 4
      %v1365 = vrot.slane %v1078, 5
      %v1366 = vsel %vm614, %v1364, %v1365
      %v1367 = vrot.slane %v1079, 5
      %v1368 = vrot.slane %v1367, 4
      %v1369 = vrot.slane %v1080, 5
      %v1370 = vsel %vm614, %v1368, %v1369
      %v1371 = vrot.slane %v1081, 5
      %v1372 = vrot.slane %v1371, 4
      %v1373 = vrot.slane %v1082, 5
      %v1374 = vsel %vm614, %v1372, %v1373
      %v1375 = vrot.slane %v1083, 5
      %v1376 = vrot.slane %v1375, 4
      %v1377 = vrot.slane %v1084, 5
      %v1378 = vsel %vm614, %v1376, %v1377
      %v1379 = vrot.slane %v1085, 5
      %v1380 = vrot.slane %v1379, 4
      %v1381 = vrot.slane %v1086, 5
      %v1382 = vsel %vm614, %v1380, %v1381
      %s1383 = scalar_lea.vmem %s3, 44
      %v1384 = vld [vmem:[%s1383] sm:$0xf]
      %v1385 = vunpack.c.l.b16 %v1354
      %v1386 = vunpack.c.l.b16 %v1358
      %v1387 = vunpack.c.l.b16 %v1362
      %v1388 = vunpack.c.l.b16 %v1366
      %v1389 = vunpack.c.l.b16 %v1370
      %v1390 = vunpack.c.l.b16 %v1374
      %v1391 = vunpack.c.l.b16 %v1378
      %v1392 = vunpack.c.l.b16 %v1382
      %v1393 = vpack.c.b16 %v1386, %v1385
      %v1394 = vpack.c.b16 %v1388, %v1387
      %v1395 = vpack.c.b16 %v1390, %v1389
      %v1396 = vpack.c.b16 %v1392, %v1391
      %v1398 = vsel %vm494, %v1393, 0
      %v1401 = vsel %vm494, %v1394, 0
      %v1404 = vsel %vm494, %v1395, 0
      %v1407 = vsel %vm494, %v1396, 0
      %v1410 = vsel %vm507, %v1384, 0
      %1412 = vmatpush.bf16.msra.mxu0 0
      %1413 = vmatpush.bf16.msra.mxu0 0
      %1414 = vmatpush.bf16.msra.mxu0 0
      %1415 = vmatpush.bf16.msra.mxu0 0
      %1416 = vmatpush.bf16.msra.mxu0 0
      %1417 = vmatpush.bf16.msra.mxu0 0
      %1418 = vmatpush.bf16.msra.mxu0 0
      %1419 = vmatpush.bf16.msra.mxu0 %v1410
      %1420 = vmatmul.bf16.gmra.mxu0 %v1398
      %v1421 = vpop.f32.mrf.mxu0
      %v1422 = vadd.f32 0.0, %v1421
      %v1423 = vpop.f32.mrf.mxu0
      %v1424 = vadd.f32 0.0, %v1423
      %1425 = vmatmul.bf16.gmra.mxu0 %v1401
      %v1426 = vpop.f32.mrf.mxu0
      %v1427 = vadd.f32 0.0, %v1426
      %v1428 = vpop.f32.mrf.mxu0
      %v1429 = vadd.f32 0.0, %v1428
      %1430 = vmatmul.bf16.gmra.mxu0 %v1404
      %v1431 = vpop.f32.mrf.mxu0
      %v1432 = vadd.f32 0.0, %v1431
      %v1433 = vpop.f32.mrf.mxu0
      %v1434 = vadd.f32 0.0, %v1433
      %1435 = vmatmul.bf16.gmra.mxu0 %v1407
      %v1436 = vpop.f32.mrf.mxu0
      %v1437 = vadd.f32 0.0, %v1436
      %v1438 = vpop.f32.mrf.mxu0
      %v1439 = vadd.f32 0.0, %v1438
      %1440 = vdwg.mxu0
      %v1441 = vadd.f32 %v1335, %v1422
      %v1442 = vadd.f32 %v1336, %v1424
      %v1443 = vadd.f32 %v1337, %v1427
      %v1444 = vadd.f32 %v1338, %v1429
      %v1445 = vadd.f32 %v1339, %v1432
      %v1446 = vadd.f32 %v1340, %v1434
      %v1447 = vadd.f32 %v1341, %v1437
      %v1448 = vadd.f32 %v1342, %v1439
      %s1449 = scalar_lea.vmem %s3, 48
      %v1450 = vld [vmem:[%s1449] sm:$0xf]
      %v1452 = vunpack.c.l.b16 %v1087
      %v1453 = vpack.c.b16 %v1103, %v1102
      %v1454 = vpack.c.b16 %v1105, %v1104
      %v1455 = vpack.c.b16 %v1107, %v1106
      %v1456 = vpack.c.b16 %v1452, %v1108
      %v1458 = vsel %vm494, %v1453, 0
      %v1461 = vsel %vm494, %v1454, 0
      %v1464 = vsel %vm494, %v1455, 0
      %v1467 = vsel %vm494, %v1456, 0
      %v1470 = vsel %vm507, %v1450, 0
      %1472 = vmatpush.bf16.msra.mxu0 0
      %1473 = vmatpush.bf16.msra.mxu0 0
      %1474 = vmatpush.bf16.msra.mxu0 0
      %1475 = vmatpush.bf16.msra.mxu0 0
      %1476 = vmatpush.bf16.msra.mxu0 0
      %1477 = vmatpush.bf16.msra.mxu0 0
      %1478 = vmatpush.bf16.msra.mxu0 0
      %1479 = vmatpush.bf16.msra.mxu0 %v1470
      %1480 = vmatmul.bf16.gmra.mxu0 %v1458
      %v1481 = vpop.f32.mrf.mxu0
      %v1482 = vadd.f32 0.0, %v1481
      %v1483 = vpop.f32.mrf.mxu0
      %v1484 = vadd.f32 0.0, %v1483
      %1485 = vmatmul.bf16.gmra.mxu0 %v1461
      %v1486 = vpop.f32.mrf.mxu0
      %v1487 = vadd.f32 0.0, %v1486
      %v1488 = vpop.f32.mrf.mxu0
      %v1489 = vadd.f32 0.0, %v1488
      %1490 = vmatmul.bf16.gmra.mxu0 %v1464
      %v1491 = vpop.f32.mrf.mxu0
      %v1492 = vadd.f32 0.0, %v1491
      %v1493 = vpop.f32.mrf.mxu0
      %v1494 = vadd.f32 0.0, %v1493
      %1495 = vmatmul.bf16.gmra.mxu0 %v1467
      %v1496 = vpop.f32.mrf.mxu0
      %v1497 = vadd.f32 0.0, %v1496
      %v1498 = vpop.f32.mrf.mxu0
      %v1499 = vadd.f32 0.0, %v1498
      %1500 = vdwg.mxu0
      %v1501 = vadd.f32 %v1441, %v1482
      %v1502 = vadd.f32 %v1442, %v1484
      %v1503 = vadd.f32 %v1443, %v1487
      %v1504 = vadd.f32 %v1444, %v1489
      %v1505 = vadd.f32 %v1445, %v1492
      %v1506 = vadd.f32 %v1446, %v1494
      %v1507 = vadd.f32 %v1447, %v1497
      %v1508 = vadd.f32 %v1448, %v1499
      %v1510 = vshrl.u32 %v1087, 16
      %v1512 = vrot.slane %v1510, 4
      %v1513 = vshll.u32 %v1087, 16
      %v1515 = vrot.slane %v1513, 5
      %v1516 = vor.u32 %v1512, %v1515
      %v1517 = vrot.slane %v1516, 4
      %v1519 = vshll.u32 %v1088, 16
      %v1521 = vrot.slane %v1519, 5
      %v1522 = vsel %vm367, %v1517, %v1521
      %s1523 = scalar_lea.vmem %s3, 52
      %v1524 = vld [vmem:[%s1523] sm:$0xf]
      %v1525 = vunpack.c.l.b16 %v1522
      %v1526 = vpack.c.b16 %v1281, %v1280
      %v1527 = vpack.c.b16 %v1283, %v1282
      %v1528 = vpack.c.b16 %v1285, %v1284
      %v1529 = vpack.c.b16 %v1525, %v1286
      %v1531 = vsel %vm494, %v1526, 0
      %v1534 = vsel %vm494, %v1527, 0
      %v1537 = vsel %vm494, %v1528, 0
      %v1540 = vsel %vm494, %v1529, 0
      %v1543 = vsel %vm507, %v1524, 0
      %1545 = vmatpush.bf16.msra.mxu0 0
      %1546 = vmatpush.bf16.msra.mxu0 0
      %1547 = vmatpush.bf16.msra.mxu0 0
      %1548 = vmatpush.bf16.msra.mxu0 0
      %1549 = vmatpush.bf16.msra.mxu0 0
      %1550 = vmatpush.bf16.msra.mxu0 0
      %1551 = vmatpush.bf16.msra.mxu0 0
      %1552 = vmatpush.bf16.msra.mxu0 %v1543
      %1553 = vmatmul.bf16.gmra.mxu0 %v1531
      %v1554 = vpop.f32.mrf.mxu0
      %v1555 = vadd.f32 0.0, %v1554
      %v1556 = vpop.f32.mrf.mxu0
      %v1557 = vadd.f32 0.0, %v1556
      %1558 = vmatmul.bf16.gmra.mxu0 %v1534
      %v1559 = vpop.f32.mrf.mxu0
      %v1560 = vadd.f32 0.0, %v1559
      %v1561 = vpop.f32.mrf.mxu0
      %v1562 = vadd.f32 0.0, %v1561
      %1563 = vmatmul.bf16.gmra.mxu0 %v1537
      %v1564 = vpop.f32.mrf.mxu0
      %v1565 = vadd.f32 0.0, %v1564
      %v1566 = vpop.f32.mrf.mxu0
      %v1567 = vadd.f32 0.0, %v1566
      %1568 = vmatmul.bf16.gmra.mxu0 %v1540
      %v1569 = vpop.f32.mrf.mxu0
      %v1570 = vadd.f32 0.0, %v1569
      %v1571 = vpop.f32.mrf.mxu0
      %v1572 = vadd.f32 0.0, %v1571
      %1573 = vdwg.mxu0
      %v1574 = vadd.f32 %v1501, %v1555
      %v1575 = vadd.f32 %v1502, %v1557
      %v1576 = vadd.f32 %v1503, %v1560
      %v1577 = vadd.f32 %v1504, %v1562
      %v1578 = vadd.f32 %v1505, %v1565
      %v1579 = vadd.f32 %v1506, %v1567
      %v1580 = vadd.f32 %v1507, %v1570
      %v1581 = vadd.f32 %v1508, %v1572
      %v1583 = vrot.slane %v1087, 5
      %v1584 = vrot.slane %v1583, 4
      %v1585 = vrot.slane %v1088, 5
      %v1586 = vsel %vm614, %v1584, %v1585
      %s1587 = scalar_lea.vmem %s3, 56
      %v1588 = vld [vmem:[%s1587] sm:$0xf]
      %v1589 = vunpack.c.l.b16 %v1586
      %v1590 = vpack.c.b16 %v1387, %v1386
      %v1591 = vpack.c.b16 %v1389, %v1388
      %v1592 = vpack.c.b16 %v1391, %v1390
      %v1593 = vpack.c.b16 %v1589, %v1392
      %v1595 = vsel %vm494, %v1590, 0
      %v1598 = vsel %vm494, %v1591, 0
      %v1601 = vsel %vm494, %v1592, 0
      %v1604 = vsel %vm494, %v1593, 0
      %v1607 = vsel %vm507, %v1588, 0
      %1609 = vmatpush.bf16.msra.mxu0 0
      %1610 = vmatpush.bf16.msra.mxu0 0
      %1611 = vmatpush.bf16.msra.mxu0 0
      %1612 = vmatpush.bf16.msra.mxu0 0
      %1613 = vmatpush.bf16.msra.mxu0 0
      %1614 = vmatpush.bf16.msra.mxu0 0
      %1615 = vmatpush.bf16.msra.mxu0 0
      %1616 = vmatpush.bf16.msra.mxu0 %v1607
      %1617 = vmatmul.bf16.gmra.mxu0 %v1595
      %v1618 = vpop.f32.mrf.mxu0
      %v1619 = vadd.f32 0.0, %v1618
      %v1620 = vpop.f32.mrf.mxu0
      %v1621 = vadd.f32 0.0, %v1620
      %1622 = vmatmul.bf16.gmra.mxu0 %v1598
      %v1623 = vpop.f32.mrf.mxu0
      %v1624 = vadd.f32 0.0, %v1623
      %v1625 = vpop.f32.mrf.mxu0
      %v1626 = vadd.f32 0.0, %v1625
      %1627 = vmatmul.bf16.gmra.mxu0 %v1601
      %v1628 = vpop.f32.mrf.mxu0
      %v1629 = vadd.f32 0.0, %v1628
      %v1630 = vpop.f32.mrf.mxu0
      %v1631 = vadd.f32 0.0, %v1630
      %1632 = vmatmul.bf16.gmra.mxu0 %v1604
      %v1633 = vpop.f32.mrf.mxu0
      %v1634 = vadd.f32 0.0, %v1633
      %v1635 = vpop.f32.mrf.mxu0
      %v1636 = vadd.f32 0.0, %v1635
      %1637 = vdwg.mxu0
      %v1638 = vadd.f32 %v1574, %v1619
      %v1639 = vadd.f32 %v1575, %v1621
      %v1640 = vadd.f32 %v1576, %v1624
      %v1641 = vadd.f32 %v1577, %v1626
      %v1642 = vadd.f32 %v1578, %v1629
      %v1643 = vadd.f32 %v1579, %v1631
      %v1644 = vadd.f32 %v1580, %v1634
      %v1645 = vadd.f32 %v1581, %v1636
      %s1646 = scalar_lea.vmem %s3, 60
      %v1647 = vld [vmem:[%s1646] sm:$0xf]
      %v1649 = vunpack.c.l.b16 %v1089
      %v1650 = vpack.c.b16 %v1649, %v1452
      %v1652 = vsel %vm494, %v1650, 0
      %v1655 = vsel %vm507, %v1647, 0
      %1657 = vmatpush.bf16.msra.mxu0 0
      %1658 = vmatpush.bf16.msra.mxu0 0
      %1659 = vmatpush.bf16.msra.mxu0 0
      %1660 = vmatpush.bf16.msra.mxu0 0
      %1661 = vmatpush.bf16.msra.mxu0 0
      %1662 = vmatpush.bf16.msra.mxu0 0
      %1663 = vmatpush.bf16.msra.mxu0 0
      %1664 = vmatpush.bf16.msra.mxu0 %v1655
      %1665 = vmatmul.bf16.gmra.mxu0 %v1117
      %v1666 = vpop.f32.mrf.mxu0
      %v1667 = vadd.f32 0.0, %v1666
      %v1668 = vpop.f32.mrf.mxu0
      %v1669 = vadd.f32 0.0, %v1668
      %1670 = vmatmul.bf16.gmra.mxu0 %v1120
      %v1671 = vpop.f32.mrf.mxu0
      %v1672 = vadd.f32 0.0, %v1671
      %v1673 = vpop.f32.mrf.mxu0
      %v1674 = vadd.f32 0.0, %v1673
      %1675 = vmatmul.bf16.gmra.mxu0 %v1123
      %v1676 = vpop.f32.mrf.mxu0
      %v1677 = vadd.f32 0.0, %v1676
      %v1678 = vpop.f32.mrf.mxu0
      %v1679 = vadd.f32 0.0, %v1678
      %1680 = vmatmul.bf16.gmra.mxu0 %v1652
      %v1681 = vpop.f32.mrf.mxu0
      %v1682 = vadd.f32 0.0, %v1681
      %v1683 = vpop.f32.mrf.mxu0
      %v1684 = vadd.f32 0.0, %v1683
      %1685 = vdwg.mxu0
      %v1686 = vadd.f32 %v1638, %v1667
      %v1687 = vadd.f32 %v1639, %v1669
      %v1688 = vadd.f32 %v1640, %v1672
      %v1689 = vadd.f32 %v1641, %v1674
      %v1690 = vadd.f32 %v1642, %v1677
      %v1691 = vadd.f32 %v1643, %v1679
      %v1692 = vadd.f32 %v1644, %v1682
      %v1693 = vadd.f32 %v1645, %v1684
      %v1695 = vshrl.u32 %v1089, 16
      %v1697 = vrot.slane %v1695, 4
      %v1698 = vshll.u32 %v1089, 16
      %v1700 = vrot.slane %v1698, 5
      %v1701 = vor.u32 %v1697, %v1700
      %v1702 = vrot.slane %v1701, 4
      %v1704 = vshll.u32 %v1090, 16
      %v1706 = vrot.slane %v1704, 5
      %v1707 = vsel %vm367, %v1702, %v1706
      %s1708 = scalar_lea.vmem %s3, 64
      %v1709 = vld [vmem:[%s1708] sm:$0xf]
      %v1710 = vunpack.c.l.b16 %v1707
      %v1711 = vpack.c.b16 %v1710, %v1525
      %v1713 = vsel %vm494, %v1711, 0
      %v1716 = vsel %vm507, %v1709, 0
      %1718 = vmatpush.bf16.msra.mxu0 0
      %1719 = vmatpush.bf16.msra.mxu0 0
      %1720 = vmatpush.bf16.msra.mxu0 0
      %1721 = vmatpush.bf16.msra.mxu0 0
      %1722 = vmatpush.bf16.msra.mxu0 0
      %1723 = vmatpush.bf16.msra.mxu0 0
      %1724 = vmatpush.bf16.msra.mxu0 0
      %1725 = vmatpush.bf16.msra.mxu0 %v1716
      %1726 = vmatmul.bf16.gmra.mxu0 %v1295
      %v1727 = vpop.f32.mrf.mxu0
      %v1728 = vadd.f32 0.0, %v1727
      %v1729 = vpop.f32.mrf.mxu0
      %v1730 = vadd.f32 0.0, %v1729
      %1731 = vmatmul.bf16.gmra.mxu0 %v1298
      %v1732 = vpop.f32.mrf.mxu0
      %v1733 = vadd.f32 0.0, %v1732
      %v1734 = vpop.f32.mrf.mxu0
      %v1735 = vadd.f32 0.0, %v1734
      %1736 = vmatmul.bf16.gmra.mxu0 %v1301
      %v1737 = vpop.f32.mrf.mxu0
      %v1738 = vadd.f32 0.0, %v1737
      %v1739 = vpop.f32.mrf.mxu0
      %v1740 = vadd.f32 0.0, %v1739
      %1741 = vmatmul.bf16.gmra.mxu0 %v1713
      %v1742 = vpop.f32.mrf.mxu0
      %v1743 = vadd.f32 0.0, %v1742
      %v1744 = vpop.f32.mrf.mxu0
      %v1745 = vadd.f32 0.0, %v1744
      %1746 = vdwg.mxu0
      %v1747 = vadd.f32 %v1686, %v1728
      %v1748 = vadd.f32 %v1687, %v1730
      %v1749 = vadd.f32 %v1688, %v1733
      %v1750 = vadd.f32 %v1689, %v1735
      %v1751 = vadd.f32 %v1690, %v1738
      %v1752 = vadd.f32 %v1691, %v1740
      %v1753 = vadd.f32 %v1692, %v1743
      %v1754 = vadd.f32 %v1693, %v1745
      %v1756 = vrot.slane %v1089, 5
      %v1757 = vrot.slane %v1756, 4
      %v1758 = vrot.slane %v1090, 5
      %v1759 = vsel %vm614, %v1757, %v1758
      %s1760 = scalar_lea.vmem %s3, 68
      %v1761 = vld [vmem:[%s1760] sm:$0xf]
      %v1762 = vunpack.c.l.b16 %v1759
      %v1763 = vpack.c.b16 %v1762, %v1589
      %v1765 = vsel %vm494, %v1763, 0
      %v1768 = vsel %vm507, %v1761, 0
      %1770 = vmatpush.bf16.msra.mxu0 0
      %1771 = vmatpush.bf16.msra.mxu0 0
      %1772 = vmatpush.bf16.msra.mxu0 0
      %1773 = vmatpush.bf16.msra.mxu0 0
      %1774 = vmatpush.bf16.msra.mxu0 0
      %1775 = vmatpush.bf16.msra.mxu0 0
      %1776 = vmatpush.bf16.msra.mxu0 0
      %1777 = vmatpush.bf16.msra.mxu0 %v1768
      %1778 = vmatmul.bf16.gmra.mxu0 %v1401
      %v1779 = vpop.f32.mrf.mxu0
      %v1780 = vadd.f32 0.0, %v1779
      %v1781 = vpop.f32.mrf.mxu0
      %v1782 = vadd.f32 0.0, %v1781
      %1783 = vmatmul.bf16.gmra.mxu0 %v1404
      %v1784 = vpop.f32.mrf.mxu0
      %v1785 = vadd.f32 0.0, %v1784
      %v1786 = vpop.f32.mrf.mxu0
      %v1787 = vadd.f32 0.0, %v1786
      %1788 = vmatmul.bf16.gmra.mxu0 %v1407
      %v1789 = vpop.f32.mrf.mxu0
      %v1790 = vadd.f32 0.0, %v1789
      %v1791 = vpop.f32.mrf.mxu0
      %v1792 = vadd.f32 0.0, %v1791
      %1793 = vmatmul.bf16.gmra.mxu0 %v1765
      %v1794 = vpop.f32.mrf.mxu0
      %v1795 = vadd.f32 0.0, %v1794
      %v1796 = vpop.f32.mrf.mxu0
      %v1797 = vadd.f32 0.0, %v1796
      %1798 = vdwg.mxu0
      %v1799 = vadd.f32 %v1747, %v1780
      %v1800 = vadd.f32 %v1748, %v1782
      %v1801 = vadd.f32 %v1749, %v1785
      %v1802 = vadd.f32 %v1750, %v1787
      %v1803 = vadd.f32 %v1751, %v1790
      %v1804 = vadd.f32 %v1752, %v1792
      %v1805 = vadd.f32 %v1753, %v1795
      %v1806 = vadd.f32 %v1754, %v1797
      %v1807 = vld [vmem:[%s332] sm:$0xf]
      %v1808 = vld [vmem:[%s332 + $0x4] sm:$0x1]
      %v1809 = vld [vmem:[%s332 + $0x8] sm:$0xf]
      %v1810 = vld [vmem:[%s332 + $0xc] sm:$0x1]
      %v1811 = vld [vmem:[%s332 + $0x10] sm:$0xf]
      %v1812 = vld [vmem:[%s332 + $0x14] sm:$0x1]
      %v1813 = vld [vmem:[%s332 + $0x18] sm:$0xf]
      %v1814 = vld [vmem:[%s332 + $0x1c] sm:$0x1]
      %v1815 = vld [vmem:[%s332 + $0x20] sm:$0xf]
      %v1816 = vld [vmem:[%s332 + $0x24] sm:$0x1]
      %v1817 = vld [vmem:[%s332 + $0x28] sm:$0xf]
      %v1818 = vld [vmem:[%s332 + $0x2c] sm:$0x1]
      %v1819 = vld [vmem:[%s332 + $0x30] sm:$0xf]
      %v1820 = vld [vmem:[%s332 + $0x34] sm:$0x1]
      %v1821 = vld [vmem:[%s332 + $0x38] sm:$0xf]
      %v1822 = vld [vmem:[%s332 + $0x3c] sm:$0x1]
      %v1823 = vld [vmem:[%s332 + $0x40] sm:$0xf]
      %v1824 = vld [vmem:[%s332 + $0x44] sm:$0x1]
      %v1825 = vld [vmem:[%s332 + $0x48] sm:$0xf]
      %v1826 = vld [vmem:[%s332 + $0x4c] sm:$0x1]
      %s1827 = scalar_lea.vmem %s3, 72
      %v1828 = vld [vmem:[%s1827] sm:$0xf]
      %v1837 = vunpack.c.l.b16 %v1807
      %v1838 = vunpack.c.l.b16 %v1809
      %v1839 = vunpack.c.l.b16 %v1811
      %v1840 = vunpack.c.l.b16 %v1813
      %v1841 = vunpack.c.l.b16 %v1815
      %v1842 = vunpack.c.l.b16 %v1817
      %v1843 = vunpack.c.l.b16 %v1819
      %v1844 = vunpack.c.l.b16 %v1821
      %v1845 = vpack.c.b16 %v1838, %v1837
      %v1846 = vpack.c.b16 %v1840, %v1839
      %v1847 = vpack.c.b16 %v1842, %v1841
      %v1848 = vpack.c.b16 %v1844, %v1843
      %v1850 = vsel %vm494, %v1845, 0
      %v1853 = vsel %vm494, %v1846, 0
      %v1856 = vsel %vm494, %v1847, 0
      %v1859 = vsel %vm494, %v1848, 0
      %v1862 = vsel %vm507, %v1828, 0
      %1864 = vmatpush.bf16.msra.mxu0 0
      %1865 = vmatpush.bf16.msra.mxu0 0
      %1866 = vmatpush.bf16.msra.mxu0 0
      %1867 = vmatpush.bf16.msra.mxu0 0
      %1868 = vmatpush.bf16.msra.mxu0 0
      %1869 = vmatpush.bf16.msra.mxu0 0
      %1870 = vmatpush.bf16.msra.mxu0 0
      %1871 = vmatpush.bf16.msra.mxu0 %v1862
      %1872 = vmatmul.bf16.gmra.mxu0 %v1850
      %v1873 = vpop.f32.mrf.mxu0
      %v1874 = vadd.f32 0.0, %v1873
      %v1875 = vpop.f32.mrf.mxu0
      %v1876 = vadd.f32 0.0, %v1875
      %1877 = vmatmul.bf16.gmra.mxu0 %v1853
      %v1878 = vpop.f32.mrf.mxu0
      %v1879 = vadd.f32 0.0, %v1878
      %v1880 = vpop.f32.mrf.mxu0
      %v1881 = vadd.f32 0.0, %v1880
      %1882 = vmatmul.bf16.gmra.mxu0 %v1856
      %v1883 = vpop.f32.mrf.mxu0
      %v1884 = vadd.f32 0.0, %v1883
      %v1885 = vpop.f32.mrf.mxu0
      %v1886 = vadd.f32 0.0, %v1885
      %1887 = vmatmul.bf16.gmra.mxu0 %v1859
      %v1888 = vpop.f32.mrf.mxu0
      %v1889 = vadd.f32 0.0, %v1888
      %v1890 = vpop.f32.mrf.mxu0
      %v1891 = vadd.f32 0.0, %v1890
      %1892 = vdwg.mxu0
      %v1893 = vadd.f32 %v1799, %v1874
      %v1894 = vadd.f32 %v1800, %v1876
      %v1895 = vadd.f32 %v1801, %v1879
      %v1896 = vadd.f32 %v1802, %v1881
      %v1897 = vadd.f32 %v1803, %v1884
      %v1898 = vadd.f32 %v1804, %v1886
      %v1899 = vadd.f32 %v1805, %v1889
      %v1900 = vadd.f32 %v1806, %v1891
      %v1902 = vshrl.u32 %v1807, 16
      %v1904 = vrot.slane %v1902, 4
      %v1905 = vshll.u32 %v1807, 16
      %v1907 = vrot.slane %v1905, 5
      %v1908 = vor.u32 %v1904, %v1907
      %v1909 = vrot.slane %v1908, 4
      %v1911 = vshll.u32 %v1808, 16
      %v1913 = vrot.slane %v1911, 5
      %v1914 = vsel %vm367, %v1909, %v1913
      %v1916 = vshrl.u32 %v1809, 16
      %v1918 = vrot.slane %v1916, 4
      %v1919 = vshll.u32 %v1809, 16
      %v1921 = vrot.slane %v1919, 5
      %v1922 = vor.u32 %v1918, %v1921
      %v1923 = vrot.slane %v1922, 4
      %v1925 = vshll.u32 %v1810, 16
      %v1927 = vrot.slane %v1925, 5
      %v1928 = vsel %vm367, %v1923, %v1927
      %v1930 = vshrl.u32 %v1811, 16
      %v1932 = vrot.slane %v1930, 4
      %v1933 = vshll.u32 %v1811, 16
      %v1935 = vrot.slane %v1933, 5
      %v1936 = vor.u32 %v1932, %v1935
      %v1937 = vrot.slane %v1936, 4
      %v1939 = vshll.u32 %v1812, 16
      %v1941 = vrot.slane %v1939, 5
      %v1942 = vsel %vm367, %v1937, %v1941
      %v1944 = vshrl.u32 %v1813, 16
      %v1946 = vrot.slane %v1944, 4
      %v1947 = vshll.u32 %v1813, 16
      %v1949 = vrot.slane %v1947, 5
      %v1950 = vor.u32 %v1946, %v1949
      %v1951 = vrot.slane %v1950, 4
      %v1953 = vshll.u32 %v1814, 16
      %v1955 = vrot.slane %v1953, 5
      %v1956 = vsel %vm367, %v1951, %v1955
      %v1958 = vshrl.u32 %v1815, 16
      %v1960 = vrot.slane %v1958, 4
      %v1961 = vshll.u32 %v1815, 16
      %v1963 = vrot.slane %v1961, 5
      %v1964 = vor.u32 %v1960, %v1963
      %v1965 = vrot.slane %v1964, 4
      %v1967 = vshll.u32 %v1816, 16
      %v1969 = vrot.slane %v1967, 5
      %v1970 = vsel %vm367, %v1965, %v1969
      %v1972 = vshrl.u32 %v1817, 16
      %v1974 = vrot.slane %v1972, 4
      %v1975 = vshll.u32 %v1817, 16
      %v1977 = vrot.slane %v1975, 5
      %v1978 = vor.u32 %v1974, %v1977
      %v1979 = vrot.slane %v1978, 4
      %v1981 = vshll.u32 %v1818, 16
      %v1983 = vrot.slane %v1981, 5
      %v1984 = vsel %vm367, %v1979, %v1983
      %v1986 = vshrl.u32 %v1819, 16
      %v1988 = vrot.slane %v1986, 4
      %v1989 = vshll.u32 %v1819, 16
      %v1991 = vrot.slane %v1989, 5
      %v1992 = vor.u32 %v1988, %v1991
      %v1993 = vrot.slane %v1992, 4
      %v1995 = vshll.u32 %v1820, 16
      %v1997 = vrot.slane %v1995, 5
      %v1998 = vsel %vm367, %v1993, %v1997
      %v2000 = vshrl.u32 %v1821, 16
      %v2002 = vrot.slane %v2000, 4
      %v2003 = vshll.u32 %v1821, 16
      %v2005 = vrot.slane %v2003, 5
      %v2006 = vor.u32 %v2002, %v2005
      %v2007 = vrot.slane %v2006, 4
      %v2009 = vshll.u32 %v1822, 16
      %v2011 = vrot.slane %v2009, 5
      %v2012 = vsel %vm367, %v2007, %v2011
      %s2013 = scalar_lea.vmem %s3, 76
      %v2014 = vld [vmem:[%s2013] sm:$0xf]
      %v2015 = vunpack.c.l.b16 %v1914
      %v2016 = vunpack.c.l.b16 %v1928
      %v2017 = vunpack.c.l.b16 %v1942
      %v2018 = vunpack.c.l.b16 %v1956
      %v2019 = vunpack.c.l.b16 %v1970
      %v2020 = vunpack.c.l.b16 %v1984
      %v2021 = vunpack.c.l.b16 %v1998
      %v2022 = vunpack.c.l.b16 %v2012
      %v2023 = vpack.c.b16 %v2016, %v2015
      %v2024 = vpack.c.b16 %v2018, %v2017
      %v2025 = vpack.c.b16 %v2020, %v2019
      %v2026 = vpack.c.b16 %v2022, %v2021
      %v2028 = vsel %vm494, %v2023, 0
      %v2031 = vsel %vm494, %v2024, 0
      %v2034 = vsel %vm494, %v2025, 0
      %v2037 = vsel %vm494, %v2026, 0
      %v2040 = vsel %vm507, %v2014, 0
      %2042 = vmatpush.bf16.msra.mxu0 0
      %2043 = vmatpush.bf16.msra.mxu0 0
      %2044 = vmatpush.bf16.msra.mxu0 0
      %2045 = vmatpush.bf16.msra.mxu0 0
      %2046 = vmatpush.bf16.msra.mxu0 0
      %2047 = vmatpush.bf16.msra.mxu0 0
      %2048 = vmatpush.bf16.msra.mxu0 0
      %2049 = vmatpush.bf16.msra.mxu0 %v2040
      %2050 = vmatmul.bf16.gmra.mxu0 %v2028
      %v2051 = vpop.f32.mrf.mxu0
      %v2052 = vadd.f32 0.0, %v2051
      %v2053 = vpop.f32.mrf.mxu0
      %v2054 = vadd.f32 0.0, %v2053
      %2055 = vmatmul.bf16.gmra.mxu0 %v2031
      %v2056 = vpop.f32.mrf.mxu0
      %v2057 = vadd.f32 0.0, %v2056
      %v2058 = vpop.f32.mrf.mxu0
      %v2059 = vadd.f32 0.0, %v2058
      %2060 = vmatmul.bf16.gmra.mxu0 %v2034
      %v2061 = vpop.f32.mrf.mxu0
      %v2062 = vadd.f32 0.0, %v2061
      %v2063 = vpop.f32.mrf.mxu0
      %v2064 = vadd.f32 0.0, %v2063
      %2065 = vmatmul.bf16.gmra.mxu0 %v2037
      %v2066 = vpop.f32.mrf.mxu0
      %v2067 = vadd.f32 0.0, %v2066
      %v2068 = vpop.f32.mrf.mxu0
      %v2069 = vadd.f32 0.0, %v2068
      %2070 = vdwg.mxu0
      %v2071 = vadd.f32 %v1893, %v2052
      %v2072 = vadd.f32 %v1894, %v2054
      %v2073 = vadd.f32 %v1895, %v2057
      %v2074 = vadd.f32 %v1896, %v2059
      %v2075 = vadd.f32 %v1897, %v2062
      %v2076 = vadd.f32 %v1898, %v2064
      %v2077 = vadd.f32 %v1899, %v2067
      %v2078 = vadd.f32 %v1900, %v2069
      %v2087 = vrot.slane %v1807, 5
      %v2088 = vrot.slane %v2087, 4
      %v2089 = vrot.slane %v1808, 5
      %v2090 = vsel %vm614, %v2088, %v2089
      %v2091 = vrot.slane %v1809, 5
      %v2092 = vrot.slane %v2091, 4
      %v2093 = vrot.slane %v1810, 5
      %v2094 = vsel %vm614, %v2092, %v2093
      %v2095 = vrot.slane %v1811, 5
      %v2096 = vrot.slane %v2095, 4
      %v2097 = vrot.slane %v1812, 5
      %v2098 = vsel %vm614, %v2096, %v2097
      %v2099 = vrot.slane %v1813, 5
      %v2100 = vrot.slane %v2099, 4
      %v2101 = vrot.slane %v1814, 5
      %v2102 = vsel %vm614, %v2100, %v2101
      %v2103 = vrot.slane %v1815, 5
      %v2104 = vrot.slane %v2103, 4
      %v2105 = vrot.slane %v1816, 5
      %v2106 = vsel %vm614, %v2104, %v2105
      %v2107 = vrot.slane %v1817, 5
      %v2108 = vrot.slane %v2107, 4
      %v2109 = vrot.slane %v1818, 5
      %v2110 = vsel %vm614, %v2108, %v2109
      %v2111 = vrot.slane %v1819, 5
      %v2112 = vrot.slane %v2111, 4
      %v2113 = vrot.slane %v1820, 5
      %v2114 = vsel %vm614, %v2112, %v2113
      %v2115 = vrot.slane %v1821, 5
      %v2116 = vrot.slane %v2115, 4
      %v2117 = vrot.slane %v1822, 5
      %v2118 = vsel %vm614, %v2116, %v2117
      %s2119 = scalar_lea.vmem %s3, 80
      %v2120 = vld [vmem:[%s2119] sm:$0xf]
      %v2121 = vunpack.c.l.b16 %v2090
      %v2122 = vunpack.c.l.b16 %v2094
      %v2123 = vunpack.c.l.b16 %v2098
      %v2124 = vunpack.c.l.b16 %v2102
      %v2125 = vunpack.c.l.b16 %v2106
      %v2126 = vunpack.c.l.b16 %v2110
      %v2127 = vunpack.c.l.b16 %v2114
      %v2128 = vunpack.c.l.b16 %v2118
      %v2129 = vpack.c.b16 %v2122, %v2121
      %v2130 = vpack.c.b16 %v2124, %v2123
      %v2131 = vpack.c.b16 %v2126, %v2125
      %v2132 = vpack.c.b16 %v2128, %v2127
      %v2134 = vsel %vm494, %v2129, 0
      %v2137 = vsel %vm494, %v2130, 0
      %v2140 = vsel %vm494, %v2131, 0
      %v2143 = vsel %vm494, %v2132, 0
      %v2146 = vsel %vm507, %v2120, 0
      %2148 = vmatpush.bf16.msra.mxu0 0
      %2149 = vmatpush.bf16.msra.mxu0 0
      %2150 = vmatpush.bf16.msra.mxu0 0
      %2151 = vmatpush.bf16.msra.mxu0 0
      %2152 = vmatpush.bf16.msra.mxu0 0
      %2153 = vmatpush.bf16.msra.mxu0 0
      %2154 = vmatpush.bf16.msra.mxu0 0
      %2155 = vmatpush.bf16.msra.mxu0 %v2146
      %2156 = vmatmul.bf16.gmra.mxu0 %v2134
      %v2157 = vpop.f32.mrf.mxu0
      %v2158 = vadd.f32 0.0, %v2157
      %v2159 = vpop.f32.mrf.mxu0
      %v2160 = vadd.f32 0.0, %v2159
      %2161 = vmatmul.bf16.gmra.mxu0 %v2137
      %v2162 = vpop.f32.mrf.mxu0
      %v2163 = vadd.f32 0.0, %v2162
      %v2164 = vpop.f32.mrf.mxu0
      %v2165 = vadd.f32 0.0, %v2164
      %2166 = vmatmul.bf16.gmra.mxu0 %v2140
      %v2167 = vpop.f32.mrf.mxu0
      %v2168 = vadd.f32 0.0, %v2167
      %v2169 = vpop.f32.mrf.mxu0
      %v2170 = vadd.f32 0.0, %v2169
      %2171 = vmatmul.bf16.gmra.mxu0 %v2143
      %v2172 = vpop.f32.mrf.mxu0
      %v2173 = vadd.f32 0.0, %v2172
      %v2174 = vpop.f32.mrf.mxu0
      %v2175 = vadd.f32 0.0, %v2174
      %2176 = vdwg.mxu0
      %v2177 = vadd.f32 %v2071, %v2158
      %v2178 = vadd.f32 %v2072, %v2160
      %v2179 = vadd.f32 %v2073, %v2163
      %v2180 = vadd.f32 %v2074, %v2165
      %v2181 = vadd.f32 %v2075, %v2168
      %v2182 = vadd.f32 %v2076, %v2170
      %v2183 = vadd.f32 %v2077, %v2173
      %v2184 = vadd.f32 %v2078, %v2175
      %s2185 = scalar_lea.vmem %s3, 84
      %v2186 = vld [vmem:[%s2185] sm:$0xf]
      %v2188 = vunpack.c.l.b16 %v1823
      %v2189 = vpack.c.b16 %v1839, %v1838
      %v2190 = vpack.c.b16 %v1841, %v1840
      %v2191 = vpack.c.b16 %v1843, %v1842
      %v2192 = vpack.c.b16 %v2188, %v1844
      %v2194 = vsel %vm494, %v2189, 0
      %v2197 = vsel %vm494, %v2190, 0
      %v2200 = vsel %vm494, %v2191, 0
      %v2203 = vsel %vm494, %v2192, 0
      %v2206 = vsel %vm507, %v2186, 0
      %2208 = vmatpush.bf16.msra.mxu0 0
      %2209 = vmatpush.bf16.msra.mxu0 0
      %2210 = vmatpush.bf16.msra.mxu0 0
      %2211 = vmatpush.bf16.msra.mxu0 0
      %2212 = vmatpush.bf16.msra.mxu0 0
      %2213 = vmatpush.bf16.msra.mxu0 0
      %2214 = vmatpush.bf16.msra.mxu0 0
      %2215 = vmatpush.bf16.msra.mxu0 %v2206
      %2216 = vmatmul.bf16.gmra.mxu0 %v2194
      %v2217 = vpop.f32.mrf.mxu0
      %v2218 = vadd.f32 0.0, %v2217
      %v2219 = vpop.f32.mrf.mxu0
      %v2220 = vadd.f32 0.0, %v2219
      %2221 = vmatmul.bf16.gmra.mxu0 %v2197
      %v2222 = vpop.f32.mrf.mxu0
      %v2223 = vadd.f32 0.0, %v2222
      %v2224 = vpop.f32.mrf.mxu0
      %v2225 = vadd.f32 0.0, %v2224
      %2226 = vmatmul.bf16.gmra.mxu0 %v2200
      %v2227 = vpop.f32.mrf.mxu0
      %v2228 = vadd.f32 0.0, %v2227
      %v2229 = vpop.f32.mrf.mxu0
      %v2230 = vadd.f32 0.0, %v2229
      %2231 = vmatmul.bf16.gmra.mxu0 %v2203
      %v2232 = vpop.f32.mrf.mxu0
      %v2233 = vadd.f32 0.0, %v2232
      %v2234 = vpop.f32.mrf.mxu0
      %v2235 = vadd.f32 0.0, %v2234
      %2236 = vdwg.mxu0
      %v2237 = vadd.f32 %v2177, %v2218
      %v2238 = vadd.f32 %v2178, %v2220
      %v2239 = vadd.f32 %v2179, %v2223
      %v2240 = vadd.f32 %v2180, %v2225
      %v2241 = vadd.f32 %v2181, %v2228
      %v2242 = vadd.f32 %v2182, %v2230
      %v2243 = vadd.f32 %v2183, %v2233
      %v2244 = vadd.f32 %v2184, %v2235
      %v2246 = vshrl.u32 %v1823, 16
      %v2248 = vrot.slane %v2246, 4
      %v2249 = vshll.u32 %v1823, 16
      %v2251 = vrot.slane %v2249, 5
      %v2252 = vor.u32 %v2248, %v2251
      %v2253 = vrot.slane %v2252, 4
      %v2255 = vshll.u32 %v1824, 16
      %v2257 = vrot.slane %v2255, 5
      %v2258 = vsel %vm367, %v2253, %v2257
      %s2259 = scalar_lea.vmem %s3, 88
      %v2260 = vld [vmem:[%s2259] sm:$0xf]
      %v2261 = vunpack.c.l.b16 %v2258
      %v2262 = vpack.c.b16 %v2017, %v2016
      %v2263 = vpack.c.b16 %v2019, %v2018
      %v2264 = vpack.c.b16 %v2021, %v2020
      %v2265 = vpack.c.b16 %v2261, %v2022
      %v2267 = vsel %vm494, %v2262, 0
      %v2270 = vsel %vm494, %v2263, 0
      %v2273 = vsel %vm494, %v2264, 0
      %v2276 = vsel %vm494, %v2265, 0
      %v2279 = vsel %vm507, %v2260, 0
      %2281 = vmatpush.bf16.msra.mxu0 0
      %2282 = vmatpush.bf16.msra.mxu0 0
      %2283 = vmatpush.bf16.msra.mxu0 0
      %2284 = vmatpush.bf16.msra.mxu0 0
      %2285 = vmatpush.bf16.msra.mxu0 0
      %2286 = vmatpush.bf16.msra.mxu0 0
      %2287 = vmatpush.bf16.msra.mxu0 0
      %2288 = vmatpush.bf16.msra.mxu0 %v2279
      %2289 = vmatmul.bf16.gmra.mxu0 %v2267
      %v2290 = vpop.f32.mrf.mxu0
      %v2291 = vadd.f32 0.0, %v2290
      %v2292 = vpop.f32.mrf.mxu0
      %v2293 = vadd.f32 0.0, %v2292
      %2294 = vmatmul.bf16.gmra.mxu0 %v2270
      %v2295 = vpop.f32.mrf.mxu0
      %v2296 = vadd.f32 0.0, %v2295
      %v2297 = vpop.f32.mrf.mxu0
      %v2298 = vadd.f32 0.0, %v2297
      %2299 = vmatmul.bf16.gmra.mxu0 %v2273
      %v2300 = vpop.f32.mrf.mxu0
      %v2301 = vadd.f32 0.0, %v2300
      %v2302 = vpop.f32.mrf.mxu0
      %v2303 = vadd.f32 0.0, %v2302
      %2304 = vmatmul.bf16.gmra.mxu0 %v2276
      %v2305 = vpop.f32.mrf.mxu0
      %v2306 = vadd.f32 0.0, %v2305
      %v2307 = vpop.f32.mrf.mxu0
      %v2308 = vadd.f32 0.0, %v2307
      %2309 = vdwg.mxu0
      %v2310 = vadd.f32 %v2237, %v2291
      %v2311 = vadd.f32 %v2238, %v2293
      %v2312 = vadd.f32 %v2239, %v2296
      %v2313 = vadd.f32 %v2240, %v2298
      %v2314 = vadd.f32 %v2241, %v2301
      %v2315 = vadd.f32 %v2242, %v2303
      %v2316 = vadd.f32 %v2243, %v2306
      %v2317 = vadd.f32 %v2244, %v2308
      %v2319 = vrot.slane %v1823, 5
      %v2320 = vrot.slane %v2319, 4
      %v2321 = vrot.slane %v1824, 5
      %v2322 = vsel %vm614, %v2320, %v2321
      %s2323 = scalar_lea.vmem %s3, 92
      %v2324 = vld [vmem:[%s2323] sm:$0xf]
      %v2325 = vunpack.c.l.b16 %v2322
      %v2326 = vpack.c.b16 %v2123, %v2122
      %v2327 = vpack.c.b16 %v2125, %v2124
      %v2328 = vpack.c.b16 %v2127, %v2126
      %v2329 = vpack.c.b16 %v2325, %v2128
      %v2331 = vsel %vm494, %v2326, 0
      %v2334 = vsel %vm494, %v2327, 0
      %v2337 = vsel %vm494, %v2328, 0
      %v2340 = vsel %vm494, %v2329, 0
      %v2343 = vsel %vm507, %v2324, 0
      %2345 = vmatpush.bf16.msra.mxu0 0
      %2346 = vmatpush.bf16.msra.mxu0 0
      %2347 = vmatpush.bf16.msra.mxu0 0
      %2348 = vmatpush.bf16.msra.mxu0 0
      %2349 = vmatpush.bf16.msra.mxu0 0
      %2350 = vmatpush.bf16.msra.mxu0 0
      %2351 = vmatpush.bf16.msra.mxu0 0
      %2352 = vmatpush.bf16.msra.mxu0 %v2343
      %2353 = vmatmul.bf16.gmra.mxu0 %v2331
      %v2354 = vpop.f32.mrf.mxu0
      %v2355 = vadd.f32 0.0, %v2354
      %v2356 = vpop.f32.mrf.mxu0
      %v2357 = vadd.f32 0.0, %v2356
      %2358 = vmatmul.bf16.gmra.mxu0 %v2334
      %v2359 = vpop.f32.mrf.mxu0
      %v2360 = vadd.f32 0.0, %v2359
      %v2361 = vpop.f32.mrf.mxu0
      %v2362 = vadd.f32 0.0, %v2361
      %2363 = vmatmul.bf16.gmra.mxu0 %v2337
      %v2364 = vpop.f32.mrf.mxu0
      %v2365 = vadd.f32 0.0, %v2364
      %v2366 = vpop.f32.mrf.mxu0
      %v2367 = vadd.f32 0.0, %v2366
      %2368 = vmatmul.bf16.gmra.mxu0 %v2340
      %v2369 = vpop.f32.mrf.mxu0
      %v2370 = vadd.f32 0.0, %v2369
      %v2371 = vpop.f32.mrf.mxu0
      %v2372 = vadd.f32 0.0, %v2371
      %2373 = vdwg.mxu0
      %v2374 = vadd.f32 %v2310, %v2355
      %v2375 = vadd.f32 %v2311, %v2357
      %v2376 = vadd.f32 %v2312, %v2360
      %v2377 = vadd.f32 %v2313, %v2362
      %v2378 = vadd.f32 %v2314, %v2365
      %v2379 = vadd.f32 %v2315, %v2367
      %v2380 = vadd.f32 %v2316, %v2370
      %v2381 = vadd.f32 %v2317, %v2372
      %s2382 = scalar_lea.vmem %s3, 96
      %v2383 = vld [vmem:[%s2382] sm:$0xf]
      %v2385 = vunpack.c.l.b16 %v1825
      %v2386 = vpack.c.b16 %v2385, %v2188
      %v2388 = vsel %vm494, %v2386, 0
      %v2391 = vsel %vm507, %v2383, 0
      %2393 = vmatpush.bf16.msra.mxu0 0
      %2394 = vmatpush.bf16.msra.mxu0 0
      %2395 = vmatpush.bf16.msra.mxu0 0
      %2396 = vmatpush.bf16.msra.mxu0 0
      %2397 = vmatpush.bf16.msra.mxu0 0
      %2398 = vmatpush.bf16.msra.mxu0 0
      %2399 = vmatpush.bf16.msra.mxu0 0
      %2400 = vmatpush.bf16.msra.mxu0 %v2391
      %2401 = vmatmul.bf16.gmra.mxu0 %v1853
      %v2402 = vpop.f32.mrf.mxu0
      %v2403 = vadd.f32 0.0, %v2402
      %v2404 = vpop.f32.mrf.mxu0
      %v2405 = vadd.f32 0.0, %v2404
      %2406 = vmatmul.bf16.gmra.mxu0 %v1856
      %v2407 = vpop.f32.mrf.mxu0
      %v2408 = vadd.f32 0.0, %v2407
      %v2409 = vpop.f32.mrf.mxu0
      %v2410 = vadd.f32 0.0, %v2409
      %2411 = vmatmul.bf16.gmra.mxu0 %v1859
      %v2412 = vpop.f32.mrf.mxu0
      %v2413 = vadd.f32 0.0, %v2412
      %v2414 = vpop.f32.mrf.mxu0
      %v2415 = vadd.f32 0.0, %v2414
      %2416 = vmatmul.bf16.gmra.mxu0 %v2388
      %v2417 = vpop.f32.mrf.mxu0
      %v2418 = vadd.f32 0.0, %v2417
      %v2419 = vpop.f32.mrf.mxu0
      %v2420 = vadd.f32 0.0, %v2419
      %2421 = vdwg.mxu0
      %v2422 = vadd.f32 %v2374, %v2403
      %v2423 = vadd.f32 %v2375, %v2405
      %v2424 = vadd.f32 %v2376, %v2408
      %v2425 = vadd.f32 %v2377, %v2410
      %v2426 = vadd.f32 %v2378, %v2413
      %v2427 = vadd.f32 %v2379, %v2415
      %v2428 = vadd.f32 %v2380, %v2418
      %v2429 = vadd.f32 %v2381, %v2420
      %v2431 = vshrl.u32 %v1825, 16
      %v2433 = vrot.slane %v2431, 4
      %v2434 = vshll.u32 %v1825, 16
      %v2436 = vrot.slane %v2434, 5
      %v2437 = vor.u32 %v2433, %v2436
      %v2438 = vrot.slane %v2437, 4
      %v2440 = vshll.u32 %v1826, 16
      %v2442 = vrot.slane %v2440, 5
      %v2443 = vsel %vm367, %v2438, %v2442
      %s2444 = scalar_lea.vmem %s3, 100
      %v2445 = vld [vmem:[%s2444] sm:$0xf]
      %v2446 = vunpack.c.l.b16 %v2443
      %v2447 = vpack.c.b16 %v2446, %v2261
      %v2449 = vsel %vm494, %v2447, 0
      %v2452 = vsel %vm507, %v2445, 0
      %2454 = vmatpush.bf16.msra.mxu0 0
      %2455 = vmatpush.bf16.msra.mxu0 0
      %2456 = vmatpush.bf16.msra.mxu0 0
      %2457 = vmatpush.bf16.msra.mxu0 0
      %2458 = vmatpush.bf16.msra.mxu0 0
      %2459 = vmatpush.bf16.msra.mxu0 0
      %2460 = vmatpush.bf16.msra.mxu0 0
      %2461 = vmatpush.bf16.msra.mxu0 %v2452
      %2462 = vmatmul.bf16.gmra.mxu0 %v2031
      %v2463 = vpop.f32.mrf.mxu0
      %v2464 = vadd.f32 0.0, %v2463
      %v2465 = vpop.f32.mrf.mxu0
      %v2466 = vadd.f32 0.0, %v2465
      %2467 = vmatmul.bf16.gmra.mxu0 %v2034
      %v2468 = vpop.f32.mrf.mxu0
      %v2469 = vadd.f32 0.0, %v2468
      %v2470 = vpop.f32.mrf.mxu0
      %v2471 = vadd.f32 0.0, %v2470
      %2472 = vmatmul.bf16.gmra.mxu0 %v2037
      %v2473 = vpop.f32.mrf.mxu0
      %v2474 = vadd.f32 0.0, %v2473
      %v2475 = vpop.f32.mrf.mxu0
      %v2476 = vadd.f32 0.0, %v2475
      %2477 = vmatmul.bf16.gmra.mxu0 %v2449
      %v2478 = vpop.f32.mrf.mxu0
      %v2479 = vadd.f32 0.0, %v2478
      %v2480 = vpop.f32.mrf.mxu0
      %v2481 = vadd.f32 0.0, %v2480
      %2482 = vdwg.mxu0
      %v2483 = vadd.f32 %v2422, %v2464
      %v2484 = vadd.f32 %v2423, %v2466
      %v2485 = vadd.f32 %v2424, %v2469
      %v2486 = vadd.f32 %v2425, %v2471
      %v2487 = vadd.f32 %v2426, %v2474
      %v2488 = vadd.f32 %v2427, %v2476
      %v2489 = vadd.f32 %v2428, %v2479
      %v2490 = vadd.f32 %v2429, %v2481
      %v2492 = vrot.slane %v1825, 5
      %v2493 = vrot.slane %v2492, 4
      %v2494 = vrot.slane %v1826, 5
      %v2495 = vsel %vm614, %v2493, %v2494
      %s2496 = scalar_lea.vmem %s3, 104
      %v2497 = vld [vmem:[%s2496] sm:$0xf]
      %v2498 = vunpack.c.l.b16 %v2495
      %v2499 = vpack.c.b16 %v2498, %v2325
      %v2501 = vsel %vm494, %v2499, 0
      %v2504 = vsel %vm507, %v2497, 0
      %2506 = vmatpush.bf16.msra.mxu0 0
      %2507 = vmatpush.bf16.msra.mxu0 0
      %2508 = vmatpush.bf16.msra.mxu0 0
      %2509 = vmatpush.bf16.msra.mxu0 0
      %2510 = vmatpush.bf16.msra.mxu0 0
      %2511 = vmatpush.bf16.msra.mxu0 0
      %2512 = vmatpush.bf16.msra.mxu0 0
      %2513 = vmatpush.bf16.msra.mxu0 %v2504
      %2514 = vmatmul.bf16.gmra.mxu0 %v2137
      %v2515 = vpop.f32.mrf.mxu0
      %v2516 = vadd.f32 0.0, %v2515
      %v2517 = vpop.f32.mrf.mxu0
      %v2518 = vadd.f32 0.0, %v2517
      %2519 = vmatmul.bf16.gmra.mxu0 %v2140
      %v2520 = vpop.f32.mrf.mxu0
      %v2521 = vadd.f32 0.0, %v2520
      %v2522 = vpop.f32.mrf.mxu0
      %v2523 = vadd.f32 0.0, %v2522
      %2524 = vmatmul.bf16.gmra.mxu0 %v2143
      %v2525 = vpop.f32.mrf.mxu0
      %v2526 = vadd.f32 0.0, %v2525
      %v2527 = vpop.f32.mrf.mxu0
      %v2528 = vadd.f32 0.0, %v2527
      %2529 = vmatmul.bf16.gmra.mxu0 %v2501
      %v2530 = vpop.f32.mrf.mxu0
      %v2531 = vadd.f32 0.0, %v2530
      %v2532 = vpop.f32.mrf.mxu0
      %v2533 = vadd.f32 0.0, %v2532
      %2534 = vdwg.mxu0
      %v2535 = vadd.f32 %v2483, %v2516
      %v2536 = vadd.f32 %v2484, %v2518
      %v2537 = vadd.f32 %v2485, %v2521
      %v2538 = vadd.f32 %v2486, %v2523
      %v2539 = vadd.f32 %v2487, %v2526
      %v2540 = vadd.f32 %v2488, %v2528
      %v2541 = vadd.f32 %v2489, %v2531
      %v2542 = vadd.f32 %v2490, %v2533
      %v2543 = vld [vmem:[%s4] sm:$0x1]
      %v2545 = vperm.slane %v2543, 0
      %v2547 = vadd.f32 %v2535, %v2545
      %v2548 = vadd.f32 %v2536, %v2545
      %v2549 = vadd.f32 %v2537, %v2545
      %v2550 = vadd.f32 %v2538, %v2545
      %v2551 = vadd.f32 %v2539, %v2545
      %v2552 = vadd.f32 %v2540, %v2545
      %v2553 = vadd.f32 %v2541, %v2545
      %v2554 = vadd.f32 %v2542, %v2545
      %v2555 = vpack.c.bf16 %v2547, %v2547
      %v2556 = vpack.c.bf16 %v2548, %v2548
      %v2557 = vpack.c.bf16 %v2549, %v2549
      %v2558 = vpack.c.bf16 %v2550, %v2550
      %v2559 = vpack.c.bf16 %v2551, %v2551
      %v2560 = vpack.c.bf16 %v2552, %v2552
      %v2561 = vpack.c.bf16 %v2553, %v2553
      %v2562 = vpack.c.bf16 %v2554, %v2554
      %vm2563 = vcmask 60416
      %2564 = vst.msk [vmem:[%s342] sm:$0xf] %vm2563, %v2555
      %2565 = vst.msk [vmem:[%s342 + $0x4] sm:$0xf] %vm2563, %v2556
      %2566 = vst.msk [vmem:[%s342 + $0x8] sm:$0xf] %vm2563, %v2557
      %2567 = vst.msk [vmem:[%s342 + $0xc] sm:$0xf] %vm2563, %v2558
      %2568 = vst.msk [vmem:[%s342 + $0x10] sm:$0xf] %vm2563, %v2559
      %2569 = vst.msk [vmem:[%s342 + $0x14] sm:$0xf] %vm2563, %v2560
      %2570 = vst.msk [vmem:[%s342 + $0x18] sm:$0xf] %vm2563, %v2561
      %2571 = vst.msk [vmem:[%s342 + $0x1c] sm:$0xf] %vm2563, %v2562
      %p2572 = scmp.lt.s32.totalorder %s20, 1
      %s2573 = scalar_select %p2572, %s20, 1
      %p2574 = scmp.lt.s32.totalorder %s21, 7
      %s2575 = scalar_select %p2574, %s21, 7
      %s2576 = smul.addr %s2575, 8
      %s2577 = smul.addr %s2573, 64
      %s2578 = sadd.s32 %s2576, %s2577
      %s2579 = smul.addr %s2578, 4
      %s2580 = scalar_lea.vmem %s5, %s2579
      // Predicated region
      $region41: #{_lambda_.11} parent=39 // pred_check
        %p2581 = pneg %p178
      $region42: #{_lambda_.11} parent=39 // pred_check_branch
        %2583 = sbr.rel (%p2581) target = $region44
      $region43: #{_lambda_.11} parent=39 // pred_region
        _
      $region44: #{_lambda_.11} parent=39 // pred_fallthru
        _
    $region40: #{_lambda_.11} parent=5 // pred_fallthru
      _
    %p2584 = scmp.le.s32.totalorder 2, %s11
    // Predicated region
    $region45: #{_lambda_.11} parent=5 // pred_check
      %p2585 = pneg %p2584
    $region46: #{_lambda_.11} parent=5 // pred_check_branch
      %2587 = sbr.rel (%p2585) target = $region48
    $region47: #{_lambda_.11} parent=5 // pred_region
      %s2588 = ssub.s32 %s11, 2
      // Predicated region
      $region49: #{_lambda_.11} parent=47 // pred_check
        %p2589 = pneg %p184
      $region50: #{_lambda_.11} parent=47 // pred_check_branch
        %2591 = sbr.rel (%p2589) target = $region52
      $region51: #{_lambda_.11} parent=47 // pred_region
        %p2592 = scmp.lt.s32.totalorder %s22, 1
        %s2593 = scalar_select %p2592, %s22, 1
        %p2594 = scmp.lt.s32.totalorder %s23, 7
        %s2595 = scalar_select %p2594, %s23, 7
        %s2596 = smul.addr %s2595, 8
        %s2597 = smul.addr %s2593, 64
        %s2598 = sadd.s32 %s2596, %s2597
        %s2599 = smul.addr %s2598, 4
        %s2600 = scalar_lea.vmem %s5, %s2599
      $region52: #{_lambda_.11} parent=47 // pred_fallthru
        _
    $region48: #{_lambda_.11} parent=5 // pred_fallthru
      _
  $region6: #{_lambda_.11} parent=0 // loop_footer
    %s15 = sadd.s32 1, %s11
  $region7: #{_lambda_.11} parent=0 // loop_footer_branch
    %10 = sbr.rel target = $region3
  $region8: #{_lambda_.11} parent=0 // loop_exit
    _

// kernel: _lambda_.8
$region0: #{_lambda_.8}
  #allocation0 [shape = 'u32[]', space=smem, size = 0x4, offset = 0x4, fixed_abs, tag = 'smem constant byte address 0x4 - core index']
  #allocation1 [shape = 'u32[72,128]{1,0:T(1,128)}', space=vmem, size = 0x9000, scoped, tag = 'internal scratch']
  %s0 = inlined_call_operand.vmem [shape: bf16[2,10,10,10,8], index: 0, kind: input, shape index: {}, may-alias: {0,1,2}]
  %s1 = inlined_call_operand.vmem [shape: bf16[2,10,10,10,8], index: 1, kind: input, shape index: {}, may-alias: {0,1,2}]
  %s2 = inlined_call_operand.vmem [shape: bf16[2,10,10,10,8], index: 2, kind: input, shape index: {}, may-alias: {0,1,2}]
  %s3 = inlined_call_operand.vmem [shape: bf16[2,10,10,10,4], index: 3, kind: input, shape index: {}, may-alias: {3,4,5}]
  %s4 = inlined_call_operand.vmem [shape: bf16[2,10,10,10,4], index: 4, kind: input, shape index: {}, may-alias: {3,4,5}]
  %s5 = inlined_call_operand.vmem [shape: bf16[2,10,10,10,4], index: 5, kind: input, shape index: {}, may-alias: {3,4,5}]
  %s6 = inlined_call_operand.vmem [shape: bf16[3,3,3,8,8], index: 6, kind: input, shape index: {}]
  %s7 = inlined_call_operand.vmem [shape: bf16[3,3,3,4,8], index: 7, kind: input, shape index: {}]
  %s8 = inlined_call_operand.vmem [shape: f32[1,8], index: 8, kind: input, shape index: {}]
  %s9 = inlined_call_operand.vmem [shape: bf16[2,8,8,8,8], index: 9, kind: output, shape index: {}]
  %s10 = sld [smem:[#allocation0]]
  $region69: #{_lambda_.8} parent=0
    _
  %s12 = ssub.s32 1, %s10
  %s13 = scalar_select 0, %s12, %s10
  loop: start=0, step=1, limit=18
  $region2: #{_lambda_.8} parent=0 // loop_pre_header
    _
  $region3: #{_lambda_.8} parent=0 // loop_header
    %s15 = sphi 0, %s19
    %p16 = scmp.ge.s32.totalorder %s15, 18
    %s22 = sphi 0, %s34
    %s23 = sphi 0, %s30
    %s24 = sphi 0, %s22
    %s25 = sphi 0, %s23
    %s26 = sphi 0, %s24
    %s27 = sphi 0, %s25
    %s39 = sphi 0, %s41
    %s42 = sphi 0, %s39
    %s43 = sphi 0, %s42
    %s59 = sphi 0, %s43
    %s69 = sphi 0, %s71
    %s72 = sphi 0, %s69
    %s73 = sphi 0, %s72
    %s89 = sphi 0, %s73
    %s99 = sphi 0, %s101
    %s102 = sphi 0, %s99
    %s103 = sphi 0, %s102
    %s119 = sphi 0, %s103
    %s127 = sphi 0, %s129
    %s130 = sphi 0, %s127
    %s131 = sphi 0, %s130
    %s147 = sphi 0, %s131
    %s157 = sphi 0, %s159
    %s160 = sphi 0, %s157
    %s161 = sphi 0, %s160
    %s177 = sphi 0, %s161
    %s187 = sphi 0, %s189
    %s190 = sphi 0, %s187
    %s191 = sphi 0, %s190
    %s207 = sphi 0, %s191
    %s211 = sphi 0, %s211
    %s213 = sphi 0, %s211
    %s214 = sphi 0, %s213
    %s228 = sphi 0, %s214
    %s232 = sphi 0, %s232
    %s234 = sphi 0, %s232
    %s235 = sphi 0, %s234
    %s249 = sphi 0, %s235
    %s253 = sphi 0, %s253
    %s255 = sphi 0, %s253
    %s256 = sphi 0, %s255
    %s270 = sphi 0, %s256
    %s278 = sphi 0, %s280
    %s281 = sphi 0, %s278
    %s282 = sphi 0, %s281
    %s298 = sphi 0, %s282
  $region4: #{_lambda_.8} parent=0 // loop_header_branch
    %18 = sbr.rel (%p16) target = $region8
  $region5: #{_lambda_.8} parent=0 // loop_body
    %s20 = ssub.s32 %s15, 1
    %s21 = ssub.s32 %s15, 2
    %s28 = sadd.s32 1, %s23
    %p29 = scmp.ge.s32.totalorder %s28, 8
    %s30 = scalar_select %p29, 0, %s28
    %s31 = sadd.s32 1, %s22
    %s32 = scalar_select %p29, %s31, %s22
    %p33 = scmp.ge.s32.totalorder %s32, 2
    %s34 = scalar_select %p33, 0, %s32
    %s35 = ssub.s32 %s22, %s34
    %s36 = ssub.s32 %s23, %s30
    %s37 = sor.u32 %s35, %s36
    %p38 = scmp.eq.s32.totalorder %s37, 0
    %s40 = sadd.s32 %s39, 1
    %s41 = scalar_select %p38, %s39, %s40
    %p44 = pneg %p38
    %p45 = scmp.eq.s32.totalorder %s15, 15
    %p46 = por %p44, %p45
    %p47 = scmp.ne.s32.totalorder %s39, %s42
    %p48 = scmp.eq.s32.totalorder %s15, 0
    %p49 = por %p47, %p48
    %p50 = scmp.ne.s32.totalorder %s39, %s42
    %p51 = scmp.eq.s32.totalorder %s20, 15
    %p52 = por %p50, %p51
    %p53 = scmp.ne.s32.totalorder %s42, %s43
    %p54 = scmp.eq.s32.totalorder %s20, 0
    %p55 = por %p53, %p54
    %p56 = scmp.ne.s32.totalorder %s42, %s43
    %p57 = scmp.eq.s32.totalorder %s21, 15
    %p58 = por %p56, %p57
    %p60 = scmp.ne.s32.totalorder %s43, %s59
    %p61 = scmp.eq.s32.totalorder %s21, 0
    %p62 = por %p60, %p61
    %s63 = sadd.s32 %s23, 1
    %s64 = sadd.s32 %s30, 1
    %s65 = ssub.s32 %s22, %s34
    %s66 = ssub.s32 %s63, %s64
    %s67 = sor.u32 %s65, %s66
    %p68 = scmp.eq.s32.totalorder %s67, 0
    %s70 = sadd.s32 %s69, 1
    %s71 = scalar_select %p68, %s69, %s70
    %p74 = pneg %p68
    %p75 = scmp.eq.s32.totalorder %s15, 15
    %p76 = por %p74, %p75
    %p77 = scmp.ne.s32.totalorder %s69, %s72
    %p78 = scmp.eq.s32.totalorder %s15, 0
    %p79 = por %p77, %p78
    %p80 = scmp.ne.s32.totalorder %s69, %s72
    %p81 = scmp.eq.s32.totalorder %s20, 15
    %p82 = por %p80, %p81
    %p83 = scmp.ne.s32.totalorder %s72, %s73
    %p84 = scmp.eq.s32.totalorder %s20, 0
    %p85 = por %p83, %p84
    %p86 = scmp.ne.s32.totalorder %s72, %s73
    %p87 = scmp.eq.s32.totalorder %s21, 15
    %p88 = por %p86, %p87
    %p90 = scmp.ne.s32.totalorder %s73, %s89
    %p91 = scmp.eq.s32.totalorder %s21, 0
    %p92 = por %p90, %p91
    %s93 = sadd.s32 %s23, 2
    %s94 = sadd.s32 %s30, 2
    %s95 = ssub.s32 %s22, %s34
    %s96 = ssub.s32 %s93, %s94
    %s97 = sor.u32 %s95, %s96
    %p98 = scmp.eq.s32.totalorder %s97, 0
    %s100 = sadd.s32 %s99, 1
    %s101 = scalar_select %p98, %s99, %s100
    %p104 = pneg %p98
    %p105 = scmp.eq.s32.totalorder %s15, 15
    %p106 = por %p104, %p105
    %p107 = scmp.ne.s32.totalorder %s99, %s102
    %p108 = scmp.eq.s32.totalorder %s15, 0
    %p109 = por %p107, %p108
    %p110 = scmp.ne.s32.totalorder %s99, %s102
    %p111 = scmp.eq.s32.totalorder %s20, 15
    %p112 = por %p110, %p111
    %p113 = scmp.ne.s32.totalorder %s102, %s103
    %p114 = scmp.eq.s32.totalorder %s20, 0
    %p115 = por %p113, %p114
    %p116 = scmp.ne.s32.totalorder %s102, %s103
    %p117 = scmp.eq.s32.totalorder %s21, 15
    %p118 = por %p116, %p117
    %p120 = scmp.ne.s32.totalorder %s103, %s119
    %p121 = scmp.eq.s32.totalorder %s21, 0
    %p122 = por %p120, %p121
    %s123 = ssub.s32 %s22, %s34
    %s124 = ssub.s32 %s23, %s30
    %s125 = sor.u32 %s123, %s124
    %p126 = scmp.eq.s32.totalorder %s125, 0
    %s128 = sadd.s32 %s127, 1
    %s129 = scalar_select %p126, %s127, %s128
    %p132 = pneg %p126
    %p133 = scmp.eq.s32.totalorder %s15, 15
    %p134 = por %p132, %p133
    %p135 = scmp.ne.s32.totalorder %s127, %s130
    %p136 = scmp.eq.s32.totalorder %s15, 0
    %p137 = por %p135, %p136
    %p138 = scmp.ne.s32.totalorder %s127, %s130
    %p139 = scmp.eq.s32.totalorder %s20, 15
    %p140 = por %p138, %p139
    %p141 = scmp.ne.s32.totalorder %s130, %s131
    %p142 = scmp.eq.s32.totalorder %s20, 0
    %p143 = por %p141, %p142
    %p144 = scmp.ne.s32.totalorder %s130, %s131
    %p145 = scmp.eq.s32.totalorder %s21, 15
    %p146 = por %p144, %p145
    %p148 = scmp.ne.s32.totalorder %s131, %s147
    %p149 = scmp.eq.s32.totalorder %s21, 0
    %p150 = por %p148, %p149
    %s151 = sadd.s32 %s23, 1
    %s152 = sadd.s32 %s30, 1
    %s153 = ssub.s32 %s22, %s34
    %s154 = ssub.s32 %s151, %s152
    %s155 = sor.u32 %s153, %s154
    %p156 = scmp.eq.s32.totalorder %s155, 0
    %s158 = sadd.s32 %s157, 1
    %s159 = scalar_select %p156, %s157, %s158
    %p162 = pneg %p156
    %p163 = scmp.eq.s32.totalorder %s15, 15
    %p164 = por %p162, %p163
    %p165 = scmp.ne.s32.totalorder %s157, %s160
    %p166 = scmp.eq.s32.totalorder %s15, 0
    %p167 = por %p165, %p166
    %p168 = scmp.ne.s32.totalorder %s157, %s160
    %p169 = scmp.eq.s32.totalorder %s20, 15
    %p170 = por %p168, %p169
    %p171 = scmp.ne.s32.totalorder %s160, %s161
    %p172 = scmp.eq.s32.totalorder %s20, 0
    %p173 = por %p171, %p172
    %p174 = scmp.ne.s32.totalorder %s160, %s161
    %p175 = scmp.eq.s32.totalorder %s21, 15
    %p176 = por %p174, %p175
    %p178 = scmp.ne.s32.totalorder %s161, %s177
    %p179 = scmp.eq.s32.totalorder %s21, 0
    %p180 = por %p178, %p179
    %s181 = sadd.s32 %s23, 2
    %s182 = sadd.s32 %s30, 2
    %s183 = ssub.s32 %s22, %s34
    %s184 = ssub.s32 %s181, %s182
    %s185 = sor.u32 %s183, %s184
    %p186 = scmp.eq.s32.totalorder %s185, 0
    %s188 = sadd.s32 %s187, 1
    %s189 = scalar_select %p186, %s187, %s188
    %p192 = pneg %p186
    %p193 = scmp.eq.s32.totalorder %s15, 15
    %p194 = por %p192, %p193
    %p195 = scmp.ne.s32.totalorder %s187, %s190
    %p196 = scmp.eq.s32.totalorder %s15, 0
    %p197 = por %p195, %p196
    %p198 = scmp.ne.s32.totalorder %s187, %s190
    %p199 = scmp.eq.s32.totalorder %s20, 15
    %p200 = por %p198, %p199
    %p201 = scmp.ne.s32.totalorder %s190, %s191
    %p202 = scmp.eq.s32.totalorder %s20, 0
    %p203 = por %p201, %p202
    %p204 = scmp.ne.s32.totalorder %s190, %s191
    %p205 = scmp.eq.s32.totalorder %s21, 15
    %p206 = por %p204, %p205
    %p208 = scmp.ne.s32.totalorder %s191, %s207
    %p209 = scmp.eq.s32.totalorder %s21, 0
    %p210 = por %p208, %p209
    %s212 = sadd.s32 %s211, 1
    %p215 = scmp.eq.s32.totalorder %s15, 15
    %p216 = scmp.ne.s32.totalorder %s211, %s213
    %p217 = scmp.eq.s32.totalorder %s15, 0
    %p218 = por %p216, %p217
    %p219 = scmp.ne.s32.totalorder %s211, %s213
    %p220 = scmp.eq.s32.totalorder %s20, 15
    %p221 = por %p219, %p220
    %p222 = scmp.ne.s32.totalorder %s213, %s214
    %p223 = scmp.eq.s32.totalorder %s20, 0
    %p224 = por %p222, %p223
    %p225 = scmp.ne.s32.totalorder %s213, %s214
    %p226 = scmp.eq.s32.totalorder %s21, 15
    %p227 = por %p225, %p226
    %p229 = scmp.ne.s32.totalorder %s214, %s228
    %p230 = scmp.eq.s32.totalorder %s21, 0
    %p231 = por %p229, %p230
    %s233 = sadd.s32 %s232, 1
    %p236 = scmp.eq.s32.totalorder %s15, 15
    %p237 = scmp.ne.s32.totalorder %s232, %s234
    %p238 = scmp.eq.s32.totalorder %s15, 0
    %p239 = por %p237, %p238
    %p240 = scmp.ne.s32.totalorder %s232, %s234
    %p241 = scmp.eq.s32.totalorder %s20, 15
    %p242 = por %p240, %p241
    %p243 = scmp.ne.s32.totalorder %s234, %s235
    %p244 = scmp.eq.s32.totalorder %s20, 0
    %p245 = por %p243, %p244
    %p246 = scmp.ne.s32.totalorder %s234, %s235
    %p247 = scmp.eq.s32.totalorder %s21, 15
    %p248 = por %p246, %p247
    %p250 = scmp.ne.s32.totalorder %s235, %s249
    %p251 = scmp.eq.s32.totalorder %s21, 0
    %p252 = por %p250, %p251
    %s254 = sadd.s32 %s253, 1
    %p257 = scmp.eq.s32.totalorder %s15, 15
    %p258 = scmp.ne.s32.totalorder %s253, %s255
    %p259 = scmp.eq.s32.totalorder %s15, 0
    %p260 = por %p258, %p259
    %p261 = scmp.ne.s32.totalorder %s253, %s255
    %p262 = scmp.eq.s32.totalorder %s20, 15
    %p263 = por %p261, %p262
    %p264 = scmp.ne.s32.totalorder %s255, %s256
    %p265 = scmp.eq.s32.totalorder %s20, 0
    %p266 = por %p264, %p265
    %p267 = scmp.ne.s32.totalorder %s255, %s256
    %p268 = scmp.eq.s32.totalorder %s21, 15
    %p269 = por %p267, %p268
    %p271 = scmp.ne.s32.totalorder %s256, %s270
    %p272 = scmp.eq.s32.totalorder %s21, 0
    %p273 = por %p271, %p272
    %s274 = ssub.s32 %s22, %s34
    %s275 = ssub.s32 %s23, %s30
    %s276 = sor.u32 %s274, %s275
    %p277 = scmp.eq.s32.totalorder %s276, 0
    %s279 = sadd.s32 %s278, 1
    %s280 = scalar_select %p277, %s278, %s279
    %p283 = pneg %p277
    %p284 = scmp.eq.s32.totalorder %s15, 15
    %p285 = por %p283, %p284
    %p286 = scmp.ne.s32.totalorder %s278, %s281
    %p287 = scmp.eq.s32.totalorder %s15, 0
    %p288 = por %p286, %p287
    %p289 = scmp.ne.s32.totalorder %s278, %s281
    %p290 = scmp.eq.s32.totalorder %s20, 15
    %p291 = por %p289, %p290
    %p292 = scmp.ne.s32.totalorder %s281, %s282
    %p293 = scmp.eq.s32.totalorder %s20, 0
    %p294 = por %p292, %p293
    %p295 = scmp.ne.s32.totalorder %s281, %s282
    %p296 = scmp.eq.s32.totalorder %s21, 15
    %p297 = por %p295, %p296
    %p299 = scmp.ne.s32.totalorder %s282, %s298
    %p300 = scmp.eq.s32.totalorder %s21, 0
    %p301 = por %p299, %p300
    %p302 = scmp.le.s32.totalorder 1, %s15
    %p303 = scmp.lt.s32.totalorder %s15, 17
    %p304 = pnand %p302, %p303
    %p305 = pneg %p304
    // Predicated region
    $region9: #{_lambda_.8} parent=5 // pred_check
      _
    $region10: #{_lambda_.8} parent=5 // pred_check_branch
      %307 = sbr.rel (%p304) target = $region12
    $region11: #{_lambda_.8} parent=5 // pred_region
      %s308 = ssub.s32 %s15, 1
      // Predicated region
      $region13: #{_lambda_.8} parent=11 // pred_check
        %p309 = pneg %p224
      $region14: #{_lambda_.8} parent=11 // pred_check_branch
        %311 = sbr.rel (%p309) target = $region16
      $region15: #{_lambda_.8} parent=11 // pred_region
        _
      $region16: #{_lambda_.8} parent=11 // pred_fallthru
        _
      // Predicated region
      $region17: #{_lambda_.8} parent=11 // pred_check
        %p312 = pneg %p245
      $region18: #{_lambda_.8} parent=11 // pred_check_branch
        %314 = sbr.rel (%p312) target = $region20
      $region19: #{_lambda_.8} parent=11 // pred_region
        _
      $region20: #{_lambda_.8} parent=11 // pred_fallthru
        _
      // Predicated region
      $region21: #{_lambda_.8} parent=11 // pred_check
        %p315 = pneg %p266
      $region22: #{_lambda_.8} parent=11 // pred_check_branch
        %317 = sbr.rel (%p315) target = $region24
      $region23: #{_lambda_.8} parent=11 // pred_region
        _
      $region24: #{_lambda_.8} parent=11 // pred_fallthru
        _
    $region12: #{_lambda_.8} parent=5 // pred_fallthru
      _
    %p318 = scmp.lt.s32.totalorder %s15, 16
    // Predicated region
    $region25: #{_lambda_.8} parent=5 // pred_check
      %p319 = pneg %p318
    $region26: #{_lambda_.8} parent=5 // pred_check_branch
      %321 = sbr.rel (%p319) target = $region28
    $region27: #{_lambda_.8} parent=5 // pred_region
      // Predicated region
      $region29: #{_lambda_.8} parent=27 // pred_check
        %p322 = pneg %p49
      $region30: #{_lambda_.8} parent=27 // pred_check_branch
        %324 = sbr.rel (%p322) target = $region32
      $region31: #{_lambda_.8} parent=27 // pred_region
        %p325 = scmp.lt.s32.totalorder %s22, 1
        %s326 = scalar_select %p325, %s22, 1
        %p327 = scmp.lt.s32.totalorder %s23, 9
        %s328 = scalar_select %p327, %s23, 9
        %s329 = smul.addr %s328, 20
        %s330 = smul.addr %s326, 200
        %s331 = sadd.s32 %s329, %s330
        %s332 = smul.addr %s331, 4
        %s333 = scalar_lea.vmem %s0, %s332
      $region32: #{_lambda_.8} parent=27 // pred_fallthru
        _
      // Predicated region
      $region33: #{_lambda_.8} parent=27 // pred_check
        %p334 = pneg %p79
      $region34: #{_lambda_.8} parent=27 // pred_check_branch
        %336 = sbr.rel (%p334) target = $region36
      $region35: #{_lambda_.8} parent=27 // pred_region
        %s337 = sadd.s32 %s23, 1
        %p338 = scmp.lt.s32.totalorder %s22, 1
        %s339 = scalar_select %p338, %s22, 1
        %p340 = scmp.lt.s32.totalorder %s337, 9
        %s341 = scalar_select %p340, %s337, 9
        %s342 = smul.addr %s341, 20
        %s343 = smul.addr %s339, 200
        %s344 = sadd.s32 %s342, %s343
        %s345 = smul.addr %s344, 4
        %s346 = scalar_lea.vmem %s1, %s345
        %s347 = sadd.s32 %s23, 1
      $region36: #{_lambda_.8} parent=27 // pred_fallthru
        _
      // Predicated region
      $region37: #{_lambda_.8} parent=27 // pred_check
        %p348 = pneg %p109
      $region38: #{_lambda_.8} parent=27 // pred_check_branch
        %350 = sbr.rel (%p348) target = $region40
      $region39: #{_lambda_.8} parent=27 // pred_region
        %s351 = sadd.s32 %s23, 2
        %p352 = scmp.lt.s32.totalorder %s22, 1
        %s353 = scalar_select %p352, %s22, 1
        %p354 = scmp.lt.s32.totalorder %s351, 9
        %s355 = scalar_select %p354, %s351, 9
        %s356 = smul.addr %s355, 20
        %s357 = smul.addr %s353, 200
        %s358 = sadd.s32 %s356, %s357
        %s359 = smul.addr %s358, 4
        %s360 = scalar_lea.vmem %s2, %s359
        %s361 = sadd.s32 %s23, 2
      $region40: #{_lambda_.8} parent=27 // pred_fallthru
        _
      // Predicated region
      $region41: #{_lambda_.8} parent=27 // pred_check
        %p362 = pneg %p137
      $region42: #{_lambda_.8} parent=27 // pred_check_branch
        %364 = sbr.rel (%p362) target = $region44
      $region43: #{_lambda_.8} parent=27 // pred_region
        %p365 = scmp.lt.s32.totalorder %s22, 1
        %s366 = scalar_select %p365, %s22, 1
        %p367 = scmp.lt.s32.totalorder %s23, 9
        %s368 = scalar_select %p367, %s23, 9
        %s369 = smul.addr %s368, 20
        %s370 = smul.addr %s366, 200
        %s371 = sadd.s32 %s369, %s370
        %s372 = smul.addr %s371, 4
        %s373 = scalar_lea.vmem %s3, %s372
      $region44: #{_lambda_.8} parent=27 // pred_fallthru
        _
      // Predicated region
      $region45: #{_lambda_.8} parent=27 // pred_check
        %p374 = pneg %p167
      $region46: #{_lambda_.8} parent=27 // pred_check_branch
        %376 = sbr.rel (%p374) target = $region48
      $region47: #{_lambda_.8} parent=27 // pred_region
        %s377 = sadd.s32 %s23, 1
        %p378 = scmp.lt.s32.totalorder %s22, 1
        %s379 = scalar_select %p378, %s22, 1
        %p380 = scmp.lt.s32.totalorder %s377, 9
        %s381 = scalar_select %p380, %s377, 9
        %s382 = smul.addr %s381, 20
        %s383 = smul.addr %s379, 200
        %s384 = sadd.s32 %s382, %s383
        %s385 = smul.addr %s384, 4
        %s386 = scalar_lea.vmem %s4, %s385
        %s387 = sadd.s32 %s23, 1
      $region48: #{_lambda_.8} parent=27 // pred_fallthru
        _
      // Predicated region
      $region49: #{_lambda_.8} parent=27 // pred_check
        %p388 = pneg %p197
      $region50: #{_lambda_.8} parent=27 // pred_check_branch
        %390 = sbr.rel (%p388) target = $region52
      $region51: #{_lambda_.8} parent=27 // pred_region
        %s391 = sadd.s32 %s23, 2
        %p392 = scmp.lt.s32.totalorder %s22, 1
        %s393 = scalar_select %p392, %s22, 1
        %p394 = scmp.lt.s32.totalorder %s391, 9
        %s395 = scalar_select %p394, %s391, 9
        %s396 = smul.addr %s395, 20
        %s397 = smul.addr %s393, 200
        %s398 = sadd.s32 %s396, %s397
        %s399 = smul.addr %s398, 4
        %s400 = scalar_lea.vmem %s5, %s399
        %s401 = sadd.s32 %s23, 2
      $region52: #{_lambda_.8} parent=27 // pred_fallthru
        _
    $region28: #{_lambda_.8} parent=5 // pred_fallthru
      _
    %p402 = scmp.le.s32.totalorder 1, %s15
    %p403 = scmp.lt.s32.totalorder %s15, 17
    %p404 = pnand %p402, %p403
    %p405 = pneg %p404
    // Predicated region
    $region53: #{_lambda_.8} parent=5 // pred_check
      _
    $region54: #{_lambda_.8} parent=5 // pred_check_branch
      %407 = sbr.rel (%p404) target = $region56
    $region55: #{_lambda_.8} parent=5 // pred_region
      %s408 = ssub.s32 %s15, 1
      %p409 = scmp.lt.s32.totalorder %s24, 1
      %s410 = scalar_select %p409, %s24, 1
      %p411 = scmp.lt.s32.totalorder %s25, 9
      %s412 = scalar_select %p411, %s25, 9
      %s413 = smul.addr %s412, 20
      %s414 = smul.addr %s410, 200
      %s415 = sadd.s32 %s413, %s414
      %s416 = smul.addr %s415, 4
      %s417 = scalar_lea.vmem %s0, %s416
      %p418 = pneg %p55
      %p419 = pneg %p52
      %s420 = sadd.s32 %s25, 1
      %p421 = scmp.lt.s32.totalorder %s24, 1
      %s422 = scalar_select %p421, %s24, 1
      %p423 = scmp.lt.s32.totalorder %s420, 9
      %s424 = scalar_select %p423, %s420, 9
      %s425 = smul.addr %s424, 20
      %s426 = smul.addr %s422, 200
      %s427 = sadd.s32 %s425, %s426
      %s428 = smul.addr %s427, 4
      %s429 = scalar_lea.vmem %s1, %s428
      %p430 = pneg %p85
      %p431 = pneg %p82
      %s432 = sadd.s32 %s25, 2
      %p433 = scmp.lt.s32.totalorder %s24, 1
      %s434 = scalar_select %p433, %s24, 1
      %p435 = scmp.lt.s32.totalorder %s432, 9
      %s436 = scalar_select %p435, %s432, 9
      %s437 = smul.addr %s436, 20
      %s438 = smul.addr %s434, 200
      %s439 = sadd.s32 %s437, %s438
      %s440 = smul.addr %s439, 4
      %s441 = scalar_lea.vmem %s2, %s440
      %p442 = pneg %p115
      %p443 = pneg %p112
      %p444 = scmp.lt.s32.totalorder %s24, 1
      %s445 = scalar_select %p444, %s24, 1
      %p446 = scmp.lt.s32.totalorder %s25, 9
      %s447 = scalar_select %p446, %s25, 9
      %s448 = smul.addr %s447, 20
      %s449 = smul.addr %s445, 200
      %s450 = sadd.s32 %s448, %s449
      %s451 = smul.addr %s450, 4
      %s452 = scalar_lea.vmem %s3, %s451
      %p453 = pneg %p143
      %p454 = pneg %p140
      %s455 = sadd.s32 %s25, 1
      %p456 = scmp.lt.s32.totalorder %s24, 1
      %s457 = scalar_select %p456, %s24, 1
      %p458 = scmp.lt.s32.totalorder %s455, 9
      %s459 = scalar_select %p458, %s455, 9
      %s460 = smul.addr %s459, 20
      %s461 = smul.addr %s457, 200
      %s462 = sadd.s32 %s460, %s461
      %s463 = smul.addr %s462, 4
      %s464 = scalar_lea.vmem %s4, %s463
      %p465 = pneg %p173
      %p466 = pneg %p170
      %s467 = sadd.s32 %s25, 2
      %p468 = scmp.lt.s32.totalorder %s24, 1
      %s469 = scalar_select %p468, %s24, 1
      %p470 = scmp.lt.s32.totalorder %s467, 9
      %s471 = scalar_select %p470, %s467, 9
      %s472 = smul.addr %s471, 20
      %s473 = smul.addr %s469, 200
      %s474 = sadd.s32 %s472, %s473
      %s475 = smul.addr %s474, 4
      %s476 = scalar_lea.vmem %s5, %s475
      %p477 = pneg %p203
      %p478 = pneg %p200
      %p479 = pneg %p224
      %p480 = pneg %p221
      %p481 = pneg %p245
      %p482 = pneg %p242
      %p483 = pneg %p266
      %p484 = pneg %p263
      %p485 = pneg %p294
      %p486 = pneg %p291
      %p487 = scmp.lt.s32.totalorder %s24, 1
      %s488 = scalar_select %p487, %s24, 1
      %p489 = scmp.lt.s32.totalorder %s25, 7
      %s490 = scalar_select %p489, %s25, 7
      %s491 = smul.addr %s490, 8
      %s492 = smul.addr %s488, 64
      %s493 = sadd.s32 %s491, %s492
      %s494 = smul.addr %s493, 4
      %s495 = scalar_lea.vmem %s9, %s494
      %p496 = scmp.lt.s32.totalorder %s24, 1
      %s497 = scalar_select %p496, %s24, 1
      %p498 = scmp.lt.s32.totalorder %s25, 9
      %s499 = scalar_select %p498, %s25, 9
      %s500 = smul.addr %s499, 20
      %s501 = smul.addr %s497, 200
      %s502 = sadd.s32 %s500, %s501
      %s503 = smul.addr %s502, 4
      %s504 = scalar_lea.vmem %s0, %s503
      %s505 = sadd.s32 %s25, 1
      %p506 = scmp.lt.s32.totalorder %s24, 1
      %s507 = scalar_select %p506, %s24, 1
      %p508 = scmp.lt.s32.totalorder %s505, 9
      %s509 = scalar_select %p508, %s505, 9
      %s510 = smul.addr %s509, 20
      %s511 = smul.addr %s507, 200
      %s512 = sadd.s32 %s510, %s511
      %s513 = smul.addr %s512, 4
      %s514 = scalar_lea.vmem %s1, %s513
      %s515 = sadd.s32 %s25, 1
      %s516 = sadd.s32 %s25, 2
      %p517 = scmp.lt.s32.totalorder %s24, 1
      %s518 = scalar_select %p517, %s24, 1
      %p519 = scmp.lt.s32.totalorder %s516, 9
      %s520 = scalar_select %p519, %s516, 9
      %s521 = smul.addr %s520, 20
      %s522 = smul.addr %s518, 200
      %s523 = sadd.s32 %s521, %s522
      %s524 = smul.addr %s523, 4
      %s525 = scalar_lea.vmem %s2, %s524
      %s526 = sadd.s32 %s25, 2
      %p527 = scmp.lt.s32.totalorder %s24, 1
      %s528 = scalar_select %p527, %s24, 1
      %p529 = scmp.lt.s32.totalorder %s25, 9
      %s530 = scalar_select %p529, %s25, 9
      %s531 = smul.addr %s530, 20
      %s532 = smul.addr %s528, 200
      %s533 = sadd.s32 %s531, %s532
      %s534 = smul.addr %s533, 4
      %s535 = scalar_lea.vmem %s3, %s534
      %s536 = sadd.s32 %s25, 1
      %p537 = scmp.lt.s32.totalorder %s24, 1
      %s538 = scalar_select %p537, %s24, 1
      %p539 = scmp.lt.s32.totalorder %s536, 9
      %s540 = scalar_select %p539, %s536, 9
      %s541 = smul.addr %s540, 20
      %s542 = smul.addr %s538, 200
      %s543 = sadd.s32 %s541, %s542
      %s544 = smul.addr %s543, 4
      %s545 = scalar_lea.vmem %s4, %s544
      %s546 = sadd.s32 %s25, 1
      %s547 = sadd.s32 %s25, 2
      %p548 = scmp.lt.s32.totalorder %s24, 1
      %s549 = scalar_select %p548, %s24, 1
      %p550 = scmp.lt.s32.totalorder %s547, 9
      %s551 = scalar_select %p550, %s547, 9
      %s552 = smul.addr %s551, 20
      %s553 = smul.addr %s549, 200
      %s554 = sadd.s32 %s552, %s553
      %s555 = smul.addr %s554, 4
      %s556 = scalar_lea.vmem %s5, %s555
      %s557 = sadd.s32 %s25, 2
      %p558 = scmp.lt.s32.totalorder %s24, 1
      %s559 = scalar_select %p558, %s24, 1
      %p560 = scmp.lt.s32.totalorder %s25, 7
      %s561 = scalar_select %p560, %s25, 7
      %s562 = smul.addr %s561, 8
      %s563 = smul.addr %s559, 64
      %s564 = sadd.s32 %s562, %s563
      %s565 = smul.addr %s564, 4
      %s566 = scalar_lea.vmem %s9, %s565
      %v568 = vld [vmem:[%s504] sm:$0xf]
      %v569 = vld [vmem:[%s504 + $0x4] sm:$0x1]
      %v570 = vld [vmem:[%s504 + $0x8] sm:$0xf]
      %v571 = vld [vmem:[%s504 + $0xc] sm:$0x1]
      %v572 = vld [vmem:[%s504 + $0x10] sm:$0xf]
      %v573 = vld [vmem:[%s504 + $0x14] sm:$0x1]
      %v574 = vld [vmem:[%s504 + $0x18] sm:$0xf]
      %v575 = vld [vmem:[%s504 + $0x1c] sm:$0x1]
      %v576 = vld [vmem:[%s504 + $0x20] sm:$0xf]
      %v577 = vld [vmem:[%s504 + $0x24] sm:$0x1]
      %v578 = vld [vmem:[%s504 + $0x28] sm:$0xf]
      %v579 = vld [vmem:[%s504 + $0x2c] sm:$0x1]
      %v580 = vld [vmem:[%s504 + $0x30] sm:$0xf]
      %v581 = vld [vmem:[%s504 + $0x34] sm:$0x1]
      %v582 = vld [vmem:[%s504 + $0x38] sm:$0xf]
      %v583 = vld [vmem:[%s504 + $0x3c] sm:$0x1]
      %v584 = vld [vmem:[%s504 + $0x40] sm:$0xf]
      %v585 = vld [vmem:[%s504 + $0x44] sm:$0x1]
      %v586 = vld [vmem:[%s504 + $0x48] sm:$0xf]
      %v587 = vld [vmem:[%s504 + $0x4c] sm:$0x1]
      %v588 = vld [vmem:[%s6] sm:$0xf]
      %vm589 = vsmask.f32 3328
      %vm590 = vsmask.f32 7440
      %vm591 = vmor %vm589, %vm590
      %v593 = vshrl.u32 %v568, 16
      %v595 = vrot.slane %v593, 4
      %v596 = vshll.u32 %v568, 16
      %v598 = vrot.slane %v596, 5
      %v599 = vor.u32 %v595, %v598
      %v600 = vrot.slane %v599, 4
      %v602 = vshll.u32 %v569, 16
      %v604 = vrot.slane %v602, 5
      %v605 = vsel %vm591, %v600, %v604
      %v607 = vshrl.u32 %v570, 16
      %v609 = vrot.slane %v607, 4
      %v610 = vshll.u32 %v570, 16
      %v612 = vrot.slane %v610, 5
      %v613 = vor.u32 %v609, %v612
      %v614 = vrot.slane %v613, 4
      %v616 = vshll.u32 %v571, 16
      %v618 = vrot.slane %v616, 5
      %v619 = vsel %vm591, %v614, %v618
      %v621 = vshrl.u32 %v572, 16
      %v623 = vrot.slane %v621, 4
      %v624 = vshll.u32 %v572, 16
      %v626 = vrot.slane %v624, 5
      %v627 = vor.u32 %v623, %v626
      %v628 = vrot.slane %v627, 4
      %v630 = vshll.u32 %v573, 16
      %v632 = vrot.slane %v630, 5
      %v633 = vsel %vm591, %v628, %v632
      %v635 = vshrl.u32 %v574, 16
      %v637 = vrot.slane %v635, 4
      %v638 = vshll.u32 %v574, 16
      %v640 = vrot.slane %v638, 5
      %v641 = vor.u32 %v637, %v640
      %v642 = vrot.slane %v641, 4
      %v644 = vshll.u32 %v575, 16
      %v646 = vrot.slane %v644, 5
      %v647 = vsel %vm591, %v642, %v646
      %v649 = vshrl.u32 %v576, 16
      %v651 = vrot.slane %v649, 4
      %v652 = vshll.u32 %v576, 16
      %v654 = vrot.slane %v652, 5
      %v655 = vor.u32 %v651, %v654
      %v656 = vrot.slane %v655, 4
      %v658 = vshll.u32 %v577, 16
      %v660 = vrot.slane %v658, 5
      %v661 = vsel %vm591, %v656, %v660
      %v663 = vshrl.u32 %v578, 16
      %v665 = vrot.slane %v663, 4
      %v666 = vshll.u32 %v578, 16
      %v668 = vrot.slane %v666, 5
      %v669 = vor.u32 %v665, %v668
      %v670 = vrot.slane %v669, 4
      %v672 = vshll.u32 %v579, 16
      %v674 = vrot.slane %v672, 5
      %v675 = vsel %vm591, %v670, %v674
      %v677 = vshrl.u32 %v580, 16
      %v679 = vrot.slane %v677, 4
      %v680 = vshll.u32 %v580, 16
      %v682 = vrot.slane %v680, 5
      %v683 = vor.u32 %v679, %v682
      %v684 = vrot.slane %v683, 4
      %v686 = vshll.u32 %v581, 16
      %v688 = vrot.slane %v686, 5
      %v689 = vsel %vm591, %v684, %v688
      %v691 = vshrl.u32 %v582, 16
      %v693 = vrot.slane %v691, 4
      %v694 = vshll.u32 %v582, 16
      %v696 = vrot.slane %v694, 5
      %v697 = vor.u32 %v693, %v696
      %v698 = vrot.slane %v697, 4
      %v700 = vshll.u32 %v583, 16
      %v702 = vrot.slane %v700, 5
      %v703 = vsel %vm591, %v698, %v702
      %s704 = scalar_lea.vmem %s6, 4
      %v705 = vld [vmem:[%s704] sm:$0xf]
      %v706 = vunpack.c.l.b16 %v605
      %v707 = vunpack.c.l.b16 %v619
      %v708 = vunpack.c.l.b16 %v633
      %v709 = vunpack.c.l.b16 %v647
      %v710 = vunpack.c.l.b16 %v661
      %v711 = vunpack.c.l.b16 %v675
      %v712 = vunpack.c.l.b16 %v689
      %v713 = vunpack.c.l.b16 %v703
      %v714 = vpack.c.b16 %v707, %v706
      %v715 = vpack.c.b16 %v709, %v708
      %v716 = vpack.c.b16 %v711, %v710
      %v717 = vpack.c.b16 %v713, %v712
      %vm718 = vcmask 64512
      %v720 = vsel %vm718, %v714, 0
      %v723 = vsel %vm718, %v715, 0
      %v726 = vsel %vm718, %v716, 0
      %v729 = vsel %vm718, %v717, 0
      %vm731 = vcmask 1043456
      %v733 = vsel %vm731, %v705, 0
      %735 = vmatpush.bf16.msra.mxu0 0
      %736 = vmatpush.bf16.msra.mxu0 0
      %737 = vmatpush.bf16.msra.mxu0 0
      %738 = vmatpush.bf16.msra.mxu0 0
      %739 = vmatpush.bf16.msra.mxu0 0
      %740 = vmatpush.bf16.msra.mxu0 0
      %741 = vmatpush.bf16.msra.mxu0 0
      %742 = vmatpush.bf16.msra.mxu0 %v733
      %743 = vmatmul.bf16.gmra.mxu0 %v720
      %v744 = vpop.f32.mrf.mxu0
      %v745 = vadd.f32 0.0, %v744
      %v746 = vpop.f32.mrf.mxu0
      %v747 = vadd.f32 0.0, %v746
      %748 = vmatmul.bf16.gmra.mxu0 %v723
      %v749 = vpop.f32.mrf.mxu0
      %v750 = vadd.f32 0.0, %v749
      %v751 = vpop.f32.mrf.mxu0
      %v752 = vadd.f32 0.0, %v751
      %753 = vmatmul.bf16.gmra.mxu0 %v726
      %v754 = vpop.f32.mrf.mxu0
      %v755 = vadd.f32 0.0, %v754
      %v756 = vpop.f32.mrf.mxu0
      %v757 = vadd.f32 0.0, %v756
      %758 = vmatmul.bf16.gmra.mxu0 %v729
      %v759 = vpop.f32.mrf.mxu0
      %v760 = vadd.f32 0.0, %v759
      %v761 = vpop.f32.mrf.mxu0
      %v762 = vadd.f32 0.0, %v761
      %763 = vdwg.mxu0
      %v772 = vunpack.c.l.b16 %v568
      %v773 = vunpack.c.l.b16 %v570
      %v774 = vunpack.c.l.b16 %v572
      %v775 = vunpack.c.l.b16 %v574
      %v776 = vunpack.c.l.b16 %v576
      %v777 = vunpack.c.l.b16 %v578
      %v778 = vunpack.c.l.b16 %v580
      %v779 = vunpack.c.l.b16 %v582
      %v780 = vpack.c.b16 %v773, %v772
      %v781 = vpack.c.b16 %v775, %v774
      %v782 = vpack.c.b16 %v777, %v776
      %v783 = vpack.c.b16 %v779, %v778
      %v785 = vsel %vm718, %v780, 0
      %v788 = vsel %vm718, %v781, 0
      %v791 = vsel %vm718, %v782, 0
      %v794 = vsel %vm718, %v783, 0
      %v797 = vsel %vm731, %v588, 0
      %799 = vmatpush.bf16.msra.mxu0 0
      %800 = vmatpush.bf16.msra.mxu0 0
      %801 = vmatpush.bf16.msra.mxu0 0
      %802 = vmatpush.bf16.msra.mxu0 0
      %803 = vmatpush.bf16.msra.mxu0 0
      %804 = vmatpush.bf16.msra.mxu0 0
      %805 = vmatpush.bf16.msra.mxu0 0
      %806 = vmatpush.bf16.msra.mxu0 %v797
      %807 = vmatmul.bf16.gmra.mxu0 %v785
      %v808 = vpop.f32.mrf.mxu0
      %v809 = vadd.f32 %v745, %v808
      %v810 = vpop.f32.mrf.mxu0
      %v811 = vadd.f32 %v747, %v810
      %812 = vmatmul.bf16.gmra.mxu0 %v788
      %v813 = vpop.f32.mrf.mxu0
      %v814 = vadd.f32 %v750, %v813
      %v815 = vpop.f32.mrf.mxu0
      %v816 = vadd.f32 %v752, %v815
      %817 = vmatmul.bf16.gmra.mxu0 %v791
      %v818 = vpop.f32.mrf.mxu0
      %v819 = vadd.f32 %v755, %v818
      %v820 = vpop.f32.mrf.mxu0
      %v821 = vadd.f32 %v757, %v820
      %822 = vmatmul.bf16.gmra.mxu0 %v794
      %v823 = vpop.f32.mrf.mxu0
      %v824 = vadd.f32 %v760, %v823
      %v825 = vpop.f32.mrf.mxu0
      %v826 = vadd.f32 %v762, %v825
      %827 = vdwg.mxu0
      %vm836 = vcmask 1042432
      %vm837 = vcmask 1046532
      %vm838 = vmor %vm836, %vm837
      %v839 = vrot.slane %v568, 5
      %v840 = vrot.slane %v839, 4
      %v841 = vrot.slane %v569, 5
      %v842 = vsel %vm838, %v840, %v841
      %v843 = vrot.slane %v570, 5
      %v844 = vrot.slane %v843, 4
      %v845 = vrot.slane %v571, 5
      %v846 = vsel %vm838, %v844, %v845
      %v847 = vrot.slane %v572, 5
      %v848 = vrot.slane %v847, 4
      %v849 = vrot.slane %v573, 5
      %v850 = vsel %vm838, %v848, %v849
      %v851 = vrot.slane %v574, 5
      %v852 = vrot.slane %v851, 4
      %v853 = vrot.slane %v575, 5
      %v854 = vsel %vm838, %v852, %v853
      %v855 = vrot.slane %v576, 5
      %v856 = vrot.slane %v855, 4
      %v857 = vrot.slane %v577, 5
      %v858 = vsel %vm838, %v856, %v857
      %v859 = vrot.slane %v578, 5
      %v860 = vrot.slane %v859, 4
      %v861 = vrot.slane %v579, 5
      %v862 = vsel %vm838, %v860, %v861
      %v863 = vrot.slane %v580, 5
      %v864 = vrot.slane %v863, 4
      %v865 = vrot.slane %v581, 5
      %v866 = vsel %vm838, %v864, %v865
      %v867 = vrot.slane %v582, 5
      %v868 = vrot.slane %v867, 4
      %v869 = vrot.slane %v583, 5
      %v870 = vsel %vm838, %v868, %v869
      %s871 = scalar_lea.vmem %s6, 8
      %v872 = vld [vmem:[%s871] sm:$0xf]
      %v873 = vunpack.c.l.b16 %v842
      %v874 = vunpack.c.l.b16 %v846
      %v875 = vunpack.c.l.b16 %v850
      %v876 = vunpack.c.l.b16 %v854
      %v877 = vunpack.c.l.b16 %v858
      %v878 = vunpack.c.l.b16 %v862
      %v879 = vunpack.c.l.b16 %v866
      %v880 = vunpack.c.l.b16 %v870
      %v881 = vpack.c.b16 %v874, %v873
      %v882 = vpack.c.b16 %v876, %v875
      %v883 = vpack.c.b16 %v878, %v877
      %v884 = vpack.c.b16 %v880, %v879
      %v886 = vsel %vm718, %v881, 0
      %v889 = vsel %vm718, %v882, 0
      %v892 = vsel %vm718, %v883, 0
      %v895 = vsel %vm718, %v884, 0
      %v898 = vsel %vm731, %v872, 0
      %900 = vmatpush.bf16.msra.mxu0 0
      %901 = vmatpush.bf16.msra.mxu0 0
      %902 = vmatpush.bf16.msra.mxu0 0
      %903 = vmatpush.bf16.msra.mxu0 0
      %904 = vmatpush.bf16.msra.mxu0 0
      %905 = vmatpush.bf16.msra.mxu0 0
      %906 = vmatpush.bf16.msra.mxu0 0
      %907 = vmatpush.bf16.msra.mxu0 %v898
      %908 = vmatmul.bf16.gmra.mxu0 %v886
      %v909 = vpop.f32.mrf.mxu0
      %v910 = vadd.f32 0.0, %v909
      %v911 = vpop.f32.mrf.mxu0
      %v912 = vadd.f32 0.0, %v911
      %913 = vmatmul.bf16.gmra.mxu0 %v889
      %v914 = vpop.f32.mrf.mxu0
      %v915 = vadd.f32 0.0, %v914
      %v916 = vpop.f32.mrf.mxu0
      %v917 = vadd.f32 0.0, %v916
      %918 = vmatmul.bf16.gmra.mxu0 %v892
      %v919 = vpop.f32.mrf.mxu0
      %v920 = vadd.f32 0.0, %v919
      %v921 = vpop.f32.mrf.mxu0
      %v922 = vadd.f32 0.0, %v921
      %923 = vmatmul.bf16.gmra.mxu0 %v895
      %v924 = vpop.f32.mrf.mxu0
      %v925 = vadd.f32 0.0, %v924
      %v926 = vpop.f32.mrf.mxu0
      %v927 = vadd.f32 0.0, %v926
      %928 = vdwg.mxu0
      %v929 = vadd.f32 %v809, %v910
      %v930 = vadd.f32 %v811, %v912
      %v931 = vadd.f32 %v814, %v915
      %v932 = vadd.f32 %v816, %v917
      %v933 = vadd.f32 %v819, %v920
      %v934 = vadd.f32 %v821, %v922
      %v935 = vadd.f32 %v824, %v925
      %v936 = vadd.f32 %v826, %v927
      %s937 = scalar_lea.vmem %s6, 12
      %v938 = vld [vmem:[%s937] sm:$0xf]
      %v940 = vunpack.c.l.b16 %v584
      %v941 = vpack.c.b16 %v774, %v773
      %v942 = vpack.c.b16 %v776, %v775
      %v943 = vpack.c.b16 %v778, %v777
      %v944 = vpack.c.b16 %v940, %v779
      %v946 = vsel %vm718, %v941, 0
      %v949 = vsel %vm718, %v942, 0
      %v952 = vsel %vm718, %v943, 0
      %v955 = vsel %vm718, %v944, 0
      %v958 = vsel %vm731, %v938, 0
      %960 = vmatpush.bf16.msra.mxu0 0
      %961 = vmatpush.bf16.msra.mxu0 0
      %962 = vmatpush.bf16.msra.mxu0 0
      %963 = vmatpush.bf16.msra.mxu0 0
      %964 = vmatpush.bf16.msra.mxu0 0
      %965 = vmatpush.bf16.msra.mxu0 0
      %966 = vmatpush.bf16.msra.mxu0 0
      %967 = vmatpush.bf16.msra.mxu0 %v958
      %968 = vmatmul.bf16.gmra.mxu0 %v946
      %v969 = vpop.f32.mrf.mxu0
      %v970 = vadd.f32 0.0, %v969
      %v971 = vpop.f32.mrf.mxu0
      %v972 = vadd.f32 0.0, %v971
      %973 = vmatmul.bf16.gmra.mxu0 %v949
      %v974 = vpop.f32.mrf.mxu0
      %v975 = vadd.f32 0.0, %v974
      %v976 = vpop.f32.mrf.mxu0
      %v977 = vadd.f32 0.0, %v976
      %978 = vmatmul.bf16.gmra.mxu0 %v952
      %v979 = vpop.f32.mrf.mxu0
      %v980 = vadd.f32 0.0, %v979
      %v981 = vpop.f32.mrf.mxu0
      %v982 = vadd.f32 0.0, %v981
      %983 = vmatmul.bf16.gmra.mxu0 %v955
      %v984 = vpop.f32.mrf.mxu0
      %v985 = vadd.f32 0.0, %v984
      %v986 = vpop.f32.mrf.mxu0
      %v987 = vadd.f32 0.0, %v986
      %988 = vdwg.mxu0
      %v989 = vadd.f32 %v929, %v970
      %v990 = vadd.f32 %v930, %v972
      %v991 = vadd.f32 %v931, %v975
      %v992 = vadd.f32 %v932, %v977
      %v993 = vadd.f32 %v933, %v980
      %v994 = vadd.f32 %v934, %v982
      %v995 = vadd.f32 %v935, %v985
      %v996 = vadd.f32 %v936, %v987
      %v998 = vshrl.u32 %v584, 16
      %v1000 = vrot.slane %v998, 4
      %v1001 = vshll.u32 %v584, 16
      %v1003 = vrot.slane %v1001, 5
      %v1004 = vor.u32 %v1000, %v1003
      %v1005 = vrot.slane %v1004, 4
      %v1007 = vshll.u32 %v585, 16
      %v1009 = vrot.slane %v1007, 5
      %v1010 = vsel %vm591, %v1005, %v1009
      %s1011 = scalar_lea.vmem %s6, 16
      %v1012 = vld [vmem:[%s1011] sm:$0xf]
      %v1013 = vunpack.c.l.b16 %v1010
      %v1014 = vpack.c.b16 %v708, %v707
      %v1015 = vpack.c.b16 %v710, %v709
      %v1016 = vpack.c.b16 %v712, %v711
      %v1017 = vpack.c.b16 %v1013, %v713
      %v1019 = vsel %vm718, %v1014, 0
      %v1022 = vsel %vm718, %v1015, 0
      %v1025 = vsel %vm718, %v1016, 0
      %v1028 = vsel %vm718, %v1017, 0
      %v1031 = vsel %vm731, %v1012, 0
      %1033 = vmatpush.bf16.msra.mxu0 0
      %1034 = vmatpush.bf16.msra.mxu0 0
      %1035 = vmatpush.bf16.msra.mxu0 0
      %1036 = vmatpush.bf16.msra.mxu0 0
      %1037 = vmatpush.bf16.msra.mxu0 0
      %1038 = vmatpush.bf16.msra.mxu0 0
      %1039 = vmatpush.bf16.msra.mxu0 0
      %1040 = vmatpush.bf16.msra.mxu0 %v1031
      %1041 = vmatmul.bf16.gmra.mxu0 %v1019
      %v1042 = vpop.f32.mrf.mxu0
      %v1043 = vadd.f32 0.0, %v1042
      %v1044 = vpop.f32.mrf.mxu0
      %v1045 = vadd.f32 0.0, %v1044
      %1046 = vmatmul.bf16.gmra.mxu0 %v1022
      %v1047 = vpop.f32.mrf.mxu0
      %v1048 = vadd.f32 0.0, %v1047
      %v1049 = vpop.f32.mrf.mxu0
      %v1050 = vadd.f32 0.0, %v1049
      %1051 = vmatmul.bf16.gmra.mxu0 %v1025
      %v1052 = vpop.f32.mrf.mxu0
      %v1053 = vadd.f32 0.0, %v1052
      %v1054 = vpop.f32.mrf.mxu0
      %v1055 = vadd.f32 0.0, %v1054
      %1056 = vmatmul.bf16.gmra.mxu0 %v1028
      %v1057 = vpop.f32.mrf.mxu0
      %v1058 = vadd.f32 0.0, %v1057
      %v1059 = vpop.f32.mrf.mxu0
      %v1060 = vadd.f32 0.0, %v1059
      %1061 = vdwg.mxu0
      %v1062 = vadd.f32 %v989, %v1043
      %v1063 = vadd.f32 %v990, %v1045
      %v1064 = vadd.f32 %v991, %v1048
      %v1065 = vadd.f32 %v992, %v1050
      %v1066 = vadd.f32 %v993, %v1053
      %v1067 = vadd.f32 %v994, %v1055
      %v1068 = vadd.f32 %v995, %v1058
      %v1069 = vadd.f32 %v996, %v1060
      %v1071 = vrot.slane %v584, 5
      %v1072 = vrot.slane %v1071, 4
      %v1073 = vrot.slane %v585, 5
      %v1074 = vsel %vm838, %v1072, %v1073
      %s1075 = scalar_lea.vmem %s6, 20
      %v1076 = vld [vmem:[%s1075] sm:$0xf]
      %v1077 = vunpack.c.l.b16 %v1074
      %v1078 = vpack.c.b16 %v875, %v874
      %v1079 = vpack.c.b16 %v877, %v876
      %v1080 = vpack.c.b16 %v879, %v878
      %v1081 = vpack.c.b16 %v1077, %v880
      %v1083 = vsel %vm718, %v1078, 0
      %v1086 = vsel %vm718, %v1079, 0
      %v1089 = vsel %vm718, %v1080, 0
      %v1092 = vsel %vm718, %v1081, 0
      %v1095 = vsel %vm731, %v1076, 0
      %1097 = vmatpush.bf16.msra.mxu0 0
      %1098 = vmatpush.bf16.msra.mxu0 0
      %1099 = vmatpush.bf16.msra.mxu0 0
      %1100 = vmatpush.bf16.msra.mxu0 0
      %1101 = vmatpush.bf16.msra.mxu0 0
      %1102 = vmatpush.bf16.msra.mxu0 0
      %1103 = vmatpush.bf16.msra.mxu0 0
      %1104 = vmatpush.bf16.msra.mxu0 %v1095
      %1105 = vmatmul.bf16.gmra.mxu0 %v1083
      %v1106 = vpop.f32.mrf.mxu0
      %v1107 = vadd.f32 0.0, %v1106
      %v1108 = vpop.f32.mrf.mxu0
      %v1109 = vadd.f32 0.0, %v1108
      %1110 = vmatmul.bf16.gmra.mxu0 %v1086
      %v1111 = vpop.f32.mrf.mxu0
      %v1112 = vadd.f32 0.0, %v1111
      %v1113 = vpop.f32.mrf.mxu0
      %v1114 = vadd.f32 0.0, %v1113
      %1115 = vmatmul.bf16.gmra.mxu0 %v1089
      %v1116 = vpop.f32.mrf.mxu0
      %v1117 = vadd.f32 0.0, %v1116
      %v1118 = vpop.f32.mrf.mxu0
      %v1119 = vadd.f32 0.0, %v1118
      %1120 = vmatmul.bf16.gmra.mxu0 %v1092
      %v1121 = vpop.f32.mrf.mxu0
      %v1122 = vadd.f32 0.0, %v1121
      %v1123 = vpop.f32.mrf.mxu0
      %v1124 = vadd.f32 0.0, %v1123
      %1125 = vdwg.mxu0
      %v1126 = vadd.f32 %v1062, %v1107
      %v1127 = vadd.f32 %v1063, %v1109
      %v1128 = vadd.f32 %v1064, %v1112
      %v1129 = vadd.f32 %v1065, %v1114
      %v1130 = vadd.f32 %v1066, %v1117
      %v1131 = vadd.f32 %v1067, %v1119
      %v1132 = vadd.f32 %v1068, %v1122
      %v1133 = vadd.f32 %v1069, %v1124
      %s1134 = scalar_lea.vmem %s6, 24
      %v1135 = vld [vmem:[%s1134] sm:$0xf]
      %v1137 = vunpack.c.l.b16 %v586
      %v1138 = vpack.c.b16 %v1137, %v940
      %v1140 = vsel %vm718, %v1138, 0
      %v1143 = vsel %vm731, %v1135, 0
      %1145 = vmatpush.bf16.msra.mxu0 0
      %1146 = vmatpush.bf16.msra.mxu0 0
      %1147 = vmatpush.bf16.msra.mxu0 0
      %1148 = vmatpush.bf16.msra.mxu0 0
      %1149 = vmatpush.bf16.msra.mxu0 0
      %1150 = vmatpush.bf16.msra.mxu0 0
      %1151 = vmatpush.bf16.msra.mxu0 0
      %1152 = vmatpush.bf16.msra.mxu0 %v1143
      %1153 = vmatmul.bf16.gmra.mxu0 %v788
      %v1154 = vpop.f32.mrf.mxu0
      %v1155 = vadd.f32 0.0, %v1154
      %v1156 = vpop.f32.mrf.mxu0
      %v1157 = vadd.f32 0.0, %v1156
      %1158 = vmatmul.bf16.gmra.mxu0 %v791
      %v1159 = vpop.f32.mrf.mxu0
      %v1160 = vadd.f32 0.0, %v1159
      %v1161 = vpop.f32.mrf.mxu0
      %v1162 = vadd.f32 0.0, %v1161
      %1163 = vmatmul.bf16.gmra.mxu0 %v794
      %v1164 = vpop.f32.mrf.mxu0
      %v1165 = vadd.f32 0.0, %v1164
      %v1166 = vpop.f32.mrf.mxu0
      %v1167 = vadd.f32 0.0, %v1166
      %1168 = vmatmul.bf16.gmra.mxu0 %v1140
      %v1169 = vpop.f32.mrf.mxu0
      %v1170 = vadd.f32 0.0, %v1169
      %v1171 = vpop.f32.mrf.mxu0
      %v1172 = vadd.f32 0.0, %v1171
      %1173 = vdwg.mxu0
      %v1174 = vadd.f32 %v1126, %v1155
      %v1175 = vadd.f32 %v1127, %v1157
      %v1176 = vadd.f32 %v1128, %v1160
      %v1177 = vadd.f32 %v1129, %v1162
      %v1178 = vadd.f32 %v1130, %v1165
      %v1179 = vadd.f32 %v1131, %v1167
      %v1180 = vadd.f32 %v1132, %v1170
      %v1181 = vadd.f32 %v1133, %v1172
      %v1183 = vshrl.u32 %v586, 16
      %v1185 = vrot.slane %v1183, 4
      %v1186 = vshll.u32 %v586, 16
      %v1188 = vrot.slane %v1186, 5
      %v1189 = vor.u32 %v1185, %v1188
      %v1190 = vrot.slane %v1189, 4
      %v1192 = vshll.u32 %v587, 16
      %v1194 = vrot.slane %v1192, 5
      %v1195 = vsel %vm591, %v1190, %v1194
      %s1196 = scalar_lea.vmem %s6, 28
      %v1197 = vld [vmem:[%s1196] sm:$0xf]
      %v1198 = vunpack.c.l.b16 %v1195
      %v1199 = vpack.c.b16 %v1198, %v1013
      %v1201 = vsel %vm718, %v1199, 0
      %v1204 = vsel %vm731, %v1197, 0
      %1206 = vmatpush.bf16.msra.mxu0 0
      %1207 = vmatpush.bf16.msra.mxu0 0
      %1208 = vmatpush.bf16.msra.mxu0 0
      %1209 = vmatpush.bf16.msra.mxu0 0
      %1210 = vmatpush.bf16.msra.mxu0 0
      %1211 = vmatpush.bf16.msra.mxu0 0
      %1212 = vmatpush.bf16.msra.mxu0 0
      %1213 = vmatpush.bf16.msra.mxu0 %v1204
      %1214 = vmatmul.bf16.gmra.mxu0 %v723
      %v1215 = vpop.f32.mrf.mxu0
      %v1216 = vadd.f32 0.0, %v1215
      %v1217 = vpop.f32.mrf.mxu0
      %v1218 = vadd.f32 0.0, %v1217
      %1219 = vmatmul.bf16.gmra.mxu0 %v726
      %v1220 = vpop.f32.mrf.mxu0
      %v1221 = vadd.f32 0.0, %v1220
      %v1222 = vpop.f32.mrf.mxu0
      %v1223 = vadd.f32 0.0, %v1222
      %1224 = vmatmul.bf16.gmra.mxu0 %v729
      %v1225 = vpop.f32.mrf.mxu0
      %v1226 = vadd.f32 0.0, %v1225
      %v1227 = vpop.f32.mrf.mxu0
      %v1228 = vadd.f32 0.0, %v1227
      %1229 = vmatmul.bf16.gmra.mxu0 %v1201
      %v1230 = vpop.f32.mrf.mxu0
      %v1231 = vadd.f32 0.0, %v1230
      %v1232 = vpop.f32.mrf.mxu0
      %v1233 = vadd.f32 0.0, %v1232
      %1234 = vdwg.mxu0
      %v1235 = vadd.f32 %v1174, %v1216
      %v1236 = vadd.f32 %v1175, %v1218
      %v1237 = vadd.f32 %v1176, %v1221
      %v1238 = vadd.f32 %v1177, %v1223
      %v1239 = vadd.f32 %v1178, %v1226
      %v1240 = vadd.f32 %v1179, %v1228
      %v1241 = vadd.f32 %v1180, %v1231
      %v1242 = vadd.f32 %v1181, %v1233
      %v1244 = vrot.slane %v586, 5
      %v1245 = vrot.slane %v1244, 4
      %v1246 = vrot.slane %v587, 5
      %v1247 = vsel %vm838, %v1245, %v1246
      %s1248 = scalar_lea.vmem %s6, 32
      %v1249 = vld [vmem:[%s1248] sm:$0xf]
      %v1250 = vunpack.c.l.b16 %v1247
      %v1251 = vpack.c.b16 %v1250, %v1077
      %v1253 = vsel %vm718, %v1251, 0
      %v1256 = vsel %vm731, %v1249, 0
      %1258 = vmatpush.bf16.msra.mxu0 0
      %1259 = vmatpush.bf16.msra.mxu0 0
      %1260 = vmatpush.bf16.msra.mxu0 0
      %1261 = vmatpush.bf16.msra.mxu0 0
      %1262 = vmatpush.bf16.msra.mxu0 0
      %1263 = vmatpush.bf16.msra.mxu0 0
      %1264 = vmatpush.bf16.msra.mxu0 0
      %1265 = vmatpush.bf16.msra.mxu0 %v1256
      %1266 = vmatmul.bf16.gmra.mxu0 %v889
      %v1267 = vpop.f32.mrf.mxu0
      %v1268 = vadd.f32 0.0, %v1267
      %v1269 = vpop.f32.mrf.mxu0
      %v1270 = vadd.f32 0.0, %v1269
      %1271 = vmatmul.bf16.gmra.mxu0 %v892
      %v1272 = vpop.f32.mrf.mxu0
      %v1273 = vadd.f32 0.0, %v1272
      %v1274 = vpop.f32.mrf.mxu0
      %v1275 = vadd.f32 0.0, %v1274
      %1276 = vmatmul.bf16.gmra.mxu0 %v895
      %v1277 = vpop.f32.mrf.mxu0
      %v1278 = vadd.f32 0.0, %v1277
      %v1279 = vpop.f32.mrf.mxu0
      %v1280 = vadd.f32 0.0, %v1279
      %1281 = vmatmul.bf16.gmra.mxu0 %v1253
      %v1282 = vpop.f32.mrf.mxu0
      %v1283 = vadd.f32 0.0, %v1282
      %v1284 = vpop.f32.mrf.mxu0
      %v1285 = vadd.f32 0.0, %v1284
      %1286 = vdwg.mxu0
      %v1287 = vadd.f32 %v1235, %v1268
      %v1288 = vadd.f32 %v1236, %v1270
      %v1289 = vadd.f32 %v1237, %v1273
      %v1290 = vadd.f32 %v1238, %v1275
      %v1291 = vadd.f32 %v1239, %v1278
      %v1292 = vadd.f32 %v1240, %v1280
      %v1293 = vadd.f32 %v1241, %v1283
      %v1294 = vadd.f32 %v1242, %v1285
      %v1295 = vld [vmem:[%s514] sm:$0xf]
      %v1296 = vld [vmem:[%s514 + $0x4] sm:$0x1]
      %v1297 = vld [vmem:[%s514 + $0x8] sm:$0xf]
      %v1298 = vld [vmem:[%s514 + $0xc] sm:$0x1]
      %v1299 = vld [vmem:[%s514 + $0x10] sm:$0xf]
      %v1300 = vld [vmem:[%s514 + $0x14] sm:$0x1]
      %v1301 = vld [vmem:[%s514 + $0x18] sm:$0xf]
      %v1302 = vld [vmem:[%s514 + $0x1c] sm:$0x1]
      %v1303 = vld [vmem:[%s514 + $0x20] sm:$0xf]
      %v1304 = vld [vmem:[%s514 + $0x24] sm:$0x1]
      %v1305 = vld [vmem:[%s514 + $0x28] sm:$0xf]
      %v1306 = vld [vmem:[%s514 + $0x2c] sm:$0x1]
      %v1307 = vld [vmem:[%s514 + $0x30] sm:$0xf]
      %v1308 = vld [vmem:[%s514 + $0x34] sm:$0x1]
      %v1309 = vld [vmem:[%s514 + $0x38] sm:$0xf]
      %v1310 = vld [vmem:[%s514 + $0x3c] sm:$0x1]
      %v1311 = vld [vmem:[%s514 + $0x40] sm:$0xf]
      %v1312 = vld [vmem:[%s514 + $0x44] sm:$0x1]
      %v1313 = vld [vmem:[%s514 + $0x48] sm:$0xf]
      %v1314 = vld [vmem:[%s514 + $0x4c] sm:$0x1]
      %s1315 = scalar_lea.vmem %s6, 36
      %v1316 = vld [vmem:[%s1315] sm:$0xf]
      %v1325 = vunpack.c.l.b16 %v1295
      %v1326 = vunpack.c.l.b16 %v1297
      %v1327 = vunpack.c.l.b16 %v1299
      %v1328 = vunpack.c.l.b16 %v1301
      %v1329 = vunpack.c.l.b16 %v1303
      %v1330 = vunpack.c.l.b16 %v1305
      %v1331 = vunpack.c.l.b16 %v1307
      %v1332 = vunpack.c.l.b16 %v1309
      %v1333 = vpack.c.b16 %v1326, %v1325
      %v1334 = vpack.c.b16 %v1328, %v1327
      %v1335 = vpack.c.b16 %v1330, %v1329
      %v1336 = vpack.c.b16 %v1332, %v1331
      %v1338 = vsel %vm718, %v1333, 0
      %v1341 = vsel %vm718, %v1334, 0
      %v1344 = vsel %vm718, %v1335, 0
      %v1347 = vsel %vm718, %v1336, 0
      %v1350 = vsel %vm731, %v1316, 0
      %1352 = vmatpush.bf16.msra.mxu0 0
      %1353 = vmatpush.bf16.msra.mxu0 0
      %1354 = vmatpush.bf16.msra.mxu0 0
      %1355 = vmatpush.bf16.msra.mxu0 0
      %1356 = vmatpush.bf16.msra.mxu0 0
      %1357 = vmatpush.bf16.msra.mxu0 0
      %1358 = vmatpush.bf16.msra.mxu0 0
      %1359 = vmatpush.bf16.msra.mxu0 %v1350
      %1360 = vmatmul.bf16.gmra.mxu0 %v1338
      %v1361 = vpop.f32.mrf.mxu0
      %v1362 = vadd.f32 0.0, %v1361
      %v1363 = vpop.f32.mrf.mxu0
      %v1364 = vadd.f32 0.0, %v1363
      %1365 = vmatmul.bf16.gmra.mxu0 %v1341
      %v1366 = vpop.f32.mrf.mxu0
      %v1367 = vadd.f32 0.0, %v1366
      %v1368 = vpop.f32.mrf.mxu0
      %v1369 = vadd.f32 0.0, %v1368
      %1370 = vmatmul.bf16.gmra.mxu0 %v1344
      %v1371 = vpop.f32.mrf.mxu0
      %v1372 = vadd.f32 0.0, %v1371
      %v1373 = vpop.f32.mrf.mxu0
      %v1374 = vadd.f32 0.0, %v1373
      %1375 = vmatmul.bf16.gmra.mxu0 %v1347
      %v1376 = vpop.f32.mrf.mxu0
      %v1377 = vadd.f32 0.0, %v1376
      %v1378 = vpop.f32.mrf.mxu0
      %v1379 = vadd.f32 0.0, %v1378
      %1380 = vdwg.mxu0
      %v1381 = vadd.f32 %v1287, %v1362
      %v1382 = vadd.f32 %v1288, %v1364
      %v1383 = vadd.f32 %v1289, %v1367
      %v1384 = vadd.f32 %v1290, %v1369
      %v1385 = vadd.f32 %v1291, %v1372
      %v1386 = vadd.f32 %v1292, %v1374
      %v1387 = vadd.f32 %v1293, %v1377
      %v1388 = vadd.f32 %v1294, %v1379
      %v1390 = vshrl.u32 %v1295, 16
      %v1392 = vrot.slane %v1390, 4
      %v1393 = vshll.u32 %v1295, 16
      %v1395 = vrot.slane %v1393, 5
      %v1396 = vor.u32 %v1392, %v1395
      %v1397 = vrot.slane %v1396, 4
      %v1399 = vshll.u32 %v1296, 16
      %v1401 = vrot.slane %v1399, 5
      %v1402 = vsel %vm591, %v1397, %v1401
      %v1404 = vshrl.u32 %v1297, 16
      %v1406 = vrot.slane %v1404, 4
      %v1407 = vshll.u32 %v1297, 16
      %v1409 = vrot.slane %v1407, 5
      %v1410 = vor.u32 %v1406, %v1409
      %v1411 = vrot.slane %v1410, 4
      %v1413 = vshll.u32 %v1298, 16
      %v1415 = vrot.slane %v1413, 5
      %v1416 = vsel %vm591, %v1411, %v1415
      %v1418 = vshrl.u32 %v1299, 16
      %v1420 = vrot.slane %v1418, 4
      %v1421 = vshll.u32 %v1299, 16
      %v1423 = vrot.slane %v1421, 5
      %v1424 = vor.u32 %v1420, %v1423
      %v1425 = vrot.slane %v1424, 4
      %v1427 = vshll.u32 %v1300, 16
      %v1429 = vrot.slane %v1427, 5
      %v1430 = vsel %vm591, %v1425, %v1429
      %v1432 = vshrl.u32 %v1301, 16
      %v1434 = vrot.slane %v1432, 4
      %v1435 = vshll.u32 %v1301, 16
      %v1437 = vrot.slane %v1435, 5
      %v1438 = vor.u32 %v1434, %v1437
      %v1439 = vrot.slane %v1438, 4
      %v1441 = vshll.u32 %v1302, 16
      %v1443 = vrot.slane %v1441, 5
      %v1444 = vsel %vm591, %v1439, %v1443
      %v1446 = vshrl.u32 %v1303, 16
      %v1448 = vrot.slane %v1446, 4
      %v1449 = vshll.u32 %v1303, 16
      %v1451 = vrot.slane %v1449, 5
      %v1452 = vor.u32 %v1448, %v1451
      %v1453 = vrot.slane %v1452, 4
      %v1455 = vshll.u32 %v1304, 16
      %v1457 = vrot.slane %v1455, 5
      %v1458 = vsel %vm591, %v1453, %v1457
      %v1460 = vshrl.u32 %v1305, 16
      %v1462 = vrot.slane %v1460, 4
      %v1463 = vshll.u32 %v1305, 16
      %v1465 = vrot.slane %v1463, 5
      %v1466 = vor.u32 %v1462, %v1465
      %v1467 = vrot.slane %v1466, 4
      %v1469 = vshll.u32 %v1306, 16
      %v1471 = vrot.slane %v1469, 5
      %v1472 = vsel %vm591, %v1467, %v1471
      %v1474 = vshrl.u32 %v1307, 16
      %v1476 = vrot.slane %v1474, 4
      %v1477 = vshll.u32 %v1307, 16
      %v1479 = vrot.slane %v1477, 5
      %v1480 = vor.u32 %v1476, %v1479
      %v1481 = vrot.slane %v1480, 4
      %v1483 = vshll.u32 %v1308, 16
      %v1485 = vrot.slane %v1483, 5
      %v1486 = vsel %vm591, %v1481, %v1485
      %v1488 = vshrl.u32 %v1309, 16
      %v1490 = vrot.slane %v1488, 4
      %v1491 = vshll.u32 %v1309, 16
      %v1493 = vrot.slane %v1491, 5
      %v1494 = vor.u32 %v1490, %v1493
      %v1495 = vrot.slane %v1494, 4
      %v1497 = vshll.u32 %v1310, 16
      %v1499 = vrot.slane %v1497, 5
      %v1500 = vsel %vm591, %v1495, %v1499
      %s1501 = scalar_lea.vmem %s6, 40
      %v1502 = vld [vmem:[%s1501] sm:$0xf]
      %v1503 = vunpack.c.l.b16 %v1402
      %v1504 = vunpack.c.l.b16 %v1416
      %v1505 = vunpack.c.l.b16 %v1430
      %v1506 = vunpack.c.l.b16 %v1444
      %v1507 = vunpack.c.l.b16 %v1458
      %v1508 = vunpack.c.l.b16 %v1472
      %v1509 = vunpack.c.l.b16 %v1486
      %v1510 = vunpack.c.l.b16 %v1500
      %v1511 = vpack.c.b16 %v1504, %v1503
      %v1512 = vpack.c.b16 %v1506, %v1505
      %v1513 = vpack.c.b16 %v1508, %v1507
      %v1514 = vpack.c.b16 %v1510, %v1509
      %v1516 = vsel %vm718, %v1511, 0
      %v1519 = vsel %vm718, %v1512, 0
      %v1522 = vsel %vm718, %v1513, 0
      %v1525 = vsel %vm718, %v1514, 0
      %v1528 = vsel %vm731, %v1502, 0
      %1530 = vmatpush.bf16.msra.mxu0 0
      %1531 = vmatpush.bf16.msra.mxu0 0
      %1532 = vmatpush.bf16.msra.mxu0 0
      %1533 = vmatpush.bf16.msra.mxu0 0
      %1534 = vmatpush.bf16.msra.mxu0 0
      %1535 = vmatpush.bf16.msra.mxu0 0
      %1536 = vmatpush.bf16.msra.mxu0 0
      %1537 = vmatpush.bf16.msra.mxu0 %v1528
      %1538 = vmatmul.bf16.gmra.mxu0 %v1516
      %v1539 = vpop.f32.mrf.mxu0
      %v1540 = vadd.f32 0.0, %v1539
      %v1541 = vpop.f32.mrf.mxu0
      %v1542 = vadd.f32 0.0, %v1541
      %1543 = vmatmul.bf16.gmra.mxu0 %v1519
      %v1544 = vpop.f32.mrf.mxu0
      %v1545 = vadd.f32 0.0, %v1544
      %v1546 = vpop.f32.mrf.mxu0
      %v1547 = vadd.f32 0.0, %v1546
      %1548 = vmatmul.bf16.gmra.mxu0 %v1522
      %v1549 = vpop.f32.mrf.mxu0
      %v1550 = vadd.f32 0.0, %v1549
      %v1551 = vpop.f32.mrf.mxu0
      %v1552 = vadd.f32 0.0, %v1551
      %1553 = vmatmul.bf16.gmra.mxu0 %v1525
      %v1554 = vpop.f32.mrf.mxu0
      %v1555 = vadd.f32 0.0, %v1554
      %v1556 = vpop.f32.mrf.mxu0
      %v1557 = vadd.f32 0.0, %v1556
      %1558 = vdwg.mxu0
      %v1559 = vadd.f32 %v1381, %v1540
      %v1560 = vadd.f32 %v1382, %v1542
      %v1561 = vadd.f32 %v1383, %v1545
      %v1562 = vadd.f32 %v1384, %v1547
      %v1563 = vadd.f32 %v1385, %v1550
      %v1564 = vadd.f32 %v1386, %v1552
      %v1565 = vadd.f32 %v1387, %v1555
      %v1566 = vadd.f32 %v1388, %v1557
      %v1575 = vrot.slane %v1295, 5
      %v1576 = vrot.slane %v1575, 4
      %v1577 = vrot.slane %v1296, 5
      %v1578 = vsel %vm838, %v1576, %v1577
      %v1579 = vrot.slane %v1297, 5
      %v1580 = vrot.slane %v1579, 4
      %v1581 = vrot.slane %v1298, 5
      %v1582 = vsel %vm838, %v1580, %v1581
      %v1583 = vrot.slane %v1299, 5
      %v1584 = vrot.slane %v1583, 4
      %v1585 = vrot.slane %v1300, 5
      %v1586 = vsel %vm838, %v1584, %v1585
      %v1587 = vrot.slane %v1301, 5
      %v1588 = vrot.slane %v1587, 4
      %v1589 = vrot.slane %v1302, 5
      %v1590 = vsel %vm838, %v1588, %v1589
      %v1591 = vrot.slane %v1303, 5
      %v1592 = vrot.slane %v1591, 4
      %v1593 = vrot.slane %v1304, 5
      %v1594 = vsel %vm838, %v1592, %v1593
      %v1595 = vrot.slane %v1305, 5
      %v1596 = vrot.slane %v1595, 4
      %v1597 = vrot.slane %v1306, 5
      %v1598 = vsel %vm838, %v1596, %v1597
      %v1599 = vrot.slane %v1307, 5
      %v1600 = vrot.slane %v1599, 4
      %v1601 = vrot.slane %v1308, 5
      %v1602 = vsel %vm838, %v1600, %v1601
      %v1603 = vrot.slane %v1309, 5
      %v1604 = vrot.slane %v1603, 4
      %v1605 = vrot.slane %v1310, 5
      %v1606 = vsel %vm838, %v1604, %v1605
      %s1607 = scalar_lea.vmem %s6, 44
      %v1608 = vld [vmem:[%s1607] sm:$0xf]
      %v1609 = vunpack.c.l.b16 %v1578
      %v1610 = vunpack.c.l.b16 %v1582
      %v1611 = vunpack.c.l.b16 %v1586
      %v1612 = vunpack.c.l.b16 %v1590
      %v1613 = vunpack.c.l.b16 %v1594
      %v1614 = vunpack.c.l.b16 %v1598
      %v1615 = vunpack.c.l.b16 %v1602
      %v1616 = vunpack.c.l.b16 %v1606
      %v1617 = vpack.c.b16 %v1610, %v1609
      %v1618 = vpack.c.b16 %v1612, %v1611
      %v1619 = vpack.c.b16 %v1614, %v1613
      %v1620 = vpack.c.b16 %v1616, %v1615
      %v1622 = vsel %vm718, %v1617, 0
      %v1625 = vsel %vm718, %v1618, 0
      %v1628 = vsel %vm718, %v1619, 0
      %v1631 = vsel %vm718, %v1620, 0
      %v1634 = vsel %vm731, %v1608, 0
      %1636 = vmatpush.bf16.msra.mxu0 0
      %1637 = vmatpush.bf16.msra.mxu0 0
      %1638 = vmatpush.bf16.msra.mxu0 0
      %1639 = vmatpush.bf16.msra.mxu0 0
      %1640 = vmatpush.bf16.msra.mxu0 0
      %1641 = vmatpush.bf16.msra.mxu0 0
      %1642 = vmatpush.bf16.msra.mxu0 0
      %1643 = vmatpush.bf16.msra.mxu0 %v1634
      %1644 = vmatmul.bf16.gmra.mxu0 %v1622
      %v1645 = vpop.f32.mrf.mxu0
      %v1646 = vadd.f32 0.0, %v1645
      %v1647 = vpop.f32.mrf.mxu0
      %v1648 = vadd.f32 0.0, %v1647
      %1649 = vmatmul.bf16.gmra.mxu0 %v1625
      %v1650 = vpop.f32.mrf.mxu0
      %v1651 = vadd.f32 0.0, %v1650
      %v1652 = vpop.f32.mrf.mxu0
      %v1653 = vadd.f32 0.0, %v1652
      %1654 = vmatmul.bf16.gmra.mxu0 %v1628
      %v1655 = vpop.f32.mrf.mxu0
      %v1656 = vadd.f32 0.0, %v1655
      %v1657 = vpop.f32.mrf.mxu0
      %v1658 = vadd.f32 0.0, %v1657
      %1659 = vmatmul.bf16.gmra.mxu0 %v1631
      %v1660 = vpop.f32.mrf.mxu0
      %v1661 = vadd.f32 0.0, %v1660
      %v1662 = vpop.f32.mrf.mxu0
      %v1663 = vadd.f32 0.0, %v1662
      %1664 = vdwg.mxu0
      %v1665 = vadd.f32 %v1559, %v1646
      %v1666 = vadd.f32 %v1560, %v1648
      %v1667 = vadd.f32 %v1561, %v1651
      %v1668 = vadd.f32 %v1562, %v1653
      %v1669 = vadd.f32 %v1563, %v1656
      %v1670 = vadd.f32 %v1564, %v1658
      %v1671 = vadd.f32 %v1565, %v1661
      %v1672 = vadd.f32 %v1566, %v1663
      %s1673 = scalar_lea.vmem %s6, 48
      %v1674 = vld [vmem:[%s1673] sm:$0xf]
      %v1676 = vunpack.c.l.b16 %v1311
      %v1677 = vpack.c.b16 %v1327, %v1326
      %v1678 = vpack.c.b16 %v1329, %v1328
      %v1679 = vpack.c.b16 %v1331, %v1330
      %v1680 = vpack.c.b16 %v1676, %v1332
      %v1682 = vsel %vm718, %v1677, 0
      %v1685 = vsel %vm718, %v1678, 0
      %v1688 = vsel %vm718, %v1679, 0
      %v1691 = vsel %vm718, %v1680, 0
      %v1694 = vsel %vm731, %v1674, 0
      %1696 = vmatpush.bf16.msra.mxu0 0
      %1697 = vmatpush.bf16.msra.mxu0 0
      %1698 = vmatpush.bf16.msra.mxu0 0
      %1699 = vmatpush.bf16.msra.mxu0 0
      %1700 = vmatpush.bf16.msra.mxu0 0
      %1701 = vmatpush.bf16.msra.mxu0 0
      %1702 = vmatpush.bf16.msra.mxu0 0
      %1703 = vmatpush.bf16.msra.mxu0 %v1694
      %1704 = vmatmul.bf16.gmra.mxu0 %v1682
      %v1705 = vpop.f32.mrf.mxu0
      %v1706 = vadd.f32 0.0, %v1705
      %v1707 = vpop.f32.mrf.mxu0
      %v1708 = vadd.f32 0.0, %v1707
      %1709 = vmatmul.bf16.gmra.mxu0 %v1685
      %v1710 = vpop.f32.mrf.mxu0
      %v1711 = vadd.f32 0.0, %v1710
      %v1712 = vpop.f32.mrf.mxu0
      %v1713 = vadd.f32 0.0, %v1712
      %1714 = vmatmul.bf16.gmra.mxu0 %v1688
      %v1715 = vpop.f32.mrf.mxu0
      %v1716 = vadd.f32 0.0, %v1715
      %v1717 = vpop.f32.mrf.mxu0
      %v1718 = vadd.f32 0.0, %v1717
      %1719 = vmatmul.bf16.gmra.mxu0 %v1691
      %v1720 = vpop.f32.mrf.mxu0
      %v1721 = vadd.f32 0.0, %v1720
      %v1722 = vpop.f32.mrf.mxu0
      %v1723 = vadd.f32 0.0, %v1722
      %1724 = vdwg.mxu0
      %v1725 = vadd.f32 %v1665, %v1706
      %v1726 = vadd.f32 %v1666, %v1708
      %v1727 = vadd.f32 %v1667, %v1711
      %v1728 = vadd.f32 %v1668, %v1713
      %v1729 = vadd.f32 %v1669, %v1716
      %v1730 = vadd.f32 %v1670, %v1718
      %v1731 = vadd.f32 %v1671, %v1721
      %v1732 = vadd.f32 %v1672, %v1723
      %v1734 = vshrl.u32 %v1311, 16
      %v1736 = vrot.slane %v1734, 4
      %v1737 = vshll.u32 %v1311, 16
      %v1739 = vrot.slane %v1737, 5
      %v1740 = vor.u32 %v1736, %v1739
      %v1741 = vrot.slane %v1740, 4
      %v1743 = vshll.u32 %v1312, 16
      %v1745 = vrot.slane %v1743, 5
      %v1746 = vsel %vm591, %v1741, %v1745
      %s1747 = scalar_lea.vmem %s6, 52
      %v1748 = vld [vmem:[%s1747] sm:$0xf]
      %v1749 = vunpack.c.l.b16 %v1746
      %v1750 = vpack.c.b16 %v1505, %v1504
      %v1751 = vpack.c.b16 %v1507, %v1506
      %v1752 = vpack.c.b16 %v1509, %v1508
      %v1753 = vpack.c.b16 %v1749, %v1510
      %v1755 = vsel %vm718, %v1750, 0
      %v1758 = vsel %vm718, %v1751, 0
      %v1761 = vsel %vm718, %v1752, 0
      %v1764 = vsel %vm718, %v1753, 0
      %v1767 = vsel %vm731, %v1748, 0
      %1769 = vmatpush.bf16.msra.mxu0 0
      %1770 = vmatpush.bf16.msra.mxu0 0
      %1771 = vmatpush.bf16.msra.mxu0 0
      %1772 = vmatpush.bf16.msra.mxu0 0
      %1773 = vmatpush.bf16.msra.mxu0 0
      %1774 = vmatpush.bf16.msra.mxu0 0
      %1775 = vmatpush.bf16.msra.mxu0 0
      %1776 = vmatpush.bf16.msra.mxu0 %v1767
      %1777 = vmatmul.bf16.gmra.mxu0 %v1755
      %v1778 = vpop.f32.mrf.mxu0
      %v1779 = vadd.f32 0.0, %v1778
      %v1780 = vpop.f32.mrf.mxu0
      %v1781 = vadd.f32 0.0, %v1780
      %1782 = vmatmul.bf16.gmra.mxu0 %v1758
      %v1783 = vpop.f32.mrf.mxu0
      %v1784 = vadd.f32 0.0, %v1783
      %v1785 = vpop.f32.mrf.mxu0
      %v1786 = vadd.f32 0.0, %v1785
      %1787 = vmatmul.bf16.gmra.mxu0 %v1761
      %v1788 = vpop.f32.mrf.mxu0
      %v1789 = vadd.f32 0.0, %v1788
      %v1790 = vpop.f32.mrf.mxu0
      %v1791 = vadd.f32 0.0, %v1790
      %1792 = vmatmul.bf16.gmra.mxu0 %v1764
      %v1793 = vpop.f32.mrf.mxu0
      %v1794 = vadd.f32 0.0, %v1793
      %v1795 = vpop.f32.mrf.mxu0
      %v1796 = vadd.f32 0.0, %v1795
      %1797 = vdwg.mxu0
      %v1798 = vadd.f32 %v1725, %v1779
      %v1799 = vadd.f32 %v1726, %v1781
      %v1800 = vadd.f32 %v1727, %v1784
      %v1801 = vadd.f32 %v1728, %v1786
      %v1802 = vadd.f32 %v1729, %v1789
      %v1803 = vadd.f32 %v1730, %v1791
      %v1804 = vadd.f32 %v1731, %v1794
      %v1805 = vadd.f32 %v1732, %v1796
      %v1807 = vrot.slane %v1311, 5
      %v1808 = vrot.slane %v1807, 4
      %v1809 = vrot.slane %v1312, 5
      %v1810 = vsel %vm838, %v1808, %v1809
      %s1811 = scalar_lea.vmem %s6, 56
      %v1812 = vld [vmem:[%s1811] sm:$0xf]
      %v1813 = vunpack.c.l.b16 %v1810
      %v1814 = vpack.c.b16 %v1611, %v1610
      %v1815 = vpack.c.b16 %v1613, %v1612
      %v1816 = vpack.c.b16 %v1615, %v1614
      %v1817 = vpack.c.b16 %v1813, %v1616
      %v1819 = vsel %vm718, %v1814, 0
      %v1822 = vsel %vm718, %v1815, 0
      %v1825 = vsel %vm718, %v1816, 0
      %v1828 = vsel %vm718, %v1817, 0
      %v1831 = vsel %vm731, %v1812, 0
      %1833 = vmatpush.bf16.msra.mxu0 0
      %1834 = vmatpush.bf16.msra.mxu0 0
      %1835 = vmatpush.bf16.msra.mxu0 0
      %1836 = vmatpush.bf16.msra.mxu0 0
      %1837 = vmatpush.bf16.msra.mxu0 0
      %1838 = vmatpush.bf16.msra.mxu0 0
      %1839 = vmatpush.bf16.msra.mxu0 0
      %1840 = vmatpush.bf16.msra.mxu0 %v1831
      %1841 = vmatmul.bf16.gmra.mxu0 %v1819
      %v1842 = vpop.f32.mrf.mxu0
      %v1843 = vadd.f32 0.0, %v1842
      %v1844 = vpop.f32.mrf.mxu0
      %v1845 = vadd.f32 0.0, %v1844
      %1846 = vmatmul.bf16.gmra.mxu0 %v1822
      %v1847 = vpop.f32.mrf.mxu0
      %v1848 = vadd.f32 0.0, %v1847
      %v1849 = vpop.f32.mrf.mxu0
      %v1850 = vadd.f32 0.0, %v1849
      %1851 = vmatmul.bf16.gmra.mxu0 %v1825
      %v1852 = vpop.f32.mrf.mxu0
      %v1853 = vadd.f32 0.0, %v1852
      %v1854 = vpop.f32.mrf.mxu0
      %v1855 = vadd.f32 0.0, %v1854
      %1856 = vmatmul.bf16.gmra.mxu0 %v1828
      %v1857 = vpop.f32.mrf.mxu0
      %v1858 = vadd.f32 0.0, %v1857
      %v1859 = vpop.f32.mrf.mxu0
      %v1860 = vadd.f32 0.0, %v1859
      %1861 = vdwg.mxu0
      %v1862 = vadd.f32 %v1798, %v1843
      %v1863 = vadd.f32 %v1799, %v1845
      %v1864 = vadd.f32 %v1800, %v1848
      %v1865 = vadd.f32 %v1801, %v1850
      %v1866 = vadd.f32 %v1802, %v1853
      %v1867 = vadd.f32 %v1803, %v1855
      %v1868 = vadd.f32 %v1804, %v1858
      %v1869 = vadd.f32 %v1805, %v1860
      %s1870 = scalar_lea.vmem %s6, 60
      %v1871 = vld [vmem:[%s1870] sm:$0xf]
      %v1873 = vunpack.c.l.b16 %v1313
      %v1874 = vpack.c.b16 %v1873, %v1676
      %v1876 = vsel %vm718, %v1874, 0
      %v1879 = vsel %vm731, %v1871, 0
      %1881 = vmatpush.bf16.msra.mxu0 0
      %1882 = vmatpush.bf16.msra.mxu0 0
      %1883 = vmatpush.bf16.msra.mxu0 0
      %1884 = vmatpush.bf16.msra.mxu0 0
      %1885 = vmatpush.bf16.msra.mxu0 0
      %1886 = vmatpush.bf16.msra.mxu0 0
      %1887 = vmatpush.bf16.msra.mxu0 0
      %1888 = vmatpush.bf16.msra.mxu0 %v1879
      %1889 = vmatmul.bf16.gmra.mxu0 %v1341
      %v1890 = vpop.f32.mrf.mxu0
      %v1891 = vadd.f32 0.0, %v1890
      %v1892 = vpop.f32.mrf.mxu0
      %v1893 = vadd.f32 0.0, %v1892
      %1894 = vmatmul.bf16.gmra.mxu0 %v1344
      %v1895 = vpop.f32.mrf.mxu0
      %v1896 = vadd.f32 0.0, %v1895
      %v1897 = vpop.f32.mrf.mxu0
      %v1898 = vadd.f32 0.0, %v1897
      %1899 = vmatmul.bf16.gmra.mxu0 %v1347
      %v1900 = vpop.f32.mrf.mxu0
      %v1901 = vadd.f32 0.0, %v1900
      %v1902 = vpop.f32.mrf.mxu0
      %v1903 = vadd.f32 0.0, %v1902
      %1904 = vmatmul.bf16.gmra.mxu0 %v1876
      %v1905 = vpop.f32.mrf.mxu0
      %v1906 = vadd.f32 0.0, %v1905
      %v1907 = vpop.f32.mrf.mxu0
      %v1908 = vadd.f32 0.0, %v1907
      %1909 = vdwg.mxu0
      %v1910 = vadd.f32 %v1862, %v1891
      %v1911 = vadd.f32 %v1863, %v1893
      %v1912 = vadd.f32 %v1864, %v1896
      %v1913 = vadd.f32 %v1865, %v1898
      %v1914 = vadd.f32 %v1866, %v1901
      %v1915 = vadd.f32 %v1867, %v1903
      %v1916 = vadd.f32 %v1868, %v1906
      %v1917 = vadd.f32 %v1869, %v1908
      %v1919 = vshrl.u32 %v1313, 16
      %v1921 = vrot.slane %v1919, 4
      %v1922 = vshll.u32 %v1313, 16
      %v1924 = vrot.slane %v1922, 5
      %v1925 = vor.u32 %v1921, %v1924
      %v1926 = vrot.slane %v1925, 4
      %v1928 = vshll.u32 %v1314, 16
      %v1930 = vrot.slane %v1928, 5
      %v1931 = vsel %vm591, %v1926, %v1930
      %s1932 = scalar_lea.vmem %s6, 64
      %v1933 = vld [vmem:[%s1932] sm:$0xf]
      %v1934 = vunpack.c.l.b16 %v1931
      %v1935 = vpack.c.b16 %v1934, %v1749
      %v1937 = vsel %vm718, %v1935, 0
      %v1940 = vsel %vm731, %v1933, 0
      %1942 = vmatpush.bf16.msra.mxu0 0
      %1943 = vmatpush.bf16.msra.mxu0 0
      %1944 = vmatpush.bf16.msra.mxu0 0
      %1945 = vmatpush.bf16.msra.mxu0 0
      %1946 = vmatpush.bf16.msra.mxu0 0
      %1947 = vmatpush.bf16.msra.mxu0 0
      %1948 = vmatpush.bf16.msra.mxu0 0
      %1949 = vmatpush.bf16.msra.mxu0 %v1940
      %1950 = vmatmul.bf16.gmra.mxu0 %v1519
      %v1951 = vpop.f32.mrf.mxu0
      %v1952 = vadd.f32 0.0, %v1951
      %v1953 = vpop.f32.mrf.mxu0
      %v1954 = vadd.f32 0.0, %v1953
      %1955 = vmatmul.bf16.gmra.mxu0 %v1522
      %v1956 = vpop.f32.mrf.mxu0
      %v1957 = vadd.f32 0.0, %v1956
      %v1958 = vpop.f32.mrf.mxu0
      %v1959 = vadd.f32 0.0, %v1958
      %1960 = vmatmul.bf16.gmra.mxu0 %v1525
      %v1961 = vpop.f32.mrf.mxu0
      %v1962 = vadd.f32 0.0, %v1961
      %v1963 = vpop.f32.mrf.mxu0
      %v1964 = vadd.f32 0.0, %v1963
      %1965 = vmatmul.bf16.gmra.mxu0 %v1937
      %v1966 = vpop.f32.mrf.mxu0
      %v1967 = vadd.f32 0.0, %v1966
      %v1968 = vpop.f32.mrf.mxu0
      %v1969 = vadd.f32 0.0, %v1968
      %1970 = vdwg.mxu0
      %v1971 = vadd.f32 %v1910, %v1952
      %v1972 = vadd.f32 %v1911, %v1954
      %v1973 = vadd.f32 %v1912, %v1957
      %v1974 = vadd.f32 %v1913, %v1959
      %v1975 = vadd.f32 %v1914, %v1962
      %v1976 = vadd.f32 %v1915, %v1964
      %v1977 = vadd.f32 %v1916, %v1967
      %v1978 = vadd.f32 %v1917, %v1969
      %v1980 = vrot.slane %v1313, 5
      %v1981 = vrot.slane %v1980, 4
      %v1982 = vrot.slane %v1314, 5
      %v1983 = vsel %vm838, %v1981, %v1982
      %s1984 = scalar_lea.vmem %s6, 68
      %v1985 = vld [vmem:[%s1984] sm:$0xf]
      %v1986 = vunpack.c.l.b16 %v1983
      %v1987 = vpack.c.b16 %v1986, %v1813
      %v1989 = vsel %vm718, %v1987, 0
      %v1992 = vsel %vm731, %v1985, 0
      %1994 = vmatpush.bf16.msra.mxu0 0
      %1995 = vmatpush.bf16.msra.mxu0 0
      %1996 = vmatpush.bf16.msra.mxu0 0
      %1997 = vmatpush.bf16.msra.mxu0 0
      %1998 = vmatpush.bf16.msra.mxu0 0
      %1999 = vmatpush.bf16.msra.mxu0 0
      %2000 = vmatpush.bf16.msra.mxu0 0
      %2001 = vmatpush.bf16.msra.mxu0 %v1992
      %2002 = vmatmul.bf16.gmra.mxu0 %v1625
      %v2003 = vpop.f32.mrf.mxu0
      %v2004 = vadd.f32 0.0, %v2003
      %v2005 = vpop.f32.mrf.mxu0
      %v2006 = vadd.f32 0.0, %v2005
      %2007 = vmatmul.bf16.gmra.mxu0 %v1628
      %v2008 = vpop.f32.mrf.mxu0
      %v2009 = vadd.f32 0.0, %v2008
      %v2010 = vpop.f32.mrf.mxu0
      %v2011 = vadd.f32 0.0, %v2010
      %2012 = vmatmul.bf16.gmra.mxu0 %v1631
      %v2013 = vpop.f32.mrf.mxu0
      %v2014 = vadd.f32 0.0, %v2013
      %v2015 = vpop.f32.mrf.mxu0
      %v2016 = vadd.f32 0.0, %v2015
      %2017 = vmatmul.bf16.gmra.mxu0 %v1989
      %v2018 = vpop.f32.mrf.mxu0
      %v2019 = vadd.f32 0.0, %v2018
      %v2020 = vpop.f32.mrf.mxu0
      %v2021 = vadd.f32 0.0, %v2020
      %2022 = vdwg.mxu0
      %v2023 = vadd.f32 %v1971, %v2004
      %v2024 = vadd.f32 %v1972, %v2006
      %v2025 = vadd.f32 %v1973, %v2009
      %v2026 = vadd.f32 %v1974, %v2011
      %v2027 = vadd.f32 %v1975, %v2014
      %v2028 = vadd.f32 %v1976, %v2016
      %v2029 = vadd.f32 %v1977, %v2019
      %v2030 = vadd.f32 %v1978, %v2021
      %v2031 = vld [vmem:[%s525] sm:$0xf]
      %v2032 = vld [vmem:[%s525 + $0x4] sm:$0x1]
      %v2033 = vld [vmem:[%s525 + $0x8] sm:$0xf]
      %v2034 = vld [vmem:[%s525 + $0xc] sm:$0x1]
      %v2035 = vld [vmem:[%s525 + $0x10] sm:$0xf]
      %v2036 = vld [vmem:[%s525 + $0x14] sm:$0x1]
      %v2037 = vld [vmem:[%s525 + $0x18] sm:$0xf]
      %v2038 = vld [vmem:[%s525 + $0x1c] sm:$0x1]
      %v2039 = vld [vmem:[%s525 + $0x20] sm:$0xf]
      %v2040 = vld [vmem:[%s525 + $0x24] sm:$0x1]
      %v2041 = vld [vmem:[%s525 + $0x28] sm:$0xf]
      %v2042 = vld [vmem:[%s525 + $0x2c] sm:$0x1]
      %v2043 = vld [vmem:[%s525 + $0x30] sm:$0xf]
      %v2044 = vld [vmem:[%s525 + $0x34] sm:$0x1]
      %v2045 = vld [vmem:[%s525 + $0x38] sm:$0xf]
      %v2046 = vld [vmem:[%s525 + $0x3c] sm:$0x1]
      %v2047 = vld [vmem:[%s525 + $0x40] sm:$0xf]
      %v2048 = vld [vmem:[%s525 + $0x44] sm:$0x1]
      %v2049 = vld [vmem:[%s525 + $0x48] sm:$0xf]
      %v2050 = vld [vmem:[%s525 + $0x4c] sm:$0x1]
      %s2051 = scalar_lea.vmem %s6, 72
      %v2052 = vld [vmem:[%s2051] sm:$0xf]
      %v2061 = vunpack.c.l.b16 %v2031
      %v2062 = vunpack.c.l.b16 %v2033
      %v2063 = vunpack.c.l.b16 %v2035
      %v2064 = vunpack.c.l.b16 %v2037
      %v2065 = vunpack.c.l.b16 %v2039
      %v2066 = vunpack.c.l.b16 %v2041
      %v2067 = vunpack.c.l.b16 %v2043
      %v2068 = vunpack.c.l.b16 %v2045
      %v2069 = vpack.c.b16 %v2062, %v2061
      %v2070 = vpack.c.b16 %v2064, %v2063
      %v2071 = vpack.c.b16 %v2066, %v2065
      %v2072 = vpack.c.b16 %v2068, %v2067
      %v2074 = vsel %vm718, %v2069, 0
      %v2077 = vsel %vm718, %v2070, 0
      %v2080 = vsel %vm718, %v2071, 0
      %v2083 = vsel %vm718, %v2072, 0
      %v2086 = vsel %vm731, %v2052, 0
      %2088 = vmatpush.bf16.msra.mxu0 0
      %2089 = vmatpush.bf16.msra.mxu0 0
      %2090 = vmatpush.bf16.msra.mxu0 0
      %2091 = vmatpush.bf16.msra.mxu0 0
      %2092 = vmatpush.bf16.msra.mxu0 0
      %2093 = vmatpush.bf16.msra.mxu0 0
      %2094 = vmatpush.bf16.msra.mxu0 0
      %2095 = vmatpush.bf16.msra.mxu0 %v2086
      %2096 = vmatmul.bf16.gmra.mxu0 %v2074
      %v2097 = vpop.f32.mrf.mxu0
      %v2098 = vadd.f32 0.0, %v2097
      %v2099 = vpop.f32.mrf.mxu0
      %v2100 = vadd.f32 0.0, %v2099
      %2101 = vmatmul.bf16.gmra.mxu0 %v2077
      %v2102 = vpop.f32.mrf.mxu0
      %v2103 = vadd.f32 0.0, %v2102
      %v2104 = vpop.f32.mrf.mxu0
      %v2105 = vadd.f32 0.0, %v2104
      %2106 = vmatmul.bf16.gmra.mxu0 %v2080
      %v2107 = vpop.f32.mrf.mxu0
      %v2108 = vadd.f32 0.0, %v2107
      %v2109 = vpop.f32.mrf.mxu0
      %v2110 = vadd.f32 0.0, %v2109
      %2111 = vmatmul.bf16.gmra.mxu0 %v2083
      %v2112 = vpop.f32.mrf.mxu0
      %v2113 = vadd.f32 0.0, %v2112
      %v2114 = vpop.f32.mrf.mxu0
      %v2115 = vadd.f32 0.0, %v2114
      %2116 = vdwg.mxu0
      %v2117 = vadd.f32 %v2023, %v2098
      %v2118 = vadd.f32 %v2024, %v2100
      %v2119 = vadd.f32 %v2025, %v2103
      %v2120 = vadd.f32 %v2026, %v2105
      %v2121 = vadd.f32 %v2027, %v2108
      %v2122 = vadd.f32 %v2028, %v2110
      %v2123 = vadd.f32 %v2029, %v2113
      %v2124 = vadd.f32 %v2030, %v2115
      %v2126 = vshrl.u32 %v2031, 16
      %v2128 = vrot.slane %v2126, 4
      %v2129 = vshll.u32 %v2031, 16
      %v2131 = vrot.slane %v2129, 5
      %v2132 = vor.u32 %v2128, %v2131
      %v2133 = vrot.slane %v2132, 4
      %v2135 = vshll.u32 %v2032, 16
      %v2137 = vrot.slane %v2135, 5
      %v2138 = vsel %vm591, %v2133, %v2137
      %v2140 = vshrl.u32 %v2033, 16
      %v2142 = vrot.slane %v2140, 4
      %v2143 = vshll.u32 %v2033, 16
      %v2145 = vrot.slane %v2143, 5
      %v2146 = vor.u32 %v2142, %v2145
      %v2147 = vrot.slane %v2146, 4
      %v2149 = vshll.u32 %v2034, 16
      %v2151 = vrot.slane %v2149, 5
      %v2152 = vsel %vm591, %v2147, %v2151
      %v2154 = vshrl.u32 %v2035, 16
      %v2156 = vrot.slane %v2154, 4
      %v2157 = vshll.u32 %v2035, 16
      %v2159 = vrot.slane %v2157, 5
      %v2160 = vor.u32 %v2156, %v2159
      %v2161 = vrot.slane %v2160, 4
      %v2163 = vshll.u32 %v2036, 16
      %v2165 = vrot.slane %v2163, 5
      %v2166 = vsel %vm591, %v2161, %v2165
      %v2168 = vshrl.u32 %v2037, 16
      %v2170 = vrot.slane %v2168, 4
      %v2171 = vshll.u32 %v2037, 16
      %v2173 = vrot.slane %v2171, 5
      %v2174 = vor.u32 %v2170, %v2173
      %v2175 = vrot.slane %v2174, 4
      %v2177 = vshll.u32 %v2038, 16
      %v2179 = vrot.slane %v2177, 5
      %v2180 = vsel %vm591, %v2175, %v2179
      %v2182 = vshrl.u32 %v2039, 16
      %v2184 = vrot.slane %v2182, 4
      %v2185 = vshll.u32 %v2039, 16
      %v2187 = vrot.slane %v2185, 5
      %v2188 = vor.u32 %v2184, %v2187
      %v2189 = vrot.slane %v2188, 4
      %v2191 = vshll.u32 %v2040, 16
      %v2193 = vrot.slane %v2191, 5
      %v2194 = vsel %vm591, %v2189, %v2193
      %v2196 = vshrl.u32 %v2041, 16
      %v2198 = vrot.slane %v2196, 4
      %v2199 = vshll.u32 %v2041, 16
      %v2201 = vrot.slane %v2199, 5
      %v2202 = vor.u32 %v2198, %v2201
      %v2203 = vrot.slane %v2202, 4
      %v2205 = vshll.u32 %v2042, 16
      %v2207 = vrot.slane %v2205, 5
      %v2208 = vsel %vm591, %v2203, %v2207
      %v2210 = vshrl.u32 %v2043, 16
      %v2212 = vrot.slane %v2210, 4
      %v2213 = vshll.u32 %v2043, 16
      %v2215 = vrot.slane %v2213, 5
      %v2216 = vor.u32 %v2212, %v2215
      %v2217 = vrot.slane %v2216, 4
      %v2219 = vshll.u32 %v2044, 16
      %v2221 = vrot.slane %v2219, 5
      %v2222 = vsel %vm591, %v2217, %v2221
      %v2224 = vshrl.u32 %v2045, 16
      %v2226 = vrot.slane %v2224, 4
      %v2227 = vshll.u32 %v2045, 16
      %v2229 = vrot.slane %v2227, 5
      %v2230 = vor.u32 %v2226, %v2229
      %v2231 = vrot.slane %v2230, 4
      %v2233 = vshll.u32 %v2046, 16
      %v2235 = vrot.slane %v2233, 5
      %v2236 = vsel %vm591, %v2231, %v2235
      %s2237 = scalar_lea.vmem %s6, 76
      %v2238 = vld [vmem:[%s2237] sm:$0xf]
      %v2239 = vunpack.c.l.b16 %v2138
      %v2240 = vunpack.c.l.b16 %v2152
      %v2241 = vunpack.c.l.b16 %v2166
      %v2242 = vunpack.c.l.b16 %v2180
      %v2243 = vunpack.c.l.b16 %v2194
      %v2244 = vunpack.c.l.b16 %v2208
      %v2245 = vunpack.c.l.b16 %v2222
      %v2246 = vunpack.c.l.b16 %v2236
      %v2247 = vpack.c.b16 %v2240, %v2239
      %v2248 = vpack.c.b16 %v2242, %v2241
      %v2249 = vpack.c.b16 %v2244, %v2243
      %v2250 = vpack.c.b16 %v2246, %v2245
      %v2252 = vsel %vm718, %v2247, 0
      %v2255 = vsel %vm718, %v2248, 0
      %v2258 = vsel %vm718, %v2249, 0
      %v2261 = vsel %vm718, %v2250, 0
      %v2264 = vsel %vm731, %v2238, 0
      %2266 = vmatpush.bf16.msra.mxu0 0
      %2267 = vmatpush.bf16.msra.mxu0 0
      %2268 = vmatpush.bf16.msra.mxu0 0
      %2269 = vmatpush.bf16.msra.mxu0 0
      %2270 = vmatpush.bf16.msra.mxu0 0
      %2271 = vmatpush.bf16.msra.mxu0 0
      %2272 = vmatpush.bf16.msra.mxu0 0
      %2273 = vmatpush.bf16.msra.mxu0 %v2264
      %2274 = vmatmul.bf16.gmra.mxu0 %v2252
      %v2275 = vpop.f32.mrf.mxu0
      %v2276 = vadd.f32 0.0, %v2275
      %v2277 = vpop.f32.mrf.mxu0
      %v2278 = vadd.f32 0.0, %v2277
      %2279 = vmatmul.bf16.gmra.mxu0 %v2255
      %v2280 = vpop.f32.mrf.mxu0
      %v2281 = vadd.f32 0.0, %v2280
      %v2282 = vpop.f32.mrf.mxu0
      %v2283 = vadd.f32 0.0, %v2282
      %2284 = vmatmul.bf16.gmra.mxu0 %v2258
      %v2285 = vpop.f32.mrf.mxu0
      %v2286 = vadd.f32 0.0, %v2285
      %v2287 = vpop.f32.mrf.mxu0
      %v2288 = vadd.f32 0.0, %v2287
      %2289 = vmatmul.bf16.gmra.mxu0 %v2261
      %v2290 = vpop.f32.mrf.mxu0
      %v2291 = vadd.f32 0.0, %v2290
      %v2292 = vpop.f32.mrf.mxu0
      %v2293 = vadd.f32 0.0, %v2292
      %2294 = vdwg.mxu0
      %v2295 = vadd.f32 %v2117, %v2276
      %v2296 = vadd.f32 %v2118, %v2278
      %v2297 = vadd.f32 %v2119, %v2281
      %v2298 = vadd.f32 %v2120, %v2283
      %v2299 = vadd.f32 %v2121, %v2286
      %v2300 = vadd.f32 %v2122, %v2288
      %v2301 = vadd.f32 %v2123, %v2291
      %v2302 = vadd.f32 %v2124, %v2293
      %v2311 = vrot.slane %v2031, 5
      %v2312 = vrot.slane %v2311, 4
      %v2313 = vrot.slane %v2032, 5
      %v2314 = vsel %vm838, %v2312, %v2313
      %v2315 = vrot.slane %v2033, 5
      %v2316 = vrot.slane %v2315, 4
      %v2317 = vrot.slane %v2034, 5
      %v2318 = vsel %vm838, %v2316, %v2317
      %v2319 = vrot.slane %v2035, 5
      %v2320 = vrot.slane %v2319, 4
      %v2321 = vrot.slane %v2036, 5
      %v2322 = vsel %vm838, %v2320, %v2321
      %v2323 = vrot.slane %v2037, 5
      %v2324 = vrot.slane %v2323, 4
      %v2325 = vrot.slane %v2038, 5
      %v2326 = vsel %vm838, %v2324, %v2325
      %v2327 = vrot.slane %v2039, 5
      %v2328 = vrot.slane %v2327, 4
      %v2329 = vrot.slane %v2040, 5
      %v2330 = vsel %vm838, %v2328, %v2329
      %v2331 = vrot.slane %v2041, 5
      %v2332 = vrot.slane %v2331, 4
      %v2333 = vrot.slane %v2042, 5
      %v2334 = vsel %vm838, %v2332, %v2333
      %v2335 = vrot.slane %v2043, 5
      %v2336 = vrot.slane %v2335, 4
      %v2337 = vrot.slane %v2044, 5
      %v2338 = vsel %vm838, %v2336, %v2337
      %v2339 = vrot.slane %v2045, 5
      %v2340 = vrot.slane %v2339, 4
      %v2341 = vrot.slane %v2046, 5
      %v2342 = vsel %vm838, %v2340, %v2341
      %s2343 = scalar_lea.vmem %s6, 80
      %v2344 = vld [vmem:[%s2343] sm:$0xf]
      %v2345 = vunpack.c.l.b16 %v2314
      %v2346 = vunpack.c.l.b16 %v2318
      %v2347 = vunpack.c.l.b16 %v2322
      %v2348 = vunpack.c.l.b16 %v2326
      %v2349 = vunpack.c.l.b16 %v2330
      %v2350 = vunpack.c.l.b16 %v2334
      %v2351 = vunpack.c.l.b16 %v2338
      %v2352 = vunpack.c.l.b16 %v2342
      %v2353 = vpack.c.b16 %v2346, %v2345
      %v2354 = vpack.c.b16 %v2348, %v2347
      %v2355 = vpack.c.b16 %v2350, %v2349
      %v2356 = vpack.c.b16 %v2352, %v2351
      %v2358 = vsel %vm718, %v2353, 0
      %v2361 = vsel %vm718, %v2354, 0
      %v2364 = vsel %vm718, %v2355, 0
      %v2367 = vsel %vm718, %v2356, 0
      %v2370 = vsel %vm731, %v2344, 0
      %2372 = vmatpush.bf16.msra.mxu0 0
      %2373 = vmatpush.bf16.msra.mxu0 0
      %2374 = vmatpush.bf16.msra.mxu0 0
      %2375 = vmatpush.bf16.msra.mxu0 0
      %2376 = vmatpush.bf16.msra.mxu0 0
      %2377 = vmatpush.bf16.msra.mxu0 0
      %2378 = vmatpush.bf16.msra.mxu0 0
      %2379 = vmatpush.bf16.msra.mxu0 %v2370
      %2380 = vmatmul.bf16.gmra.mxu0 %v2358
      %v2381 = vpop.f32.mrf.mxu0
      %v2382 = vadd.f32 0.0, %v2381
      %v2383 = vpop.f32.mrf.mxu0
      %v2384 = vadd.f32 0.0, %v2383
      %2385 = vmatmul.bf16.gmra.mxu0 %v2361
      %v2386 = vpop.f32.mrf.mxu0
      %v2387 = vadd.f32 0.0, %v2386
      %v2388 = vpop.f32.mrf.mxu0
      %v2389 = vadd.f32 0.0, %v2388
      %2390 = vmatmul.bf16.gmra.mxu0 %v2364
      %v2391 = vpop.f32.mrf.mxu0
      %v2392 = vadd.f32 0.0, %v2391
      %v2393 = vpop.f32.mrf.mxu0
      %v2394 = vadd.f32 0.0, %v2393
      %2395 = vmatmul.bf16.gmra.mxu0 %v2367
      %v2396 = vpop.f32.mrf.mxu0
      %v2397 = vadd.f32 0.0, %v2396
      %v2398 = vpop.f32.mrf.mxu0
      %v2399 = vadd.f32 0.0, %v2398
      %2400 = vdwg.mxu0
      %v2401 = vadd.f32 %v2295, %v2382
      %v2402 = vadd.f32 %v2296, %v2384
      %v2403 = vadd.f32 %v2297, %v2387
      %v2404 = vadd.f32 %v2298, %v2389
      %v2405 = vadd.f32 %v2299, %v2392
      %v2406 = vadd.f32 %v2300, %v2394
      %v2407 = vadd.f32 %v2301, %v2397
      %v2408 = vadd.f32 %v2302, %v2399
      %s2409 = scalar_lea.vmem %s6, 84
      %v2410 = vld [vmem:[%s2409] sm:$0xf]
      %v2412 = vunpack.c.l.b16 %v2047
      %v2413 = vpack.c.b16 %v2063, %v2062
      %v2414 = vpack.c.b16 %v2065, %v2064
      %v2415 = vpack.c.b16 %v2067, %v2066
      %v2416 = vpack.c.b16 %v2412, %v2068
      %v2418 = vsel %vm718, %v2413, 0
      %v2421 = vsel %vm718, %v2414, 0
      %v2424 = vsel %vm718, %v2415, 0
      %v2427 = vsel %vm718, %v2416, 0
      %v2430 = vsel %vm731, %v2410, 0
      %2432 = vmatpush.bf16.msra.mxu0 0
      %2433 = vmatpush.bf16.msra.mxu0 0
      %2434 = vmatpush.bf16.msra.mxu0 0
      %2435 = vmatpush.bf16.msra.mxu0 0
      %2436 = vmatpush.bf16.msra.mxu0 0
      %2437 = vmatpush.bf16.msra.mxu0 0
      %2438 = vmatpush.bf16.msra.mxu0 0
      %2439 = vmatpush.bf16.msra.mxu0 %v2430
      %2440 = vmatmul.bf16.gmra.mxu0 %v2418
      %v2441 = vpop.f32.mrf.mxu0
      %v2442 = vadd.f32 0.0, %v2441
      %v2443 = vpop.f32.mrf.mxu0
      %v2444 = vadd.f32 0.0, %v2443
      %2445 = vmatmul.bf16.gmra.mxu0 %v2421
      %v2446 = vpop.f32.mrf.mxu0
      %v2447 = vadd.f32 0.0, %v2446
      %v2448 = vpop.f32.mrf.mxu0
      %v2449 = vadd.f32 0.0, %v2448
      %2450 = vmatmul.bf16.gmra.mxu0 %v2424
      %v2451 = vpop.f32.mrf.mxu0
      %v2452 = vadd.f32 0.0, %v2451
      %v2453 = vpop.f32.mrf.mxu0
      %v2454 = vadd.f32 0.0, %v2453
      %2455 = vmatmul.bf16.gmra.mxu0 %v2427
      %v2456 = vpop.f32.mrf.mxu0
      %v2457 = vadd.f32 0.0, %v2456
      %v2458 = vpop.f32.mrf.mxu0
      %v2459 = vadd.f32 0.0, %v2458
      %2460 = vdwg.mxu0
      %v2461 = vadd.f32 %v2401, %v2442
      %v2462 = vadd.f32 %v2402, %v2444
      %v2463 = vadd.f32 %v2403, %v2447
      %v2464 = vadd.f32 %v2404, %v2449
      %v2465 = vadd.f32 %v2405, %v2452
      %v2466 = vadd.f32 %v2406, %v2454
      %v2467 = vadd.f32 %v2407, %v2457
      %v2468 = vadd.f32 %v2408, %v2459
      %v2470 = vshrl.u32 %v2047, 16
      %v2472 = vrot.slane %v2470, 4
      %v2473 = vshll.u32 %v2047, 16
      %v2475 = vrot.slane %v2473, 5
      %v2476 = vor.u32 %v2472, %v2475
      %v2477 = vrot.slane %v2476, 4
      %v2479 = vshll.u32 %v2048, 16
      %v2481 = vrot.slane %v2479, 5
      %v2482 = vsel %vm591, %v2477, %v2481
      %s2483 = scalar_lea.vmem %s6, 88
      %v2484 = vld [vmem:[%s2483] sm:$0xf]
      %v2485 = vunpack.c.l.b16 %v2482
      %v2486 = vpack.c.b16 %v2241, %v2240
      %v2487 = vpack.c.b16 %v2243, %v2242
      %v2488 = vpack.c.b16 %v2245, %v2244
      %v2489 = vpack.c.b16 %v2485, %v2246
      %v2491 = vsel %vm718, %v2486, 0
      %v2494 = vsel %vm718, %v2487, 0
      %v2497 = vsel %vm718, %v2488, 0
      %v2500 = vsel %vm718, %v2489, 0
      %v2503 = vsel %vm731, %v2484, 0
      %2505 = vmatpush.bf16.msra.mxu0 0
      %2506 = vmatpush.bf16.msra.mxu0 0
      %2507 = vmatpush.bf16.msra.mxu0 0
      %2508 = vmatpush.bf16.msra.mxu0 0
      %2509 = vmatpush.bf16.msra.mxu0 0
      %2510 = vmatpush.bf16.msra.mxu0 0
      %2511 = vmatpush.bf16.msra.mxu0 0
      %2512 = vmatpush.bf16.msra.mxu0 %v2503
      %2513 = vmatmul.bf16.gmra.mxu0 %v2491
      %v2514 = vpop.f32.mrf.mxu0
      %v2515 = vadd.f32 0.0, %v2514
      %v2516 = vpop.f32.mrf.mxu0
      %v2517 = vadd.f32 0.0, %v2516
      %2518 = vmatmul.bf16.gmra.mxu0 %v2494
      %v2519 = vpop.f32.mrf.mxu0
      %v2520 = vadd.f32 0.0, %v2519
      %v2521 = vpop.f32.mrf.mxu0
      %v2522 = vadd.f32 0.0, %v2521
      %2523 = vmatmul.bf16.gmra.mxu0 %v2497
      %v2524 = vpop.f32.mrf.mxu0
      %v2525 = vadd.f32 0.0, %v2524
      %v2526 = vpop.f32.mrf.mxu0
      %v2527 = vadd.f32 0.0, %v2526
      %2528 = vmatmul.bf16.gmra.mxu0 %v2500
      %v2529 = vpop.f32.mrf.mxu0
      %v2530 = vadd.f32 0.0, %v2529
      %v2531 = vpop.f32.mrf.mxu0
      %v2532 = vadd.f32 0.0, %v2531
      %2533 = vdwg.mxu0
      %v2534 = vadd.f32 %v2461, %v2515
      %v2535 = vadd.f32 %v2462, %v2517
      %v2536 = vadd.f32 %v2463, %v2520
      %v2537 = vadd.f32 %v2464, %v2522
      %v2538 = vadd.f32 %v2465, %v2525
      %v2539 = vadd.f32 %v2466, %v2527
      %v2540 = vadd.f32 %v2467, %v2530
      %v2541 = vadd.f32 %v2468, %v2532
      %v2543 = vrot.slane %v2047, 5
      %v2544 = vrot.slane %v2543, 4
      %v2545 = vrot.slane %v2048, 5
      %v2546 = vsel %vm838, %v2544, %v2545
      %s2547 = scalar_lea.vmem %s6, 92
      %v2548 = vld [vmem:[%s2547] sm:$0xf]
      %v2549 = vunpack.c.l.b16 %v2546
      %v2550 = vpack.c.b16 %v2347, %v2346
      %v2551 = vpack.c.b16 %v2349, %v2348
      %v2552 = vpack.c.b16 %v2351, %v2350
      %v2553 = vpack.c.b16 %v2549, %v2352
      %v2555 = vsel %vm718, %v2550, 0
      %v2558 = vsel %vm718, %v2551, 0
      %v2561 = vsel %vm718, %v2552, 0
      %v2564 = vsel %vm718, %v2553, 0
      %v2567 = vsel %vm731, %v2548, 0
      %2569 = vmatpush.bf16.msra.mxu0 0
      %2570 = vmatpush.bf16.msra.mxu0 0
      %2571 = vmatpush.bf16.msra.mxu0 0
      %2572 = vmatpush.bf16.msra.mxu0 0
      %2573 = vmatpush.bf16.msra.mxu0 0
      %2574 = vmatpush.bf16.msra.mxu0 0
      %2575 = vmatpush.bf16.msra.mxu0 0
      %2576 = vmatpush.bf16.msra.mxu0 %v2567
      %2577 = vmatmul.bf16.gmra.mxu0 %v2555
      %v2578 = vpop.f32.mrf.mxu0
      %v2579 = vadd.f32 0.0, %v2578
      %v2580 = vpop.f32.mrf.mxu0
      %v2581 = vadd.f32 0.0, %v2580
      %2582 = vmatmul.bf16.gmra.mxu0 %v2558
      %v2583 = vpop.f32.mrf.mxu0
      %v2584 = vadd.f32 0.0, %v2583
      %v2585 = vpop.f32.mrf.mxu0
      %v2586 = vadd.f32 0.0, %v2585
      %2587 = vmatmul.bf16.gmra.mxu0 %v2561
      %v2588 = vpop.f32.mrf.mxu0
      %v2589 = vadd.f32 0.0, %v2588
      %v2590 = vpop.f32.mrf.mxu0
      %v2591 = vadd.f32 0.0, %v2590
      %2592 = vmatmul.bf16.gmra.mxu0 %v2564
      %v2593 = vpop.f32.mrf.mxu0
      %v2594 = vadd.f32 0.0, %v2593
      %v2595 = vpop.f32.mrf.mxu0
      %v2596 = vadd.f32 0.0, %v2595
      %2597 = vdwg.mxu0
      %v2598 = vadd.f32 %v2534, %v2579
      %v2599 = vadd.f32 %v2535, %v2581
      %v2600 = vadd.f32 %v2536, %v2584
      %v2601 = vadd.f32 %v2537, %v2586
      %v2602 = vadd.f32 %v2538, %v2589
      %v2603 = vadd.f32 %v2539, %v2591
      %v2604 = vadd.f32 %v2540, %v2594
      %v2605 = vadd.f32 %v2541, %v2596
      %s2606 = scalar_lea.vmem %s6, 96
      %v2607 = vld [vmem:[%s2606] sm:$0xf]
      %v2609 = vunpack.c.l.b16 %v2049
      %v2610 = vpack.c.b16 %v2609, %v2412
      %v2612 = vsel %vm718, %v2610, 0
      %v2615 = vsel %vm731, %v2607, 0
      %2617 = vmatpush.bf16.msra.mxu0 0
      %2618 = vmatpush.bf16.msra.mxu0 0
      %2619 = vmatpush.bf16.msra.mxu0 0
      %2620 = vmatpush.bf16.msra.mxu0 0
      %2621 = vmatpush.bf16.msra.mxu0 0
      %2622 = vmatpush.bf16.msra.mxu0 0
      %2623 = vmatpush.bf16.msra.mxu0 0
      %2624 = vmatpush.bf16.msra.mxu0 %v2615
      %2625 = vmatmul.bf16.gmra.mxu0 %v2077
      %v2626 = vpop.f32.mrf.mxu0
      %v2627 = vadd.f32 0.0, %v2626
      %v2628 = vpop.f32.mrf.mxu0
      %v2629 = vadd.f32 0.0, %v2628
      %2630 = vmatmul.bf16.gmra.mxu0 %v2080
      %v2631 = vpop.f32.mrf.mxu0
      %v2632 = vadd.f32 0.0, %v2631
      %v2633 = vpop.f32.mrf.mxu0
      %v2634 = vadd.f32 0.0, %v2633
      %2635 = vmatmul.bf16.gmra.mxu0 %v2083
      %v2636 = vpop.f32.mrf.mxu0
      %v2637 = vadd.f32 0.0, %v2636
      %v2638 = vpop.f32.mrf.mxu0
      %v2639 = vadd.f32 0.0, %v2638
      %2640 = vmatmul.bf16.gmra.mxu0 %v2612
      %v2641 = vpop.f32.mrf.mxu0
      %v2642 = vadd.f32 0.0, %v2641
      %v2643 = vpop.f32.mrf.mxu0
      %v2644 = vadd.f32 0.0, %v2643
      %2645 = vdwg.mxu0
      %v2646 = vadd.f32 %v2598, %v2627
      %v2647 = vadd.f32 %v2599, %v2629
      %v2648 = vadd.f32 %v2600, %v2632
      %v2649 = vadd.f32 %v2601, %v2634
      %v2650 = vadd.f32 %v2602, %v2637
      %v2651 = vadd.f32 %v2603, %v2639
      %v2652 = vadd.f32 %v2604, %v2642
      %v2653 = vadd.f32 %v2605, %v2644
      %v2655 = vshrl.u32 %v2049, 16
      %v2657 = vrot.slane %v2655, 4
      %v2658 = vshll.u32 %v2049, 16
      %v2660 = vrot.slane %v2658, 5
      %v2661 = vor.u32 %v2657, %v2660
      %v2662 = vrot.slane %v2661, 4
      %v2664 = vshll.u32 %v2050, 16
      %v2666 = vrot.slane %v2664, 5
      %v2667 = vsel %vm591, %v2662, %v2666
      %s2668 = scalar_lea.vmem %s6, 100
      %v2669 = vld [vmem:[%s2668] sm:$0xf]
      %v2670 = vunpack.c.l.b16 %v2667
      %v2671 = vpack.c.b16 %v2670, %v2485
      %v2673 = vsel %vm718, %v2671, 0
      %v2676 = vsel %vm731, %v2669, 0
      %2678 = vmatpush.bf16.msra.mxu0 0
      %2679 = vmatpush.bf16.msra.mxu0 0
      %2680 = vmatpush.bf16.msra.mxu0 0
      %2681 = vmatpush.bf16.msra.mxu0 0
      %2682 = vmatpush.bf16.msra.mxu0 0
      %2683 = vmatpush.bf16.msra.mxu0 0
      %2684 = vmatpush.bf16.msra.mxu0 0
      %2685 = vmatpush.bf16.msra.mxu0 %v2676
      %2686 = vmatmul.bf16.gmra.mxu0 %v2255
      %v2687 = vpop.f32.mrf.mxu0
      %v2688 = vadd.f32 0.0, %v2687
      %v2689 = vpop.f32.mrf.mxu0
      %v2690 = vadd.f32 0.0, %v2689
      %2691 = vmatmul.bf16.gmra.mxu0 %v2258
      %v2692 = vpop.f32.mrf.mxu0
      %v2693 = vadd.f32 0.0, %v2692
      %v2694 = vpop.f32.mrf.mxu0
      %v2695 = vadd.f32 0.0, %v2694
      %2696 = vmatmul.bf16.gmra.mxu0 %v2261
      %v2697 = vpop.f32.mrf.mxu0
      %v2698 = vadd.f32 0.0, %v2697
      %v2699 = vpop.f32.mrf.mxu0
      %v2700 = vadd.f32 0.0, %v2699
      %2701 = vmatmul.bf16.gmra.mxu0 %v2673
      %v2702 = vpop.f32.mrf.mxu0
      %v2703 = vadd.f32 0.0, %v2702
      %v2704 = vpop.f32.mrf.mxu0
      %v2705 = vadd.f32 0.0, %v2704
      %2706 = vdwg.mxu0
      %v2707 = vadd.f32 %v2646, %v2688
      %v2708 = vadd.f32 %v2647, %v2690
      %v2709 = vadd.f32 %v2648, %v2693
      %v2710 = vadd.f32 %v2649, %v2695
      %v2711 = vadd.f32 %v2650, %v2698
      %v2712 = vadd.f32 %v2651, %v2700
      %v2713 = vadd.f32 %v2652, %v2703
      %v2714 = vadd.f32 %v2653, %v2705
      %v2716 = vrot.slane %v2049, 5
      %v2717 = vrot.slane %v2716, 4
      %v2718 = vrot.slane %v2050, 5
      %v2719 = vsel %vm838, %v2717, %v2718
      %s2720 = scalar_lea.vmem %s6, 104
      %v2721 = vld [vmem:[%s2720] sm:$0xf]
      %v2722 = vunpack.c.l.b16 %v2719
      %v2723 = vpack.c.b16 %v2722, %v2549
      %v2725 = vsel %vm718, %v2723, 0
      %v2728 = vsel %vm731, %v2721, 0
      %2730 = vmatpush.bf16.msra.mxu0 0
      %2731 = vmatpush.bf16.msra.mxu0 0
      %2732 = vmatpush.bf16.msra.mxu0 0
      %2733 = vmatpush.bf16.msra.mxu0 0
      %2734 = vmatpush.bf16.msra.mxu0 0
      %2735 = vmatpush.bf16.msra.mxu0 0
      %2736 = vmatpush.bf16.msra.mxu0 0
      %2737 = vmatpush.bf16.msra.mxu0 %v2728
      %2738 = vmatmul.bf16.gmra.mxu0 %v2361
      %v2739 = vpop.f32.mrf.mxu0
      %v2740 = vadd.f32 0.0, %v2739
      %v2741 = vpop.f32.mrf.mxu0
      %v2742 = vadd.f32 0.0, %v2741
      %2743 = vmatmul.bf16.gmra.mxu0 %v2364
      %v2744 = vpop.f32.mrf.mxu0
      %v2745 = vadd.f32 0.0, %v2744
      %v2746 = vpop.f32.mrf.mxu0
      %v2747 = vadd.f32 0.0, %v2746
      %2748 = vmatmul.bf16.gmra.mxu0 %v2367
      %v2749 = vpop.f32.mrf.mxu0
      %v2750 = vadd.f32 0.0, %v2749
      %v2751 = vpop.f32.mrf.mxu0
      %v2752 = vadd.f32 0.0, %v2751
      %2753 = vmatmul.bf16.gmra.mxu0 %v2725
      %v2754 = vpop.f32.mrf.mxu0
      %v2755 = vadd.f32 0.0, %v2754
      %v2756 = vpop.f32.mrf.mxu0
      %v2757 = vadd.f32 0.0, %v2756
      %2758 = vdwg.mxu0
      %v2759 = vadd.f32 %v2707, %v2740
      %v2760 = vadd.f32 %v2708, %v2742
      %v2761 = vadd.f32 %v2709, %v2745
      %v2762 = vadd.f32 %v2710, %v2747
      %v2763 = vadd.f32 %v2711, %v2750
      %v2764 = vadd.f32 %v2712, %v2752
      %v2765 = vadd.f32 %v2713, %v2755
      %v2766 = vadd.f32 %v2714, %v2757
      %v2767 = vld [vmem:[%s535] sm:$0xf]
      %v2768 = vld [vmem:[%s535 + $0x4] sm:$0x1]
      %v2769 = vld [vmem:[%s535 + $0x8] sm:$0xf]
      %v2770 = vld [vmem:[%s535 + $0xc] sm:$0x1]
      %v2771 = vld [vmem:[%s535 + $0x10] sm:$0xf]
      %v2772 = vld [vmem:[%s535 + $0x14] sm:$0x1]
      %v2773 = vld [vmem:[%s535 + $0x18] sm:$0xf]
      %v2774 = vld [vmem:[%s535 + $0x1c] sm:$0x1]
      %v2775 = vld [vmem:[%s535 + $0x20] sm:$0xf]
      %v2776 = vld [vmem:[%s535 + $0x24] sm:$0x1]
      %v2777 = vld [vmem:[%s535 + $0x28] sm:$0xf]
      %v2778 = vld [vmem:[%s535 + $0x2c] sm:$0x1]
      %v2779 = vld [vmem:[%s535 + $0x30] sm:$0xf]
      %v2780 = vld [vmem:[%s535 + $0x34] sm:$0x1]
      %v2781 = vld [vmem:[%s535 + $0x38] sm:$0xf]
      %v2782 = vld [vmem:[%s535 + $0x3c] sm:$0x1]
      %v2783 = vld [vmem:[%s535 + $0x40] sm:$0xf]
      %v2784 = vld [vmem:[%s535 + $0x44] sm:$0x1]
      %v2785 = vld [vmem:[%s535 + $0x48] sm:$0xf]
      %v2786 = vld [vmem:[%s535 + $0x4c] sm:$0x1]
      %v2787 = vld [vmem:[%s7] sm:$0x3]
      %v2796 = vunpack.c.l.b16 %v2767
      %v2797 = vunpack.c.l.b16 %v2769
      %v2798 = vunpack.c.l.b16 %v2771
      %v2799 = vunpack.c.l.b16 %v2773
      %v2800 = vunpack.c.l.b16 %v2775
      %v2801 = vunpack.c.l.b16 %v2777
      %v2802 = vunpack.c.l.b16 %v2779
      %v2803 = vunpack.c.l.b16 %v2781
      %v2804 = vpack.c.b16 %v2797, %v2796
      %v2805 = vpack.c.b16 %v2799, %v2798
      %v2806 = vpack.c.b16 %v2801, %v2800
      %v2807 = vpack.c.b16 %v2803, %v2802
      %vm2808 = vcmask 31744
      %v2810 = vsel %vm2808, %v2804, 0
      %v2813 = vsel %vm2808, %v2805, 0
      %v2816 = vsel %vm2808, %v2806, 0
      %v2819 = vsel %vm2808, %v2807, 0
      %vm2821 = vcmask 1041408
      %v2823 = vsel %vm2821, %v2787, 0
      %2825 = vmatpush.bf16.msra.mxu0 0
      %2826 = vmatpush.bf16.msra.mxu0 0
      %2827 = vmatpush.bf16.msra.mxu0 0
      %2828 = vmatpush.bf16.msra.mxu0 0
      %2829 = vmatpush.bf16.msra.mxu0 0
      %2830 = vmatpush.bf16.msra.mxu0 0
      %2831 = vmatpush.bf16.msra.mxu0 0
      %2832 = vmatpush.bf16.msra.mxu0 %v2823
      %2833 = vmatmul.bf16.gmra.mxu0 %v2810
      %v2834 = vpop.f32.mrf.mxu0
      %v2835 = vadd.f32 0.0, %v2834
      %v2836 = vpop.f32.mrf.mxu0
      %v2837 = vadd.f32 0.0, %v2836
      %2838 = vmatmul.bf16.gmra.mxu0 %v2813
      %v2839 = vpop.f32.mrf.mxu0
      %v2840 = vadd.f32 0.0, %v2839
      %v2841 = vpop.f32.mrf.mxu0
      %v2842 = vadd.f32 0.0, %v2841
      %2843 = vmatmul.bf16.gmra.mxu0 %v2816
      %v2844 = vpop.f32.mrf.mxu0
      %v2845 = vadd.f32 0.0, %v2844
      %v2846 = vpop.f32.mrf.mxu0
      %v2847 = vadd.f32 0.0, %v2846
      %2848 = vmatmul.bf16.gmra.mxu0 %v2819
      %v2849 = vpop.f32.mrf.mxu0
      %v2850 = vadd.f32 0.0, %v2849
      %v2851 = vpop.f32.mrf.mxu0
      %v2852 = vadd.f32 0.0, %v2851
      %2853 = vdwg.mxu0
      %v2854 = vadd.f32 %v2759, %v2835
      %v2855 = vadd.f32 %v2760, %v2837
      %v2856 = vadd.f32 %v2761, %v2840
      %v2857 = vadd.f32 %v2762, %v2842
      %v2858 = vadd.f32 %v2763, %v2845
      %v2859 = vadd.f32 %v2764, %v2847
      %v2860 = vadd.f32 %v2765, %v2850
      %v2861 = vadd.f32 %v2766, %v2852
      %v2863 = vshrl.u32 %v2767, 16
      %v2865 = vrot.slane %v2863, 4
      %v2866 = vshll.u32 %v2767, 16
      %v2868 = vrot.slane %v2866, 5
      %v2869 = vor.u32 %v2865, %v2868
      %v2870 = vrot.slane %v2869, 4
      %v2872 = vshll.u32 %v2768, 16
      %v2874 = vrot.slane %v2872, 5
      %v2875 = vsel %vm591, %v2870, %v2874
      %v2877 = vshrl.u32 %v2769, 16
      %v2879 = vrot.slane %v2877, 4
      %v2880 = vshll.u32 %v2769, 16
      %v2882 = vrot.slane %v2880, 5
      %v2883 = vor.u32 %v2879, %v2882
      %v2884 = vrot.slane %v2883, 4
      %v2886 = vshll.u32 %v2770, 16
      %v2888 = vrot.slane %v2886, 5
      %v2889 = vsel %vm591, %v2884, %v2888
      %v2891 = vshrl.u32 %v2771, 16
      %v2893 = vrot.slane %v2891, 4
      %v2894 = vshll.u32 %v2771, 16
      %v2896 = vrot.slane %v2894, 5
      %v2897 = vor.u32 %v2893, %v2896
      %v2898 = vrot.slane %v2897, 4
      %v2900 = vshll.u32 %v2772, 16
      %v2902 = vrot.slane %v2900, 5
      %v2903 = vsel %vm591, %v2898, %v2902
      %v2905 = vshrl.u32 %v2773, 16
      %v2907 = vrot.slane %v2905, 4
      %v2908 = vshll.u32 %v2773, 16
      %v2910 = vrot.slane %v2908, 5
      %v2911 = vor.u32 %v2907, %v2910
      %v2912 = vrot.slane %v2911, 4
      %v2914 = vshll.u32 %v2774, 16
      %v2916 = vrot.slane %v2914, 5
      %v2917 = vsel %vm591, %v2912, %v2916
      %v2919 = vshrl.u32 %v2775, 16
      %v2921 = vrot.slane %v2919, 4
      %v2922 = vshll.u32 %v2775, 16
      %v2924 = vrot.slane %v2922, 5
      %v2925 = vor.u32 %v2921, %v2924
      %v2926 = vrot.slane %v2925, 4
      %v2928 = vshll.u32 %v2776, 16
      %v2930 = vrot.slane %v2928, 5
      %v2931 = vsel %vm591, %v2926, %v2930
      %v2933 = vshrl.u32 %v2777, 16
      %v2935 = vrot.slane %v2933, 4
      %v2936 = vshll.u32 %v2777, 16
      %v2938 = vrot.slane %v2936, 5
      %v2939 = vor.u32 %v2935, %v2938
      %v2940 = vrot.slane %v2939, 4
      %v2942 = vshll.u32 %v2778, 16
      %v2944 = vrot.slane %v2942, 5
      %v2945 = vsel %vm591, %v2940, %v2944
      %v2947 = vshrl.u32 %v2779, 16
      %v2949 = vrot.slane %v2947, 4
      %v2950 = vshll.u32 %v2779, 16
      %v2952 = vrot.slane %v2950, 5
      %v2953 = vor.u32 %v2949, %v2952
      %v2954 = vrot.slane %v2953, 4
      %v2956 = vshll.u32 %v2780, 16
      %v2958 = vrot.slane %v2956, 5
      %v2959 = vsel %vm591, %v2954, %v2958
      %v2961 = vshrl.u32 %v2781, 16
      %v2963 = vrot.slane %v2961, 4
      %v2964 = vshll.u32 %v2781, 16
      %v2966 = vrot.slane %v2964, 5
      %v2967 = vor.u32 %v2963, %v2966
      %v2968 = vrot.slane %v2967, 4
      %v2970 = vshll.u32 %v2782, 16
      %v2972 = vrot.slane %v2970, 5
      %v2973 = vsel %vm591, %v2968, %v2972
      %s2974 = scalar_lea.vmem %s7, 2
      %v2975 = vld [vmem:[%s2974] sm:$0x3]
      %v2976 = vunpack.c.l.b16 %v2875
      %v2977 = vunpack.c.l.b16 %v2889
      %v2978 = vunpack.c.l.b16 %v2903
      %v2979 = vunpack.c.l.b16 %v2917
      %v2980 = vunpack.c.l.b16 %v2931
      %v2981 = vunpack.c.l.b16 %v2945
      %v2982 = vunpack.c.l.b16 %v2959
      %v2983 = vunpack.c.l.b16 %v2973
      %v2984 = vpack.c.b16 %v2977, %v2976
      %v2985 = vpack.c.b16 %v2979, %v2978
      %v2986 = vpack.c.b16 %v2981, %v2980
      %v2987 = vpack.c.b16 %v2983, %v2982
      %v2989 = vsel %vm2808, %v2984, 0
      %v2992 = vsel %vm2808, %v2985, 0
      %v2995 = vsel %vm2808, %v2986, 0
      %v2998 = vsel %vm2808, %v2987, 0
      %v3001 = vsel %vm2821, %v2975, 0
      %3003 = vmatpush.bf16.msra.mxu0 0
      %3004 = vmatpush.bf16.msra.mxu0 0
      %3005 = vmatpush.bf16.msra.mxu0 0
      %3006 = vmatpush.bf16.msra.mxu0 0
      %3007 = vmatpush.bf16.msra.mxu0 0
      %3008 = vmatpush.bf16.msra.mxu0 0
      %3009 = vmatpush.bf16.msra.mxu0 0
      %3010 = vmatpush.bf16.msra.mxu0 %v3001
      %3011 = vmatmul.bf16.gmra.mxu0 %v2989
      %v3012 = vpop.f32.mrf.mxu0
      %v3013 = vadd.f32 0.0, %v3012
      %v3014 = vpop.f32.mrf.mxu0
      %v3015 = vadd.f32 0.0, %v3014
      %3016 = vmatmul.bf16.gmra.mxu0 %v2992
      %v3017 = vpop.f32.mrf.mxu0
      %v3018 = vadd.f32 0.0, %v3017
      %v3019 = vpop.f32.mrf.mxu0
      %v3020 = vadd.f32 0.0, %v3019
      %3021 = vmatmul.bf16.gmra.mxu0 %v2995
      %v3022 = vpop.f32.mrf.mxu0
      %v3023 = vadd.f32 0.0, %v3022
      %v3024 = vpop.f32.mrf.mxu0
      %v3025 = vadd.f32 0.0, %v3024
      %3026 = vmatmul.bf16.gmra.mxu0 %v2998
      %v3027 = vpop.f32.mrf.mxu0
      %v3028 = vadd.f32 0.0, %v3027
      %v3029 = vpop.f32.mrf.mxu0
      %v3030 = vadd.f32 0.0, %v3029
      %3031 = vdwg.mxu0
      %v3032 = vadd.f32 %v2854, %v3013
      %v3033 = vadd.f32 %v2855, %v3015
      %v3034 = vadd.f32 %v2856, %v3018
      %v3035 = vadd.f32 %v2857, %v3020
      %v3036 = vadd.f32 %v2858, %v3023
      %v3037 = vadd.f32 %v2859, %v3025
      %v3038 = vadd.f32 %v2860, %v3028
      %v3039 = vadd.f32 %v2861, %v3030
      %v3048 = vrot.slane %v2767, 5
      %v3049 = vrot.slane %v3048, 4
      %v3050 = vrot.slane %v2768, 5
      %v3051 = vsel %vm838, %v3049, %v3050
      %v3052 = vrot.slane %v2769, 5
      %v3053 = vrot.slane %v3052, 4
      %v3054 = vrot.slane %v2770, 5
      %v3055 = vsel %vm838, %v3053, %v3054
      %v3056 = vrot.slane %v2771, 5
      %v3057 = vrot.slane %v3056, 4
      %v3058 = vrot.slane %v2772, 5
      %v3059 = vsel %vm838, %v3057, %v3058
      %v3060 = vrot.slane %v2773, 5
      %v3061 = vrot.slane %v3060, 4
      %v3062 = vrot.slane %v2774, 5
      %v3063 = vsel %vm838, %v3061, %v3062
      %v3064 = vrot.slane %v2775, 5
      %v3065 = vrot.slane %v3064, 4
      %v3066 = vrot.slane %v2776, 5
      %v3067 = vsel %vm838, %v3065, %v3066
      %v3068 = vrot.slane %v2777, 5
      %v3069 = vrot.slane %v3068, 4
      %v3070 = vrot.slane %v2778, 5
      %v3071 = vsel %vm838, %v3069, %v3070
      %v3072 = vrot.slane %v2779, 5
      %v3073 = vrot.slane %v3072, 4
      %v3074 = vrot.slane %v2780, 5
      %v3075 = vsel %vm838, %v3073, %v3074
      %v3076 = vrot.slane %v2781, 5
      %v3077 = vrot.slane %v3076, 4
      %v3078 = vrot.slane %v2782, 5
      %v3079 = vsel %vm838, %v3077, %v3078
      %s3080 = scalar_lea.vmem %s7, 4
      %v3081 = vld [vmem:[%s3080] sm:$0x3]
      %v3082 = vunpack.c.l.b16 %v3051
      %v3083 = vunpack.c.l.b16 %v3055
      %v3084 = vunpack.c.l.b16 %v3059
      %v3085 = vunpack.c.l.b16 %v3063
      %v3086 = vunpack.c.l.b16 %v3067
      %v3087 = vunpack.c.l.b16 %v3071
      %v3088 = vunpack.c.l.b16 %v3075
      %v3089 = vunpack.c.l.b16 %v3079
      %v3090 = vpack.c.b16 %v3083, %v3082
      %v3091 = vpack.c.b16 %v3085, %v3084
      %v3092 = vpack.c.b16 %v3087, %v3086
      %v3093 = vpack.c.b16 %v3089, %v3088
      %v3095 = vsel %vm2808, %v3090, 0
      %v3098 = vsel %vm2808, %v3091, 0
      %v3101 = vsel %vm2808, %v3092, 0
      %v3104 = vsel %vm2808, %v3093, 0
      %v3107 = vsel %vm2821, %v3081, 0
      %3109 = vmatpush.bf16.msra.mxu0 0
      %3110 = vmatpush.bf16.msra.mxu0 0
      %3111 = vmatpush.bf16.msra.mxu0 0
      %3112 = vmatpush.bf16.msra.mxu0 0
      %3113 = vmatpush.bf16.msra.mxu0 0
      %3114 = vmatpush.bf16.msra.mxu0 0
      %3115 = vmatpush.bf16.msra.mxu0 0
      %3116 = vmatpush.bf16.msra.mxu0 %v3107
      %3117 = vmatmul.bf16.gmra.mxu0 %v3095
      %v3118 = vpop.f32.mrf.mxu0
      %v3119 = vadd.f32 0.0, %v3118
      %v3120 = vpop.f32.mrf.mxu0
      %v3121 = vadd.f32 0.0, %v3120
      %3122 = vmatmul.bf16.gmra.mxu0 %v3098
      %v3123 = vpop.f32.mrf.mxu0
      %v3124 = vadd.f32 0.0, %v3123
      %v3125 = vpop.f32.mrf.mxu0
      %v3126 = vadd.f32 0.0, %v3125
      %3127 = vmatmul.bf16.gmra.mxu0 %v3101
      %v3128 = vpop.f32.mrf.mxu0
      %v3129 = vadd.f32 0.0, %v3128
      %v3130 = vpop.f32.mrf.mxu0
      %v3131 = vadd.f32 0.0, %v3130
      %3132 = vmatmul.bf16.gmra.mxu0 %v3104
      %v3133 = vpop.f32.mrf.mxu0
      %v3134 = vadd.f32 0.0, %v3133
      %v3135 = vpop.f32.mrf.mxu0
      %v3136 = vadd.f32 0.0, %v3135
      %3137 = vdwg.mxu0
      %v3138 = vadd.f32 %v3032, %v3119
      %v3139 = vadd.f32 %v3033, %v3121
      %v3140 = vadd.f32 %v3034, %v3124
      %v3141 = vadd.f32 %v3035, %v3126
      %v3142 = vadd.f32 %v3036, %v3129
      %v3143 = vadd.f32 %v3037, %v3131
      %v3144 = vadd.f32 %v3038, %v3134
      %v3145 = vadd.f32 %v3039, %v3136
      %s3146 = scalar_lea.vmem %s7, 6
      %v3147 = vld [vmem:[%s3146] sm:$0x3]
      %v3149 = vunpack.c.l.b16 %v2783
      %v3150 = vpack.c.b16 %v2798, %v2797
      %v3151 = vpack.c.b16 %v2800, %v2799
      %v3152 = vpack.c.b16 %v2802, %v2801
      %v3153 = vpack.c.b16 %v3149, %v2803
      %v3155 = vsel %vm2808, %v3150, 0
      %v3158 = vsel %vm2808, %v3151, 0
      %v3161 = vsel %vm2808, %v3152, 0
      %v3164 = vsel %vm2808, %v3153, 0
      %v3167 = vsel %vm2821, %v3147, 0
      %3169 = vmatpush.bf16.msra.mxu0 0
      %3170 = vmatpush.bf16.msra.mxu0 0
      %3171 = vmatpush.bf16.msra.mxu0 0
      %3172 = vmatpush.bf16.msra.mxu0 0
      %3173 = vmatpush.bf16.msra.mxu0 0
      %3174 = vmatpush.bf16.msra.mxu0 0
      %3175 = vmatpush.bf16.msra.mxu0 0
      %3176 = vmatpush.bf16.msra.mxu0 %v3167
      %3177 = vmatmul.bf16.gmra.mxu0 %v3155
      %v3178 = vpop.f32.mrf.mxu0
      %v3179 = vadd.f32 0.0, %v3178
      %v3180 = vpop.f32.mrf.mxu0
      %v3181 = vadd.f32 0.0, %v3180
      %3182 = vmatmul.bf16.gmra.mxu0 %v3158
      %v3183 = vpop.f32.mrf.mxu0
      %v3184 = vadd.f32 0.0, %v3183
      %v3185 = vpop.f32.mrf.mxu0
      %v3186 = vadd.f32 0.0, %v3185
      %3187 = vmatmul.bf16.gmra.mxu0 %v3161
      %v3188 = vpop.f32.mrf.mxu0
      %v3189 = vadd.f32 0.0, %v3188
      %v3190 = vpop.f32.mrf.mxu0
      %v3191 = vadd.f32 0.0, %v3190
      %3192 = vmatmul.bf16.gmra.mxu0 %v3164
      %v3193 = vpop.f32.mrf.mxu0
      %v3194 = vadd.f32 0.0, %v3193
      %v3195 = vpop.f32.mrf.mxu0
      %v3196 = vadd.f32 0.0, %v3195
      %3197 = vdwg.mxu0
      %v3198 = vadd.f32 %v3138, %v3179
      %v3199 = vadd.f32 %v3139, %v3181
      %v3200 = vadd.f32 %v3140, %v3184
      %v3201 = vadd.f32 %v3141, %v3186
      %v3202 = vadd.f32 %v3142, %v3189
      %v3203 = vadd.f32 %v3143, %v3191
      %v3204 = vadd.f32 %v3144, %v3194
      %v3205 = vadd.f32 %v3145, %v3196
      %v3207 = vshrl.u32 %v2783, 16
      %v3209 = vrot.slane %v3207, 4
      %v3210 = vshll.u32 %v2783, 16
      %v3212 = vrot.slane %v3210, 5
      %v3213 = vor.u32 %v3209, %v3212
      %v3214 = vrot.slane %v3213, 4
      %v3216 = vshll.u32 %v2784, 16
      %v3218 = vrot.slane %v3216, 5
      %v3219 = vsel %vm591, %v3214, %v3218
      %s3220 = scalar_lea.vmem %s7, 8
      %v3221 = vld [vmem:[%s3220] sm:$0x3]
      %v3222 = vunpack.c.l.b16 %v3219
      %v3223 = vpack.c.b16 %v2978, %v2977
      %v3224 = vpack.c.b16 %v2980, %v2979
      %v3225 = vpack.c.b16 %v2982, %v2981
      %v3226 = vpack.c.b16 %v3222, %v2983
      %v3228 = vsel %vm2808, %v3223, 0
      %v3231 = vsel %vm2808, %v3224, 0
      %v3234 = vsel %vm2808, %v3225, 0
      %v3237 = vsel %vm2808, %v3226, 0
      %v3240 = vsel %vm2821, %v3221, 0
      %3242 = vmatpush.bf16.msra.mxu0 0
      %3243 = vmatpush.bf16.msra.mxu0 0
      %3244 = vmatpush.bf16.msra.mxu0 0
      %3245 = vmatpush.bf16.msra.mxu0 0
      %3246 = vmatpush.bf16.msra.mxu0 0
      %3247 = vmatpush.bf16.msra.mxu0 0
      %3248 = vmatpush.bf16.msra.mxu0 0
      %3249 = vmatpush.bf16.msra.mxu0 %v3240
      %3250 = vmatmul.bf16.gmra.mxu0 %v3228
      %v3251 = vpop.f32.mrf.mxu0
      %v3252 = vadd.f32 0.0, %v3251
      %v3253 = vpop.f32.mrf.mxu0
      %v3254 = vadd.f32 0.0, %v3253
      %3255 = vmatmul.bf16.gmra.mxu0 %v3231
      %v3256 = vpop.f32.mrf.mxu0
      %v3257 = vadd.f32 0.0, %v3256
      %v3258 = vpop.f32.mrf.mxu0
      %v3259 = vadd.f32 0.0, %v3258
      %3260 = vmatmul.bf16.gmra.mxu0 %v3234
      %v3261 = vpop.f32.mrf.mxu0
      %v3262 = vadd.f32 0.0, %v3261
      %v3263 = vpop.f32.mrf.mxu0
      %v3264 = vadd.f32 0.0, %v3263
      %3265 = vmatmul.bf16.gmra.mxu0 %v3237
      %v3266 = vpop.f32.mrf.mxu0
      %v3267 = vadd.f32 0.0, %v3266
      %v3268 = vpop.f32.mrf.mxu0
      %v3269 = vadd.f32 0.0, %v3268
      %3270 = vdwg.mxu0
      %v3271 = vadd.f32 %v3198, %v3252
      %v3272 = vadd.f32 %v3199, %v3254
      %v3273 = vadd.f32 %v3200, %v3257
      %v3274 = vadd.f32 %v3201, %v3259
      %v3275 = vadd.f32 %v3202, %v3262
      %v3276 = vadd.f32 %v3203, %v3264
      %v3277 = vadd.f32 %v3204, %v3267
      %v3278 = vadd.f32 %v3205, %v3269
      %v3280 = vrot.slane %v2783, 5
      %v3281 = vrot.slane %v3280, 4
      %v3282 = vrot.slane %v2784, 5
      %v3283 = vsel %vm838, %v3281, %v3282
      %s3284 = scalar_lea.vmem %s7, 10
      %v3285 = vld [vmem:[%s3284] sm:$0x3]
      %v3286 = vunpack.c.l.b16 %v3283
      %v3287 = vpack.c.b16 %v3084, %v3083
      %v3288 = vpack.c.b16 %v3086, %v3085
      %v3289 = vpack.c.b16 %v3088, %v3087
      %v3290 = vpack.c.b16 %v3286, %v3089
      %v3292 = vsel %vm2808, %v3287, 0
      %v3295 = vsel %vm2808, %v3288, 0
      %v3298 = vsel %vm2808, %v3289, 0
      %v3301 = vsel %vm2808, %v3290, 0
      %v3304 = vsel %vm2821, %v3285, 0
      %3306 = vmatpush.bf16.msra.mxu0 0
      %3307 = vmatpush.bf16.msra.mxu0 0
      %3308 = vmatpush.bf16.msra.mxu0 0
      %3309 = vmatpush.bf16.msra.mxu0 0
      %3310 = vmatpush.bf16.msra.mxu0 0
      %3311 = vmatpush.bf16.msra.mxu0 0
      %3312 = vmatpush.bf16.msra.mxu0 0
      %3313 = vmatpush.bf16.msra.mxu0 %v3304
      %3314 = vmatmul.bf16.gmra.mxu0 %v3292
      %v3315 = vpop.f32.mrf.mxu0
      %v3316 = vadd.f32 0.0, %v3315
      %v3317 = vpop.f32.mrf.mxu0
      %v3318 = vadd.f32 0.0, %v3317
      %3319 = vmatmul.bf16.gmra.mxu0 %v3295
      %v3320 = vpop.f32.mrf.mxu0
      %v3321 = vadd.f32 0.0, %v3320
      %v3322 = vpop.f32.mrf.mxu0
      %v3323 = vadd.f32 0.0, %v3322
      %3324 = vmatmul.bf16.gmra.mxu0 %v3298
      %v3325 = vpop.f32.mrf.mxu0
      %v3326 = vadd.f32 0.0, %v3325
      %v3327 = vpop.f32.mrf.mxu0
      %v3328 = vadd.f32 0.0, %v3327
      %3329 = vmatmul.bf16.gmra.mxu0 %v3301
      %v3330 = vpop.f32.mrf.mxu0
      %v3331 = vadd.f32 0.0, %v3330
      %v3332 = vpop.f32.mrf.mxu0
      %v3333 = vadd.f32 0.0, %v3332
      %3334 = vdwg.mxu0
      %v3335 = vadd.f32 %v3271, %v3316
      %v3336 = vadd.f32 %v3272, %v3318
      %v3337 = vadd.f32 %v3273, %v3321
      %v3338 = vadd.f32 %v3274, %v3323
      %v3339 = vadd.f32 %v3275, %v3326
      %v3340 = vadd.f32 %v3276, %v3328
      %v3341 = vadd.f32 %v3277, %v3331
      %v3342 = vadd.f32 %v3278, %v3333
      %s3343 = scalar_lea.vmem %s7, 12
      %v3344 = vld [vmem:[%s3343] sm:$0x3]
      %v3346 = vunpack.c.l.b16 %v2785
      %v3347 = vpack.c.b16 %v3346, %v3149
      %v3349 = vsel %vm2808, %v3347, 0
      %v3352 = vsel %vm2821, %v3344, 0
      %3354 = vmatpush.bf16.msra.mxu0 0
      %3355 = vmatpush.bf16.msra.mxu0 0
      %3356 = vmatpush.bf16.msra.mxu0 0
      %3357 = vmatpush.bf16.msra.mxu0 0
      %3358 = vmatpush.bf16.msra.mxu0 0
      %3359 = vmatpush.bf16.msra.mxu0 0
      %3360 = vmatpush.bf16.msra.mxu0 0
      %3361 = vmatpush.bf16.msra.mxu0 %v3352
      %3362 = vmatmul.bf16.gmra.mxu0 %v2813
      %v3363 = vpop.f32.mrf.mxu0
      %v3364 = vadd.f32 0.0, %v3363
      %v3365 = vpop.f32.mrf.mxu0
      %v3366 = vadd.f32 0.0, %v3365
      %3367 = vmatmul.bf16.gmra.mxu0 %v2816
      %v3368 = vpop.f32.mrf.mxu0
      %v3369 = vadd.f32 0.0, %v3368
      %v3370 = vpop.f32.mrf.mxu0
      %v3371 = vadd.f32 0.0, %v3370
      %3372 = vmatmul.bf16.gmra.mxu0 %v2819
      %v3373 = vpop.f32.mrf.mxu0
      %v3374 = vadd.f32 0.0, %v3373
      %v3375 = vpop.f32.mrf.mxu0
      %v3376 = vadd.f32 0.0, %v3375
      %3377 = vmatmul.bf16.gmra.mxu0 %v3349
      %v3378 = vpop.f32.mrf.mxu0
      %v3379 = vadd.f32 0.0, %v3378
      %v3380 = vpop.f32.mrf.mxu0
      %v3381 = vadd.f32 0.0, %v3380
      %3382 = vdwg.mxu0
      %v3383 = vadd.f32 %v3335, %v3364
      %v3384 = vadd.f32 %v3336, %v3366
      %v3385 = vadd.f32 %v3337, %v3369
      %v3386 = vadd.f32 %v3338, %v3371
      %v3387 = vadd.f32 %v3339, %v3374
      %v3388 = vadd.f32 %v3340, %v3376
      %v3389 = vadd.f32 %v3341, %v3379
      %v3390 = vadd.f32 %v3342, %v3381
      %v3392 = vshrl.u32 %v2785, 16
      %v3394 = vrot.slane %v3392, 4
      %v3395 = vshll.u32 %v2785, 16
      %v3397 = vrot.slane %v3395, 5
      %v3398 = vor.u32 %v3394, %v3397
      %v3399 = vrot.slane %v3398, 4
      %v3401 = vshll.u32 %v2786, 16
      %v3403 = vrot.slane %v3401, 5
      %v3404 = vsel %vm591, %v3399, %v3403
      %s3405 = scalar_lea.vmem %s7, 14
      %v3406 = vld [vmem:[%s3405] sm:$0x3]
      %v3407 = vunpack.c.l.b16 %v3404
      %v3408 = vpack.c.b16 %v3407, %v3222
      %v3410 = vsel %vm2808, %v3408, 0
      %v3413 = vsel %vm2821, %v3406, 0
      %3415 = vmatpush.bf16.msra.mxu0 0
      %3416 = vmatpush.bf16.msra.mxu0 0
      %3417 = vmatpush.bf16.msra.mxu0 0
      %3418 = vmatpush.bf16.msra.mxu0 0
      %3419 = vmatpush.bf16.msra.mxu0 0
      %3420 = vmatpush.bf16.msra.mxu0 0
      %3421 = vmatpush.bf16.msra.mxu0 0
      %3422 = vmatpush.bf16.msra.mxu0 %v3413
      %3423 = vmatmul.bf16.gmra.mxu0 %v2992
      %v3424 = vpop.f32.mrf.mxu0
      %v3425 = vadd.f32 0.0, %v3424
      %v3426 = vpop.f32.mrf.mxu0
      %v3427 = vadd.f32 0.0, %v3426
      %3428 = vmatmul.bf16.gmra.mxu0 %v2995
      %v3429 = vpop.f32.mrf.mxu0
      %v3430 = vadd.f32 0.0, %v3429
      %v3431 = vpop.f32.mrf.mxu0
      %v3432 = vadd.f32 0.0, %v3431
      %3433 = vmatmul.bf16.gmra.mxu0 %v2998
      %v3434 = vpop.f32.mrf.mxu0
      %v3435 = vadd.f32 0.0, %v3434
      %v3436 = vpop.f32.mrf.mxu0
      %v3437 = vadd.f32 0.0, %v3436
      %3438 = vmatmul.bf16.gmra.mxu0 %v3410
      %v3439 = vpop.f32.mrf.mxu0
      %v3440 = vadd.f32 0.0, %v3439
      %v3441 = vpop.f32.mrf.mxu0
      %v3442 = vadd.f32 0.0, %v3441
      %3443 = vdwg.mxu0
      %v3444 = vadd.f32 %v3383, %v3425
      %v3445 = vadd.f32 %v3384, %v3427
      %v3446 = vadd.f32 %v3385, %v3430
      %v3447 = vadd.f32 %v3386, %v3432
      %v3448 = vadd.f32 %v3387, %v3435
      %v3449 = vadd.f32 %v3388, %v3437
      %v3450 = vadd.f32 %v3389, %v3440
      %v3451 = vadd.f32 %v3390, %v3442
      %v3453 = vrot.slane %v2785, 5
      %v3454 = vrot.slane %v3453, 4
      %v3455 = vrot.slane %v2786, 5
      %v3456 = vsel %vm838, %v3454, %v3455
      %s3457 = scalar_lea.vmem %s7, 16
      %v3458 = vld [vmem:[%s3457] sm:$0x3]
      %v3459 = vunpack.c.l.b16 %v3456
      %v3460 = vpack.c.b16 %v3459, %v3286
      %v3462 = vsel %vm2808, %v3460, 0
      %v3465 = vsel %vm2821, %v3458, 0
      %3467 = vmatpush.bf16.msra.mxu0 0
      %3468 = vmatpush.bf16.msra.mxu0 0
      %3469 = vmatpush.bf16.msra.mxu0 0
      %3470 = vmatpush.bf16.msra.mxu0 0
      %3471 = vmatpush.bf16.msra.mxu0 0
      %3472 = vmatpush.bf16.msra.mxu0 0
      %3473 = vmatpush.bf16.msra.mxu0 0
      %3474 = vmatpush.bf16.msra.mxu0 %v3465
      %3475 = vmatmul.bf16.gmra.mxu0 %v3098
      %v3476 = vpop.f32.mrf.mxu0
      %v3477 = vadd.f32 0.0, %v3476
      %v3478 = vpop.f32.mrf.mxu0
      %v3479 = vadd.f32 0.0, %v3478
      %3480 = vmatmul.bf16.gmra.mxu0 %v3101
      %v3481 = vpop.f32.mrf.mxu0
      %v3482 = vadd.f32 0.0, %v3481
      %v3483 = vpop.f32.mrf.mxu0
      %v3484 = vadd.f32 0.0, %v3483
      %3485 = vmatmul.bf16.gmra.mxu0 %v3104
      %v3486 = vpop.f32.mrf.mxu0
      %v3487 = vadd.f32 0.0, %v3486
      %v3488 = vpop.f32.mrf.mxu0
      %v3489 = vadd.f32 0.0, %v3488
      %3490 = vmatmul.bf16.gmra.mxu0 %v3462
      %v3491 = vpop.f32.mrf.mxu0
      %v3492 = vadd.f32 0.0, %v3491
      %v3493 = vpop.f32.mrf.mxu0
      %v3494 = vadd.f32 0.0, %v3493
      %3495 = vdwg.mxu0
      %v3496 = vadd.f32 %v3444, %v3477
      %v3497 = vadd.f32 %v3445, %v3479
      %v3498 = vadd.f32 %v3446, %v3482
      %v3499 = vadd.f32 %v3447, %v3484
      %v3500 = vadd.f32 %v3448, %v3487
      %v3501 = vadd.f32 %v3449, %v3489
      %v3502 = vadd.f32 %v3450, %v3492
      %v3503 = vadd.f32 %v3451, %v3494
      %v3504 = vld [vmem:[%s545] sm:$0xf]
      %v3505 = vld [vmem:[%s545 + $0x4] sm:$0x1]
      %v3506 = vld [vmem:[%s545 + $0x8] sm:$0xf]
      %v3507 = vld [vmem:[%s545 + $0xc] sm:$0x1]
      %v3508 = vld [vmem:[%s545 + $0x10] sm:$0xf]
      %v3509 = vld [vmem:[%s545 + $0x14] sm:$0x1]
      %v3510 = vld [vmem:[%s545 + $0x18] sm:$0xf]
      %v3511 = vld [vmem:[%s545 + $0x1c] sm:$0x1]
      %v3512 = vld [vmem:[%s545 + $0x20] sm:$0xf]
      %v3513 = vld [vmem:[%s545 + $0x24] sm:$0x1]
      %v3514 = vld [vmem:[%s545 + $0x28] sm:$0xf]
      %v3515 = vld [vmem:[%s545 + $0x2c] sm:$0x1]
      %v3516 = vld [vmem:[%s545 + $0x30] sm:$0xf]
      %v3517 = vld [vmem:[%s545 + $0x34] sm:$0x1]
      %v3518 = vld [vmem:[%s545 + $0x38] sm:$0xf]
      %v3519 = vld [vmem:[%s545 + $0x3c] sm:$0x1]
      %v3520 = vld [vmem:[%s545 + $0x40] sm:$0xf]
      %v3521 = vld [vmem:[%s545 + $0x44] sm:$0x1]
      %v3522 = vld [vmem:[%s545 + $0x48] sm:$0xf]
      %v3523 = vld [vmem:[%s545 + $0x4c] sm:$0x1]
      %s3524 = scalar_lea.vmem %s7, 18
      %v3525 = vld [vmem:[%s3524] sm:$0x3]
      %v3534 = vunpack.c.l.b16 %v3504
      %v3535 = vunpack.c.l.b16 %v3506
      %v3536 = vunpack.c.l.b16 %v3508
      %v3537 = vunpack.c.l.b16 %v3510
      %v3538 = vunpack.c.l.b16 %v3512
      %v3539 = vunpack.c.l.b16 %v3514
      %v3540 = vunpack.c.l.b16 %v3516
      %v3541 = vunpack.c.l.b16 %v3518
      %v3542 = vpack.c.b16 %v3535, %v3534
      %v3543 = vpack.c.b16 %v3537, %v3536
      %v3544 = vpack.c.b16 %v3539, %v3538
      %v3545 = vpack.c.b16 %v3541, %v3540
      %v3547 = vsel %vm2808, %v3542, 0
      %v3550 = vsel %vm2808, %v3543, 0
      %v3553 = vsel %vm2808, %v3544, 0
      %v3556 = vsel %vm2808, %v3545, 0
      %v3559 = vsel %vm2821, %v3525, 0
      %3561 = vmatpush.bf16.msra.mxu0 0
      %3562 = vmatpush.bf16.msra.mxu0 0
      %3563 = vmatpush.bf16.msra.mxu0 0
      %3564 = vmatpush.bf16.msra.mxu0 0
      %3565 = vmatpush.bf16.msra.mxu0 0
      %3566 = vmatpush.bf16.msra.mxu0 0
      %3567 = vmatpush.bf16.msra.mxu0 0
      %3568 = vmatpush.bf16.msra.mxu0 %v3559
      %3569 = vmatmul.bf16.gmra.mxu0 %v3547
      %v3570 = vpop.f32.mrf.mxu0
      %v3571 = vadd.f32 0.0, %v3570
      %v3572 = vpop.f32.mrf.mxu0
      %v3573 = vadd.f32 0.0, %v3572
      %3574 = vmatmul.bf16.gmra.mxu0 %v3550
      %v3575 = vpop.f32.mrf.mxu0
      %v3576 = vadd.f32 0.0, %v3575
      %v3577 = vpop.f32.mrf.mxu0
      %v3578 = vadd.f32 0.0, %v3577
      %3579 = vmatmul.bf16.gmra.mxu0 %v3553
      %v3580 = vpop.f32.mrf.mxu0
      %v3581 = vadd.f32 0.0, %v3580
      %v3582 = vpop.f32.mrf.mxu0
      %v3583 = vadd.f32 0.0, %v3582
      %3584 = vmatmul.bf16.gmra.mxu0 %v3556
      %v3585 = vpop.f32.mrf.mxu0
      %v3586 = vadd.f32 0.0, %v3585
      %v3587 = vpop.f32.mrf.mxu0
      %v3588 = vadd.f32 0.0, %v3587
      %3589 = vdwg.mxu0
      %v3590 = vadd.f32 %v3496, %v3571
      %v3591 = vadd.f32 %v3497, %v3573
      %v3592 = vadd.f32 %v3498, %v3576
      %v3593 = vadd.f32 %v3499, %v3578
      %v3594 = vadd.f32 %v3500, %v3581
      %v3595 = vadd.f32 %v3501, %v3583
      %v3596 = vadd.f32 %v3502, %v3586
      %v3597 = vadd.f32 %v3503, %v3588
      %v3599 = vshrl.u32 %v3504, 16
      %v3601 = vrot.slane %v3599, 4
      %v3602 = vshll.u32 %v3504, 16
      %v3604 = vrot.slane %v3602, 5
      %v3605 = vor.u32 %v3601, %v3604
      %v3606 = vrot.slane %v3605, 4
      %v3608 = vshll.u32 %v3505, 16
      %v3610 = vrot.slane %v3608, 5
      %v3611 = vsel %vm591, %v3606, %v3610
      %v3613 = vshrl.u32 %v3506, 16
      %v3615 = vrot.slane %v3613, 4
      %v3616 = vshll.u32 %v3506, 16
      %v3618 = vrot.slane %v3616, 5
      %v3619 = vor.u32 %v3615, %v3618
      %v3620 = vrot.slane %v3619, 4
      %v3622 = vshll.u32 %v3507, 16
      %v3624 = vrot.slane %v3622, 5
      %v3625 = vsel %vm591, %v3620, %v3624
      %v3627 = vshrl.u32 %v3508, 16
      %v3629 = vrot.slane %v3627, 4
      %v3630 = vshll.u32 %v3508, 16
      %v3632 = vrot.slane %v3630, 5
      %v3633 = vor.u32 %v3629, %v3632
      %v3634 = vrot.slane %v3633, 4
      %v3636 = vshll.u32 %v3509, 16
      %v3638 = vrot.slane %v3636, 5
      %v3639 = vsel %vm591, %v3634, %v3638
      %v3641 = vshrl.u32 %v3510, 16
      %v3643 = vrot.slane %v3641, 4
      %v3644 = vshll.u32 %v3510, 16
      %v3646 = vrot.slane %v3644, 5
      %v3647 = vor.u32 %v3643, %v3646
      %v3648 = vrot.slane %v3647, 4
      %v3650 = vshll.u32 %v3511, 16
      %v3652 = vrot.slane %v3650, 5
      %v3653 = vsel %vm591, %v3648, %v3652
      %v3655 = vshrl.u32 %v3512, 16
      %v3657 = vrot.slane %v3655, 4
      %v3658 = vshll.u32 %v3512, 16
      %v3660 = vrot.slane %v3658, 5
      %v3661 = vor.u32 %v3657, %v3660
      %v3662 = vrot.slane %v3661, 4
      %v3664 = vshll.u32 %v3513, 16
      %v3666 = vrot.slane %v3664, 5
      %v3667 = vsel %vm591, %v3662, %v3666
      %v3669 = vshrl.u32 %v3514, 16
      %v3671 = vrot.slane %v3669, 4
      %v3672 = vshll.u32 %v3514, 16
      %v3674 = vrot.slane %v3672, 5
      %v3675 = vor.u32 %v3671, %v3674
      %v3676 = vrot.slane %v3675, 4
      %v3678 = vshll.u32 %v3515, 16
      %v3680 = vrot.slane %v3678, 5
      %v3681 = vsel %vm591, %v3676, %v3680
      %v3683 = vshrl.u32 %v3516, 16
      %v3685 = vrot.slane %v3683, 4
      %v3686 = vshll.u32 %v3516, 16
      %v3688 = vrot.slane %v3686, 5
      %v3689 = vor.u32 %v3685, %v3688
      %v3690 = vrot.slane %v3689, 4
      %v3692 = vshll.u32 %v3517, 16
      %v3694 = vrot.slane %v3692, 5
      %v3695 = vsel %vm591, %v3690, %v3694
      %v3697 = vshrl.u32 %v3518, 16
      %v3699 = vrot.slane %v3697, 4
      %v3700 = vshll.u32 %v3518, 16
      %v3702 = vrot.slane %v3700, 5
      %v3703 = vor.u32 %v3699, %v3702
      %v3704 = vrot.slane %v3703, 4
      %v3706 = vshll.u32 %v3519, 16
      %v3708 = vrot.slane %v3706, 5
      %v3709 = vsel %vm591, %v3704, %v3708
      %s3710 = scalar_lea.vmem %s7, 20
      %v3711 = vld [vmem:[%s3710] sm:$0x3]
      %v3712 = vunpack.c.l.b16 %v3611
      %v3713 = vunpack.c.l.b16 %v3625
      %v3714 = vunpack.c.l.b16 %v3639
      %v3715 = vunpack.c.l.b16 %v3653
      %v3716 = vunpack.c.l.b16 %v3667
      %v3717 = vunpack.c.l.b16 %v3681
      %v3718 = vunpack.c.l.b16 %v3695
      %v3719 = vunpack.c.l.b16 %v3709
      %v3720 = vpack.c.b16 %v3713, %v3712
      %v3721 = vpack.c.b16 %v3715, %v3714
      %v3722 = vpack.c.b16 %v3717, %v3716
      %v3723 = vpack.c.b16 %v3719, %v3718
      %v3725 = vsel %vm2808, %v3720, 0
      %v3728 = vsel %vm2808, %v3721, 0
      %v3731 = vsel %vm2808, %v3722, 0
      %v3734 = vsel %vm2808, %v3723, 0
      %v3737 = vsel %vm2821, %v3711, 0
      %3739 = vmatpush.bf16.msra.mxu0 0
      %3740 = vmatpush.bf16.msra.mxu0 0
      %3741 = vmatpush.bf16.msra.mxu0 0
      %3742 = vmatpush.bf16.msra.mxu0 0
      %3743 = vmatpush.bf16.msra.mxu0 0
      %3744 = vmatpush.bf16.msra.mxu0 0
      %3745 = vmatpush.bf16.msra.mxu0 0
      %3746 = vmatpush.bf16.msra.mxu0 %v3737
      %3747 = vmatmul.bf16.gmra.mxu0 %v3725
      %v3748 = vpop.f32.mrf.mxu0
      %v3749 = vadd.f32 0.0, %v3748
      %v3750 = vpop.f32.mrf.mxu0
      %v3751 = vadd.f32 0.0, %v3750
      %3752 = vmatmul.bf16.gmra.mxu0 %v3728
      %v3753 = vpop.f32.mrf.mxu0
      %v3754 = vadd.f32 0.0, %v3753
      %v3755 = vpop.f32.mrf.mxu0
      %v3756 = vadd.f32 0.0, %v3755
      %3757 = vmatmul.bf16.gmra.mxu0 %v3731
      %v3758 = vpop.f32.mrf.mxu0
      %v3759 = vadd.f32 0.0, %v3758
      %v3760 = vpop.f32.mrf.mxu0
      %v3761 = vadd.f32 0.0, %v3760
      %3762 = vmatmul.bf16.gmra.mxu0 %v3734
      %v3763 = vpop.f32.mrf.mxu0
      %v3764 = vadd.f32 0.0, %v3763
      %v3765 = vpop.f32.mrf.mxu0
      %v3766 = vadd.f32 0.0, %v3765
      %3767 = vdwg.mxu0
      %v3768 = vadd.f32 %v3590, %v3749
      %v3769 = vadd.f32 %v3591, %v3751
      %v3770 = vadd.f32 %v3592, %v3754
      %v3771 = vadd.f32 %v3593, %v3756
      %v3772 = vadd.f32 %v3594, %v3759
      %v3773 = vadd.f32 %v3595, %v3761
      %v3774 = vadd.f32 %v3596, %v3764
      %v3775 = vadd.f32 %v3597, %v3766
      %v3784 = vrot.slane %v3504, 5
      %v3785 = vrot.slane %v3784, 4
      %v3786 = vrot.slane %v3505, 5
      %v3787 = vsel %vm838, %v3785, %v3786
      %v3788 = vrot.slane %v3506, 5
      %v3789 = vrot.slane %v3788, 4
      %v3790 = vrot.slane %v3507, 5
      %v3791 = vsel %vm838, %v3789, %v3790
      %v3792 = vrot.slane %v3508, 5
      %v3793 = vrot.slane %v3792, 4
      %v3794 = vrot.slane %v3509, 5
      %v3795 = vsel %vm838, %v3793, %v3794
      %v3796 = vrot.slane %v3510, 5
      %v3797 = vrot.slane %v3796, 4
      %v3798 = vrot.slane %v3511, 5
      %v3799 = vsel %vm838, %v3797, %v3798
      %v3800 = vrot.slane %v3512, 5
      %v3801 = vrot.slane %v3800, 4
      %v3802 = vrot.slane %v3513, 5
      %v3803 = vsel %vm838, %v3801, %v3802
      %v3804 = vrot.slane %v3514, 5
      %v3805 = vrot.slane %v3804, 4
      %v3806 = vrot.slane %v3515, 5
      %v3807 = vsel %vm838, %v3805, %v3806
      %v3808 = vrot.slane %v3516, 5
      %v3809 = vrot.slane %v3808, 4
      %v3810 = vrot.slane %v3517, 5
      %v3811 = vsel %vm838, %v3809, %v3810
      %v3812 = vrot.slane %v3518, 5
      %v3813 = vrot.slane %v3812, 4
      %v3814 = vrot.slane %v3519, 5
      %v3815 = vsel %vm838, %v3813, %v3814
      %s3816 = scalar_lea.vmem %s7, 22
      %v3817 = vld [vmem:[%s3816] sm:$0x3]
      %v3818 = vunpack.c.l.b16 %v3787
      %v3819 = vunpack.c.l.b16 %v3791
      %v3820 = vunpack.c.l.b16 %v3795
      %v3821 = vunpack.c.l.b16 %v3799
      %v3822 = vunpack.c.l.b16 %v3803
      %v3823 = vunpack.c.l.b16 %v3807
      %v3824 = vunpack.c.l.b16 %v3811
      %v3825 = vunpack.c.l.b16 %v3815
      %v3826 = vpack.c.b16 %v3819, %v3818
      %v3827 = vpack.c.b16 %v3821, %v3820
      %v3828 = vpack.c.b16 %v3823, %v3822
      %v3829 = vpack.c.b16 %v3825, %v3824
      %v3831 = vsel %vm2808, %v3826, 0
      %v3834 = vsel %vm2808, %v3827, 0
      %v3837 = vsel %vm2808, %v3828, 0
      %v3840 = vsel %vm2808, %v3829, 0
      %v3843 = vsel %vm2821, %v3817, 0
      %3845 = vmatpush.bf16.msra.mxu0 0
      %3846 = vmatpush.bf16.msra.mxu0 0
      %3847 = vmatpush.bf16.msra.mxu0 0
      %3848 = vmatpush.bf16.msra.mxu0 0
      %3849 = vmatpush.bf16.msra.mxu0 0
      %3850 = vmatpush.bf16.msra.mxu0 0
      %3851 = vmatpush.bf16.msra.mxu0 0
      %3852 = vmatpush.bf16.msra.mxu0 %v3843
      %3853 = vmatmul.bf16.gmra.mxu0 %v3831
      %v3854 = vpop.f32.mrf.mxu0
      %v3855 = vadd.f32 0.0, %v3854
      %v3856 = vpop.f32.mrf.mxu0
      %v3857 = vadd.f32 0.0, %v3856
      %3858 = vmatmul.bf16.gmra.mxu0 %v3834
      %v3859 = vpop.f32.mrf.mxu0
      %v3860 = vadd.f32 0.0, %v3859
      %v3861 = vpop.f32.mrf.mxu0
      %v3862 = vadd.f32 0.0, %v3861
      %3863 = vmatmul.bf16.gmra.mxu0 %v3837
      %v3864 = vpop.f32.mrf.mxu0
      %v3865 = vadd.f32 0.0, %v3864
      %v3866 = vpop.f32.mrf.mxu0
      %v3867 = vadd.f32 0.0, %v3866
      %3868 = vmatmul.bf16.gmra.mxu0 %v3840
      %v3869 = vpop.f32.mrf.mxu0
      %v3870 = vadd.f32 0.0, %v3869
      %v3871 = vpop.f32.mrf.mxu0
      %v3872 = vadd.f32 0.0, %v3871
      %3873 = vdwg.mxu0
      %v3874 = vadd.f32 %v3768, %v3855
      %v3875 = vadd.f32 %v3769, %v3857
      %v3876 = vadd.f32 %v3770, %v3860
      %v3877 = vadd.f32 %v3771, %v3862
      %v3878 = vadd.f32 %v3772, %v3865
      %v3879 = vadd.f32 %v3773, %v3867
      %v3880 = vadd.f32 %v3774, %v3870
      %v3881 = vadd.f32 %v3775, %v3872
      %s3882 = scalar_lea.vmem %s7, 24
      %v3883 = vld [vmem:[%s3882] sm:$0x3]
      %v3885 = vunpack.c.l.b16 %v3520
      %v3886 = vpack.c.b16 %v3536, %v3535
      %v3887 = vpack.c.b16 %v3538, %v3537
      %v3888 = vpack.c.b16 %v3540, %v3539
      %v3889 = vpack.c.b16 %v3885, %v3541
      %v3891 = vsel %vm2808, %v3886, 0
      %v3894 = vsel %vm2808, %v3887, 0
      %v3897 = vsel %vm2808, %v3888, 0
      %v3900 = vsel %vm2808, %v3889, 0
      %v3903 = vsel %vm2821, %v3883, 0
      %3905 = vmatpush.bf16.msra.mxu0 0
      %3906 = vmatpush.bf16.msra.mxu0 0
      %3907 = vmatpush.bf16.msra.mxu0 0
      %3908 = vmatpush.bf16.msra.mxu0 0
      %3909 = vmatpush.bf16.msra.mxu0 0
      %3910 = vmatpush.bf16.msra.mxu0 0
      %3911 = vmatpush.bf16.msra.mxu0 0
      %3912 = vmatpush.bf16.msra.mxu0 %v3903
      %3913 = vmatmul.bf16.gmra.mxu0 %v3891
      %v3914 = vpop.f32.mrf.mxu0
      %v3915 = vadd.f32 0.0, %v3914
      %v3916 = vpop.f32.mrf.mxu0
      %v3917 = vadd.f32 0.0, %v3916
      %3918 = vmatmul.bf16.gmra.mxu0 %v3894
      %v3919 = vpop.f32.mrf.mxu0
      %v3920 = vadd.f32 0.0, %v3919
      %v3921 = vpop.f32.mrf.mxu0
      %v3922 = vadd.f32 0.0, %v3921
      %3923 = vmatmul.bf16.gmra.mxu0 %v3897
      %v3924 = vpop.f32.mrf.mxu0
      %v3925 = vadd.f32 0.0, %v3924
      %v3926 = vpop.f32.mrf.mxu0
      %v3927 = vadd.f32 0.0, %v3926
      %3928 = vmatmul.bf16.gmra.mxu0 %v3900
      %v3929 = vpop.f32.mrf.mxu0
      %v3930 = vadd.f32 0.0, %v3929
      %v3931 = vpop.f32.mrf.mxu0
      %v3932 = vadd.f32 0.0, %v3931
      %3933 = vdwg.mxu0
      %v3934 = vadd.f32 %v3874, %v3915
      %v3935 = vadd.f32 %v3875, %v3917
      %v3936 = vadd.f32 %v3876, %v3920
      %v3937 = vadd.f32 %v3877, %v3922
      %v3938 = vadd.f32 %v3878, %v3925
      %v3939 = vadd.f32 %v3879, %v3927
      %v3940 = vadd.f32 %v3880, %v3930
      %v3941 = vadd.f32 %v3881, %v3932
      %v3943 = vshrl.u32 %v3520, 16
      %v3945 = vrot.slane %v3943, 4
      %v3946 = vshll.u32 %v3520, 16
      %v3948 = vrot.slane %v3946, 5
      %v3949 = vor.u32 %v3945, %v3948
      %v3950 = vrot.slane %v3949, 4
      %v3952 = vshll.u32 %v3521, 16
      %v3954 = vrot.slane %v3952, 5
      %v3955 = vsel %vm591, %v3950, %v3954
      %s3956 = scalar_lea.vmem %s7, 26
      %v3957 = vld [vmem:[%s3956] sm:$0x3]
      %v3958 = vunpack.c.l.b16 %v3955
      %v3959 = vpack.c.b16 %v3714, %v3713
      %v3960 = vpack.c.b16 %v3716, %v3715
      %v3961 = vpack.c.b16 %v3718, %v3717
      %v3962 = vpack.c.b16 %v3958, %v3719
      %v3964 = vsel %vm2808, %v3959, 0
      %v3967 = vsel %vm2808, %v3960, 0
      %v3970 = vsel %vm2808, %v3961, 0
      %v3973 = vsel %vm2808, %v3962, 0
      %v3976 = vsel %vm2821, %v3957, 0
      %3978 = vmatpush.bf16.msra.mxu0 0
      %3979 = vmatpush.bf16.msra.mxu0 0
      %3980 = vmatpush.bf16.msra.mxu0 0
      %3981 = vmatpush.bf16.msra.mxu0 0
      %3982 = vmatpush.bf16.msra.mxu0 0
      %3983 = vmatpush.bf16.msra.mxu0 0
      %3984 = vmatpush.bf16.msra.mxu0 0
      %3985 = vmatpush.bf16.msra.mxu0 %v3976
      %3986 = vmatmul.bf16.gmra.mxu0 %v3964
      %v3987 = vpop.f32.mrf.mxu0
      %v3988 = vadd.f32 0.0, %v3987
      %v3989 = vpop.f32.mrf.mxu0
      %v3990 = vadd.f32 0.0, %v3989
      %3991 = vmatmul.bf16.gmra.mxu0 %v3967
      %v3992 = vpop.f32.mrf.mxu0
      %v3993 = vadd.f32 0.0, %v3992
      %v3994 = vpop.f32.mrf.mxu0
      %v3995 = vadd.f32 0.0, %v3994
      %3996 = vmatmul.bf16.gmra.mxu0 %v3970
      %v3997 = vpop.f32.mrf.mxu0
      %v3998 = vadd.f32 0.0, %v3997
      %v3999 = vpop.f32.mrf.mxu0
      %v4000 = vadd.f32 0.0, %v3999
      %4001 = vmatmul.bf16.gmra.mxu0 %v3973
      %v4002 = vpop.f32.mrf.mxu0
      %v4003 = vadd.f32 0.0, %v4002
      %v4004 = vpop.f32.mrf.mxu0
      %v4005 = vadd.f32 0.0, %v4004
      %4006 = vdwg.mxu0
      %v4007 = vadd.f32 %v3934, %v3988
      %v4008 = vadd.f32 %v3935, %v3990
      %v4009 = vadd.f32 %v3936, %v3993
      %v4010 = vadd.f32 %v3937, %v3995
      %v4011 = vadd.f32 %v3938, %v3998
      %v4012 = vadd.f32 %v3939, %v4000
      %v4013 = vadd.f32 %v3940, %v4003
      %v4014 = vadd.f32 %v3941, %v4005
      %v4016 = vrot.slane %v3520, 5
      %v4017 = vrot.slane %v4016, 4
      %v4018 = vrot.slane %v3521, 5
      %v4019 = vsel %vm838, %v4017, %v4018
      %s4020 = scalar_lea.vmem %s7, 28
      %v4021 = vld [vmem:[%s4020] sm:$0x3]
      %v4022 = vunpack.c.l.b16 %v4019
      %v4023 = vpack.c.b16 %v3820, %v3819
      %v4024 = vpack.c.b16 %v3822, %v3821
      %v4025 = vpack.c.b16 %v3824, %v3823
      %v4026 = vpack.c.b16 %v4022, %v3825
      %v4028 = vsel %vm2808, %v4023, 0
      %v4031 = vsel %vm2808, %v4024, 0
      %v4034 = vsel %vm2808, %v4025, 0
      %v4037 = vsel %vm2808, %v4026, 0
      %v4040 = vsel %vm2821, %v4021, 0
      %4042 = vmatpush.bf16.msra.mxu0 0
      %4043 = vmatpush.bf16.msra.mxu0 0
      %4044 = vmatpush.bf16.msra.mxu0 0
      %4045 = vmatpush.bf16.msra.mxu0 0
      %4046 = vmatpush.bf16.msra.mxu0 0
      %4047 = vmatpush.bf16.msra.mxu0 0
      %4048 = vmatpush.bf16.msra.mxu0 0
      %4049 = vmatpush.bf16.msra.mxu0 %v4040
      %4050 = vmatmul.bf16.gmra.mxu0 %v4028
      %v4051 = vpop.f32.mrf.mxu0
      %v4052 = vadd.f32 0.0, %v4051
      %v4053 = vpop.f32.mrf.mxu0
      %v4054 = vadd.f32 0.0, %v4053
      %4055 = vmatmul.bf16.gmra.mxu0 %v4031
      %v4056 = vpop.f32.mrf.mxu0
      %v4057 = vadd.f32 0.0, %v4056
      %v4058 = vpop.f32.mrf.mxu0
      %v4059 = vadd.f32 0.0, %v4058
      %4060 = vmatmul.bf16.gmra.mxu0 %v4034
      %v4061 = vpop.f32.mrf.mxu0
      %v4062 = vadd.f32 0.0, %v4061
      %v4063 = vpop.f32.mrf.mxu0
      %v4064 = vadd.f32 0.0, %v4063
      %4065 = vmatmul.bf16.gmra.mxu0 %v4037
      %v4066 = vpop.f32.mrf.mxu0
      %v4067 = vadd.f32 0.0, %v4066
      %v4068 = vpop.f32.mrf.mxu0
      %v4069 = vadd.f32 0.0, %v4068
      %4070 = vdwg.mxu0
      %v4071 = vadd.f32 %v4007, %v4052
      %v4072 = vadd.f32 %v4008, %v4054
      %v4073 = vadd.f32 %v4009, %v4057
      %v4074 = vadd.f32 %v4010, %v4059
      %v4075 = vadd.f32 %v4011, %v4062
      %v4076 = vadd.f32 %v4012, %v4064
      %v4077 = vadd.f32 %v4013, %v4067
      %v4078 = vadd.f32 %v4014, %v4069
      %s4079 = scalar_lea.vmem %s7, 30
      %v4080 = vld [vmem:[%s4079] sm:$0x3]
      %v4082 = vunpack.c.l.b16 %v3522
      %v4083 = vpack.c.b16 %v4082, %v3885
      %v4085 = vsel %vm2808, %v4083, 0
      %v4088 = vsel %vm2821, %v4080, 0
      %4090 = vmatpush.bf16.msra.mxu0 0
      %4091 = vmatpush.bf16.msra.mxu0 0
      %4092 = vmatpush.bf16.msra.mxu0 0
      %4093 = vmatpush.bf16.msra.mxu0 0
      %4094 = vmatpush.bf16.msra.mxu0 0
      %4095 = vmatpush.bf16.msra.mxu0 0
      %4096 = vmatpush.bf16.msra.mxu0 0
      %4097 = vmatpush.bf16.msra.mxu0 %v4088
      %4098 = vmatmul.bf16.gmra.mxu0 %v3550
      %v4099 = vpop.f32.mrf.mxu0
      %v4100 = vadd.f32 0.0, %v4099
      %v4101 = vpop.f32.mrf.mxu0
      %v4102 = vadd.f32 0.0, %v4101
      %4103 = vmatmul.bf16.gmra.mxu0 %v3553
      %v4104 = vpop.f32.mrf.mxu0
      %v4105 = vadd.f32 0.0, %v4104
      %v4106 = vpop.f32.mrf.mxu0
      %v4107 = vadd.f32 0.0, %v4106
      %4108 = vmatmul.bf16.gmra.mxu0 %v3556
      %v4109 = vpop.f32.mrf.mxu0
      %v4110 = vadd.f32 0.0, %v4109
      %v4111 = vpop.f32.mrf.mxu0
      %v4112 = vadd.f32 0.0, %v4111
      %4113 = vmatmul.bf16.gmra.mxu0 %v4085
      %v4114 = vpop.f32.mrf.mxu0
      %v4115 = vadd.f32 0.0, %v4114
      %v4116 = vpop.f32.mrf.mxu0
      %v4117 = vadd.f32 0.0, %v4116
      %4118 = vdwg.mxu0
      %v4119 = vadd.f32 %v4071, %v4100
      %v4120 = vadd.f32 %v4072, %v4102
      %v4121 = vadd.f32 %v4073, %v4105
      %v4122 = vadd.f32 %v4074, %v4107
      %v4123 = vadd.f32 %v4075, %v4110
      %v4124 = vadd.f32 %v4076, %v4112
      %v4125 = vadd.f32 %v4077, %v4115
      %v4126 = vadd.f32 %v4078, %v4117
      %v4128 = vshrl.u32 %v3522, 16
      %v4130 = vrot.slane %v4128, 4
      %v4131 = vshll.u32 %v3522, 16
      %v4133 = vrot.slane %v4131, 5
      %v4134 = vor.u32 %v4130, %v4133
      %v4135 = vrot.slane %v4134, 4
      %v4137 = vshll.u32 %v3523, 16
      %v4139 = vrot.slane %v4137, 5
      %v4140 = vsel %vm591, %v4135, %v4139
      %s4141 = scalar_lea.vmem %s7, 32
      %v4142 = vld [vmem:[%s4141] sm:$0x3]
      %v4143 = vunpack.c.l.b16 %v4140
      %v4144 = vpack.c.b16 %v4143, %v3958
      %v4146 = vsel %vm2808, %v4144, 0
      %v4149 = vsel %vm2821, %v4142, 0
      %4151 = vmatpush.bf16.msra.mxu0 0
      %4152 = vmatpush.bf16.msra.mxu0 0
      %4153 = vmatpush.bf16.msra.mxu0 0
      %4154 = vmatpush.bf16.msra.mxu0 0
      %4155 = vmatpush.bf16.msra.mxu0 0
      %4156 = vmatpush.bf16.msra.mxu0 0
      %4157 = vmatpush.bf16.msra.mxu0 0
      %4158 = vmatpush.bf16.msra.mxu0 %v4149
      %4159 = vmatmul.bf16.gmra.mxu0 %v3728
      %v4160 = vpop.f32.mrf.mxu0
      %v4161 = vadd.f32 0.0, %v4160
      %v4162 = vpop.f32.mrf.mxu0
      %v4163 = vadd.f32 0.0, %v4162
      %4164 = vmatmul.bf16.gmra.mxu0 %v3731
      %v4165 = vpop.f32.mrf.mxu0
      %v4166 = vadd.f32 0.0, %v4165
      %v4167 = vpop.f32.mrf.mxu0
      %v4168 = vadd.f32 0.0, %v4167
      %4169 = vmatmul.bf16.gmra.mxu0 %v3734
      %v4170 = vpop.f32.mrf.mxu0
      %v4171 = vadd.f32 0.0, %v4170
      %v4172 = vpop.f32.mrf.mxu0
      %v4173 = vadd.f32 0.0, %v4172
      %4174 = vmatmul.bf16.gmra.mxu0 %v4146
      %v4175 = vpop.f32.mrf.mxu0
      %v4176 = vadd.f32 0.0, %v4175
      %v4177 = vpop.f32.mrf.mxu0
      %v4178 = vadd.f32 0.0, %v4177
      %4179 = vdwg.mxu0
      %v4180 = vadd.f32 %v4119, %v4161
      %v4181 = vadd.f32 %v4120, %v4163
      %v4182 = vadd.f32 %v4121, %v4166
      %v4183 = vadd.f32 %v4122, %v4168
      %v4184 = vadd.f32 %v4123, %v4171
      %v4185 = vadd.f32 %v4124, %v4173
      %v4186 = vadd.f32 %v4125, %v4176
      %v4187 = vadd.f32 %v4126, %v4178
      %v4189 = vrot.slane %v3522, 5
      %v4190 = vrot.slane %v4189, 4
      %v4191 = vrot.slane %v3523, 5
      %v4192 = vsel %vm838, %v4190, %v4191
      %s4193 = scalar_lea.vmem %s7, 34
      %v4194 = vld [vmem:[%s4193] sm:$0x3]
      %v4195 = vunpack.c.l.b16 %v4192
      %v4196 = vpack.c.b16 %v4195, %v4022
      %v4198 = vsel %vm2808, %v4196, 0
      %v4201 = vsel %vm2821, %v4194, 0
      %4203 = vmatpush.bf16.msra.mxu0 0
      %4204 = vmatpush.bf16.msra.mxu0 0
      %4205 = vmatpush.bf16.msra.mxu0 0
      %4206 = vmatpush.bf16.msra.mxu0 0
      %4207 = vmatpush.bf16.msra.mxu0 0
      %4208 = vmatpush.bf16.msra.mxu0 0
      %4209 = vmatpush.bf16.msra.mxu0 0
      %4210 = vmatpush.bf16.msra.mxu0 %v4201
      %4211 = vmatmul.bf16.gmra.mxu0 %v3834
      %v4212 = vpop.f32.mrf.mxu0
      %v4213 = vadd.f32 0.0, %v4212
      %v4214 = vpop.f32.mrf.mxu0
      %v4215 = vadd.f32 0.0, %v4214
      %4216 = vmatmul.bf16.gmra.mxu0 %v3837
      %v4217 = vpop.f32.mrf.mxu0
      %v4218 = vadd.f32 0.0, %v4217
      %v4219 = vpop.f32.mrf.mxu0
      %v4220 = vadd.f32 0.0, %v4219
      %4221 = vmatmul.bf16.gmra.mxu0 %v3840
      %v4222 = vpop.f32.mrf.mxu0
      %v4223 = vadd.f32 0.0, %v4222
      %v4224 = vpop.f32.mrf.mxu0
      %v4225 = vadd.f32 0.0, %v4224
      %4226 = vmatmul.bf16.gmra.mxu0 %v4198
      %v4227 = vpop.f32.mrf.mxu0
      %v4228 = vadd.f32 0.0, %v4227
      %v4229 = vpop.f32.mrf.mxu0
      %v4230 = vadd.f32 0.0, %v4229
      %4231 = vdwg.mxu0
      %v4232 = vadd.f32 %v4180, %v4213
      %v4233 = vadd.f32 %v4181, %v4215
      %v4234 = vadd.f32 %v4182, %v4218
      %v4235 = vadd.f32 %v4183, %v4220
      %v4236 = vadd.f32 %v4184, %v4223
      %v4237 = vadd.f32 %v4185, %v4225
      %v4238 = vadd.f32 %v4186, %v4228
      %v4239 = vadd.f32 %v4187, %v4230
      %v4240 = vld [vmem:[%s556] sm:$0xf]
      %v4241 = vld [vmem:[%s556 + $0x4] sm:$0x1]
      %v4242 = vld [vmem:[%s556 + $0x8] sm:$0xf]
      %v4243 = vld [vmem:[%s556 + $0xc] sm:$0x1]
      %v4244 = vld [vmem:[%s556 + $0x10] sm:$0xf]
      %v4245 = vld [vmem:[%s556 + $0x14] sm:$0x1]
      %v4246 = vld [vmem:[%s556 + $0x18] sm:$0xf]
      %v4247 = vld [vmem:[%s556 + $0x1c] sm:$0x1]
      %v4248 = vld [vmem:[%s556 + $0x20] sm:$0xf]
      %v4249 = vld [vmem:[%s556 + $0x24] sm:$0x1]
      %v4250 = vld [vmem:[%s556 + $0x28] sm:$0xf]
      %v4251 = vld [vmem:[%s556 + $0x2c] sm:$0x1]
      %v4252 = vld [vmem:[%s556 + $0x30] sm:$0xf]
      %v4253 = vld [vmem:[%s556 + $0x34] sm:$0x1]
      %v4254 = vld [vmem:[%s556 + $0x38] sm:$0xf]
      %v4255 = vld [vmem:[%s556 + $0x3c] sm:$0x1]
      %v4256 = vld [vmem:[%s556 + $0x40] sm:$0xf]
      %v4257 = vld [vmem:[%s556 + $0x44] sm:$0x1]
      %v4258 = vld [vmem:[%s556 + $0x48] sm:$0xf]
      %v4259 = vld [vmem:[%s556 + $0x4c] sm:$0x1]
      %s4260 = scalar_lea.vmem %s7, 36
      %v4261 = vld [vmem:[%s4260] sm:$0x3]
      %v4270 = vunpack.c.l.b16 %v4240
      %v4271 = vunpack.c.l.b16 %v4242
      %v4272 = vunpack.c.l.b16 %v4244
      %v4273 = vunpack.c.l.b16 %v4246
      %v4274 = vunpack.c.l.b16 %v4248
      %v4275 = vunpack.c.l.b16 %v4250
      %v4276 = vunpack.c.l.b16 %v4252
      %v4277 = vunpack.c.l.b16 %v4254
      %v4278 = vpack.c.b16 %v4271, %v4270
      %v4279 = vpack.c.b16 %v4273, %v4272
      %v4280 = vpack.c.b16 %v4275, %v4274
      %v4281 = vpack.c.b16 %v4277, %v4276
      %v4283 = vsel %vm2808, %v4278, 0
      %v4286 = vsel %vm2808, %v4279, 0
      %v4289 = vsel %vm2808, %v4280, 0
      %v4292 = vsel %vm2808, %v4281, 0
      %v4295 = vsel %vm2821, %v4261, 0
      %4297 = vmatpush.bf16.msra.mxu0 0
      %4298 = vmatpush.bf16.msra.mxu0 0
      %4299 = vmatpush.bf16.msra.mxu0 0
      %4300 = vmatpush.bf16.msra.mxu0 0
      %4301 = vmatpush.bf16.msra.mxu0 0
      %4302 = vmatpush.bf16.msra.mxu0 0
      %4303 = vmatpush.bf16.msra.mxu0 0
      %4304 = vmatpush.bf16.msra.mxu0 %v4295
      %4305 = vmatmul.bf16.gmra.mxu0 %v4283
      %v4306 = vpop.f32.mrf.mxu0
      %v4307 = vadd.f32 0.0, %v4306
      %v4308 = vpop.f32.mrf.mxu0
      %v4309 = vadd.f32 0.0, %v4308
      %4310 = vmatmul.bf16.gmra.mxu0 %v4286
      %v4311 = vpop.f32.mrf.mxu0
      %v4312 = vadd.f32 0.0, %v4311
      %v4313 = vpop.f32.mrf.mxu0
      %v4314 = vadd.f32 0.0, %v4313
      %4315 = vmatmul.bf16.gmra.mxu0 %v4289
      %v4316 = vpop.f32.mrf.mxu0
      %v4317 = vadd.f32 0.0, %v4316
      %v4318 = vpop.f32.mrf.mxu0
      %v4319 = vadd.f32 0.0, %v4318
      %4320 = vmatmul.bf16.gmra.mxu0 %v4292
      %v4321 = vpop.f32.mrf.mxu0
      %v4322 = vadd.f32 0.0, %v4321
      %v4323 = vpop.f32.mrf.mxu0
      %v4324 = vadd.f32 0.0, %v4323
      %4325 = vdwg.mxu0
      %v4326 = vadd.f32 %v4232, %v4307
      %v4327 = vadd.f32 %v4233, %v4309
      %v4328 = vadd.f32 %v4234, %v4312
      %v4329 = vadd.f32 %v4235, %v4314
      %v4330 = vadd.f32 %v4236, %v4317
      %v4331 = vadd.f32 %v4237, %v4319
      %v4332 = vadd.f32 %v4238, %v4322
      %v4333 = vadd.f32 %v4239, %v4324
      %v4335 = vshrl.u32 %v4240, 16
      %v4337 = vrot.slane %v4335, 4
      %v4338 = vshll.u32 %v4240, 16
      %v4340 = vrot.slane %v4338, 5
      %v4341 = vor.u32 %v4337, %v4340
      %v4342 = vrot.slane %v4341, 4
      %v4344 = vshll.u32 %v4241, 16
      %v4346 = vrot.slane %v4344, 5
      %v4347 = vsel %vm591, %v4342, %v4346
      %v4349 = vshrl.u32 %v4242, 16
      %v4351 = vrot.slane %v4349, 4
      %v4352 = vshll.u32 %v4242, 16
      %v4354 = vrot.slane %v4352, 5
      %v4355 = vor.u32 %v4351, %v4354
      %v4356 = vrot.slane %v4355, 4
      %v4358 = vshll.u32 %v4243, 16
      %v4360 = vrot.slane %v4358, 5
      %v4361 = vsel %vm591, %v4356, %v4360
      %v4363 = vshrl.u32 %v4244, 16
      %v4365 = vrot.slane %v4363, 4
      %v4366 = vshll.u32 %v4244, 16
      %v4368 = vrot.slane %v4366, 5
      %v4369 = vor.u32 %v4365, %v4368
      %v4370 = vrot.slane %v4369, 4
      %v4372 = vshll.u32 %v4245, 16
      %v4374 = vrot.slane %v4372, 5
      %v4375 = vsel %vm591, %v4370, %v4374
      %v4377 = vshrl.u32 %v4246, 16
      %v4379 = vrot.slane %v4377, 4
      %v4380 = vshll.u32 %v4246, 16
      %v4382 = vrot.slane %v4380, 5
      %v4383 = vor.u32 %v4379, %v4382
      %v4384 = vrot.slane %v4383, 4
      %v4386 = vshll.u32 %v4247, 16
      %v4388 = vrot.slane %v4386, 5
      %v4389 = vsel %vm591, %v4384, %v4388
      %v4391 = vshrl.u32 %v4248, 16
      %v4393 = vrot.slane %v4391, 4
      %v4394 = vshll.u32 %v4248, 16
      %v4396 = vrot.slane %v4394, 5
      %v4397 = vor.u32 %v4393, %v4396
      %v4398 = vrot.slane %v4397, 4
      %v4400 = vshll.u32 %v4249, 16
      %v4402 = vrot.slane %v4400, 5
      %v4403 = vsel %vm591, %v4398, %v4402
      %v4405 = vshrl.u32 %v4250, 16
      %v4407 = vrot.slane %v4405, 4
      %v4408 = vshll.u32 %v4250, 16
      %v4410 = vrot.slane %v4408, 5
      %v4411 = vor.u32 %v4407, %v4410
      %v4412 = vrot.slane %v4411, 4
      %v4414 = vshll.u32 %v4251, 16
      %v4416 = vrot.slane %v4414, 5
      %v4417 = vsel %vm591, %v4412, %v4416
      %v4419 = vshrl.u32 %v4252, 16
      %v4421 = vrot.slane %v4419, 4
      %v4422 = vshll.u32 %v4252, 16
      %v4424 = vrot.slane %v4422, 5
      %v4425 = vor.u32 %v4421, %v4424
      %v4426 = vrot.slane %v4425, 4
      %v4428 = vshll.u32 %v4253, 16
      %v4430 = vrot.slane %v4428, 5
      %v4431 = vsel %vm591, %v4426, %v4430
      %v4433 = vshrl.u32 %v4254, 16
      %v4435 = vrot.slane %v4433, 4
      %v4436 = vshll.u32 %v4254, 16
      %v4438 = vrot.slane %v4436, 5
      %v4439 = vor.u32 %v4435, %v4438
      %v4440 = vrot.slane %v4439, 4
      %v4442 = vshll.u32 %v4255, 16
      %v4444 = vrot.slane %v4442, 5
      %v4445 = vsel %vm591, %v4440, %v4444
      %s4446 = scalar_lea.vmem %s7, 38
      %v4447 = vld [vmem:[%s4446] sm:$0x3]
      %v4448 = vunpack.c.l.b16 %v4347
      %v4449 = vunpack.c.l.b16 %v4361
      %v4450 = vunpack.c.l.b16 %v4375
      %v4451 = vunpack.c.l.b16 %v4389
      %v4452 = vunpack.c.l.b16 %v4403
      %v4453 = vunpack.c.l.b16 %v4417
      %v4454 = vunpack.c.l.b16 %v4431
      %v4455 = vunpack.c.l.b16 %v4445
      %v4456 = vpack.c.b16 %v4449, %v4448
      %v4457 = vpack.c.b16 %v4451, %v4450
      %v4458 = vpack.c.b16 %v4453, %v4452
      %v4459 = vpack.c.b16 %v4455, %v4454
      %v4461 = vsel %vm2808, %v4456, 0
      %v4464 = vsel %vm2808, %v4457, 0
      %v4467 = vsel %vm2808, %v4458, 0
      %v4470 = vsel %vm2808, %v4459, 0
      %v4473 = vsel %vm2821, %v4447, 0
      %4475 = vmatpush.bf16.msra.mxu0 0
      %4476 = vmatpush.bf16.msra.mxu0 0
      %4477 = vmatpush.bf16.msra.mxu0 0
      %4478 = vmatpush.bf16.msra.mxu0 0
      %4479 = vmatpush.bf16.msra.mxu0 0
      %4480 = vmatpush.bf16.msra.mxu0 0
      %4481 = vmatpush.bf16.msra.mxu0 0
      %4482 = vmatpush.bf16.msra.mxu0 %v4473
      %4483 = vmatmul.bf16.gmra.mxu0 %v4461
      %v4484 = vpop.f32.mrf.mxu0
      %v4485 = vadd.f32 0.0, %v4484
      %v4486 = vpop.f32.mrf.mxu0
      %v4487 = vadd.f32 0.0, %v4486
      %4488 = vmatmul.bf16.gmra.mxu0 %v4464
      %v4489 = vpop.f32.mrf.mxu0
      %v4490 = vadd.f32 0.0, %v4489
      %v4491 = vpop.f32.mrf.mxu0
      %v4492 = vadd.f32 0.0, %v4491
      %4493 = vmatmul.bf16.gmra.mxu0 %v4467
      %v4494 = vpop.f32.mrf.mxu0
      %v4495 = vadd.f32 0.0, %v4494
      %v4496 = vpop.f32.mrf.mxu0
      %v4497 = vadd.f32 0.0, %v4496
      %4498 = vmatmul.bf16.gmra.mxu0 %v4470
      %v4499 = vpop.f32.mrf.mxu0
      %v4500 = vadd.f32 0.0, %v4499
      %v4501 = vpop.f32.mrf.mxu0
      %v4502 = vadd.f32 0.0, %v4501
      %4503 = vdwg.mxu0
      %v4504 = vadd.f32 %v4326, %v4485
      %v4505 = vadd.f32 %v4327, %v4487
      %v4506 = vadd.f32 %v4328, %v4490
      %v4507 = vadd.f32 %v4329, %v4492
      %v4508 = vadd.f32 %v4330, %v4495
      %v4509 = vadd.f32 %v4331, %v4497
      %v4510 = vadd.f32 %v4332, %v4500
      %v4511 = vadd.f32 %v4333, %v4502
      %v4520 = vrot.slane %v4240, 5
      %v4521 = vrot.slane %v4520, 4
      %v4522 = vrot.slane %v4241, 5
      %v4523 = vsel %vm838, %v4521, %v4522
      %v4524 = vrot.slane %v4242, 5
      %v4525 = vrot.slane %v4524, 4
      %v4526 = vrot.slane %v4243, 5
      %v4527 = vsel %vm838, %v4525, %v4526
      %v4528 = vrot.slane %v4244, 5
      %v4529 = vrot.slane %v4528, 4
      %v4530 = vrot.slane %v4245, 5
      %v4531 = vsel %vm838, %v4529, %v4530
      %v4532 = vrot.slane %v4246, 5
      %v4533 = vrot.slane %v4532, 4
      %v4534 = vrot.slane %v4247, 5
      %v4535 = vsel %vm838, %v4533, %v4534
      %v4536 = vrot.slane %v4248, 5
      %v4537 = vrot.slane %v4536, 4
      %v4538 = vrot.slane %v4249, 5
      %v4539 = vsel %vm838, %v4537, %v4538
      %v4540 = vrot.slane %v4250, 5
      %v4541 = vrot.slane %v4540, 4
      %v4542 = vrot.slane %v4251, 5
      %v4543 = vsel %vm838, %v4541, %v4542
      %v4544 = vrot.slane %v4252, 5
      %v4545 = vrot.slane %v4544, 4
      %v4546 = vrot.slane %v4253, 5
      %v4547 = vsel %vm838, %v4545, %v4546
      %v4548 = vrot.slane %v4254, 5
      %v4549 = vrot.slane %v4548, 4
      %v4550 = vrot.slane %v4255, 5
      %v4551 = vsel %vm838, %v4549, %v4550
      %s4552 = scalar_lea.vmem %s7, 40
      %v4553 = vld [vmem:[%s4552] sm:$0x3]
      %v4554 = vunpack.c.l.b16 %v4523
      %v4555 = vunpack.c.l.b16 %v4527
      %v4556 = vunpack.c.l.b16 %v4531
      %v4557 = vunpack.c.l.b16 %v4535
      %v4558 = vunpack.c.l.b16 %v4539
      %v4559 = vunpack.c.l.b16 %v4543
      %v4560 = vunpack.c.l.b16 %v4547
      %v4561 = vunpack.c.l.b16 %v4551
      %v4562 = vpack.c.b16 %v4555, %v4554
      %v4563 = vpack.c.b16 %v4557, %v4556
      %v4564 = vpack.c.b16 %v4559, %v4558
      %v4565 = vpack.c.b16 %v4561, %v4560
      %v4567 = vsel %vm2808, %v4562, 0
      %v4570 = vsel %vm2808, %v4563, 0
      %v4573 = vsel %vm2808, %v4564, 0
      %v4576 = vsel %vm2808, %v4565, 0
      %v4579 = vsel %vm2821, %v4553, 0
      %4581 = vmatpush.bf16.msra.mxu0 0
      %4582 = vmatpush.bf16.msra.mxu0 0
      %4583 = vmatpush.bf16.msra.mxu0 0
      %4584 = vmatpush.bf16.msra.mxu0 0
      %4585 = vmatpush.bf16.msra.mxu0 0
      %4586 = vmatpush.bf16.msra.mxu0 0
      %4587 = vmatpush.bf16.msra.mxu0 0
      %4588 = vmatpush.bf16.msra.mxu0 %v4579
      %4589 = vmatmul.bf16.gmra.mxu0 %v4567
      %v4590 = vpop.f32.mrf.mxu0
      %v4591 = vadd.f32 0.0, %v4590
      %v4592 = vpop.f32.mrf.mxu0
      %v4593 = vadd.f32 0.0, %v4592
      %4594 = vmatmul.bf16.gmra.mxu0 %v4570
      %v4595 = vpop.f32.mrf.mxu0
      %v4596 = vadd.f32 0.0, %v4595
      %v4597 = vpop.f32.mrf.mxu0
      %v4598 = vadd.f32 0.0, %v4597
      %4599 = vmatmul.bf16.gmra.mxu0 %v4573
      %v4600 = vpop.f32.mrf.mxu0
      %v4601 = vadd.f32 0.0, %v4600
      %v4602 = vpop.f32.mrf.mxu0
      %v4603 = vadd.f32 0.0, %v4602
      %4604 = vmatmul.bf16.gmra.mxu0 %v4576
      %v4605 = vpop.f32.mrf.mxu0
      %v4606 = vadd.f32 0.0, %v4605
      %v4607 = vpop.f32.mrf.mxu0
      %v4608 = vadd.f32 0.0, %v4607
      %4609 = vdwg.mxu0
      %v4610 = vadd.f32 %v4504, %v4591
      %v4611 = vadd.f32 %v4505, %v4593
      %v4612 = vadd.f32 %v4506, %v4596
      %v4613 = vadd.f32 %v4507, %v4598
      %v4614 = vadd.f32 %v4508, %v4601
      %v4615 = vadd.f32 %v4509, %v4603
      %v4616 = vadd.f32 %v4510, %v4606
      %v4617 = vadd.f32 %v4511, %v4608
      %s4618 = scalar_lea.vmem %s7, 42
      %v4619 = vld [vmem:[%s4618] sm:$0x3]
      %v4621 = vunpack.c.l.b16 %v4256
      %v4622 = vpack.c.b16 %v4272, %v4271
      %v4623 = vpack.c.b16 %v4274, %v4273
      %v4624 = vpack.c.b16 %v4276, %v4275
      %v4625 = vpack.c.b16 %v4621, %v4277
      %v4627 = vsel %vm2808, %v4622, 0
      %v4630 = vsel %vm2808, %v4623, 0
      %v4633 = vsel %vm2808, %v4624, 0
      %v4636 = vsel %vm2808, %v4625, 0
      %v4639 = vsel %vm2821, %v4619, 0
      %4641 = vmatpush.bf16.msra.mxu0 0
      %4642 = vmatpush.bf16.msra.mxu0 0
      %4643 = vmatpush.bf16.msra.mxu0 0
      %4644 = vmatpush.bf16.msra.mxu0 0
      %4645 = vmatpush.bf16.msra.mxu0 0
      %4646 = vmatpush.bf16.msra.mxu0 0
      %4647 = vmatpush.bf16.msra.mxu0 0
      %4648 = vmatpush.bf16.msra.mxu0 %v4639
      %4649 = vmatmul.bf16.gmra.mxu0 %v4627
      %v4650 = vpop.f32.mrf.mxu0
      %v4651 = vadd.f32 0.0, %v4650
      %v4652 = vpop.f32.mrf.mxu0
      %v4653 = vadd.f32 0.0, %v4652
      %4654 = vmatmul.bf16.gmra.mxu0 %v4630
      %v4655 = vpop.f32.mrf.mxu0
      %v4656 = vadd.f32 0.0, %v4655
      %v4657 = vpop.f32.mrf.mxu0
      %v4658 = vadd.f32 0.0, %v4657
      %4659 = vmatmul.bf16.gmra.mxu0 %v4633
      %v4660 = vpop.f32.mrf.mxu0
      %v4661 = vadd.f32 0.0, %v4660
      %v4662 = vpop.f32.mrf.mxu0
      %v4663 = vadd.f32 0.0, %v4662
      %4664 = vmatmul.bf16.gmra.mxu0 %v4636
      %v4665 = vpop.f32.mrf.mxu0
      %v4666 = vadd.f32 0.0, %v4665
      %v4667 = vpop.f32.mrf.mxu0
      %v4668 = vadd.f32 0.0, %v4667
      %4669 = vdwg.mxu0
      %v4670 = vadd.f32 %v4610, %v4651
      %v4671 = vadd.f32 %v4611, %v4653
      %v4672 = vadd.f32 %v4612, %v4656
      %v4673 = vadd.f32 %v4613, %v4658
      %v4674 = vadd.f32 %v4614, %v4661
      %v4675 = vadd.f32 %v4615, %v4663
      %v4676 = vadd.f32 %v4616, %v4666
      %v4677 = vadd.f32 %v4617, %v4668
      %v4679 = vshrl.u32 %v4256, 16
      %v4681 = vrot.slane %v4679, 4
      %v4682 = vshll.u32 %v4256, 16
      %v4684 = vrot.slane %v4682, 5
      %v4685 = vor.u32 %v4681, %v4684
      %v4686 = vrot.slane %v4685, 4
      %v4688 = vshll.u32 %v4257, 16
      %v4690 = vrot.slane %v4688, 5
      %v4691 = vsel %vm591, %v4686, %v4690
      %s4692 = scalar_lea.vmem %s7, 44
      %v4693 = vld [vmem:[%s4692] sm:$0x3]
      %v4694 = vunpack.c.l.b16 %v4691
      %v4695 = vpack.c.b16 %v4450, %v4449
      %v4696 = vpack.c.b16 %v4452, %v4451
      %v4697 = vpack.c.b16 %v4454, %v4453
      %v4698 = vpack.c.b16 %v4694, %v4455
      %v4700 = vsel %vm2808, %v4695, 0
      %v4703 = vsel %vm2808, %v4696, 0
      %v4706 = vsel %vm2808, %v4697, 0
      %v4709 = vsel %vm2808, %v4698, 0
      %v4712 = vsel %vm2821, %v4693, 0
      %4714 = vmatpush.bf16.msra.mxu0 0
      %4715 = vmatpush.bf16.msra.mxu0 0
      %4716 = vmatpush.bf16.msra.mxu0 0
      %4717 = vmatpush.bf16.msra.mxu0 0
      %4718 = vmatpush.bf16.msra.mxu0 0
      %4719 = vmatpush.bf16.msra.mxu0 0
      %4720 = vmatpush.bf16.msra.mxu0 0
      %4721 = vmatpush.bf16.msra.mxu0 %v4712
      %4722 = vmatmul.bf16.gmra.mxu0 %v4700
      %v4723 = vpop.f32.mrf.mxu0
      %v4724 = vadd.f32 0.0, %v4723
      %v4725 = vpop.f32.mrf.mxu0
      %v4726 = vadd.f32 0.0, %v4725
      %4727 = vmatmul.bf16.gmra.mxu0 %v4703
      %v4728 = vpop.f32.mrf.mxu0
      %v4729 = vadd.f32 0.0, %v4728
      %v4730 = vpop.f32.mrf.mxu0
      %v4731 = vadd.f32 0.0, %v4730
      %4732 = vmatmul.bf16.gmra.mxu0 %v4706
      %v4733 = vpop.f32.mrf.mxu0
      %v4734 = vadd.f32 0.0, %v4733
      %v4735 = vpop.f32.mrf.mxu0
      %v4736 = vadd.f32 0.0, %v4735
      %4737 = vmatmul.bf16.gmra.mxu0 %v4709
      %v4738 = vpop.f32.mrf.mxu0
      %v4739 = vadd.f32 0.0, %v4738
      %v4740 = vpop.f32.mrf.mxu0
      %v4741 = vadd.f32 0.0, %v4740
      %4742 = vdwg.mxu0
      %v4743 = vadd.f32 %v4670, %v4724
      %v4744 = vadd.f32 %v4671, %v4726
      %v4745 = vadd.f32 %v4672, %v4729
      %v4746 = vadd.f32 %v4673, %v4731
      %v4747 = vadd.f32 %v4674, %v4734
      %v4748 = vadd.f32 %v4675, %v4736
      %v4749 = vadd.f32 %v4676, %v4739
      %v4750 = vadd.f32 %v4677, %v4741
      %v4752 = vrot.slane %v4256, 5
      %v4753 = vrot.slane %v4752, 4
      %v4754 = vrot.slane %v4257, 5
      %v4755 = vsel %vm838, %v4753, %v4754
      %s4756 = scalar_lea.vmem %s7, 46
      %v4757 = vld [vmem:[%s4756] sm:$0x3]
      %v4758 = vunpack.c.l.b16 %v4755
      %v4759 = vpack.c.b16 %v4556, %v4555
      %v4760 = vpack.c.b16 %v4558, %v4557
      %v4761 = vpack.c.b16 %v4560, %v4559
      %v4762 = vpack.c.b16 %v4758, %v4561
      %v4764 = vsel %vm2808, %v4759, 0
      %v4767 = vsel %vm2808, %v4760, 0
      %v4770 = vsel %vm2808, %v4761, 0
      %v4773 = vsel %vm2808, %v4762, 0
      %v4776 = vsel %vm2821, %v4757, 0
      %4778 = vmatpush.bf16.msra.mxu0 0
      %4779 = vmatpush.bf16.msra.mxu0 0
      %4780 = vmatpush.bf16.msra.mxu0 0
      %4781 = vmatpush.bf16.msra.mxu0 0
      %4782 = vmatpush.bf16.msra.mxu0 0
      %4783 = vmatpush.bf16.msra.mxu0 0
      %4784 = vmatpush.bf16.msra.mxu0 0
      %4785 = vmatpush.bf16.msra.mxu0 %v4776
      %4786 = vmatmul.bf16.gmra.mxu0 %v4764
      %v4787 = vpop.f32.mrf.mxu0
      %v4788 = vadd.f32 0.0, %v4787
      %v4789 = vpop.f32.mrf.mxu0
      %v4790 = vadd.f32 0.0, %v4789
      %4791 = vmatmul.bf16.gmra.mxu0 %v4767
      %v4792 = vpop.f32.mrf.mxu0
      %v4793 = vadd.f32 0.0, %v4792
      %v4794 = vpop.f32.mrf.mxu0
      %v4795 = vadd.f32 0.0, %v4794
      %4796 = vmatmul.bf16.gmra.mxu0 %v4770
      %v4797 = vpop.f32.mrf.mxu0
      %v4798 = vadd.f32 0.0, %v4797
      %v4799 = vpop.f32.mrf.mxu0
      %v4800 = vadd.f32 0.0, %v4799
      %4801 = vmatmul.bf16.gmra.mxu0 %v4773
      %v4802 = vpop.f32.mrf.mxu0
      %v4803 = vadd.f32 0.0, %v4802
      %v4804 = vpop.f32.mrf.mxu0
      %v4805 = vadd.f32 0.0, %v4804
      %4806 = vdwg.mxu0
      %v4807 = vadd.f32 %v4743, %v4788
      %v4808 = vadd.f32 %v4744, %v4790
      %v4809 = vadd.f32 %v4745, %v4793
      %v4810 = vadd.f32 %v4746, %v4795
      %v4811 = vadd.f32 %v4747, %v4798
      %v4812 = vadd.f32 %v4748, %v4800
      %v4813 = vadd.f32 %v4749, %v4803
      %v4814 = vadd.f32 %v4750, %v4805
      %s4815 = scalar_lea.vmem %s7, 48
      %v4816 = vld [vmem:[%s4815] sm:$0x3]
      %v4818 = vunpack.c.l.b16 %v4258
      %v4819 = vpack.c.b16 %v4818, %v4621
      %v4821 = vsel %vm2808, %v4819, 0
      %v4824 = vsel %vm2821, %v4816, 0
      %4826 = vmatpush.bf16.msra.mxu0 0
      %4827 = vmatpush.bf16.msra.mxu0 0
      %4828 = vmatpush.bf16.msra.mxu0 0
      %4829 = vmatpush.bf16.msra.mxu0 0
      %4830 = vmatpush.bf16.msra.mxu0 0
      %4831 = vmatpush.bf16.msra.mxu0 0
      %4832 = vmatpush.bf16.msra.mxu0 0
      %4833 = vmatpush.bf16.msra.mxu0 %v4824
      %4834 = vmatmul.bf16.gmra.mxu0 %v4286
      %v4835 = vpop.f32.mrf.mxu0
      %v4836 = vadd.f32 0.0, %v4835
      %v4837 = vpop.f32.mrf.mxu0
      %v4838 = vadd.f32 0.0, %v4837
      %4839 = vmatmul.bf16.gmra.mxu0 %v4289
      %v4840 = vpop.f32.mrf.mxu0
      %v4841 = vadd.f32 0.0, %v4840
      %v4842 = vpop.f32.mrf.mxu0
      %v4843 = vadd.f32 0.0, %v4842
      %4844 = vmatmul.bf16.gmra.mxu0 %v4292
      %v4845 = vpop.f32.mrf.mxu0
      %v4846 = vadd.f32 0.0, %v4845
      %v4847 = vpop.f32.mrf.mxu0
      %v4848 = vadd.f32 0.0, %v4847
      %4849 = vmatmul.bf16.gmra.mxu0 %v4821
      %v4850 = vpop.f32.mrf.mxu0
      %v4851 = vadd.f32 0.0, %v4850
      %v4852 = vpop.f32.mrf.mxu0
      %v4853 = vadd.f32 0.0, %v4852
      %4854 = vdwg.mxu0
      %v4855 = vadd.f32 %v4807, %v4836
      %v4856 = vadd.f32 %v4808, %v4838
      %v4857 = vadd.f32 %v4809, %v4841
      %v4858 = vadd.f32 %v4810, %v4843
      %v4859 = vadd.f32 %v4811, %v4846
      %v4860 = vadd.f32 %v4812, %v4848
      %v4861 = vadd.f32 %v4813, %v4851
      %v4862 = vadd.f32 %v4814, %v4853
      %v4864 = vshrl.u32 %v4258, 16
      %v4866 = vrot.slane %v4864, 4
      %v4867 = vshll.u32 %v4258, 16
      %v4869 = vrot.slane %v4867, 5
      %v4870 = vor.u32 %v4866, %v4869
      %v4871 = vrot.slane %v4870, 4
      %v4873 = vshll.u32 %v4259, 16
      %v4875 = vrot.slane %v4873, 5
      %v4876 = vsel %vm591, %v4871, %v4875
      %s4877 = scalar_lea.vmem %s7, 50
      %v4878 = vld [vmem:[%s4877] sm:$0x3]
      %v4879 = vunpack.c.l.b16 %v4876
      %v4880 = vpack.c.b16 %v4879, %v4694
      %v4882 = vsel %vm2808, %v4880, 0
      %v4885 = vsel %vm2821, %v4878, 0
      %4887 = vmatpush.bf16.msra.mxu0 0
      %4888 = vmatpush.bf16.msra.mxu0 0
      %4889 = vmatpush.bf16.msra.mxu0 0
      %4890 = vmatpush.bf16.msra.mxu0 0
      %4891 = vmatpush.bf16.msra.mxu0 0
      %4892 = vmatpush.bf16.msra.mxu0 0
      %4893 = vmatpush.bf16.msra.mxu0 0
      %4894 = vmatpush.bf16.msra.mxu0 %v4885
      %4895 = vmatmul.bf16.gmra.mxu0 %v4464
      %v4896 = vpop.f32.mrf.mxu0
      %v4897 = vadd.f32 0.0, %v4896
      %v4898 = vpop.f32.mrf.mxu0
      %v4899 = vadd.f32 0.0, %v4898
      %4900 = vmatmul.bf16.gmra.mxu0 %v4467
      %v4901 = vpop.f32.mrf.mxu0
      %v4902 = vadd.f32 0.0, %v4901
      %v4903 = vpop.f32.mrf.mxu0
      %v4904 = vadd.f32 0.0, %v4903
      %4905 = vmatmul.bf16.gmra.mxu0 %v4470
      %v4906 = vpop.f32.mrf.mxu0
      %v4907 = vadd.f32 0.0, %v4906
      %v4908 = vpop.f32.mrf.mxu0
      %v4909 = vadd.f32 0.0, %v4908
      %4910 = vmatmul.bf16.gmra.mxu0 %v4882
      %v4911 = vpop.f32.mrf.mxu0
      %v4912 = vadd.f32 0.0, %v4911
      %v4913 = vpop.f32.mrf.mxu0
      %v4914 = vadd.f32 0.0, %v4913
      %4915 = vdwg.mxu0
      %v4916 = vadd.f32 %v4855, %v4897
      %v4917 = vadd.f32 %v4856, %v4899
      %v4918 = vadd.f32 %v4857, %v4902
      %v4919 = vadd.f32 %v4858, %v4904
      %v4920 = vadd.f32 %v4859, %v4907
      %v4921 = vadd.f32 %v4860, %v4909
      %v4922 = vadd.f32 %v4861, %v4912
      %v4923 = vadd.f32 %v4862, %v4914
      %v4925 = vrot.slane %v4258, 5
      %v4926 = vrot.slane %v4925, 4
      %v4927 = vrot.slane %v4259, 5
      %v4928 = vsel %vm838, %v4926, %v4927
      %s4929 = scalar_lea.vmem %s7, 52
      %v4930 = vld [vmem:[%s4929] sm:$0x3]
      %v4931 = vunpack.c.l.b16 %v4928
      %v4932 = vpack.c.b16 %v4931, %v4758
      %v4934 = vsel %vm2808, %v4932, 0
      %v4937 = vsel %vm2821, %v4930, 0
      %4939 = vmatpush.bf16.msra.mxu0 0
      %4940 = vmatpush.bf16.msra.mxu0 0
      %4941 = vmatpush.bf16.msra.mxu0 0
      %4942 = vmatpush.bf16.msra.mxu0 0
      %4943 = vmatpush.bf16.msra.mxu0 0
      %4944 = vmatpush.bf16.msra.mxu0 0
      %4945 = vmatpush.bf16.msra.mxu0 0
      %4946 = vmatpush.bf16.msra.mxu0 %v4937
      %4947 = vmatmul.bf16.gmra.mxu0 %v4570
      %v4948 = vpop.f32.mrf.mxu0
      %v4949 = vadd.f32 0.0, %v4948
      %v4950 = vpop.f32.mrf.mxu0
      %v4951 = vadd.f32 0.0, %v4950
      %4952 = vmatmul.bf16.gmra.mxu0 %v4573
      %v4953 = vpop.f32.mrf.mxu0
      %v4954 = vadd.f32 0.0, %v4953
      %v4955 = vpop.f32.mrf.mxu0
      %v4956 = vadd.f32 0.0, %v4955
      %4957 = vmatmul.bf16.gmra.mxu0 %v4576
      %v4958 = vpop.f32.mrf.mxu0
      %v4959 = vadd.f32 0.0, %v4958
      %v4960 = vpop.f32.mrf.mxu0
      %v4961 = vadd.f32 0.0, %v4960
      %4962 = vmatmul.bf16.gmra.mxu0 %v4934
      %v4963 = vpop.f32.mrf.mxu0
      %v4964 = vadd.f32 0.0, %v4963
      %v4965 = vpop.f32.mrf.mxu0
      %v4966 = vadd.f32 0.0, %v4965
      %4967 = vdwg.mxu0
      %v4968 = vadd.f32 %v4916, %v4949
      %v4969 = vadd.f32 %v4917, %v4951
      %v4970 = vadd.f32 %v4918, %v4954
      %v4971 = vadd.f32 %v4919, %v4956
      %v4972 = vadd.f32 %v4920, %v4959
      %v4973 = vadd.f32 %v4921, %v4961
      %v4974 = vadd.f32 %v4922, %v4964
      %v4975 = vadd.f32 %v4923, %v4966
      %v4976 = vld [vmem:[%s8] sm:$0x1]
      %v4978 = vperm.slane %v4976, 0
      %v4980 = vadd.f32 %v4968, %v4978
      %v4981 = vadd.f32 %v4969, %v4978
      %v4982 = vadd.f32 %v4970, %v4978
      %v4983 = vadd.f32 %v4971, %v4978
      %v4984 = vadd.f32 %v4972, %v4978
      %v4985 = vadd.f32 %v4973, %v4978
      %v4986 = vadd.f32 %v4974, %v4978
      %v4987 = vadd.f32 %v4975, %v4978
      %v4988 = vpack.c.bf16 %v4980, %v4980
      %v4989 = vpack.c.bf16 %v4981, %v4981
      %v4990 = vpack.c.bf16 %v4982, %v4982
      %v4991 = vpack.c.bf16 %v4983, %v4983
      %v4992 = vpack.c.bf16 %v4984, %v4984
      %v4993 = vpack.c.bf16 %v4985, %v4985
      %v4994 = vpack.c.bf16 %v4986, %v4986
      %v4995 = vpack.c.bf16 %v4987, %v4987
      %vm4996 = vcmask 60416
      %4997 = vst.msk [vmem:[%s566] sm:$0xf] %vm4996, %v4988
      %4998 = vst.msk [vmem:[%s566 + $0x4] sm:$0xf] %vm4996, %v4989
      %4999 = vst.msk [vmem:[%s566 + $0x8] sm:$0xf] %vm4996, %v4990
      %5000 = vst.msk [vmem:[%s566 + $0xc] sm:$0xf] %vm4996, %v4991
      %5001 = vst.msk [vmem:[%s566 + $0x10] sm:$0xf] %vm4996, %v4992
      %5002 = vst.msk [vmem:[%s566 + $0x14] sm:$0xf] %vm4996, %v4993
      %5003 = vst.msk [vmem:[%s566 + $0x18] sm:$0xf] %vm4996, %v4994
      %5004 = vst.msk [vmem:[%s566 + $0x1c] sm:$0xf] %vm4996, %v4995
      %p5005 = scmp.lt.s32.totalorder %s24, 1
      %s5006 = scalar_select %p5005, %s24, 1
      %p5007 = scmp.lt.s32.totalorder %s25, 7
      %s5008 = scalar_select %p5007, %s25, 7
      %s5009 = smul.addr %s5008, 8
      %s5010 = smul.addr %s5006, 64
      %s5011 = sadd.s32 %s5009, %s5010
      %s5012 = smul.addr %s5011, 4
      %s5013 = scalar_lea.vmem %s9, %s5012
      // Predicated region
      $region57: #{_lambda_.8} parent=55 // pred_check
        %p5014 = pneg %p291
      $region58: #{_lambda_.8} parent=55 // pred_check_branch
        %5016 = sbr.rel (%p5014) target = $region60
      $region59: #{_lambda_.8} parent=55 // pred_region
        _
      $region60: #{_lambda_.8} parent=55 // pred_fallthru
        _
    $region56: #{_lambda_.8} parent=5 // pred_fallthru
      _
    %p5017 = scmp.le.s32.totalorder 2, %s15
    // Predicated region
    $region61: #{_lambda_.8} parent=5 // pred_check
      %p5018 = pneg %p5017
    $region62: #{_lambda_.8} parent=5 // pred_check_branch
      %5020 = sbr.rel (%p5018) target = $region64
    $region63: #{_lambda_.8} parent=5 // pred_region
      %s5021 = ssub.s32 %s15, 2
      // Predicated region
      $region65: #{_lambda_.8} parent=63 // pred_check
        %p5022 = pneg %p297
      $region66: #{_lambda_.8} parent=63 // pred_check_branch
        %5024 = sbr.rel (%p5022) target = $region68
      $region67: #{_lambda_.8} parent=63 // pred_region
        %p5025 = scmp.lt.s32.totalorder %s26, 1
        %s5026 = scalar_select %p5025, %s26, 1
        %p5027 = scmp.lt.s32.totalorder %s27, 7
        %s5028 = scalar_select %p5027, %s27, 7
        %s5029 = smul.addr %s5028, 8
        %s5030 = smul.addr %s5026, 64
        %s5031 = sadd.s32 %s5029, %s5030
        %s5032 = smul.addr %s5031, 4
        %s5033 = scalar_lea.vmem %s9, %s5032
      $region68: #{_lambda_.8} parent=63 // pred_fallthru
        _
    $region64: #{_lambda_.8} parent=5 // pred_fallthru
      _
  $region6: #{_lambda_.8} parent=0 // loop_footer
    %s19 = sadd.s32 1, %s15
  $region7: #{_lambda_.8} parent=0 // loop_footer_branch
    %14 = sbr.rel target = $region3
  $region8: #{_lambda_.8} parent=0 // loop_exit
    _

</llo_original>
